<compile_context>
chip_gen: v5e
topology: v5e:2x2
jax: 0.10.0
libtpu: 0.0.40
codegen_flags: <defaults>
</compile_context>

<pallas_src>
import jax
import jax.numpy as jnp
from jax.experimental import pallas as pl
from jax.experimental.pallas import tpu as pltpu


# ----------------------------------------------------------------------------
# Fused Pallas kernel
# ----------------------------------------------------------------------------
def cnn22_fused_kernel(x_ref, cw1_ref, cb1_ref, cw2_ref, cb2_ref,
                       fw1_ref, fb1_ref, fw2_ref, fb2_ref, fw3_ref, fb3_ref,
                       o_ref, flat_sc, h2acc_sc):
    """One grid step = one tile of fc1 output columns (+ matching fc2 rows).

    x_ref:    (N, H, W, Cin)        f32, NHWC
    cw1_ref:  (4*Cin, 256)          f32, conv1 taps folded into K
    cb1_ref:  (1, 256)              f32
    cw2_ref:  (4*256, 512)          bf16, conv2 taps folded into K
    cb2_ref:  (1, 512)              f32
    fw1_ref:  (P, 512, TN1)         bf16 block, P = Ho2*Wo2 spatial positions
    fb1_ref:  (1, TN1)              f32 block
    fw2_ref:  (TN1, 256)            bf16 block (rows matching this fc1 tile)
    fb2_ref:  (1, 256)              f32
    fw3_ref:  (256, 1)              bf16
    fb3_ref:  (1, 1)                f32
    o_ref:    (N, 1)                f32
    flat_sc:  (N, P, 512)           bf16 VMEM scratch (flattened conv2 output)
    h2acc_sc: (N, 256)              f32 VMEM scratch (fc2 pre-activation acc)
    """
    j = pl.program_id(0)
    nj = pl.num_programs(0)

    # ---- conv1 -> conv2 -> flatten: done once, result kept in VMEM scratch.
    @pl.when(j == 0)
    def _convs_and_init():
        N, H, W, Cin = x_ref.shape
        Ho, Wo = H - 1, W - 1
        Ho2, Wo2 = Ho - 1, Wo - 1
        C1 = cw1_ref.shape[-1]          # 256
        C2 = cw2_ref.shape[-1]          # 512

        x = x_ref[...]                  # f32, tiny
        # conv1 as a single im2col matmul: K = 4*Cin
        p1 = jnp.concatenate(
            [x[:, ky:ky + Ho, kx:kx + Wo, :]
             for ky in range(2) for kx in range(2)], axis=-1)
        p1 = p1.reshape(N * Ho * Wo, 4 * Cin)
        h1 = jnp.dot(p1, cw1_ref[...], preferred_element_type=jnp.float32)
        h1 = jnp.maximum(h1 + cb1_ref[...], 0.0)
        h1 = h1.reshape(N, Ho, Wo, C1)                       # f32

        # conv2 as a single im2col matmul: K = 4*256 = 1024 (bf16 in, f32 acc)
        p2 = jnp.concatenate(
            [h1[:, ky:ky + Ho2, kx:kx + Wo2, :]
             for ky in range(2) for kx in range(2)], axis=-1)
        p2 = p2.reshape(N * Ho2 * Wo2, 4 * C1).astype(jnp.bfloat16)
        h2 = jnp.dot(p2, cw2_ref[...], preferred_element_type=jnp.float32)
        h2 = jnp.maximum(h2 + cb2_ref[...], 0.0)
        # Flatten stays in NHWC order; fw1 rows were permuted at prep time.
        flat_sc[...] = h2.reshape(N, Ho2 * Wo2, C2).astype(jnp.bfloat16)

        h2acc_sc[...] = jnp.zeros_like(h2acc_sc)

    # ---- fc1 tile (overlapped with the fw1/fw2 block DMA of the next tile)
    N, P, _ = flat_sc.shape
    tn1 = fw1_ref.shape[-1]
    t = jnp.zeros((N, tn1), jnp.float32)
    for p in range(P):                  # static unroll over spatial positions
        t += jnp.dot(flat_sc[:, p, :], fw1_ref[p],
                     preferred_element_type=jnp.float32)
    t = jnp.maximum(t + fb1_ref[...], 0.0).astype(jnp.bfloat16)
    # partial fc2: this tile's fc1 outputs hit the matching rows of fw2
    h2acc_sc[...] += jnp.dot(t, fw2_ref[...],
                             preferred_element_type=jnp.float32)

    # ---- fc2 bias/ReLU + fc3 on the last grid step
    @pl.when(j == nj - 1)
    def _fc_tail():
        h = jnp.maximum(h2acc_sc[...] + fb2_ref[...], 0.0).astype(jnp.bfloat16)
        out = jnp.dot(h, fw3_ref[...], preferred_element_type=jnp.float32)
        o_ref[...] = (out + fb3_ref[...]).astype(o_ref.dtype)


# ----------------------------------------------------------------------------
# Wrapper
# ----------------------------------------------------------------------------
_TN1 = 512  # fc1 output-column tile (1024 // 512 = 2 grid steps)


@jax.jit
def cnn22_forward(kparams, x_nchw):
    # NCHW (PyTorch convention) -> NHWC for the fused kernel (tiny transpose).
    x = jnp.transpose(x_nchw, (0, 2, 3, 1)).astype(jnp.float32)
    N, H, W, Cin = x.shape
    Ho2, Wo2 = H - 2, W - 2
    P = Ho2 * Wo2
    nj = 1024 // _TN1

    grid_spec = pltpu.PrefetchScalarGridSpec(
        num_scalar_prefetch=0,
        grid=(nj,),
        in_specs=[
            pl.BlockSpec((N, H, W, Cin), lambda j: (0, 0, 0, 0)),   # x
            pl.BlockSpec((4 * Cin, 256), lambda j: (0, 0)),         # cw1 folded
            pl.BlockSpec((1, 256), lambda j: (0, 0)),               # cb1
            pl.BlockSpec((4 * 256, 512), lambda j: (0, 0)),         # cw2 folded
            pl.BlockSpec((1, 512), lambda j: (0, 0)),               # cb2
            pl.BlockSpec((P, 512, _TN1), lambda j: (0, 0, j)),      # fw1 (perm)
            pl.BlockSpec((1, _TN1), lambda j: (0, j)),              # fb1
            pl.BlockSpec((_TN1, 256), lambda j: (j, 0)),            # fw2 rows
            pl.BlockSpec((1, 256), lambda j: (0, 0)),               # fb2
            pl.BlockSpec((256, 1), lambda j: (0, 0)),               # fw3
            pl.BlockSpec((1, 1), lambda j: (0, 0)),                 # fb3
        ],
        out_specs=pl.BlockSpec((N, 1), lambda j: (0, 0)),
        scratch_shapes=[
            pltpu.VMEM((N, P, 512), jnp.bfloat16),   # flattened conv2 output
            pltpu.VMEM((N, 256), jnp.float32),       # fc2 accumulator
        ],
    )

    return pl.pallas_call(
        cnn22_fused_kernel,
        out_shape=jax.ShapeDtypeStruct((N, 1), jnp.float32),
        grid_spec=grid_spec,
        compiler_params=pltpu.CompilerParams(
            dimension_semantics=("arbitrary",),
            vmem_limit_bytes=32 * 1024 * 1024,
        ),
    )(x,
      kparams["cw1f"], kparams["cb1"],
      kparams["cw2f"], kparams["cb2"],
      kparams["fw1p"], kparams["fb1"],
      kparams["fw2"], kparams["fb2"],
      kparams["fw3"], kparams["fb3"])


# ----------------------------------------------------------------------------
# Parameters: torch-equivalent init + one-time kernel-layout prep
# ----------------------------------------------------------------------------
def trunc_normal(key, shape, std=0.1):
    # mimics nn.init.trunc_normal_(mean=0, std=0.1, a=-0.2, b=0.2)
    return std * jax.random.truncated_normal(key, -2.0, 2.0, shape, jnp.float32)


def init_params(key, c_in, h, w):
    ks = jax.random.split(key, 5)
    h2, w2 = h - 2, w - 2
    n_flatten = 512 * h2 * w2
    return {
        # conv weights stored HWIO
        "cw1": trunc_normal(ks[0], (2, 2, c_in, 256)),
        "cb1": jnp.zeros((256,), jnp.float32),
        "cw2": trunc_normal(ks[1], (2, 2, 256, 512)),
        "cb2": jnp.zeros((512,), jnp.float32),
        # fc weights stored (in, out); fw1 rows in torch NCHW-flatten order
        "fw1": trunc_normal(ks[2], (n_flatten, 1024)),
        "fb1": jnp.zeros((1024,), jnp.float32),
        "fw2": trunc_normal(ks[3], (1024, 256)),
        "fb2": jnp.zeros((256,), jnp.float32),
        "fw3": trunc_normal(ks[4], (256, 1)),
        "fb3": jnp.zeros((1,), jnp.float32),
    }


def prepare_kernel_params(params, conv2_out_hw):
    """One-time weight re-layout + bf16 cast for the fused kernel.

    * conv weights: HWIO -> (4*Cin, Cout)  (2x2 taps folded into K)
    * fw1: rows permuted from torch NCHW-flatten order to (spatial, channel)
      so the kernel can flatten in NHWC memory order with no transpose.
    """
    ho2, wo2 = conv2_out_hw
    cw1 = params["cw1"]
    cw2 = params["cw2"]
    cin = cw1.shape[2]
    fw1 = params["fw1"]                                  # (512*P, 1024)
    fw1p = (fw1.reshape(512, ho2, wo2, 1024)
               .transpose(1, 2, 0, 3)
               .reshape(ho2 * wo2, 512, 1024))
    return {
        "cw1f": cw1.reshape(4 * cin, 256).astype(jnp.float32),   # tiny, keep f32
        "cb1": params["cb1"].reshape(1, -1).astype(jnp.float32),
        "cw2f": cw2.reshape(4 * 256, 512).astype(jnp.bfloat16),
        "cb2": params["cb2"].reshape(1, -1).astype(jnp.float32),
        "fw1p": fw1p.astype(jnp.bfloat16),
        "fb1": params["fb1"].reshape(1, -1).astype(jnp.float32),
        "fw2": params["fw2"].astype(jnp.bfloat16),
        "fb2": params["fb2"].reshape(1, -1).astype(jnp.float32),
        "fw3": params["fw3"].astype(jnp.bfloat16),
        "fb3": params["fb3"].reshape(1, -1).astype(jnp.float32),
    }


# ----------------------------------------------------------------------------
# Pure-JAX reference (same mixed precision, torch-style NCHW flatten)
# ----------------------------------------------------------------------------
def _conv_ref(x, w, b, cast_bf16):
    N, H, W, Cin = x.shape
    Cout = w.shape[-1]
    Ho, Wo = H - 1, W - 1
    acc = jnp.zeros((N, Ho, Wo, Cout), jnp.float32)
    for ky in range(2):
        for kx in range(2):
            xs = x[:, ky:ky + Ho, kx:kx + Wo, :]
            wk = w[ky, kx]
            if cast_bf16:
                xs = xs.astype(jnp.bfloat16)
                wk = wk.astype(jnp.bfloat16)
            acc = acc + jnp.einsum("nhwc,co->nhwo", xs, wk,
                                   preferred_element_type=jnp.float32)
    return jnp.maximum(acc + b, 0.0)


def _fc_ref(a, w, b):
    return jnp.dot(a.astype(jnp.bfloat16), w.astype(jnp.bfloat16),
                   preferred_element_type=jnp.float32) + b


def cnn22_reference(params, x_nchw):
    x = jnp.transpose(x_nchw, (0, 2, 3, 1)).astype(jnp.float32)
    h = _conv_ref(x, params["cw1"], params["cb1"], cast_bf16=False)
    h = _conv_ref(h, params["cw2"], params["cb2"], cast_bf16=True)
    # torch Flatten operates on NCHW
    flat = jnp.transpose(h, (0, 3, 1, 2)).reshape(h.shape[0], -1)
    h = jnp.maximum(_fc_ref(flat, params["fw1"], params["fb1"]), 0.0)
    h = jnp.maximum(_fc_ref(h, params["fw2"], params["fb2"]), 0.0)
    return _fc_ref(h, params["fw3"], params["fb3"])


# ----------------------------------------------------------------------------
if __name__ == "__main__":
    # observation_space.shape = (4, 4, 4)  -> n_flatten = 512 * 2 * 2 = 2048
    N, C, H, W = 2, 4, 4, 4
    key = jax.random.PRNGKey(0)
    k_x, k_p = jax.random.split(key)
    x = jax.random.normal(k_x, (N, C, H, W), jnp.float32)

    params = init_params(k_p, C, H, W)
    kparams = prepare_kernel_params(params, (H - 2, W - 2))   # one-time prep

    out = cnn22_forward(kparams, x)
    out = jax.block_until_ready(out)

    ref = cnn22_reference(params, x)
    assert out.shape == (N, 1), out.shape
    assert jnp.allclose(out, ref, atol=5e-2, rtol=5e-2), (out, ref)

    print("KERNEL_OK")
</pallas_src>

<mosaic_0001>
module attributes {stable_mosaic.version = 11 : i64} {
  func.func @cnn22_fused_kernel(%arg0: i32, %arg1: memref<2x4x4x4xf32, #tpu.memory_space<vmem>>, %arg2: memref<16x256xf32, #tpu.memory_space<vmem>>, %arg3: memref<1x256xf32, #tpu.memory_space<vmem>>, %arg4: memref<1024x512xbf16, #tpu.memory_space<vmem>>, %arg5: memref<1x512xf32, #tpu.memory_space<vmem>>, %arg6: memref<4x512x512xbf16, #tpu.memory_space<vmem>>, %arg7: memref<1x512xf32, #tpu.memory_space<vmem>>, %arg8: memref<512x256xbf16, #tpu.memory_space<vmem>>, %arg9: memref<1x256xf32, #tpu.memory_space<vmem>>, %arg10: memref<256x1xbf16, #tpu.memory_space<vmem>>, %arg11: memref<1x1xf32, #tpu.memory_space<vmem>>, %arg12: memref<2x1xf32, #tpu.memory_space<vmem>>, %arg13: memref<2x4x512xbf16, #tpu.memory_space<vmem>>, %arg14: memref<2x256xf32, #tpu.memory_space<vmem>>) attributes {dimension_semantics = [#tpu.dimension_semantics<arbitrary>], iteration_bounds = array<i64: 2>, scalar_prefetch = 0 : i64, scratch_operands = 2 : i64, tpu.core_type = #tpu.core_type<tc>, window_params = [{pipeline_mode = #tpu.pipeline_mode<synchronous>, transform_indices = @transform_0, window_bounds = array<i64: 2, 4, 4, 4>}, {pipeline_mode = #tpu.pipeline_mode<synchronous>, transform_indices = @transform_1, window_bounds = array<i64: 16, 256>}, {pipeline_mode = #tpu.pipeline_mode<synchronous>, transform_indices = @transform_2, window_bounds = array<i64: 1, 256>}, {pipeline_mode = #tpu.pipeline_mode<synchronous>, transform_indices = @transform_3, window_bounds = array<i64: 1024, 512>}, {pipeline_mode = #tpu.pipeline_mode<synchronous>, transform_indices = @transform_4, window_bounds = array<i64: 1, 512>}, {transform_indices = @transform_5, window_bounds = array<i64: 4, 512, 512>}, {transform_indices = @transform_6, window_bounds = array<i64: 1, 512>}, {transform_indices = @transform_7, window_bounds = array<i64: 512, 256>}, {pipeline_mode = #tpu.pipeline_mode<synchronous>, transform_indices = @transform_8, window_bounds = array<i64: 1, 256>}, {pipeline_mode = #tpu.pipeline_mode<synchronous>, transform_indices = @transform_9, window_bounds = array<i64: 256, 1>}, {pipeline_mode = #tpu.pipeline_mode<synchronous>, transform_indices = @transform_10, window_bounds = array<i64: 1, 1>}, {pipeline_mode = #tpu.pipeline_mode<synchronous>, transform_indices = @transform_11, window_bounds = array<i64: 2, 1>}]} {
    %c0_i32 = arith.constant 0 : i32
    %0 = arith.cmpi eq, %arg0, %c0_i32 : i32
    %1 = arith.extui %0 : i1 to i32
    %c0_i32_0 = arith.constant 0 : i32
    %2 = arith.cmpi ne, %1, %c0_i32_0 : i32
    scf.if %2 {
      %c0_36 = arith.constant 0 : index
      %c0_37 = arith.constant 0 : index
      %c0_38 = arith.constant 0 : index
      %c0_39 = arith.constant 0 : index
      %42 = vector.load %arg1[%c0_36, %c0_37, %c0_38, %c0_39] : memref<2x4x4x4xf32, #tpu.memory_space<vmem>>, vector<2x4x4x4xf32>
      %43 = vector.extract_strided_slice %42 {offsets = [0, 0, 0, 0], sizes = [2, 3, 3, 4], strides = [1, 1, 1, 1]} : vector<2x4x4x4xf32> to vector<2x3x3x4xf32>
      %44 = vector.extract_strided_slice %42 {offsets = [0, 0, 1, 0], sizes = [2, 3, 3, 4], strides = [1, 1, 1, 1]} : vector<2x4x4x4xf32> to vector<2x3x3x4xf32>
      %45 = vector.extract_strided_slice %42 {offsets = [0, 1, 0, 0], sizes = [2, 3, 3, 4], strides = [1, 1, 1, 1]} : vector<2x4x4x4xf32> to vector<2x3x3x4xf32>
      %46 = vector.extract_strided_slice %42 {offsets = [0, 1, 1, 0], sizes = [2, 3, 3, 4], strides = [1, 1, 1, 1]} : vector<2x4x4x4xf32> to vector<2x3x3x4xf32>
      %47 = tpu.concatenate %43, %44, %45, %46 in 3 : vector<2x3x3x4xf32>, vector<2x3x3x4xf32>, vector<2x3x3x4xf32>, vector<2x3x3x4xf32> -> vector<2x3x3x16xf32>
      %48 = vector.shape_cast %47 : vector<2x3x3x16xf32> to vector<18x16xf32>
      %c0_40 = arith.constant 0 : index
      %c0_41 = arith.constant 0 : index
      %49 = vector.load %arg2[%c0_40, %c0_41] : memref<16x256xf32, #tpu.memory_space<vmem>>, vector<16x256xf32>
      %cst_42 = arith.constant dense<0.000000e+00> : vector<18x256xf32>
      %50 = tpu.matmul %48, %49, %cst_42 {dimension_numbers = #tpu.dot_dimension_numbers<[1], [0], [0], [1], [0, 0, 1, 1], [], []>} : vector<18x16xf32>, vector<16x256xf32>, vector<18x256xf32> -> vector<18x256xf32>
      %c0_43 = arith.constant 0 : index
      %c0_44 = arith.constant 0 : index
      %51 = vector.load %arg3[%c0_43, %c0_44] : memref<1x256xf32, #tpu.memory_space<vmem>>, vector<1x256xf32>
      %52 = vector.broadcast %51 : vector<1x256xf32> to vector<18x256xf32>
      %53 = arith.addf %50, %52 : vector<18x256xf32>
      %cst_45 = arith.constant 0.000000e+00 : f32
      %54 = vector.broadcast %cst_45 : f32 to vector<18x256xf32>
      %55 = arith.maximumf %53, %54 : vector<18x256xf32>
      %56 = vector.shape_cast %55 : vector<18x256xf32> to vector<2x3x3x256xf32>
      %57 = vector.extract_strided_slice %56 {offsets = [0, 0, 0, 0], sizes = [2, 2, 2, 256], strides = [1, 1, 1, 1]} : vector<2x3x3x256xf32> to vector<2x2x2x256xf32>
      %58 = vector.extract_strided_slice %56 {offsets = [0, 0, 1, 0], sizes = [2, 2, 2, 256], strides = [1, 1, 1, 1]} : vector<2x3x3x256xf32> to vector<2x2x2x256xf32>
      %59 = vector.extract_strided_slice %56 {offsets = [0, 1, 0, 0], sizes = [2, 2, 2, 256], strides = [1, 1, 1, 1]} : vector<2x3x3x256xf32> to vector<2x2x2x256xf32>
      %60 = vector.extract_strided_slice %56 {offsets = [0, 1, 1, 0], sizes = [2, 2, 2, 256], strides = [1, 1, 1, 1]} : vector<2x3x3x256xf32> to vector<2x2x2x256xf32>
      %61 = tpu.concatenate %57, %58, %59, %60 in 3 : vector<2x2x2x256xf32>, vector<2x2x2x256xf32>, vector<2x2x2x256xf32>, vector<2x2x2x256xf32> -> vector<2x2x2x1024xf32>
      %62 = vector.shape_cast %61 : vector<2x2x2x1024xf32> to vector<8x1024xf32>
      %63 = arith.truncf %62 : vector<8x1024xf32> to vector<8x1024xbf16>
      %c0_46 = arith.constant 0 : index
      %c0_47 = arith.constant 0 : index
      %64 = vector.load %arg4[%c0_46, %c0_47] : memref<1024x512xbf16, #tpu.memory_space<vmem>>, vector<1024x512xbf16>
      %cst_48 = arith.constant dense<0.000000e+00> : vector<8x512xf32>
      %65 = tpu.matmul %63, %64, %cst_48 {dimension_numbers = #tpu.dot_dimension_numbers<[1], [0], [0], [1], [0, 0, 1, 1], [], []>} : vector<8x1024xbf16>, vector<1024x512xbf16>, vector<8x512xf32> -> vector<8x512xf32>
      %c0_49 = arith.constant 0 : index
      %c0_50 = arith.constant 0 : index
      %66 = vector.load %arg5[%c0_49, %c0_50] : memref<1x512xf32, #tpu.memory_space<vmem>>, vector<1x512xf32>
      %67 = vector.broadcast %66 : vector<1x512xf32> to vector<8x512xf32>
      %68 = arith.addf %65, %67 : vector<8x512xf32>
      %cst_51 = arith.constant 0.000000e+00 : f32
      %69 = vector.broadcast %cst_51 : f32 to vector<8x512xf32>
      %70 = arith.maximumf %68, %69 : vector<8x512xf32>
      %71 = vector.shape_cast %70 : vector<8x512xf32> to vector<2x4x512xf32>
      %72 = arith.truncf %71 : vector<2x4x512xf32> to vector<2x4x512xbf16>
      %c0_52 = arith.constant 0 : index
      %c0_53 = arith.constant 0 : index
      %c0_54 = arith.constant 0 : index
      %73 = vector.load %arg13[%c0_52, %c0_53, %c0_54] : memref<2x4x512xbf16, #tpu.memory_space<vmem>>, vector<2x4x512xbf16>
      tpu.vector_store %arg13[%c0_52, %c0_53, %c0_54], %72 {strides = array<i32>} : memref<2x4x512xbf16, #tpu.memory_space<vmem>>, vector<2x4x512xbf16>,
      %cst_55 = arith.constant 0.000000e+00 : f32
      %74 = vector.broadcast %cst_55 : f32 to vector<2x256xf32>
      %c0_56 = arith.constant 0 : index
      %c0_57 = arith.constant 0 : index
      %75 = vector.load %arg14[%c0_56, %c0_57] : memref<2x256xf32, #tpu.memory_space<vmem>>, vector<2x256xf32>
      tpu.vector_store %arg14[%c0_56, %c0_57], %74 {strides = array<i32>} : memref<2x256xf32, #tpu.memory_space<vmem>>, vector<2x256xf32>,
    } else {
    }
    %cst = arith.constant 0.000000e+00 : f32
    %3 = vector.broadcast %cst : f32 to vector<2x512xf32>
    %c0 = arith.constant 0 : index
    %c0_1 = arith.constant 0 : index
    %c0_2 = arith.constant 0 : index
    %4 = vector.load %arg13[%c0, %c0_1, %c0_2] : memref<2x4x512xbf16, #tpu.memory_space<vmem>>, vector<2x1x512xbf16>
    %5 = vector.shape_cast %4 : vector<2x1x512xbf16> to vector<2x512xbf16>
    %c0_3 = arith.constant 0 : index
    %c0_4 = arith.constant 0 : index
    %c0_5 = arith.constant 0 : index
    %6 = vector.load %arg6[%c0_3, %c0_4, %c0_5] : memref<4x512x512xbf16, #tpu.memory_space<vmem>>, vector<1x512x512xbf16>
    %7 = vector.shape_cast %6 : vector<1x512x512xbf16> to vector<512x512xbf16>
    %cst_6 = arith.constant dense<0.000000e+00> : vector<2x512xf32>
    %8 = tpu.matmul %5, %7, %cst_6 {dimension_numbers = #tpu.dot_dimension_numbers<[1], [0], [0], [1], [0, 0, 1, 1], [], []>} : vector<2x512xbf16>, vector<512x512xbf16>, vector<2x512xf32> -> vector<2x512xf32>
    %9 = arith.addf %3, %8 : vector<2x512xf32>
    %c0_7 = arith.constant 0 : index
    %c1 = arith.constant 1 : index
    %c0_8 = arith.constant 0 : index
    %10 = vector.load %arg13[%c0_7, %c1, %c0_8] : memref<2x4x512xbf16, #tpu.memory_space<vmem>>, vector<2x1x512xbf16>
    %11 = vector.shape_cast %10 : vector<2x1x512xbf16> to vector<2x512xbf16>
    %c1_9 = arith.constant 1 : index
    %c0_10 = arith.constant 0 : index
    %c0_11 = arith.constant 0 : index
    %12 = vector.load %arg6[%c1_9, %c0_10, %c0_11] : memref<4x512x512xbf16, #tpu.memory_space<vmem>>, vector<1x512x512xbf16>
    %13 = vector.shape_cast %12 : vector<1x512x512xbf16> to vector<512x512xbf16>
    %cst_12 = arith.constant dense<0.000000e+00> : vector<2x512xf32>
    %14 = tpu.matmul %11, %13, %cst_12 {dimension_numbers = #tpu.dot_dimension_numbers<[1], [0], [0], [1], [0, 0, 1, 1], [], []>} : vector<2x512xbf16>, vector<512x512xbf16>, vector<2x512xf32> -> vector<2x512xf32>
    %15 = arith.addf %9, %14 : vector<2x512xf32>
    %c0_13 = arith.constant 0 : index
    %c2 = arith.constant 2 : index
    %c0_14 = arith.constant 0 : index
    %16 = vector.load %arg13[%c0_13, %c2, %c0_14] : memref<2x4x512xbf16, #tpu.memory_space<vmem>>, vector<2x1x512xbf16>
    %17 = vector.shape_cast %16 : vector<2x1x512xbf16> to vector<2x512xbf16>
    %c2_15 = arith.constant 2 : index
    %c0_16 = arith.constant 0 : index
    %c0_17 = arith.constant 0 : index
    %18 = vector.load %arg6[%c2_15, %c0_16, %c0_17] : memref<4x512x512xbf16, #tpu.memory_space<vmem>>, vector<1x512x512xbf16>
    %19 = vector.shape_cast %18 : vector<1x512x512xbf16> to vector<512x512xbf16>
    %cst_18 = arith.constant dense<0.000000e+00> : vector<2x512xf32>
    %20 = tpu.matmul %17, %19, %cst_18 {dimension_numbers = #tpu.dot_dimension_numbers<[1], [0], [0], [1], [0, 0, 1, 1], [], []>} : vector<2x512xbf16>, vector<512x512xbf16>, vector<2x512xf32> -> vector<2x512xf32>
    %21 = arith.addf %15, %20 : vector<2x512xf32>
    %c0_19 = arith.constant 0 : index
    %c3 = arith.constant 3 : index
    %c0_20 = arith.constant 0 : index
    %22 = vector.load %arg13[%c0_19, %c3, %c0_20] : memref<2x4x512xbf16, #tpu.memory_space<vmem>>, vector<2x1x512xbf16>
    %23 = vector.shape_cast %22 : vector<2x1x512xbf16> to vector<2x512xbf16>
    %c3_21 = arith.constant 3 : index
    %c0_22 = arith.constant 0 : index
    %c0_23 = arith.constant 0 : index
    %24 = vector.load %arg6[%c3_21, %c0_22, %c0_23] : memref<4x512x512xbf16, #tpu.memory_space<vmem>>, vector<1x512x512xbf16>
    %25 = vector.shape_cast %24 : vector<1x512x512xbf16> to vector<512x512xbf16>
    %cst_24 = arith.constant dense<0.000000e+00> : vector<2x512xf32>
    %26 = tpu.matmul %23, %25, %cst_24 {dimension_numbers = #tpu.dot_dimension_numbers<[1], [0], [0], [1], [0, 0, 1, 1], [], []>} : vector<2x512xbf16>, vector<512x512xbf16>, vector<2x512xf32> -> vector<2x512xf32>
    %27 = arith.addf %21, %26 : vector<2x512xf32>
    %c0_25 = arith.constant 0 : index
    %c0_26 = arith.constant 0 : index
    %28 = vector.load %arg7[%c0_25, %c0_26] : memref<1x512xf32, #tpu.memory_space<vmem>>, vector<1x512xf32>
    %29 = vector.broadcast %28 : vector<1x512xf32> to vector<2x512xf32>
    %30 = arith.addf %27, %29 : vector<2x512xf32>
    %cst_27 = arith.constant 0.000000e+00 : f32
    %31 = vector.broadcast %cst_27 : f32 to vector<2x512xf32>
    %32 = arith.maximumf %30, %31 : vector<2x512xf32>
    %33 = arith.truncf %32 : vector<2x512xf32> to vector<2x512xbf16>
    %c0_28 = arith.constant 0 : index
    %c0_29 = arith.constant 0 : index
    %34 = vector.load %arg14[%c0_28, %c0_29] : memref<2x256xf32, #tpu.memory_space<vmem>>, vector<2x256xf32>
    %c0_30 = arith.constant 0 : index
    %c0_31 = arith.constant 0 : index
    %35 = vector.load %arg8[%c0_30, %c0_31] : memref<512x256xbf16, #tpu.memory_space<vmem>>, vector<512x256xbf16>
    %cst_32 = arith.constant dense<0.000000e+00> : vector<2x256xf32>
    %36 = tpu.matmul %33, %35, %cst_32 {dimension_numbers = #tpu.dot_dimension_numbers<[1], [0], [0], [1], [0, 0, 1, 1], [], []>} : vector<2x512xbf16>, vector<512x256xbf16>, vector<2x256xf32> -> vector<2x256xf32>
    %37 = arith.addf %34, %36 : vector<2x256xf32>
    %c0_33 = arith.constant 0 : index
    %c0_34 = arith.constant 0 : index
    %38 = vector.load %arg14[%c0_33, %c0_34] : memref<2x256xf32, #tpu.memory_space<vmem>>, vector<2x256xf32>
    tpu.vector_store %arg14[%c0_33, %c0_34], %37 {strides = array<i32>} : memref<2x256xf32, #tpu.memory_space<vmem>>, vector<2x256xf32>,
    %c1_i32 = arith.constant 1 : i32
    %39 = arith.cmpi eq, %arg0, %c1_i32 : i32
    %40 = arith.extui %39 : i1 to i32
    %c0_i32_35 = arith.constant 0 : i32
    %41 = arith.cmpi ne, %40, %c0_i32_35 : i32
    scf.if %41 {
      %c0_36 = arith.constant 0 : index
      %c0_37 = arith.constant 0 : index
      %42 = vector.load %arg14[%c0_36, %c0_37] : memref<2x256xf32, #tpu.memory_space<vmem>>, vector<2x256xf32>
      %c0_38 = arith.constant 0 : index
      %c0_39 = arith.constant 0 : index
      %43 = vector.load %arg9[%c0_38, %c0_39] : memref<1x256xf32, #tpu.memory_space<vmem>>, vector<1x256xf32>
      %44 = vector.broadcast %43 : vector<1x256xf32> to vector<2x256xf32>
      %45 = arith.addf %42, %44 : vector<2x256xf32>
      %cst_40 = arith.constant 0.000000e+00 : f32
      %46 = vector.broadcast %cst_40 : f32 to vector<2x256xf32>
      %47 = arith.maximumf %45, %46 : vector<2x256xf32>
      %48 = arith.truncf %47 : vector<2x256xf32> to vector<2x256xbf16>
      %c0_41 = arith.constant 0 : index
      %c0_42 = arith.constant 0 : index
      %49 = vector.load %arg10[%c0_41, %c0_42] : memref<256x1xbf16, #tpu.memory_space<vmem>>, vector<256x1xbf16>
      %cst_43 = arith.constant dense<0.000000e+00> : vector<2x1xf32>
      %50 = tpu.matmul %48, %49, %cst_43 {dimension_numbers = #tpu.dot_dimension_numbers<[1], [0], [0], [1], [0, 0, 1, 1], [], []>} : vector<2x256xbf16>, vector<256x1xbf16>, vector<2x1xf32> -> vector<2x1xf32>
      %c0_44 = arith.constant 0 : index
      %c0_45 = arith.constant 0 : index
      %51 = vector.load %arg11[%c0_44, %c0_45] : memref<1x1xf32, #tpu.memory_space<vmem>>, vector<1x1xf32>
      %52 = vector.broadcast %51 : vector<1x1xf32> to vector<2x1xf32>
      %53 = arith.addf %50, %52 : vector<2x1xf32>
      %c0_46 = arith.constant 0 : index
      %c0_47 = arith.constant 0 : index
      %54 = vector.load %arg12[%c0_46, %c0_47] : memref<2x1xf32, #tpu.memory_space<vmem>>, vector<2x1xf32>
      tpu.vector_store %arg12[%c0_46, %c0_47], %53 {strides = array<i32>} : memref<2x1xf32, #tpu.memory_space<vmem>>, vector<2x1xf32>,
    } else {
    }
    return
  }
  func.func @transform_0(%arg0: i32) -> (i32, i32, i32, i32) {
    %c0_i32 = arith.constant 0 : i32
    %c0_i32_0 = arith.constant 0 : i32
    %c0_i32_1 = arith.constant 0 : i32
    %c0_i32_2 = arith.constant 0 : i32
    %c0_i32_3 = arith.constant 0 : i32
    return %c0_i32, %c0_i32_0, %c0_i32_1, %c0_i32_2 : i32, i32, i32, i32
  }
  func.func @transform_1(%arg0: i32) -> (i32, i32) {
    %c0_i32 = arith.constant 0 : i32
    %c0_i32_0 = arith.constant 0 : i32
    %c0_i32_1 = arith.constant 0 : i32
    return %c0_i32, %c0_i32_0 : i32, i32
  }
  func.func @transform_2(%arg0: i32) -> (i32, i32) {
    %c0_i32 = arith.constant 0 : i32
    %c0_i32_0 = arith.constant 0 : i32
    %c0_i32_1 = arith.constant 0 : i32
    return %c0_i32, %c0_i32_0 : i32, i32
  }
  func.func @transform_3(%arg0: i32) -> (i32, i32) {
    %c0_i32 = arith.constant 0 : i32
    %c0_i32_0 = arith.constant 0 : i32
    %c0_i32_1 = arith.constant 0 : i32
    return %c0_i32, %c0_i32_0 : i32, i32
  }
  func.func @transform_4(%arg0: i32) -> (i32, i32) {
    %c0_i32 = arith.constant 0 : i32
    %c0_i32_0 = arith.constant 0 : i32
    %c0_i32_1 = arith.constant 0 : i32
    return %c0_i32, %c0_i32_0 : i32, i32
  }
  func.func @transform_5(%arg0: i32) -> (i32, i32, i32) {
    %c0_i32 = arith.constant 0 : i32
    %c0_i32_0 = arith.constant 0 : i32
    %c0_i32_1 = arith.constant 0 : i32
    return %c0_i32, %c0_i32_0, %arg0 : i32, i32, i32
  }
  func.func @transform_6(%arg0: i32) -> (i32, i32) {
    %c0_i32 = arith.constant 0 : i32
    %c0_i32_0 = arith.constant 0 : i32
    return %c0_i32, %arg0 : i32, i32
  }
  func.func @transform_7(%arg0: i32) -> (i32, i32) {
    %c0_i32 = arith.constant 0 : i32
    %c0_i32_0 = arith.constant 0 : i32
    return %arg0, %c0_i32 : i32, i32
  }
  func.func @transform_8(%arg0: i32) -> (i32, i32) {
    %c0_i32 = arith.constant 0 : i32
    %c0_i32_0 = arith.constant 0 : i32
    %c0_i32_1 = arith.constant 0 : i32
    return %c0_i32, %c0_i32_0 : i32, i32
  }
  func.func @transform_9(%arg0: i32) -> (i32, i32) {
    %c0_i32 = arith.constant 0 : i32
    %c0_i32_0 = arith.constant 0 : i32
    %c0_i32_1 = arith.constant 0 : i32
    return %c0_i32, %c0_i32_0 : i32, i32
  }
  func.func @transform_10(%arg0: i32) -> (i32, i32) {
    %c0_i32 = arith.constant 0 : i32
    %c0_i32_0 = arith.constant 0 : i32
    %c0_i32_1 = arith.constant 0 : i32
    return %c0_i32, %c0_i32_0 : i32, i32
  }
  func.func @transform_11(%arg0: i32) -> (i32, i32) {
    %c0_i32 = arith.constant 0 : i32
    %c0_i32_0 = arith.constant 0 : i32
    %c0_i32_1 = arith.constant 0 : i32
    return %c0_i32, %c0_i32_0 : i32, i32
  }
}

</mosaic_0001>

<llo_original>
// kernel: cnn22_forward.1
$region0: #{cnn22_forward.1}
  #allocation0 [shape = 'u32[]', space=smem, size = 0x4, offset = 0x4, fixed_abs, tag = 'smem constant byte address 0x4 - core index']
  #allocation1 [shape = 'u32[72,128]{1,0:T(1,128)}', space=vmem, size = 0x9000, scoped, tag = 'internal scratch']
  #allocation2 [shape = 'bf16[2,4,512]{2,1,0:T(4,128)(2,1)}', space=vmem, size = 0x2000, scoped, tag = 'scratch operand']
  #allocation3 [shape = 'f32[2,256]{1,0:T(2,128)}', space=vmem, size = 0x800, scoped, tag = 'scratch operand']
  #allocation4 [shape = 'f32[1,1]{1,0:T(1,128)S(1)}', space=vmem, size = 0x200, scoped, tag = 'scoped memory for cnn22_forward.1']
  %s0 = inlined_call_operand.vmem [shape: f32[2,4,4,4], index: 0, kind: input, shape index: {}]
  %s1 = inlined_call_operand.hbm [shape: f32[16,256], index: 1, kind: input, shape index: {}]
  %s2 = inlined_call_operand.hbm [shape: f32[1,256], index: 2, kind: input, shape index: {}]
  %s3 = inlined_call_operand.hbm [shape: bf16[1024,512], index: 3, kind: input, shape index: {}]
  %s4 = inlined_call_operand.hbm [shape: f32[1,512], index: 4, kind: input, shape index: {}]
  %s5 = inlined_call_operand.hbm [shape: bf16[4,512,1024], index: 5, kind: input, shape index: {}]
  %s6 = inlined_call_operand.hbm [shape: f32[1,1024], index: 6, kind: input, shape index: {}]
  %s7 = inlined_call_operand.hbm [shape: bf16[1024,256], index: 7, kind: input, shape index: {}]
  %s8 = inlined_call_operand.hbm [shape: f32[1,256], index: 8, kind: input, shape index: {}]
  %s9 = inlined_call_operand.vmem [shape: bf16[256,1], index: 9, kind: input, shape index: {}]
  %s10 = inlined_call_operand.<no memory space> [shape: f32[1,1], index: 10, kind: input, shape index: {}]
  %s11 = inlined_call_operand.vmem [shape: f32[2,1], index: 11, kind: output, shape index: {}]
  %s12 = sld [smem:[#allocation0]]
  $region117: #{cnn22_forward.1} parent=0
    _
  %s14 = ssub.s32 1, %s12
  %s15 = scalar_select 0, %s14, %s12
  %v16 = vstv %s10
  %17 = vst [vmem:[#allocation4] sm:$0x1] %v16
  $region1: #{cnn22_forward.1} parent=0
    #allocation5 [shape = 'u8[16384]{0}', space=vmem, size = 0x4000, scoped, tag = 'input window, operand 1, single buffered']
    #allocation6 [shape = 's32[2]{0}', space=sflag, size = 0x8, scoped, tag = 'scoped memory for cnn22_forward.1']
    #allocation7 [shape = 'u8[1024]{0}', space=vmem, size = 0x400, scoped, tag = 'input window, operand 2, single buffered']
    #allocation8 [shape = 's32[1]{0}', space=sflag, size = 0x4, scoped, tag = 'scoped memory for cnn22_forward.1']
    #allocation9 [shape = 'u8[1048576]{0}', space=vmem, size = 0x100000, scoped, tag = 'input window, operand 3, single buffered']
    #allocation10 [shape = 'u8[2048]{0}', space=vmem, size = 0x800, scoped, tag = 'input window, operand 4, single buffered']
    #allocation11 [shape = 's32[1]{0}', space=sflag, size = 0x4, scoped, tag = 'scoped memory for cnn22_forward.1']
    #allocation12 [shape = 'u8[4194304]{0}', space=vmem, size = 0x400000, scoped, tag = 'input window, operand 5']
    #allocation13 [shape = 'u8[4096]{0}', space=vmem, size = 0x1000, scoped, tag = 'input window, operand 6']
    #allocation14 [shape = 'u8[524288]{0}', space=vmem, size = 0x80000, scoped, tag = 'input window, operand 7']
    #allocation15 [shape = 'u8[1024]{0}', space=vmem, size = 0x400, scoped, tag = 'input window, operand 8, single buffered']
    %18 = vsyncpa [#allocation6], 0
    %19 = vsyncpa [#allocation8], 0
    %20 = vsyncpa [#allocation11], 0
    loop: start=0, step=1, limit=4
    $region2: #{cnn22_forward.1} parent=1 // loop_pre_header
      _
    $region3: #{cnn22_forward.1} parent=1 // loop_header
      %s22 = sphi 0, %s26
      %p23 = scmp.ge.s32.totalorder %s22, 4
      %s30 = sphi 0, %s30
      %s32 = sphi 0, %s30
      %s33 = sphi 0, %s32
      %s47 = sphi 0, %s33
      %s51 = sphi 0, %s51
      %s53 = sphi 0, %s51
      %s54 = sphi 0, %s53
      %s68 = sphi 0, %s54
      %s72 = sphi 0, %s72
      %s74 = sphi 0, %s72
      %s75 = sphi 0, %s74
      %s89 = sphi 0, %s75
      %s93 = sphi 0, %s93
      %s95 = sphi 0, %s93
      %s96 = sphi 0, %s95
      %s110 = sphi 0, %s96
      %s114 = sphi 0, %s114
      %s116 = sphi 0, %s114
      %s117 = sphi 0, %s116
      %s131 = sphi 0, %s117
      %s137 = sphi 0, %s139
      %s140 = sphi 0, %s137
      %s141 = sphi 0, %s140
      %s157 = sphi 0, %s141
      %s163 = sphi 0, %s165
      %s166 = sphi 0, %s163
      %s167 = sphi 0, %s166
      %s183 = sphi 0, %s167
      %s189 = sphi 0, %s191
      %s192 = sphi 0, %s189
      %s193 = sphi 0, %s192
      %s209 = sphi 0, %s193
      %s213 = sphi 0, %s213
      %s215 = sphi 0, %s213
      %s216 = sphi 0, %s215
      %s230 = sphi 0, %s216
      %s234 = sphi 0, %s234
      %s236 = sphi 0, %s234
      %s237 = sphi 0, %s236
      %s251 = sphi 0, %s237
      %s255 = sphi 0, %s255
      %s257 = sphi 0, %s255
      %s258 = sphi 0, %s257
      %s272 = sphi 0, %s258
      %s276 = sphi 0, %s276
      %s278 = sphi 0, %s276
      %s279 = sphi 0, %s278
      %s293 = sphi 0, %s279
    $region4: #{cnn22_forward.1} parent=1 // loop_header_branch
      %25 = sbr.rel (%p23) target = $region8
    $region5: #{cnn22_forward.1} parent=1 // loop_body
      %s27 = ssub.s32 %s22, 1
      %s28 = ssub.s32 %s22, 2
      %s29 = sadd.s32 %s22, 1
      %s31 = sadd.s32 %s30, 1
      %p34 = scmp.eq.s32.totalorder %s22, 1
      %p35 = scmp.ne.s32.totalorder %s30, %s32
      %p36 = scmp.eq.s32.totalorder %s22, 0
      %p37 = por %p35, %p36
      %p38 = scmp.ne.s32.totalorder %s30, %s32
      %p39 = scmp.eq.s32.totalorder %s27, 1
      %p40 = por %p38, %p39
      %p41 = scmp.ne.s32.totalorder %s32, %s33
      %p42 = scmp.eq.s32.totalorder %s27, 0
      %p43 = por %p41, %p42
      %p44 = scmp.ne.s32.totalorder %s32, %s33
      %p45 = scmp.eq.s32.totalorder %s28, 1
      %p46 = por %p44, %p45
      %p48 = scmp.ne.s32.totalorder %s33, %s47
      %p49 = scmp.eq.s32.totalorder %s28, 0
      %p50 = por %p48, %p49
      %s52 = sadd.s32 %s51, 1
      %p55 = scmp.eq.s32.totalorder %s22, 1
      %p56 = scmp.ne.s32.totalorder %s51, %s53
      %p57 = scmp.eq.s32.totalorder %s22, 0
      %p58 = por %p56, %p57
      %p59 = scmp.ne.s32.totalorder %s51, %s53
      %p60 = scmp.eq.s32.totalorder %s27, 1
      %p61 = por %p59, %p60
      %p62 = scmp.ne.s32.totalorder %s53, %s54
      %p63 = scmp.eq.s32.totalorder %s27, 0
      %p64 = por %p62, %p63
      %p65 = scmp.ne.s32.totalorder %s53, %s54
      %p66 = scmp.eq.s32.totalorder %s28, 1
      %p67 = por %p65, %p66
      %p69 = scmp.ne.s32.totalorder %s54, %s68
      %p70 = scmp.eq.s32.totalorder %s28, 0
      %p71 = por %p69, %p70
      %s73 = sadd.s32 %s72, 1
      %p76 = scmp.eq.s32.totalorder %s22, 1
      %p77 = scmp.ne.s32.totalorder %s72, %s74
      %p78 = scmp.eq.s32.totalorder %s22, 0
      %p79 = por %p77, %p78
      %p80 = scmp.ne.s32.totalorder %s72, %s74
      %p81 = scmp.eq.s32.totalorder %s27, 1
      %p82 = por %p80, %p81
      %p83 = scmp.ne.s32.totalorder %s74, %s75
      %p84 = scmp.eq.s32.totalorder %s27, 0
      %p85 = por %p83, %p84
      %p86 = scmp.ne.s32.totalorder %s74, %s75
      %p87 = scmp.eq.s32.totalorder %s28, 1
      %p88 = por %p86, %p87
      %p90 = scmp.ne.s32.totalorder %s75, %s89
      %p91 = scmp.eq.s32.totalorder %s28, 0
      %p92 = por %p90, %p91
      %s94 = sadd.s32 %s93, 1
      %p97 = scmp.eq.s32.totalorder %s22, 1
      %p98 = scmp.ne.s32.totalorder %s93, %s95
      %p99 = scmp.eq.s32.totalorder %s22, 0
      %p100 = por %p98, %p99
      %p101 = scmp.ne.s32.totalorder %s93, %s95
      %p102 = scmp.eq.s32.totalorder %s27, 1
      %p103 = por %p101, %p102
      %p104 = scmp.ne.s32.totalorder %s95, %s96
      %p105 = scmp.eq.s32.totalorder %s27, 0
      %p106 = por %p104, %p105
      %p107 = scmp.ne.s32.totalorder %s95, %s96
      %p108 = scmp.eq.s32.totalorder %s28, 1
      %p109 = por %p107, %p108
      %p111 = scmp.ne.s32.totalorder %s96, %s110
      %p112 = scmp.eq.s32.totalorder %s28, 0
      %p113 = por %p111, %p112
      %s115 = sadd.s32 %s114, 1
      %p118 = scmp.eq.s32.totalorder %s22, 1
      %p119 = scmp.ne.s32.totalorder %s114, %s116
      %p120 = scmp.eq.s32.totalorder %s22, 0
      %p121 = por %p119, %p120
      %p122 = scmp.ne.s32.totalorder %s114, %s116
      %p123 = scmp.eq.s32.totalorder %s27, 1
      %p124 = por %p122, %p123
      %p125 = scmp.ne.s32.totalorder %s116, %s117
      %p126 = scmp.eq.s32.totalorder %s27, 0
      %p127 = por %p125, %p126
      %p128 = scmp.ne.s32.totalorder %s116, %s117
      %p129 = scmp.eq.s32.totalorder %s28, 1
      %p130 = por %p128, %p129
      %p132 = scmp.ne.s32.totalorder %s117, %s131
      %p133 = scmp.eq.s32.totalorder %s28, 0
      %p134 = por %p132, %p133
      %s135 = ssub.s32 %s22, %s29
      %p136 = scmp.eq.s32.totalorder %s135, 0
      %s138 = sadd.s32 %s137, 1
      %s139 = scalar_select %p136, %s137, %s138
      %p142 = pneg %p136
      %p143 = scmp.eq.s32.totalorder %s22, 1
      %p144 = por %p142, %p143
      %p145 = scmp.ne.s32.totalorder %s137, %s140
      %p146 = scmp.eq.s32.totalorder %s22, 0
      %p147 = por %p145, %p146
      %p148 = scmp.ne.s32.totalorder %s137, %s140
      %p149 = scmp.eq.s32.totalorder %s27, 1
      %p150 = por %p148, %p149
      %p151 = scmp.ne.s32.totalorder %s140, %s141
      %p152 = scmp.eq.s32.totalorder %s27, 0
      %p153 = por %p151, %p152
      %p154 = scmp.ne.s32.totalorder %s140, %s141
      %p155 = scmp.eq.s32.totalorder %s28, 1
      %p156 = por %p154, %p155
      %p158 = scmp.ne.s32.totalorder %s141, %s157
      %p159 = scmp.eq.s32.totalorder %s28, 0
      %p160 = por %p158, %p159
      %s161 = ssub.s32 %s22, %s29
      %p162 = scmp.eq.s32.totalorder %s161, 0
      %s164 = sadd.s32 %s163, 1
      %s165 = scalar_select %p162, %s163, %s164
      %p168 = pneg %p162
      %p169 = scmp.eq.s32.totalorder %s22, 1
      %p170 = por %p168, %p169
      %p171 = scmp.ne.s32.totalorder %s163, %s166
      %p172 = scmp.eq.s32.totalorder %s22, 0
      %p173 = por %p171, %p172
      %p174 = scmp.ne.s32.totalorder %s163, %s166
      %p175 = scmp.eq.s32.totalorder %s27, 1
      %p176 = por %p174, %p175
      %p177 = scmp.ne.s32.totalorder %s166, %s167
      %p178 = scmp.eq.s32.totalorder %s27, 0
      %p179 = por %p177, %p178
      %p180 = scmp.ne.s32.totalorder %s166, %s167
      %p181 = scmp.eq.s32.totalorder %s28, 1
      %p182 = por %p180, %p181
      %p184 = scmp.ne.s32.totalorder %s167, %s183
      %p185 = scmp.eq.s32.totalorder %s28, 0
      %p186 = por %p184, %p185
      %s187 = ssub.s32 %s22, %s29
      %p188 = scmp.eq.s32.totalorder %s187, 0
      %s190 = sadd.s32 %s189, 1
      %s191 = scalar_select %p188, %s189, %s190
      %p194 = pneg %p188
      %p195 = scmp.eq.s32.totalorder %s22, 1
      %p196 = por %p194, %p195
      %p197 = scmp.ne.s32.totalorder %s189, %s192
      %p198 = scmp.eq.s32.totalorder %s22, 0
      %p199 = por %p197, %p198
      %p200 = scmp.ne.s32.totalorder %s189, %s192
      %p201 = scmp.eq.s32.totalorder %s27, 1
      %p202 = por %p200, %p201
      %p203 = scmp.ne.s32.totalorder %s192, %s193
      %p204 = scmp.eq.s32.totalorder %s27, 0
      %p205 = por %p203, %p204
      %p206 = scmp.ne.s32.totalorder %s192, %s193
      %p207 = scmp.eq.s32.totalorder %s28, 1
      %p208 = por %p206, %p207
      %p210 = scmp.ne.s32.totalorder %s193, %s209
      %p211 = scmp.eq.s32.totalorder %s28, 0
      %p212 = por %p210, %p211
      %s214 = sadd.s32 %s213, 1
      %p217 = scmp.eq.s32.totalorder %s22, 1
      %p218 = scmp.ne.s32.totalorder %s213, %s215
      %p219 = scmp.eq.s32.totalorder %s22, 0
      %p220 = por %p218, %p219
      %p221 = scmp.ne.s32.totalorder %s213, %s215
      %p222 = scmp.eq.s32.totalorder %s27, 1
      %p223 = por %p221, %p222
      %p224 = scmp.ne.s32.totalorder %s215, %s216
      %p225 = scmp.eq.s32.totalorder %s27, 0
      %p226 = por %p224, %p225
      %p227 = scmp.ne.s32.totalorder %s215, %s216
      %p228 = scmp.eq.s32.totalorder %s28, 1
      %p229 = por %p227, %p228
      %p231 = scmp.ne.s32.totalorder %s216, %s230
      %p232 = scmp.eq.s32.totalorder %s28, 0
      %p233 = por %p231, %p232
      %s235 = sadd.s32 %s234, 1
      %p238 = scmp.eq.s32.totalorder %s22, 1
      %p239 = scmp.ne.s32.totalorder %s234, %s236
      %p240 = scmp.eq.s32.totalorder %s22, 0
      %p241 = por %p239, %p240
      %p242 = scmp.ne.s32.totalorder %s234, %s236
      %p243 = scmp.eq.s32.totalorder %s27, 1
      %p244 = por %p242, %p243
      %p245 = scmp.ne.s32.totalorder %s236, %s237
      %p246 = scmp.eq.s32.totalorder %s27, 0
      %p247 = por %p245, %p246
      %p248 = scmp.ne.s32.totalorder %s236, %s237
      %p249 = scmp.eq.s32.totalorder %s28, 1
      %p250 = por %p248, %p249
      %p252 = scmp.ne.s32.totalorder %s237, %s251
      %p253 = scmp.eq.s32.totalorder %s28, 0
      %p254 = por %p252, %p253
      %s256 = sadd.s32 %s255, 1
      %p259 = scmp.eq.s32.totalorder %s22, 1
      %p260 = scmp.ne.s32.totalorder %s255, %s257
      %p261 = scmp.eq.s32.totalorder %s22, 0
      %p262 = por %p260, %p261
      %p263 = scmp.ne.s32.totalorder %s255, %s257
      %p264 = scmp.eq.s32.totalorder %s27, 1
      %p265 = por %p263, %p264
      %p266 = scmp.ne.s32.totalorder %s257, %s258
      %p267 = scmp.eq.s32.totalorder %s27, 0
      %p268 = por %p266, %p267
      %p269 = scmp.ne.s32.totalorder %s257, %s258
      %p270 = scmp.eq.s32.totalorder %s28, 1
      %p271 = por %p269, %p270
      %p273 = scmp.ne.s32.totalorder %s258, %s272
      %p274 = scmp.eq.s32.totalorder %s28, 0
      %p275 = por %p273, %p274
      %s277 = sadd.s32 %s276, 1
      %p280 = scmp.eq.s32.totalorder %s22, 1
      %p281 = scmp.ne.s32.totalorder %s276, %s278
      %p282 = scmp.eq.s32.totalorder %s22, 0
      %p283 = por %p281, %p282
      %p284 = scmp.ne.s32.totalorder %s276, %s278
      %p285 = scmp.eq.s32.totalorder %s27, 1
      %p286 = por %p284, %p285
      %p287 = scmp.ne.s32.totalorder %s278, %s279
      %p288 = scmp.eq.s32.totalorder %s27, 0
      %p289 = por %p287, %p288
      %p290 = scmp.ne.s32.totalorder %s278, %s279
      %p291 = scmp.eq.s32.totalorder %s28, 1
      %p292 = por %p290, %p291
      %p294 = scmp.ne.s32.totalorder %s279, %s293
      %p295 = scmp.eq.s32.totalorder %s28, 0
      %p296 = por %p294, %p295
      %p297 = scmp.le.s32.totalorder 1, %s22
      %p298 = scmp.lt.s32.totalorder %s22, 3
      %p299 = pnand %p297, %p298
      %p300 = pneg %p299
      // Predicated region
      $region9: #{cnn22_forward.1} parent=5 // pred_check
        _
      $region10: #{cnn22_forward.1} parent=5 // pred_check_branch
        %302 = sbr.rel (%p299) target = $region12
      $region11: #{cnn22_forward.1} parent=5 // pred_region
        %s303 = ssub.s32 %s22, 1
        // Predicated region
        $region13: #{cnn22_forward.1} parent=11 // pred_check
          %p304 = pneg %p43
        $region14: #{cnn22_forward.1} parent=11 // pred_check_branch
          %306 = sbr.rel (%p304) target = $region16
        $region15: #{cnn22_forward.1} parent=11 // pred_region
          _
        $region16: #{cnn22_forward.1} parent=11 // pred_fallthru
          _
        // Predicated region
        $region17: #{cnn22_forward.1} parent=11 // pred_check
          %p307 = pneg %p64
        $region18: #{cnn22_forward.1} parent=11 // pred_check_branch
          %309 = sbr.rel (%p307) target = $region20
        $region19: #{cnn22_forward.1} parent=11 // pred_region
          %311 = vsyncadd [#allocation6], 0
          %s312 = sshll.u32 %s1, 4
          %s313 = int_to_ptr.hbm [resolvable:$true] %s312
          %s314 = sshll.u32 [#allocation5], 4
          %s315 = int_to_ptr.vmem [resolvable:$true] %s314
          %320 = dma.hbm_to_vmem [thread:$0]  %s313, 512, %s315, [#allocation6], 256, 256, 16
        $region20: #{cnn22_forward.1} parent=11 // pred_fallthru
          _
        // Predicated region
        $region21: #{cnn22_forward.1} parent=11 // pred_check
          %p321 = pneg %p85
        $region22: #{cnn22_forward.1} parent=11 // pred_check_branch
          %323 = sbr.rel (%p321) target = $region24
        $region23: #{cnn22_forward.1} parent=11 // pred_region
          %325 = vsyncadd [#allocation8], 0
          %s327 = sshll.u32 %s2, 4
          %s328 = int_to_ptr.hbm [resolvable:$true] %s327
          %s329 = sshll.u32 [#allocation7], 4
          %s330 = int_to_ptr.vmem [resolvable:$true] %s329
          %332 = dma.hbm_to_vmem [thread:$0]  %s328, 32, %s330, [#allocation8]
        $region24: #{cnn22_forward.1} parent=11 // pred_fallthru
          _
        // Predicated region
        $region25: #{cnn22_forward.1} parent=11 // pred_check
          %p333 = pneg %p106
        $region26: #{cnn22_forward.1} parent=11 // pred_check_branch
          %335 = sbr.rel (%p333) target = $region28
        $region27: #{cnn22_forward.1} parent=11 // pred_region
          %337 = vsyncadd [#allocation8], 0
          %s338 = sshll.u32 %s3, 4
          %s339 = int_to_ptr.hbm [resolvable:$true] %s338
          %s340 = sshll.u32 [#allocation9], 4
          %s341 = int_to_ptr.vmem [resolvable:$true] %s340
          %346 = dma.hbm_to_vmem [thread:$0]  %s339, 32768, %s341, [#allocation8], 256, 256, 16
        $region28: #{cnn22_forward.1} parent=11 // pred_fallthru
          _
        // Predicated region
        $region29: #{cnn22_forward.1} parent=11 // pred_check
          %p347 = pneg %p127
        $region30: #{cnn22_forward.1} parent=11 // pred_check_branch
          %349 = sbr.rel (%p347) target = $region32
        $region31: #{cnn22_forward.1} parent=11 // pred_region
          %351 = vsyncadd [#allocation11], 0
          %s353 = sshll.u32 %s4, 4
          %s354 = int_to_ptr.hbm [resolvable:$true] %s353
          %s355 = sshll.u32 [#allocation10], 4
          %s356 = int_to_ptr.vmem [resolvable:$true] %s355
          %358 = dma.hbm_to_vmem [thread:$0]  %s354, 64, %s356, [#allocation11]
        $region32: #{cnn22_forward.1} parent=11 // pred_fallthru
          _
        // Predicated region
        $region33: #{cnn22_forward.1} parent=11 // pred_check
          %p359 = pneg %p226
        $region34: #{cnn22_forward.1} parent=11 // pred_check_branch
          %361 = sbr.rel (%p359) target = $region36
        $region35: #{cnn22_forward.1} parent=11 // pred_region
          %363 = vsyncadd [#allocation8], 0
          %s365 = sshll.u32 %s8, 4
          %s366 = int_to_ptr.hbm [resolvable:$true] %s365
          %s367 = sshll.u32 [#allocation15], 4
          %s368 = int_to_ptr.vmem [resolvable:$true] %s367
          %370 = dma.hbm_to_vmem [thread:$0]  %s366, 32, %s368, [#allocation8]
        $region36: #{cnn22_forward.1} parent=11 // pred_fallthru
          _
        // Predicated region
        $region37: #{cnn22_forward.1} parent=11 // pred_check
          %p371 = pneg %p247
        $region38: #{cnn22_forward.1} parent=11 // pred_check_branch
          %373 = sbr.rel (%p371) target = $region40
        $region39: #{cnn22_forward.1} parent=11 // pred_region
          _
        $region40: #{cnn22_forward.1} parent=11 // pred_fallthru
          _
        // Predicated region
        $region41: #{cnn22_forward.1} parent=11 // pred_check
          %p374 = pneg %p268
        $region42: #{cnn22_forward.1} parent=11 // pred_check_branch
          %376 = sbr.rel (%p374) target = $region44
        $region43: #{cnn22_forward.1} parent=11 // pred_region
          _
        $region44: #{cnn22_forward.1} parent=11 // pred_fallthru
          _
      $region12: #{cnn22_forward.1} parent=5 // pred_fallthru
        _
      %p377 = scmp.lt.s32.totalorder %s22, 2
      // Predicated region
      $region45: #{cnn22_forward.1} parent=5 // pred_check
        %p378 = pneg %p377
      $region46: #{cnn22_forward.1} parent=5 // pred_check_branch
        %380 = sbr.rel (%p378) target = $region48
      $region47: #{cnn22_forward.1} parent=5 // pred_region
        // Predicated region
        $region49: #{cnn22_forward.1} parent=47 // pred_check
          %p381 = pneg %p147
        $region50: #{cnn22_forward.1} parent=47 // pred_check_branch
          %383 = sbr.rel (%p381) target = $region52
        $region51: #{cnn22_forward.1} parent=47 // pred_region
          %s384 = sand.u32 %s22, 1
          %s385 = scalar_lea.sflag [#allocation6], %s384
          %s386 = sand.u32 %s137, 1
          %s387 = smul.addr %s386, 4096
          %s388 = scalar_lea.vmem [#allocation12], %s387
          %s389 = smul.u32 4, %s22
          %391 = vsyncadd %s385, 0
          %s392 = smul.addr %s389, 4
          %s393 = scalar_lea.hbm %s5, %s392
          %s394 = sshll.u32 %s393, 4
          %s395 = int_to_ptr.hbm [resolvable:$true] %s394
          %s396 = sshll.u32 %s388, 4
          %s397 = int_to_ptr.vmem [resolvable:$true] %s396
          %402 = dma.hbm_to_vmem [thread:$0]  %s395, 65536, %s397, %s385, 512, 256, 16
        $region52: #{cnn22_forward.1} parent=47 // pred_fallthru
          _
        // Predicated region
        $region53: #{cnn22_forward.1} parent=47 // pred_check
          %p403 = pneg %p173
        $region54: #{cnn22_forward.1} parent=47 // pred_check_branch
          %405 = sbr.rel (%p403) target = $region56
        $region55: #{cnn22_forward.1} parent=47 // pred_region
          %s406 = sand.u32 %s22, 1
          %s407 = scalar_lea.sflag [#allocation6], %s406
          %s408 = sand.u32 %s163, 1
          %s409 = smul.addr %s408, 4
          %s410 = scalar_lea.vmem [#allocation13], %s409
          %s411 = smul.u32 4, %s22
          %413 = vsyncadd %s407, 0
          %s414 = scalar_lea.hbm %s6, %s411
          %s416 = sshll.u32 %s414, 4
          %s417 = int_to_ptr.hbm [resolvable:$true] %s416
          %s418 = sshll.u32 %s410, 4
          %s419 = int_to_ptr.vmem [resolvable:$true] %s418
          %421 = dma.hbm_to_vmem [thread:$0]  %s417, 64, %s419, %s407
        $region56: #{cnn22_forward.1} parent=47 // pred_fallthru
          _
        // Predicated region
        $region57: #{cnn22_forward.1} parent=47 // pred_check
          %p422 = pneg %p199
        $region58: #{cnn22_forward.1} parent=47 // pred_check_branch
          %424 = sbr.rel (%p422) target = $region60
        $region59: #{cnn22_forward.1} parent=47 // pred_region
          %s425 = sand.u32 %s22, 1
          %s426 = scalar_lea.sflag [#allocation6], %s425
          %s427 = sand.u32 %s189, 1
          %s428 = smul.addr %s427, 512
          %s429 = scalar_lea.vmem [#allocation14], %s428
          %s430 = smul.u32 64, %s22
          %432 = vsyncadd %s426, 0
          %s433 = smul.addr %s430, 2
          %s434 = smul.addr %s433, 4
          %s435 = scalar_lea.hbm %s7, %s434
          %s436 = sshll.u32 %s435, 4
          %s437 = int_to_ptr.hbm [resolvable:$true] %s436
          %s438 = sshll.u32 %s429, 4
          %s439 = int_to_ptr.vmem [resolvable:$true] %s438
          %444 = dma.hbm_to_vmem [thread:$0]  %s437, 8192, %s439, %s426, 128, 128, 8
        $region60: #{cnn22_forward.1} parent=47 // pred_fallthru
          _
      $region48: #{cnn22_forward.1} parent=5 // pred_fallthru
        _
      %p445 = scmp.le.s32.totalorder 1, %s22
      %p446 = scmp.lt.s32.totalorder %s22, 3
      %p447 = pnand %p445, %p446
      %p448 = pneg %p447
      // Predicated region
      $region61: #{cnn22_forward.1} parent=5 // pred_check
        _
      $region62: #{cnn22_forward.1} parent=5 // pred_check_branch
        %450 = sbr.rel (%p447) target = $region64
      $region63: #{cnn22_forward.1} parent=5 // pred_region
        %s451 = ssub.s32 %s22, 1
        // Predicated region
        $region65: #{cnn22_forward.1} parent=63 // pred_check
          %p452 = pneg %p64
        $region66: #{cnn22_forward.1} parent=63 // pred_check_branch
          %454 = sbr.rel (%p452) target = $region68
        $region67: #{cnn22_forward.1} parent=63 // pred_region
          %456 = dma.done [#allocation6], 512
        $region68: #{cnn22_forward.1} parent=63 // pred_fallthru
          _
        // Predicated region
        $region69: #{cnn22_forward.1} parent=63 // pred_check
          %p457 = pneg %p85
        $region70: #{cnn22_forward.1} parent=63 // pred_check_branch
          %459 = sbr.rel (%p457) target = $region72
        $region71: #{cnn22_forward.1} parent=63 // pred_region
          %461 = dma.done [#allocation8], 32
        $region72: #{cnn22_forward.1} parent=63 // pred_fallthru
          _
        // Predicated region
        $region73: #{cnn22_forward.1} parent=63 // pred_check
          %p462 = pneg %p106
        $region74: #{cnn22_forward.1} parent=63 // pred_check_branch
          %464 = sbr.rel (%p462) target = $region76
        $region75: #{cnn22_forward.1} parent=63 // pred_region
          %466 = dma.done [#allocation8], 32768
        $region76: #{cnn22_forward.1} parent=63 // pred_fallthru
          _
        // Predicated region
        $region77: #{cnn22_forward.1} parent=63 // pred_check
          %p467 = pneg %p127
        $region78: #{cnn22_forward.1} parent=63 // pred_check_branch
          %469 = sbr.rel (%p467) target = $region80
        $region79: #{cnn22_forward.1} parent=63 // pred_region
          %471 = dma.done [#allocation11], 64
        $region80: #{cnn22_forward.1} parent=63 // pred_fallthru
          _
        %s472 = sand.u32 %s27, 1
        %s473 = scalar_lea.sflag [#allocation6], %s472
        %s474 = sand.u32 %s140, 1
        %s475 = smul.addr %s474, 4096
        %s476 = scalar_lea.vmem [#allocation12], %s475
        // Predicated region
        $region81: #{cnn22_forward.1} parent=63 // pred_check
          %p477 = pneg %p153
        $region82: #{cnn22_forward.1} parent=63 // pred_check_branch
          %479 = sbr.rel (%p477) target = $region84
        $region83: #{cnn22_forward.1} parent=63 // pred_region
          %481 = dma.done %s473, 65536
        $region84: #{cnn22_forward.1} parent=63 // pred_fallthru
          _
        %s482 = sand.u32 %s27, 1
        %s483 = scalar_lea.sflag [#allocation6], %s482
        %s484 = sand.u32 %s166, 1
        %s485 = smul.addr %s484, 4
        %s486 = scalar_lea.vmem [#allocation13], %s485
        // Predicated region
        $region85: #{cnn22_forward.1} parent=63 // pred_check
          %p487 = pneg %p179
        $region86: #{cnn22_forward.1} parent=63 // pred_check_branch
          %489 = sbr.rel (%p487) target = $region88
        $region87: #{cnn22_forward.1} parent=63 // pred_region
          %491 = dma.done %s483, 64
        $region88: #{cnn22_forward.1} parent=63 // pred_fallthru
          _
        %s492 = sand.u32 %s27, 1
        %s493 = scalar_lea.sflag [#allocation6], %s492
        %s494 = sand.u32 %s192, 1
        %s495 = smul.addr %s494, 512
        %s496 = scalar_lea.vmem [#allocation14], %s495
        // Predicated region
        $region89: #{cnn22_forward.1} parent=63 // pred_check
          %p497 = pneg %p205
        $region90: #{cnn22_forward.1} parent=63 // pred_check_branch
          %499 = sbr.rel (%p497) target = $region92
        $region91: #{cnn22_forward.1} parent=63 // pred_region
          %501 = dma.done %s493, 8192
        $region92: #{cnn22_forward.1} parent=63 // pred_fallthru
          _
        // Predicated region
        $region93: #{cnn22_forward.1} parent=63 // pred_check
          %p502 = pneg %p226
        $region94: #{cnn22_forward.1} parent=63 // pred_check_branch
          %504 = sbr.rel (%p502) target = $region96
        $region95: #{cnn22_forward.1} parent=63 // pred_region
          %506 = dma.done [#allocation8], 32
        $region96: #{cnn22_forward.1} parent=63 // pred_fallthru
          _
        %p507 = pneg %p43
        %p508 = pneg %p40
        %p509 = pneg %p64
        %p510 = pneg %p61
        %p511 = pneg %p85
        %p512 = pneg %p82
        %p513 = pneg %p106
        %p514 = pneg %p103
        %p515 = pneg %p127
        %p516 = pneg %p124
        %s517 = sand.u32 %s27, 1
        %s518 = scalar_lea.sflag [#allocation6], %s517
        %s519 = sand.u32 %s140, 1
        %s520 = smul.addr %s519, 4096
        %s521 = scalar_lea.vmem [#allocation12], %s520
        %p522 = pneg %p153
        %p523 = pneg %p150
        %s524 = sand.u32 %s27, 1
        %s525 = scalar_lea.sflag [#allocation6], %s524
        %s526 = sand.u32 %s166, 1
        %s527 = smul.addr %s526, 4
        %s528 = scalar_lea.vmem [#allocation13], %s527
        %p529 = pneg %p179
        %p530 = pneg %p176
        %s531 = sand.u32 %s27, 1
        %s532 = scalar_lea.sflag [#allocation6], %s531
        %s533 = sand.u32 %s192, 1
        %s534 = smul.addr %s533, 512
        %s535 = scalar_lea.vmem [#allocation14], %s534
        %p536 = pneg %p205
        %p537 = pneg %p202
        %p538 = pneg %p226
        %p539 = pneg %p223
        %p540 = pneg %p247
        %p541 = pneg %p244
        %p542 = pneg %p268
        %p543 = pneg %p265
        %p544 = pneg %p289
        %p545 = pneg %p286
        %s546 = smul.u32 4, %s27
        %s547 = smul.u32 4, %s27
        %s548 = smul.u32 64, %s27
        %p549 = scmp.eq.s32.totalorder %s27, 0
        // Predicated region
        $region97: #{cnn22_forward.1} parent=63 // pred_check
          %p550 = pneg %p549
        $region98: #{cnn22_forward.1} parent=63 // pred_check_branch
          %552 = sbr.rel (%p550) target = $region100
        $region99: #{cnn22_forward.1} parent=63 // pred_region
          %v553 = vld [vmem:[%s0] sm:$0xf]
          %v554 = vld [vmem:[%s0 + $0x4] sm:$0xf]
          %v555 = vld [vmem:[%s0 + $0x8] sm:$0xf]
          %v556 = vld [vmem:[%s0 + $0xc] sm:$0xf]
          %v557 = vld [vmem:[%s0 + $0x10] sm:$0xf]
          %v558 = vld [vmem:[%s0 + $0x14] sm:$0xf]
          %v559 = vld [vmem:[%s0 + $0x18] sm:$0xf]
          %v560 = vld [vmem:[%s0 + $0x1c] sm:$0xf]
          %v567 = vrot.slane %v553, 1
          %v568 = vrot.slane %v554, 1
          %v569 = vrot.slane %v555, 1
          %v570 = vrot.slane %v557, 1
          %v571 = vrot.slane %v558, 1
          %v572 = vrot.slane %v559, 1
          %573 = vrot.lane.b32.xlu0 %v567, 4
          %v574 = vpop.permute.xlu0 %573
          %575 = vrot.lane.b32.xlu0 %v568, 4
          %v576 = vpop.permute.xlu0 %575
          %577 = vrot.lane.b32.xlu0 %v569, 4
          %v578 = vpop.permute.xlu0 %577
          %579 = vrot.lane.b32.xlu0 %v570, 4
          %v580 = vpop.permute.xlu0 %579
          %581 = vrot.lane.b32.xlu0 %v571, 4
          %v582 = vpop.permute.xlu0 %581
          %583 = vrot.lane.b32.xlu0 %v572, 4
          %v584 = vpop.permute.xlu0 %583
          %593 = vrot.lane.b32.xlu0 %v554, 8
          %v594 = vpop.permute.xlu0 %593
          %595 = vrot.lane.b32.xlu0 %v555, 8
          %v596 = vpop.permute.xlu0 %595
          %597 = vrot.lane.b32.xlu0 %v556, 8
          %v598 = vpop.permute.xlu0 %597
          %599 = vrot.lane.b32.xlu0 %v558, 8
          %v600 = vpop.permute.xlu0 %599
          %601 = vrot.lane.b32.xlu0 %v559, 8
          %v602 = vpop.permute.xlu0 %601
          %603 = vrot.lane.b32.xlu0 %v560, 8
          %v604 = vpop.permute.xlu0 %603
          %v611 = vrot.slane %v556, 1
          %v612 = vrot.slane %v560, 1
          %613 = vrot.lane.b32.xlu0 %v568, 12
          %v614 = vpop.permute.xlu0 %613
          %615 = vrot.lane.b32.xlu0 %v569, 12
          %v616 = vpop.permute.xlu0 %615
          %617 = vrot.lane.b32.xlu0 %v611, 12
          %v618 = vpop.permute.xlu0 %617
          %619 = vrot.lane.b32.xlu0 %v571, 12
          %v620 = vpop.permute.xlu0 %619
          %621 = vrot.lane.b32.xlu0 %v572, 12
          %v622 = vpop.permute.xlu0 %621
          %623 = vrot.lane.b32.xlu0 %v612, 12
          %v624 = vpop.permute.xlu0 %623
          %vm631 = vcmask 31744
          %v632 = vsel %vm631, %v553, %v574
          %v633 = vsel %vm631, %v554, %v576
          %v634 = vsel %vm631, %v555, %v578
          %v635 = vsel %vm631, %v557, %v580
          %v636 = vsel %vm631, %v558, %v582
          %v637 = vsel %vm631, %v559, %v584
          %vm638 = vcmask 64512
          %v639 = vsel %vm638, %v632, %v594
          %v640 = vsel %vm638, %v633, %v596
          %v641 = vsel %vm638, %v634, %v598
          %v642 = vsel %vm638, %v635, %v600
          %v643 = vsel %vm638, %v636, %v602
          %v644 = vsel %vm638, %v637, %v604
          %vm645 = vcmask 97280
          %v646 = vsel %vm645, %v639, %v614
          %v647 = vsel %vm645, %v640, %v616
          %v648 = vsel %vm645, %v641, %v618
          %v649 = vsel %vm645, %v642, %v620
          %v650 = vsel %vm645, %v643, %v622
          %v651 = vsel %vm645, %v644, %v624
          %v658 = vrot.slane %v646, 1
          %v659 = vrot.slane %v646, 2
          %v660 = vrot.slane %v647, 1
          %v661 = vrot.slane %v647, 2
          %v662 = vrot.slane %v648, 1
          %v663 = vrot.slane %v648, 2
          %v664 = vrot.slane %v649, 1
          %v665 = vrot.slane %v649, 2
          %v666 = vrot.slane %v650, 1
          %v667 = vrot.slane %v650, 2
          %v668 = vrot.slane %v651, 1
          %v669 = vrot.slane %v651, 2
          %v670 = vld [vmem:[#allocation5] sm:$0xff]
          %v671 = vld [vmem:[#allocation5 + $0x8] sm:$0xff]
          %v672 = vld [vmem:[#allocation5 + $0x10] sm:$0xff]
          %v673 = vld [vmem:[#allocation5 + $0x18] sm:$0xff]
          %v674 = vld [vmem:[#allocation7] sm:$0x3]
          %v676 = vperm.slane %v674, 0
          %v677 = vperm.slane %v674, 1
          %680 = vst [vmem:[#allocation1] ss:$9 sm:$0xff] %v646
          %s681 = scalar_lea.vmem [#allocation1], 1
          %682 = vst [vmem:[%s681] ss:$9 sm:$0xff] %v658
          %s683 = scalar_lea.vmem [#allocation1], 2
          %684 = vst [vmem:[%s683] ss:$9 sm:$0xff] %v659
          %s685 = scalar_lea.vmem [#allocation1], 3
          %686 = vst [vmem:[%s685] ss:$9 sm:$0xff] %v647
          %s687 = scalar_lea.vmem [#allocation1], 4
          %688 = vst [vmem:[%s687] ss:$9 sm:$0xff] %v660
          %s689 = scalar_lea.vmem [#allocation1], 5
          %690 = vst [vmem:[%s689] ss:$9 sm:$0xff] %v661
          %s691 = scalar_lea.vmem [#allocation1], 6
          %692 = vst [vmem:[%s691] ss:$9 sm:$0xff] %v648
          %s693 = scalar_lea.vmem [#allocation1], 7
          %694 = vst [vmem:[%s693] ss:$9 sm:$0xff] %v662
          %v695 = vld [vmem:[#allocation1] sm:$0xff]
          %696 = vst [vmem:[#allocation1] ss:$9 sm:$0xff] %v663
          %697 = vst [vmem:[%s681] ss:$9 sm:$0xff] %v649
          %698 = vst [vmem:[%s683] ss:$9 sm:$0xff] %v664
          %699 = vst [vmem:[%s685] ss:$9 sm:$0xff] %v665
          %700 = vst [vmem:[%s687] ss:$9 sm:$0xff] %v650
          %701 = vst [vmem:[%s689] ss:$9 sm:$0xff] %v666
          %702 = vst [vmem:[%s691] ss:$9 sm:$0xff] %v667
          %703 = vst [vmem:[%s693] ss:$9 sm:$0xff] %v651
          %v704 = vld [vmem:[#allocation1] sm:$0xff]
          %705 = vst [vmem:[#allocation1] ss:$9 sm:$0xff] %v668
          %706 = vst [vmem:[%s681] ss:$9 sm:$0xff] %v669
          %v707 = vld [vmem:[#allocation1] sm:$0xff]
          %vm708 = vcmask 130048
          %v709 = vsel %vm708, %v695, 0
          %v711 = vsel %vm708, %v704, 0
          %v713 = vsel %vm708, %v707, 0
          %715 = vmatpush.msra.mxu0 0.0
          %716 = vmatpush.msra.mxu0 0.0
          %717 = vmatpush.msra.mxu0 0.0
          %718 = vmatpush.msra.mxu0 0.0
          %719 = vmatpush.msra.mxu0 0.0
          %720 = vmatpush.msra.mxu0 0.0
          %721 = vmatpush.msra.mxu0 0.0
          %722 = vmatpush.msra.mxu0 0.0
          %723 = vmatpush.msra.mxu0 0.0
          %724 = vmatpush.msra.mxu0 0.0
          %725 = vmatpush.msra.mxu0 0.0
          %726 = vmatpush.msra.mxu0 0.0
          %727 = vmatpush.msra.mxu0 0.0
          %728 = vmatpush.msra.mxu0 0.0
          %729 = vmatpush.msra.mxu0 %v672
          %730 = vmatpush.msra.mxu0 %v670
          %731 = vmatmul.f32.gmra.mxu0 %v709
          %v732 = vpop.f32.mrf.mxu0
          %v733 = vadd.f32 %v676, %v732
          %734 = vmatmul.f32.gmra.mxu0 %v711
          %v735 = vpop.f32.mrf.mxu0
          %v736 = vadd.f32 %v676, %v735
          %737 = vmatmul.f32.gmra.mxu0 %v713
          %v738 = vpop.f32.mrf.mxu0
          %v739 = vadd.f32 %v676, %v738
          %740 = vdwg.mxu0
          %741 = vmatpush.msra.mxu0 0.0
          %742 = vmatpush.msra.mxu0 0.0
          %743 = vmatpush.msra.mxu0 0.0
          %744 = vmatpush.msra.mxu0 0.0
          %745 = vmatpush.msra.mxu0 0.0
          %746 = vmatpush.msra.mxu0 0.0
          %747 = vmatpush.msra.mxu0 0.0
          %748 = vmatpush.msra.mxu0 0.0
          %749 = vmatpush.msra.mxu0 0.0
          %750 = vmatpush.msra.mxu0 0.0
          %751 = vmatpush.msra.mxu0 0.0
          %752 = vmatpush.msra.mxu0 0.0
          %753 = vmatpush.msra.mxu0 0.0
          %754 = vmatpush.msra.mxu0 0.0
          %755 = vmatpush.msra.mxu0 %v673
          %756 = vmatpush.msra.mxu0 %v671
          %757 = vmatmul.f32.gmra.mxu0 %v709
          %v758 = vpop.f32.mrf.mxu0
          %v759 = vadd.f32 %v677, %v758
          %760 = vmatmul.f32.gmra.mxu0 %v711
          %v761 = vpop.f32.mrf.mxu0
          %v762 = vadd.f32 %v677, %v761
          %763 = vmatmul.f32.gmra.mxu0 %v713
          %v764 = vpop.f32.mrf.mxu0
          %v765 = vadd.f32 %v677, %v764
          %766 = vdwg.mxu0
          %v767 = vmax.f32 %v733, 0.0
          %v768 = vmax.f32 %v759, 0.0
          %v769 = vmax.f32 %v736, 0.0
          %v770 = vmax.f32 %v762, 0.0
          %v771 = vmax.f32 %v739, 0.0
          %v772 = vmax.f32 %v765, 0.0
          %v779 = vrot.slane %v768, 7
          %v780 = vrot.slane %v770, 7
          %v781 = vrot.slane %v772, 7
          %vm782 = vcmask 1040384
          %v783 = vsel %vm782, %v767, %v779
          %vm784 = vcmask 1041409
          %v785 = vsel %vm784, %v767, %v779
          %v786 = vrot.slane %v785, 1
          %vm787 = vcmask 1042434
          %v788 = vsel %vm787, %v767, %v779
          %v789 = vrot.slane %v788, 2
          %vm790 = vcmask 1043459
          %v791 = vsel %vm790, %v767, %v779
          %v792 = vrot.slane %v791, 3
          %vm793 = vcmask 1044484
          %v794 = vsel %vm793, %v767, %v779
          %v795 = vrot.slane %v794, 4
          %vm796 = vcmask 1045509
          %v797 = vsel %vm796, %v767, %v779
          %v798 = vrot.slane %v797, 5
          %vm799 = vcmask 1046534
          %v800 = vsel %vm799, %v767, %v779
          %v801 = vrot.slane %v800, 6
          %vm802 = vcmask 1046528
          %v803 = vsel %vm802, %v779, %v767
          %v804 = vrot.slane %v803, 7
          %v805 = vsel %vm782, %v769, %v780
          %v806 = vsel %vm784, %v769, %v780
          %v807 = vrot.slane %v806, 1
          %v808 = vsel %vm787, %v769, %v780
          %v809 = vrot.slane %v808, 2
          %v810 = vsel %vm790, %v769, %v780
          %v811 = vrot.slane %v810, 3
          %v812 = vsel %vm793, %v769, %v780
          %v813 = vrot.slane %v812, 4
          %v814 = vsel %vm796, %v769, %v780
          %v815 = vrot.slane %v814, 5
          %v816 = vsel %vm799, %v769, %v780
          %v817 = vrot.slane %v816, 6
          %v818 = vsel %vm802, %v780, %v769
          %v819 = vrot.slane %v818, 7
          %v820 = vsel %vm782, %v771, %v781
          %v821 = vsel %vm784, %v771, %v781
          %v822 = vrot.slane %v821, 1
          %823 = vst [vmem:[#allocation1] ss:$9 sm:$0xff] %v783
          %s824 = scalar_lea.vmem [#allocation1], 1
          %825 = vst [vmem:[%s824] ss:$9 sm:$0xff] %v786
          %v826 = vld [vmem:[#allocation1] sm:$0xff]
          %v827 = vld [vmem:[#allocation1 + $0x9] sm:$0xff]
          %828 = vst [vmem:[#allocation1] ss:$9 sm:$0xff] %v792
          %829 = vst [vmem:[%s824] ss:$9 sm:$0xff] %v795
          %v830 = vld [vmem:[#allocation1] sm:$0xff]
          %v831 = vld [vmem:[#allocation1 + $0x9] sm:$0xff]
          %832 = vst [vmem:[#allocation1] ss:$9 sm:$0xff] %v807
          %833 = vst [vmem:[%s824] ss:$9 sm:$0xff] %v809
          %v834 = vld [vmem:[#allocation1] sm:$0xff]
          %v835 = vld [vmem:[#allocation1 + $0x9] sm:$0xff]
          %836 = vst [vmem:[#allocation1] ss:$9 sm:$0xff] %v813
          %837 = vst [vmem:[%s824] ss:$9 sm:$0xff] %v815
          %v838 = vld [vmem:[#allocation1] sm:$0xff]
          %v839 = vld [vmem:[#allocation1 + $0x9] sm:$0xff]
          %840 = vst [vmem:[#allocation1] ss:$9 sm:$0xff] %v786
          %s841 = scalar_lea.vmem [#allocation1], 1
          %842 = vst [vmem:[%s841] ss:$9 sm:$0xff] %v789
          %v843 = vld [vmem:[#allocation1] sm:$0xff]
          %v844 = vld [vmem:[#allocation1 + $0x9] sm:$0xff]
          %845 = vst [vmem:[#allocation1] ss:$9 sm:$0xff] %v795
          %846 = vst [vmem:[%s841] ss:$9 sm:$0xff] %v798
          %v847 = vld [vmem:[#allocation1] sm:$0xff]
          %v848 = vld [vmem:[#allocation1 + $0x9] sm:$0xff]
          %849 = vst [vmem:[#allocation1] ss:$9 sm:$0xff] %v809
          %850 = vst [vmem:[%s841] ss:$9 sm:$0xff] %v811
          %v851 = vld [vmem:[#allocation1] sm:$0xff]
          %v852 = vld [vmem:[#allocation1 + $0x9] sm:$0xff]
          %853 = vst [vmem:[#allocation1] ss:$9 sm:$0xff] %v815
          %854 = vst [vmem:[%s841] ss:$9 sm:$0xff] %v817
          %v855 = vld [vmem:[#allocation1] sm:$0xff]
          %v856 = vld [vmem:[#allocation1 + $0x9] sm:$0xff]
          %857 = vst [vmem:[#allocation1] ss:$9 sm:$0xff] %v792
          %s858 = scalar_lea.vmem [#allocation1], 1
          %859 = vst [vmem:[%s858] ss:$9 sm:$0xff] %v795
          %v860 = vld [vmem:[#allocation1] sm:$0xff]
          %v861 = vld [vmem:[#allocation1 + $0x9] sm:$0xff]
          %862 = vst [vmem:[#allocation1] ss:$9 sm:$0xff] %v801
          %863 = vst [vmem:[%s858] ss:$9 sm:$0xff] %v804
          %v864 = vld [vmem:[#allocation1] sm:$0xff]
          %v865 = vld [vmem:[#allocation1 + $0x9] sm:$0xff]
          %866 = vst [vmem:[#allocation1] ss:$9 sm:$0xff] %v813
          %867 = vst [vmem:[%s858] ss:$9 sm:$0xff] %v815
          %v868 = vld [vmem:[#allocation1] sm:$0xff]
          %v869 = vld [vmem:[#allocation1 + $0x9] sm:$0xff]
          %870 = vst [vmem:[#allocation1] ss:$9 sm:$0xff] %v819
          %871 = vst [vmem:[%s858] ss:$9 sm:$0xff] %v820
          %v872 = vld [vmem:[#allocation1] sm:$0xff]
          %v873 = vld [vmem:[#allocation1 + $0x9] sm:$0xff]
          %874 = vst [vmem:[#allocation1] ss:$9 sm:$0xff] %v795
          %s875 = scalar_lea.vmem [#allocation1], 1
          %876 = vst [vmem:[%s875] ss:$9 sm:$0xff] %v798
          %v877 = vld [vmem:[#allocation1] sm:$0xff]
          %v878 = vld [vmem:[#allocation1 + $0x9] sm:$0xff]
          %879 = vst [vmem:[#allocation1] ss:$9 sm:$0xff] %v804
          %880 = vst [vmem:[%s875] ss:$9 sm:$0xff] %v805
          %v881 = vld [vmem:[#allocation1] sm:$0xff]
          %v882 = vld [vmem:[#allocation1 + $0x9] sm:$0xff]
          %883 = vst [vmem:[#allocation1] ss:$9 sm:$0xff] %v815
          %884 = vst [vmem:[%s875] ss:$9 sm:$0xff] %v817
          %v885 = vld [vmem:[#allocation1] sm:$0xff]
          %v886 = vld [vmem:[#allocation1 + $0x9] sm:$0xff]
          %887 = vst [vmem:[#allocation1] ss:$9 sm:$0xff] %v820
          %888 = vst [vmem:[%s875] ss:$9 sm:$0xff] %v822
          %v889 = vld [vmem:[#allocation1] sm:$0xff]
          %v890 = vld [vmem:[#allocation1 + $0x9] sm:$0xff]
          %v891 = vrot.slane %v827, 6
          %v892 = vrot.slane %v843, 4
          %v893 = vrot.slane %v844, 2
          %v894 = vrot.slane %v861, 6
          %v895 = vrot.slane %v877, 4
          %v896 = vrot.slane %v878, 2
          %v897 = vrot.slane %v831, 6
          %v898 = vrot.slane %v847, 4
          %v899 = vrot.slane %v848, 2
          %v900 = vrot.slane %v865, 6
          %v901 = vrot.slane %v881, 4
          %v902 = vrot.slane %v882, 2
          %v903 = vrot.slane %v835, 6
          %v904 = vrot.slane %v851, 4
          %v905 = vrot.slane %v852, 2
          %v906 = vrot.slane %v869, 6
          %v907 = vrot.slane %v885, 4
          %v908 = vrot.slane %v886, 2
          %v909 = vrot.slane %v839, 6
          %v910 = vrot.slane %v855, 4
          %v911 = vrot.slane %v856, 2
          %v912 = vrot.slane %v873, 6
          %v913 = vrot.slane %v889, 4
          %v914 = vrot.slane %v890, 2
          %vm915 = vcmask 1041408
          %v916 = vsel %vm915, %v826, %v891
          %vm917 = vcmask 1045508
          %v918 = vsel %vm917, %v892, %v893
          %vm919 = vcmask 1043456
          %v920 = vsel %vm919, %v916, %v918
          %v921 = vsel %vm915, %v860, %v894
          %v922 = vsel %vm917, %v895, %v896
          %v923 = vsel %vm919, %v921, %v922
          %v924 = vsel %vm915, %v830, %v897
          %v925 = vsel %vm917, %v898, %v899
          %v926 = vsel %vm919, %v924, %v925
          %v927 = vsel %vm915, %v864, %v900
          %v928 = vsel %vm917, %v901, %v902
          %v929 = vsel %vm919, %v927, %v928
          %v930 = vsel %vm915, %v834, %v903
          %v931 = vsel %vm917, %v904, %v905
          %v932 = vsel %vm919, %v930, %v931
          %v933 = vsel %vm915, %v868, %v906
          %v934 = vsel %vm917, %v907, %v908
          %v935 = vsel %vm919, %v933, %v934
          %v936 = vsel %vm915, %v838, %v909
          %v937 = vsel %vm917, %v910, %v911
          %v938 = vsel %vm919, %v936, %v937
          %v939 = vsel %vm915, %v872, %v912
          %v940 = vsel %vm917, %v913, %v914
          %v941 = vsel %vm919, %v939, %v940
          %942 = vst [vmem:[#allocation1] ss:$4 sm:$0xff] %v920
          %s943 = scalar_lea.vmem [#allocation1], 1
          %944 = vst [vmem:[%s943] ss:$4 sm:$0xff] %v926
          %s945 = scalar_lea.vmem [#allocation1], 2
          %946 = vst [vmem:[%s945] ss:$4 sm:$0xff] %v932
          %s947 = scalar_lea.vmem [#allocation1], 3
          %948 = vst [vmem:[%s947] ss:$4 sm:$0xff] %v938
          %s949 = scalar_lea.vmem [#allocation1], 32
          %950 = vst [vmem:[%s949] ss:$4 sm:$0xff] %v923
          %s951 = scalar_lea.vmem [#allocation1], 33
          %952 = vst [vmem:[%s951] ss:$4 sm:$0xff] %v929
          %s953 = scalar_lea.vmem [#allocation1], 34
          %954 = vst [vmem:[%s953] ss:$4 sm:$0xff] %v935
          %s955 = scalar_lea.vmem [#allocation1], 35
          %956 = vst [vmem:[%s955] ss:$4 sm:$0xff] %v941
          %v957 = vld.sshfl [vmem:[#allocation1] sm:$0xff pattern:$0x73625140]
          %v958 = vld.sshfl [vmem:[#allocation1 + $0x8] sm:$0xff pattern:$0x73625140]
          %v959 = vld.sshfl [vmem:[#allocation1 + $0x10] sm:$0xff pattern:$0x73625140]
          %v960 = vld.sshfl [vmem:[#allocation1 + $0x18] sm:$0xff pattern:$0x73625140]
          %v961 = vld.sshfl [vmem:[#allocation1 + $0x20] sm:$0xff pattern:$0x73625140]
          %v962 = vld.sshfl [vmem:[#allocation1 + $0x28] sm:$0xff pattern:$0x73625140]
          %v963 = vld.sshfl [vmem:[#allocation1 + $0x30] sm:$0xff pattern:$0x73625140]
          %v964 = vld.sshfl [vmem:[#allocation1 + $0x38] sm:$0xff pattern:$0x73625140]
          %v973 = vpack.c.bf16 %v957, %v957
          %v974 = vpack.c.bf16 %v958, %v958
          %v975 = vpack.c.bf16 %v959, %v959
          %v976 = vpack.c.bf16 %v960, %v960
          %v977 = vpack.c.bf16 %v961, %v961
          %v978 = vpack.c.bf16 %v962, %v962
          %v979 = vpack.c.bf16 %v963, %v963
          %v980 = vpack.c.bf16 %v964, %v964
          %v981 = vld [vmem:[#allocation9] sm:$0xff]
          %v982 = vld [vmem:[#allocation9 + $0x8] sm:$0xff]
          %v983 = vld [vmem:[#allocation9 + $0x10] sm:$0xff]
          %v984 = vld [vmem:[#allocation9 + $0x18] sm:$0xff]
          %v985 = vld [vmem:[#allocation9 + $0x20] sm:$0xff]
          %v986 = vld [vmem:[#allocation9 + $0x28] sm:$0xff]
          %v987 = vld [vmem:[#allocation9 + $0x30] sm:$0xff]
          %v988 = vld [vmem:[#allocation9 + $0x38] sm:$0xff]
          %v989 = vld [vmem:[#allocation9 + $0x40] sm:$0xff]
          %v990 = vld [vmem:[#allocation9 + $0x48] sm:$0xff]
          %v991 = vld [vmem:[#allocation9 + $0x50] sm:$0xff]
          %v992 = vld [vmem:[#allocation9 + $0x58] sm:$0xff]
          %v993 = vld [vmem:[#allocation9 + $0x60] sm:$0xff]
          %v994 = vld [vmem:[#allocation9 + $0x68] sm:$0xff]
          %v995 = vld [vmem:[#allocation9 + $0x70] sm:$0xff]
          %v996 = vld [vmem:[#allocation9 + $0x78] sm:$0xff]
          %v997 = vld [vmem:[#allocation9 + $0x80] sm:$0xff]
          %v998 = vld [vmem:[#allocation9 + $0x88] sm:$0xff]
          %v999 = vld [vmem:[#allocation9 + $0x90] sm:$0xff]
          %v1000 = vld [vmem:[#allocation9 + $0x98] sm:$0xff]
          %v1001 = vld [vmem:[#allocation9 + $0xa0] sm:$0xff]
          %v1002 = vld [vmem:[#allocation9 + $0xa8] sm:$0xff]
          %v1003 = vld [vmem:[#allocation9 + $0xb0] sm:$0xff]
          %v1004 = vld [vmem:[#allocation9 + $0xb8] sm:$0xff]
          %v1005 = vld [vmem:[#allocation9 + $0xc0] sm:$0xff]
          %v1006 = vld [vmem:[#allocation9 + $0xc8] sm:$0xff]
          %v1007 = vld [vmem:[#allocation9 + $0xd0] sm:$0xff]
          %v1008 = vld [vmem:[#allocation9 + $0xd8] sm:$0xff]
          %v1009 = vld [vmem:[#allocation9 + $0xe0] sm:$0xff]
          %v1010 = vld [vmem:[#allocation9 + $0xe8] sm:$0xff]
          %v1011 = vld [vmem:[#allocation9 + $0xf0] sm:$0xff]
          %v1012 = vld [vmem:[#allocation9 + $0xf8] sm:$0xff]
          %v1013 = vld [vmem:[#allocation9 + $0x100] sm:$0xff]
          %v1014 = vld [vmem:[#allocation9 + $0x108] sm:$0xff]
          %v1015 = vld [vmem:[#allocation9 + $0x110] sm:$0xff]
          %v1016 = vld [vmem:[#allocation9 + $0x118] sm:$0xff]
          %v1017 = vld [vmem:[#allocation9 + $0x120] sm:$0xff]
          %v1018 = vld [vmem:[#allocation9 + $0x128] sm:$0xff]
          %v1019 = vld [vmem:[#allocation9 + $0x130] sm:$0xff]
          %v1020 = vld [vmem:[#allocation9 + $0x138] sm:$0xff]
          %v1021 = vld [vmem:[#allocation9 + $0x140] sm:$0xff]
          %v1022 = vld [vmem:[#allocation9 + $0x148] sm:$0xff]
          %v1023 = vld [vmem:[#allocation9 + $0x150] sm:$0xff]
          %v1024 = vld [vmem:[#allocation9 + $0x158] sm:$0xff]
          %v1025 = vld [vmem:[#allocation9 + $0x160] sm:$0xff]
          %v1026 = vld [vmem:[#allocation9 + $0x168] sm:$0xff]
          %v1027 = vld [vmem:[#allocation9 + $0x170] sm:$0xff]
          %v1028 = vld [vmem:[#allocation9 + $0x178] sm:$0xff]
          %v1029 = vld [vmem:[#allocation9 + $0x180] sm:$0xff]
          %v1030 = vld [vmem:[#allocation9 + $0x188] sm:$0xff]
          %v1031 = vld [vmem:[#allocation9 + $0x190] sm:$0xff]
          %v1032 = vld [vmem:[#allocation9 + $0x198] sm:$0xff]
          %v1033 = vld [vmem:[#allocation9 + $0x1a0] sm:$0xff]
          %v1034 = vld [vmem:[#allocation9 + $0x1a8] sm:$0xff]
          %v1035 = vld [vmem:[#allocation9 + $0x1b0] sm:$0xff]
          %v1036 = vld [vmem:[#allocation9 + $0x1b8] sm:$0xff]
          %v1037 = vld [vmem:[#allocation9 + $0x1c0] sm:$0xff]
          %v1038 = vld [vmem:[#allocation9 + $0x1c8] sm:$0xff]
          %v1039 = vld [vmem:[#allocation9 + $0x1d0] sm:$0xff]
          %v1040 = vld [vmem:[#allocation9 + $0x1d8] sm:$0xff]
          %v1041 = vld [vmem:[#allocation9 + $0x1e0] sm:$0xff]
          %v1042 = vld [vmem:[#allocation9 + $0x1e8] sm:$0xff]
          %v1043 = vld [vmem:[#allocation9 + $0x1f0] sm:$0xff]
          %v1044 = vld [vmem:[#allocation9 + $0x1f8] sm:$0xff]
          %v1045 = vld [vmem:[#allocation9 + $0x200] sm:$0xff]
          %v1046 = vld [vmem:[#allocation9 + $0x208] sm:$0xff]
          %v1047 = vld [vmem:[#allocation9 + $0x210] sm:$0xff]
          %v1048 = vld [vmem:[#allocation9 + $0x218] sm:$0xff]
          %v1049 = vld [vmem:[#allocation9 + $0x220] sm:$0xff]
          %v1050 = vld [vmem:[#allocation9 + $0x228] sm:$0xff]
          %v1051 = vld [vmem:[#allocation9 + $0x230] sm:$0xff]
          %v1052 = vld [vmem:[#allocation9 + $0x238] sm:$0xff]
          %v1053 = vld [vmem:[#allocation9 + $0x240] sm:$0xff]
          %v1054 = vld [vmem:[#allocation9 + $0x248] sm:$0xff]
          %v1055 = vld [vmem:[#allocation9 + $0x250] sm:$0xff]
          %v1056 = vld [vmem:[#allocation9 + $0x258] sm:$0xff]
          %v1057 = vld [vmem:[#allocation9 + $0x260] sm:$0xff]
          %v1058 = vld [vmem:[#allocation9 + $0x268] sm:$0xff]
          %v1059 = vld [vmem:[#allocation9 + $0x270] sm:$0xff]
          %v1060 = vld [vmem:[#allocation9 + $0x278] sm:$0xff]
          %v1061 = vld [vmem:[#allocation9 + $0x280] sm:$0xff]
          %v1062 = vld [vmem:[#allocation9 + $0x288] sm:$0xff]
          %v1063 = vld [vmem:[#allocation9 + $0x290] sm:$0xff]
          %v1064 = vld [vmem:[#allocation9 + $0x298] sm:$0xff]
          %v1065 = vld [vmem:[#allocation9 + $0x2a0] sm:$0xff]
          %v1066 = vld [vmem:[#allocation9 + $0x2a8] sm:$0xff]
          %v1067 = vld [vmem:[#allocation9 + $0x2b0] sm:$0xff]
          %v1068 = vld [vmem:[#allocation9 + $0x2b8] sm:$0xff]
          %v1069 = vld [vmem:[#allocation9 + $0x2c0] sm:$0xff]
          %v1070 = vld [vmem:[#allocation9 + $0x2c8] sm:$0xff]
          %v1071 = vld [vmem:[#allocation9 + $0x2d0] sm:$0xff]
          %v1072 = vld [vmem:[#allocation9 + $0x2d8] sm:$0xff]
          %v1073 = vld [vmem:[#allocation9 + $0x2e0] sm:$0xff]
          %v1074 = vld [vmem:[#allocation9 + $0x2e8] sm:$0xff]
          %v1075 = vld [vmem:[#allocation9 + $0x2f0] sm:$0xff]
          %v1076 = vld [vmem:[#allocation9 + $0x2f8] sm:$0xff]
          %v1077 = vld [vmem:[#allocation9 + $0x300] sm:$0xff]
          %v1078 = vld [vmem:[#allocation9 + $0x308] sm:$0xff]
          %v1079 = vld [vmem:[#allocation9 + $0x310] sm:$0xff]
          %v1080 = vld [vmem:[#allocation9 + $0x318] sm:$0xff]
          %v1081 = vld [vmem:[#allocation9 + $0x320] sm:$0xff]
          %v1082 = vld [vmem:[#allocation9 + $0x328] sm:$0xff]
          %v1083 = vld [vmem:[#allocation9 + $0x330] sm:$0xff]
          %v1084 = vld [vmem:[#allocation9 + $0x338] sm:$0xff]
          %v1085 = vld [vmem:[#allocation9 + $0x340] sm:$0xff]
          %v1086 = vld [vmem:[#allocation9 + $0x348] sm:$0xff]
          %v1087 = vld [vmem:[#allocation9 + $0x350] sm:$0xff]
          %v1088 = vld [vmem:[#allocation9 + $0x358] sm:$0xff]
          %v1089 = vld [vmem:[#allocation9 + $0x360] sm:$0xff]
          %v1090 = vld [vmem:[#allocation9 + $0x368] sm:$0xff]
          %v1091 = vld [vmem:[#allocation9 + $0x370] sm:$0xff]
          %v1092 = vld [vmem:[#allocation9 + $0x378] sm:$0xff]
          %v1093 = vld [vmem:[#allocation9 + $0x380] sm:$0xff]
          %v1094 = vld [vmem:[#allocation9 + $0x388] sm:$0xff]
          %v1095 = vld [vmem:[#allocation9 + $0x390] sm:$0xff]
          %v1096 = vld [vmem:[#allocation9 + $0x398] sm:$0xff]
          %v1097 = vld [vmem:[#allocation9 + $0x3a0] sm:$0xff]
          %v1098 = vld [vmem:[#allocation9 + $0x3a8] sm:$0xff]
          %v1099 = vld [vmem:[#allocation9 + $0x3b0] sm:$0xff]
          %v1100 = vld [vmem:[#allocation9 + $0x3b8] sm:$0xff]
          %v1101 = vld [vmem:[#allocation9 + $0x3c0] sm:$0xff]
          %v1102 = vld [vmem:[#allocation9 + $0x3c8] sm:$0xff]
          %v1103 = vld [vmem:[#allocation9 + $0x3d0] sm:$0xff]
          %v1104 = vld [vmem:[#allocation9 + $0x3d8] sm:$0xff]
          %v1105 = vld [vmem:[#allocation9 + $0x3e0] sm:$0xff]
          %v1106 = vld [vmem:[#allocation9 + $0x3e8] sm:$0xff]
          %v1107 = vld [vmem:[#allocation9 + $0x3f0] sm:$0xff]
          %v1108 = vld [vmem:[#allocation9 + $0x3f8] sm:$0xff]
          %v1109 = vld [vmem:[#allocation9 + $0x400] sm:$0xff]
          %v1110 = vld [vmem:[#allocation9 + $0x408] sm:$0xff]
          %v1111 = vld [vmem:[#allocation9 + $0x410] sm:$0xff]
          %v1112 = vld [vmem:[#allocation9 + $0x418] sm:$0xff]
          %v1113 = vld [vmem:[#allocation9 + $0x420] sm:$0xff]
          %v1114 = vld [vmem:[#allocation9 + $0x428] sm:$0xff]
          %v1115 = vld [vmem:[#allocation9 + $0x430] sm:$0xff]
          %v1116 = vld [vmem:[#allocation9 + $0x438] sm:$0xff]
          %v1117 = vld [vmem:[#allocation9 + $0x440] sm:$0xff]
          %v1118 = vld [vmem:[#allocation9 + $0x448] sm:$0xff]
          %v1119 = vld [vmem:[#allocation9 + $0x450] sm:$0xff]
          %v1120 = vld [vmem:[#allocation9 + $0x458] sm:$0xff]
          %v1121 = vld [vmem:[#allocation9 + $0x460] sm:$0xff]
          %v1122 = vld [vmem:[#allocation9 + $0x468] sm:$0xff]
          %v1123 = vld [vmem:[#allocation9 + $0x470] sm:$0xff]
          %v1124 = vld [vmem:[#allocation9 + $0x478] sm:$0xff]
          %v1125 = vld [vmem:[#allocation9 + $0x480] sm:$0xff]
          %v1126 = vld [vmem:[#allocation9 + $0x488] sm:$0xff]
          %v1127 = vld [vmem:[#allocation9 + $0x490] sm:$0xff]
          %v1128 = vld [vmem:[#allocation9 + $0x498] sm:$0xff]
          %v1129 = vld [vmem:[#allocation9 + $0x4a0] sm:$0xff]
          %v1130 = vld [vmem:[#allocation9 + $0x4a8] sm:$0xff]
          %v1131 = vld [vmem:[#allocation9 + $0x4b0] sm:$0xff]
          %v1132 = vld [vmem:[#allocation9 + $0x4b8] sm:$0xff]
          %v1133 = vld [vmem:[#allocation9 + $0x4c0] sm:$0xff]
          %v1134 = vld [vmem:[#allocation9 + $0x4c8] sm:$0xff]
          %v1135 = vld [vmem:[#allocation9 + $0x4d0] sm:$0xff]
          %v1136 = vld [vmem:[#allocation9 + $0x4d8] sm:$0xff]
          %v1137 = vld [vmem:[#allocation9 + $0x4e0] sm:$0xff]
          %v1138 = vld [vmem:[#allocation9 + $0x4e8] sm:$0xff]
          %v1139 = vld [vmem:[#allocation9 + $0x4f0] sm:$0xff]
          %v1140 = vld [vmem:[#allocation9 + $0x4f8] sm:$0xff]
          %v1141 = vld [vmem:[#allocation9 + $0x500] sm:$0xff]
          %v1142 = vld [vmem:[#allocation9 + $0x508] sm:$0xff]
          %v1143 = vld [vmem:[#allocation9 + $0x510] sm:$0xff]
          %v1144 = vld [vmem:[#allocation9 + $0x518] sm:$0xff]
          %v1145 = vld [vmem:[#allocation9 + $0x520] sm:$0xff]
          %v1146 = vld [vmem:[#allocation9 + $0x528] sm:$0xff]
          %v1147 = vld [vmem:[#allocation9 + $0x530] sm:$0xff]
          %v1148 = vld [vmem:[#allocation9 + $0x538] sm:$0xff]
          %v1149 = vld [vmem:[#allocation9 + $0x540] sm:$0xff]
          %v1150 = vld [vmem:[#allocation9 + $0x548] sm:$0xff]
          %v1151 = vld [vmem:[#allocation9 + $0x550] sm:$0xff]
          %v1152 = vld [vmem:[#allocation9 + $0x558] sm:$0xff]
          %v1153 = vld [vmem:[#allocation9 + $0x560] sm:$0xff]
          %v1154 = vld [vmem:[#allocation9 + $0x568] sm:$0xff]
          %v1155 = vld [vmem:[#allocation9 + $0x570] sm:$0xff]
          %v1156 = vld [vmem:[#allocation9 + $0x578] sm:$0xff]
          %v1157 = vld [vmem:[#allocation9 + $0x580] sm:$0xff]
          %v1158 = vld [vmem:[#allocation9 + $0x588] sm:$0xff]
          %v1159 = vld [vmem:[#allocation9 + $0x590] sm:$0xff]
          %v1160 = vld [vmem:[#allocation9 + $0x598] sm:$0xff]
          %v1161 = vld [vmem:[#allocation9 + $0x5a0] sm:$0xff]
          %v1162 = vld [vmem:[#allocation9 + $0x5a8] sm:$0xff]
          %v1163 = vld [vmem:[#allocation9 + $0x5b0] sm:$0xff]
          %v1164 = vld [vmem:[#allocation9 + $0x5b8] sm:$0xff]
          %v1165 = vld [vmem:[#allocation9 + $0x5c0] sm:$0xff]
          %v1166 = vld [vmem:[#allocation9 + $0x5c8] sm:$0xff]
          %v1167 = vld [vmem:[#allocation9 + $0x5d0] sm:$0xff]
          %v1168 = vld [vmem:[#allocation9 + $0x5d8] sm:$0xff]
          %v1169 = vld [vmem:[#allocation9 + $0x5e0] sm:$0xff]
          %v1170 = vld [vmem:[#allocation9 + $0x5e8] sm:$0xff]
          %v1171 = vld [vmem:[#allocation9 + $0x5f0] sm:$0xff]
          %v1172 = vld [vmem:[#allocation9 + $0x5f8] sm:$0xff]
          %v1173 = vld [vmem:[#allocation9 + $0x600] sm:$0xff]
          %v1174 = vld [vmem:[#allocation9 + $0x608] sm:$0xff]
          %v1175 = vld [vmem:[#allocation9 + $0x610] sm:$0xff]
          %v1176 = vld [vmem:[#allocation9 + $0x618] sm:$0xff]
          %v1177 = vld [vmem:[#allocation9 + $0x620] sm:$0xff]
          %v1178 = vld [vmem:[#allocation9 + $0x628] sm:$0xff]
          %v1179 = vld [vmem:[#allocation9 + $0x630] sm:$0xff]
          %v1180 = vld [vmem:[#allocation9 + $0x638] sm:$0xff]
          %v1181 = vld [vmem:[#allocation9 + $0x640] sm:$0xff]
          %v1182 = vld [vmem:[#allocation9 + $0x648] sm:$0xff]
          %v1183 = vld [vmem:[#allocation9 + $0x650] sm:$0xff]
          %v1184 = vld [vmem:[#allocation9 + $0x658] sm:$0xff]
          %v1185 = vld [vmem:[#allocation9 + $0x660] sm:$0xff]
          %v1186 = vld [vmem:[#allocation9 + $0x668] sm:$0xff]
          %v1187 = vld [vmem:[#allocation9 + $0x670] sm:$0xff]
          %v1188 = vld [vmem:[#allocation9 + $0x678] sm:$0xff]
          %v1189 = vld [vmem:[#allocation9 + $0x680] sm:$0xff]
          %v1190 = vld [vmem:[#allocation9 + $0x688] sm:$0xff]
          %v1191 = vld [vmem:[#allocation9 + $0x690] sm:$0xff]
          %v1192 = vld [vmem:[#allocation9 + $0x698] sm:$0xff]
          %v1193 = vld [vmem:[#allocation9 + $0x6a0] sm:$0xff]
          %v1194 = vld [vmem:[#allocation9 + $0x6a8] sm:$0xff]
          %v1195 = vld [vmem:[#allocation9 + $0x6b0] sm:$0xff]
          %v1196 = vld [vmem:[#allocation9 + $0x6b8] sm:$0xff]
          %v1197 = vld [vmem:[#allocation9 + $0x6c0] sm:$0xff]
          %v1198 = vld [vmem:[#allocation9 + $0x6c8] sm:$0xff]
          %v1199 = vld [vmem:[#allocation9 + $0x6d0] sm:$0xff]
          %v1200 = vld [vmem:[#allocation9 + $0x6d8] sm:$0xff]
          %v1201 = vld [vmem:[#allocation9 + $0x6e0] sm:$0xff]
          %v1202 = vld [vmem:[#allocation9 + $0x6e8] sm:$0xff]
          %v1203 = vld [vmem:[#allocation9 + $0x6f0] sm:$0xff]
          %v1204 = vld [vmem:[#allocation9 + $0x6f8] sm:$0xff]
          %v1205 = vld [vmem:[#allocation9 + $0x700] sm:$0xff]
          %v1206 = vld [vmem:[#allocation9 + $0x708] sm:$0xff]
          %v1207 = vld [vmem:[#allocation9 + $0x710] sm:$0xff]
          %v1208 = vld [vmem:[#allocation9 + $0x718] sm:$0xff]
          %v1209 = vld [vmem:[#allocation9 + $0x720] sm:$0xff]
          %v1210 = vld [vmem:[#allocation9 + $0x728] sm:$0xff]
          %v1211 = vld [vmem:[#allocation9 + $0x730] sm:$0xff]
          %v1212 = vld [vmem:[#allocation9 + $0x738] sm:$0xff]
          %v1213 = vld [vmem:[#allocation9 + $0x740] sm:$0xff]
          %v1214 = vld [vmem:[#allocation9 + $0x748] sm:$0xff]
          %v1215 = vld [vmem:[#allocation9 + $0x750] sm:$0xff]
          %v1216 = vld [vmem:[#allocation9 + $0x758] sm:$0xff]
          %v1217 = vld [vmem:[#allocation9 + $0x760] sm:$0xff]
          %v1218 = vld [vmem:[#allocation9 + $0x768] sm:$0xff]
          %v1219 = vld [vmem:[#allocation9 + $0x770] sm:$0xff]
          %v1220 = vld [vmem:[#allocation9 + $0x778] sm:$0xff]
          %v1221 = vld [vmem:[#allocation9 + $0x780] sm:$0xff]
          %v1222 = vld [vmem:[#allocation9 + $0x788] sm:$0xff]
          %v1223 = vld [vmem:[#allocation9 + $0x790] sm:$0xff]
          %v1224 = vld [vmem:[#allocation9 + $0x798] sm:$0xff]
          %v1225 = vld [vmem:[#allocation9 + $0x7a0] sm:$0xff]
          %v1226 = vld [vmem:[#allocation9 + $0x7a8] sm:$0xff]
          %v1227 = vld [vmem:[#allocation9 + $0x7b0] sm:$0xff]
          %v1228 = vld [vmem:[#allocation9 + $0x7b8] sm:$0xff]
          %v1229 = vld [vmem:[#allocation9 + $0x7c0] sm:$0xff]
          %v1230 = vld [vmem:[#allocation9 + $0x7c8] sm:$0xff]
          %v1231 = vld [vmem:[#allocation9 + $0x7d0] sm:$0xff]
          %v1232 = vld [vmem:[#allocation9 + $0x7d8] sm:$0xff]
          %v1233 = vld [vmem:[#allocation9 + $0x7e0] sm:$0xff]
          %v1234 = vld [vmem:[#allocation9 + $0x7e8] sm:$0xff]
          %v1235 = vld [vmem:[#allocation9 + $0x7f0] sm:$0xff]
          %v1236 = vld [vmem:[#allocation9 + $0x7f8] sm:$0xff]
          %v1237 = vld [vmem:[#allocation10] sm:$0xf]
          %v1239 = vperm.slane %v1237, 0
          %v1240 = vperm.slane %v1237, 1
          %v1241 = vperm.slane %v1237, 2
          %v1242 = vperm.slane %v1237, 3
          %v1503 = vunpack.c.l.b16 %v981
          %v1504 = vunpack.c.h.b16 %v981
          %v1505 = vunpack.c.l.b16 %v982
          %v1506 = vunpack.c.h.b16 %v982
          %v1507 = vunpack.c.l.b16 %v983
          %v1508 = vunpack.c.h.b16 %v983
          %v1509 = vunpack.c.l.b16 %v984
          %v1510 = vunpack.c.h.b16 %v984
          %v1511 = vunpack.c.l.b16 %v985
          %v1512 = vunpack.c.h.b16 %v985
          %v1513 = vunpack.c.l.b16 %v986
          %v1514 = vunpack.c.h.b16 %v986
          %v1515 = vunpack.c.l.b16 %v987
          %v1516 = vunpack.c.h.b16 %v987
          %v1517 = vunpack.c.l.b16 %v988
          %v1518 = vunpack.c.h.b16 %v988
          %v1519 = vunpack.c.l.b16 %v989
          %v1520 = vunpack.c.h.b16 %v989
          %v1521 = vunpack.c.l.b16 %v990
          %v1522 = vunpack.c.h.b16 %v990
          %v1523 = vunpack.c.l.b16 %v991
          %v1524 = vunpack.c.h.b16 %v991
          %v1525 = vunpack.c.l.b16 %v992
          %v1526 = vunpack.c.h.b16 %v992
          %v1527 = vunpack.c.l.b16 %v993
          %v1528 = vunpack.c.h.b16 %v993
          %v1529 = vunpack.c.l.b16 %v994
          %v1530 = vunpack.c.h.b16 %v994
          %v1531 = vunpack.c.l.b16 %v995
          %v1532 = vunpack.c.h.b16 %v995
          %v1533 = vunpack.c.l.b16 %v996
          %v1534 = vunpack.c.h.b16 %v996
          %v1535 = vunpack.c.l.b16 %v997
          %v1536 = vunpack.c.h.b16 %v997
          %v1537 = vunpack.c.l.b16 %v998
          %v1538 = vunpack.c.h.b16 %v998
          %v1539 = vunpack.c.l.b16 %v999
          %v1540 = vunpack.c.h.b16 %v999
          %v1541 = vunpack.c.l.b16 %v1000
          %v1542 = vunpack.c.h.b16 %v1000
          %v1543 = vunpack.c.l.b16 %v1001
          %v1544 = vunpack.c.h.b16 %v1001
          %v1545 = vunpack.c.l.b16 %v1002
          %v1546 = vunpack.c.h.b16 %v1002
          %v1547 = vunpack.c.l.b16 %v1003
          %v1548 = vunpack.c.h.b16 %v1003
          %v1549 = vunpack.c.l.b16 %v1004
          %v1550 = vunpack.c.h.b16 %v1004
          %v1551 = vunpack.c.l.b16 %v1005
          %v1552 = vunpack.c.h.b16 %v1005
          %v1553 = vunpack.c.l.b16 %v1006
          %v1554 = vunpack.c.h.b16 %v1006
          %v1555 = vunpack.c.l.b16 %v1007
          %v1556 = vunpack.c.h.b16 %v1007
          %v1557 = vunpack.c.l.b16 %v1008
          %v1558 = vunpack.c.h.b16 %v1008
          %v1559 = vunpack.c.l.b16 %v1009
          %v1560 = vunpack.c.h.b16 %v1009
          %v1561 = vunpack.c.l.b16 %v1010
          %v1562 = vunpack.c.h.b16 %v1010
          %v1563 = vunpack.c.l.b16 %v1011
          %v1564 = vunpack.c.h.b16 %v1011
          %v1565 = vunpack.c.l.b16 %v1012
          %v1566 = vunpack.c.h.b16 %v1012
          %v1567 = vunpack.c.l.b16 %v1013
          %v1568 = vunpack.c.h.b16 %v1013
          %v1569 = vunpack.c.l.b16 %v1014
          %v1570 = vunpack.c.h.b16 %v1014
          %v1571 = vunpack.c.l.b16 %v1015
          %v1572 = vunpack.c.h.b16 %v1015
          %v1573 = vunpack.c.l.b16 %v1016
          %v1574 = vunpack.c.h.b16 %v1016
          %v1575 = vunpack.c.l.b16 %v1017
          %v1576 = vunpack.c.h.b16 %v1017
          %v1577 = vunpack.c.l.b16 %v1018
          %v1578 = vunpack.c.h.b16 %v1018
          %v1579 = vunpack.c.l.b16 %v1019
          %v1580 = vunpack.c.h.b16 %v1019
          %v1581 = vunpack.c.l.b16 %v1020
          %v1582 = vunpack.c.h.b16 %v1020
          %v1583 = vunpack.c.l.b16 %v1021
          %v1584 = vunpack.c.h.b16 %v1021
          %v1585 = vunpack.c.l.b16 %v1022
          %v1586 = vunpack.c.h.b16 %v1022
          %v1587 = vunpack.c.l.b16 %v1023
          %v1588 = vunpack.c.h.b16 %v1023
          %v1589 = vunpack.c.l.b16 %v1024
          %v1590 = vunpack.c.h.b16 %v1024
          %v1591 = vunpack.c.l.b16 %v1025
          %v1592 = vunpack.c.h.b16 %v1025
          %v1593 = vunpack.c.l.b16 %v1026
          %v1594 = vunpack.c.h.b16 %v1026
          %v1595 = vunpack.c.l.b16 %v1027
          %v1596 = vunpack.c.h.b16 %v1027
          %v1597 = vunpack.c.l.b16 %v1028
          %v1598 = vunpack.c.h.b16 %v1028
          %v1599 = vunpack.c.l.b16 %v1029
          %v1600 = vunpack.c.h.b16 %v1029
          %v1601 = vunpack.c.l.b16 %v1030
          %v1602 = vunpack.c.h.b16 %v1030
          %v1603 = vunpack.c.l.b16 %v1031
          %v1604 = vunpack.c.h.b16 %v1031
          %v1605 = vunpack.c.l.b16 %v1032
          %v1606 = vunpack.c.h.b16 %v1032
          %v1607 = vunpack.c.l.b16 %v1033
          %v1608 = vunpack.c.h.b16 %v1033
          %v1609 = vunpack.c.l.b16 %v1034
          %v1610 = vunpack.c.h.b16 %v1034
          %v1611 = vunpack.c.l.b16 %v1035
          %v1612 = vunpack.c.h.b16 %v1035
          %v1613 = vunpack.c.l.b16 %v1036
          %v1614 = vunpack.c.h.b16 %v1036
          %v1615 = vunpack.c.l.b16 %v1037
          %v1616 = vunpack.c.h.b16 %v1037
          %v1617 = vunpack.c.l.b16 %v1038
          %v1618 = vunpack.c.h.b16 %v1038
          %v1619 = vunpack.c.l.b16 %v1039
          %v1620 = vunpack.c.h.b16 %v1039
          %v1621 = vunpack.c.l.b16 %v1040
          %v1622 = vunpack.c.h.b16 %v1040
          %v1623 = vunpack.c.l.b16 %v1041
          %v1624 = vunpack.c.h.b16 %v1041
          %v1625 = vunpack.c.l.b16 %v1042
          %v1626 = vunpack.c.h.b16 %v1042
          %v1627 = vunpack.c.l.b16 %v1043
          %v1628 = vunpack.c.h.b16 %v1043
          %v1629 = vunpack.c.l.b16 %v1044
          %v1630 = vunpack.c.h.b16 %v1044
          %v1631 = vunpack.c.l.b16 %v1045
          %v1632 = vunpack.c.h.b16 %v1045
          %v1633 = vunpack.c.l.b16 %v1046
          %v1634 = vunpack.c.h.b16 %v1046
          %v1635 = vunpack.c.l.b16 %v1047
          %v1636 = vunpack.c.h.b16 %v1047
          %v1637 = vunpack.c.l.b16 %v1048
          %v1638 = vunpack.c.h.b16 %v1048
          %v1639 = vunpack.c.l.b16 %v1049
          %v1640 = vunpack.c.h.b16 %v1049
          %v1641 = vunpack.c.l.b16 %v1050
          %v1642 = vunpack.c.h.b16 %v1050
          %v1643 = vunpack.c.l.b16 %v1051
          %v1644 = vunpack.c.h.b16 %v1051
          %v1645 = vunpack.c.l.b16 %v1052
          %v1646 = vunpack.c.h.b16 %v1052
          %v1647 = vunpack.c.l.b16 %v1053
          %v1648 = vunpack.c.h.b16 %v1053
          %v1649 = vunpack.c.l.b16 %v1054
          %v1650 = vunpack.c.h.b16 %v1054
          %v1651 = vunpack.c.l.b16 %v1055
          %v1652 = vunpack.c.h.b16 %v1055
          %v1653 = vunpack.c.l.b16 %v1056
          %v1654 = vunpack.c.h.b16 %v1056
          %v1655 = vunpack.c.l.b16 %v1057
          %v1656 = vunpack.c.h.b16 %v1057
          %v1657 = vunpack.c.l.b16 %v1058
          %v1658 = vunpack.c.h.b16 %v1058
          %v1659 = vunpack.c.l.b16 %v1059
          %v1660 = vunpack.c.h.b16 %v1059
          %v1661 = vunpack.c.l.b16 %v1060
          %v1662 = vunpack.c.h.b16 %v1060
          %v1663 = vunpack.c.l.b16 %v1061
          %v1664 = vunpack.c.h.b16 %v1061
          %v1665 = vunpack.c.l.b16 %v1062
          %v1666 = vunpack.c.h.b16 %v1062
          %v1667 = vunpack.c.l.b16 %v1063
          %v1668 = vunpack.c.h.b16 %v1063
          %v1669 = vunpack.c.l.b16 %v1064
          %v1670 = vunpack.c.h.b16 %v1064
          %v1671 = vunpack.c.l.b16 %v1065
          %v1672 = vunpack.c.h.b16 %v1065
          %v1673 = vunpack.c.l.b16 %v1066
          %v1674 = vunpack.c.h.b16 %v1066
          %v1675 = vunpack.c.l.b16 %v1067
          %v1676 = vunpack.c.h.b16 %v1067
          %v1677 = vunpack.c.l.b16 %v1068
          %v1678 = vunpack.c.h.b16 %v1068
          %v1679 = vunpack.c.l.b16 %v1069
          %v1680 = vunpack.c.h.b16 %v1069
          %v1681 = vunpack.c.l.b16 %v1070
          %v1682 = vunpack.c.h.b16 %v1070
          %v1683 = vunpack.c.l.b16 %v1071
          %v1684 = vunpack.c.h.b16 %v1071
          %v1685 = vunpack.c.l.b16 %v1072
          %v1686 = vunpack.c.h.b16 %v1072
          %v1687 = vunpack.c.l.b16 %v1073
          %v1688 = vunpack.c.h.b16 %v1073
          %v1689 = vunpack.c.l.b16 %v1074
          %v1690 = vunpack.c.h.b16 %v1074
          %v1691 = vunpack.c.l.b16 %v1075
          %v1692 = vunpack.c.h.b16 %v1075
          %v1693 = vunpack.c.l.b16 %v1076
          %v1694 = vunpack.c.h.b16 %v1076
          %v1695 = vunpack.c.l.b16 %v1077
          %v1696 = vunpack.c.h.b16 %v1077
          %v1697 = vunpack.c.l.b16 %v1078
          %v1698 = vunpack.c.h.b16 %v1078
          %v1699 = vunpack.c.l.b16 %v1079
          %v1700 = vunpack.c.h.b16 %v1079
          %v1701 = vunpack.c.l.b16 %v1080
          %v1702 = vunpack.c.h.b16 %v1080
          %v1703 = vunpack.c.l.b16 %v1081
          %v1704 = vunpack.c.h.b16 %v1081
          %v1705 = vunpack.c.l.b16 %v1082
          %v1706 = vunpack.c.h.b16 %v1082
          %v1707 = vunpack.c.l.b16 %v1083
          %v1708 = vunpack.c.h.b16 %v1083
          %v1709 = vunpack.c.l.b16 %v1084
          %v1710 = vunpack.c.h.b16 %v1084
          %v1711 = vunpack.c.l.b16 %v1085
          %v1712 = vunpack.c.h.b16 %v1085
          %v1713 = vunpack.c.l.b16 %v1086
          %v1714 = vunpack.c.h.b16 %v1086
          %v1715 = vunpack.c.l.b16 %v1087
          %v1716 = vunpack.c.h.b16 %v1087
          %v1717 = vunpack.c.l.b16 %v1088
          %v1718 = vunpack.c.h.b16 %v1088
          %v1719 = vunpack.c.l.b16 %v1089
          %v1720 = vunpack.c.h.b16 %v1089
          %v1721 = vunpack.c.l.b16 %v1090
          %v1722 = vunpack.c.h.b16 %v1090
          %v1723 = vunpack.c.l.b16 %v1091
          %v1724 = vunpack.c.h.b16 %v1091
          %v1725 = vunpack.c.l.b16 %v1092
          %v1726 = vunpack.c.h.b16 %v1092
          %v1727 = vunpack.c.l.b16 %v1093
          %v1728 = vunpack.c.h.b16 %v1093
          %v1729 = vunpack.c.l.b16 %v1094
          %v1730 = vunpack.c.h.b16 %v1094
          %v1731 = vunpack.c.l.b16 %v1095
          %v1732 = vunpack.c.h.b16 %v1095
          %v1733 = vunpack.c.l.b16 %v1096
          %v1734 = vunpack.c.h.b16 %v1096
          %v1735 = vunpack.c.l.b16 %v1097
          %v1736 = vunpack.c.h.b16 %v1097
          %v1737 = vunpack.c.l.b16 %v1098
          %v1738 = vunpack.c.h.b16 %v1098
          %v1739 = vunpack.c.l.b16 %v1099
          %v1740 = vunpack.c.h.b16 %v1099
          %v1741 = vunpack.c.l.b16 %v1100
          %v1742 = vunpack.c.h.b16 %v1100
          %v1743 = vunpack.c.l.b16 %v1101
          %v1744 = vunpack.c.h.b16 %v1101
          %v1745 = vunpack.c.l.b16 %v1102
          %v1746 = vunpack.c.h.b16 %v1102
          %v1747 = vunpack.c.l.b16 %v1103
          %v1748 = vunpack.c.h.b16 %v1103
          %v1749 = vunpack.c.l.b16 %v1104
          %v1750 = vunpack.c.h.b16 %v1104
          %v1751 = vunpack.c.l.b16 %v1105
          %v1752 = vunpack.c.h.b16 %v1105
          %v1753 = vunpack.c.l.b16 %v1106
          %v1754 = vunpack.c.h.b16 %v1106
          %v1755 = vunpack.c.l.b16 %v1107
          %v1756 = vunpack.c.h.b16 %v1107
          %v1757 = vunpack.c.l.b16 %v1108
          %v1758 = vunpack.c.h.b16 %v1108
          %v1759 = vunpack.c.l.b16 %v1109
          %v1760 = vunpack.c.h.b16 %v1109
          %v1761 = vunpack.c.l.b16 %v1110
          %v1762 = vunpack.c.h.b16 %v1110
          %v1763 = vunpack.c.l.b16 %v1111
          %v1764 = vunpack.c.h.b16 %v1111
          %v1765 = vunpack.c.l.b16 %v1112
          %v1766 = vunpack.c.h.b16 %v1112
          %v1767 = vunpack.c.l.b16 %v1113
          %v1768 = vunpack.c.h.b16 %v1113
          %v1769 = vunpack.c.l.b16 %v1114
          %v1770 = vunpack.c.h.b16 %v1114
          %v1771 = vunpack.c.l.b16 %v1115
          %v1772 = vunpack.c.h.b16 %v1115
          %v1773 = vunpack.c.l.b16 %v1116
          %v1774 = vunpack.c.h.b16 %v1116
          %v1775 = vunpack.c.l.b16 %v1117
          %v1776 = vunpack.c.h.b16 %v1117
          %v1777 = vunpack.c.l.b16 %v1118
          %v1778 = vunpack.c.h.b16 %v1118
          %v1779 = vunpack.c.l.b16 %v1119
          %v1780 = vunpack.c.h.b16 %v1119
          %v1781 = vunpack.c.l.b16 %v1120
          %v1782 = vunpack.c.h.b16 %v1120
          %v1783 = vunpack.c.l.b16 %v1121
          %v1784 = vunpack.c.h.b16 %v1121
          %v1785 = vunpack.c.l.b16 %v1122
          %v1786 = vunpack.c.h.b16 %v1122
          %v1787 = vunpack.c.l.b16 %v1123
          %v1788 = vunpack.c.h.b16 %v1123
          %v1789 = vunpack.c.l.b16 %v1124
          %v1790 = vunpack.c.h.b16 %v1124
          %v1791 = vunpack.c.l.b16 %v1125
          %v1792 = vunpack.c.h.b16 %v1125
          %v1793 = vunpack.c.l.b16 %v1126
          %v1794 = vunpack.c.h.b16 %v1126
          %v1795 = vunpack.c.l.b16 %v1127
          %v1796 = vunpack.c.h.b16 %v1127
          %v1797 = vunpack.c.l.b16 %v1128
          %v1798 = vunpack.c.h.b16 %v1128
          %v1799 = vunpack.c.l.b16 %v1129
          %v1800 = vunpack.c.h.b16 %v1129
          %v1801 = vunpack.c.l.b16 %v1130
          %v1802 = vunpack.c.h.b16 %v1130
          %v1803 = vunpack.c.l.b16 %v1131
          %v1804 = vunpack.c.h.b16 %v1131
          %v1805 = vunpack.c.l.b16 %v1132
          %v1806 = vunpack.c.h.b16 %v1132
          %v1807 = vunpack.c.l.b16 %v1133
          %v1808 = vunpack.c.h.b16 %v1133
          %v1809 = vunpack.c.l.b16 %v1134
          %v1810 = vunpack.c.h.b16 %v1134
          %v1811 = vunpack.c.l.b16 %v1135
          %v1812 = vunpack.c.h.b16 %v1135
          %v1813 = vunpack.c.l.b16 %v1136
          %v1814 = vunpack.c.h.b16 %v1136
          %v1815 = vunpack.c.l.b16 %v1137
          %v1816 = vunpack.c.h.b16 %v1137
          %v1817 = vunpack.c.l.b16 %v1138
          %v1818 = vunpack.c.h.b16 %v1138
          %v1819 = vunpack.c.l.b16 %v1139
          %v1820 = vunpack.c.h.b16 %v1139
          %v1821 = vunpack.c.l.b16 %v1140
          %v1822 = vunpack.c.h.b16 %v1140
          %v1823 = vunpack.c.l.b16 %v1141
          %v1824 = vunpack.c.h.b16 %v1141
          %v1825 = vunpack.c.l.b16 %v1142
          %v1826 = vunpack.c.h.b16 %v1142
          %v1827 = vunpack.c.l.b16 %v1143
          %v1828 = vunpack.c.h.b16 %v1143
          %v1829 = vunpack.c.l.b16 %v1144
          %v1830 = vunpack.c.h.b16 %v1144
          %v1831 = vunpack.c.l.b16 %v1145
          %v1832 = vunpack.c.h.b16 %v1145
          %v1833 = vunpack.c.l.b16 %v1146
          %v1834 = vunpack.c.h.b16 %v1146
          %v1835 = vunpack.c.l.b16 %v1147
          %v1836 = vunpack.c.h.b16 %v1147
          %v1837 = vunpack.c.l.b16 %v1148
          %v1838 = vunpack.c.h.b16 %v1148
          %v1839 = vunpack.c.l.b16 %v1149
          %v1840 = vunpack.c.h.b16 %v1149
          %v1841 = vunpack.c.l.b16 %v1150
          %v1842 = vunpack.c.h.b16 %v1150
          %v1843 = vunpack.c.l.b16 %v1151
          %v1844 = vunpack.c.h.b16 %v1151
          %v1845 = vunpack.c.l.b16 %v1152
          %v1846 = vunpack.c.h.b16 %v1152
          %v1847 = vunpack.c.l.b16 %v1153
          %v1848 = vunpack.c.h.b16 %v1153
          %v1849 = vunpack.c.l.b16 %v1154
          %v1850 = vunpack.c.h.b16 %v1154
          %v1851 = vunpack.c.l.b16 %v1155
          %v1852 = vunpack.c.h.b16 %v1155
          %v1853 = vunpack.c.l.b16 %v1156
          %v1854 = vunpack.c.h.b16 %v1156
          %v1855 = vunpack.c.l.b16 %v1157
          %v1856 = vunpack.c.h.b16 %v1157
          %v1857 = vunpack.c.l.b16 %v1158
          %v1858 = vunpack.c.h.b16 %v1158
          %v1859 = vunpack.c.l.b16 %v1159
          %v1860 = vunpack.c.h.b16 %v1159
          %v1861 = vunpack.c.l.b16 %v1160
          %v1862 = vunpack.c.h.b16 %v1160
          %v1863 = vunpack.c.l.b16 %v1161
          %v1864 = vunpack.c.h.b16 %v1161
          %v1865 = vunpack.c.l.b16 %v1162
          %v1866 = vunpack.c.h.b16 %v1162
          %v1867 = vunpack.c.l.b16 %v1163
          %v1868 = vunpack.c.h.b16 %v1163
          %v1869 = vunpack.c.l.b16 %v1164
          %v1870 = vunpack.c.h.b16 %v1164
          %v1871 = vunpack.c.l.b16 %v1165
          %v1872 = vunpack.c.h.b16 %v1165
          %v1873 = vunpack.c.l.b16 %v1166
          %v1874 = vunpack.c.h.b16 %v1166
          %v1875 = vunpack.c.l.b16 %v1167
          %v1876 = vunpack.c.h.b16 %v1167
          %v1877 = vunpack.c.l.b16 %v1168
          %v1878 = vunpack.c.h.b16 %v1168
          %v1879 = vunpack.c.l.b16 %v1169
          %v1880 = vunpack.c.h.b16 %v1169
          %v1881 = vunpack.c.l.b16 %v1170
          %v1882 = vunpack.c.h.b16 %v1170
          %v1883 = vunpack.c.l.b16 %v1171
          %v1884 = vunpack.c.h.b16 %v1171
          %v1885 = vunpack.c.l.b16 %v1172
          %v1886 = vunpack.c.h.b16 %v1172
          %v1887 = vunpack.c.l.b16 %v1173
          %v1888 = vunpack.c.h.b16 %v1173
          %v1889 = vunpack.c.l.b16 %v1174
          %v1890 = vunpack.c.h.b16 %v1174
          %v1891 = vunpack.c.l.b16 %v1175
          %v1892 = vunpack.c.h.b16 %v1175
          %v1893 = vunpack.c.l.b16 %v1176
          %v1894 = vunpack.c.h.b16 %v1176
          %v1895 = vunpack.c.l.b16 %v1177
          %v1896 = vunpack.c.h.b16 %v1177
          %v1897 = vunpack.c.l.b16 %v1178
          %v1898 = vunpack.c.h.b16 %v1178
          %v1899 = vunpack.c.l.b16 %v1179
          %v1900 = vunpack.c.h.b16 %v1179
          %v1901 = vunpack.c.l.b16 %v1180
          %v1902 = vunpack.c.h.b16 %v1180
          %v1903 = vunpack.c.l.b16 %v1181
          %v1904 = vunpack.c.h.b16 %v1181
          %v1905 = vunpack.c.l.b16 %v1182
          %v1906 = vunpack.c.h.b16 %v1182
          %v1907 = vunpack.c.l.b16 %v1183
          %v1908 = vunpack.c.h.b16 %v1183
          %v1909 = vunpack.c.l.b16 %v1184
          %v1910 = vunpack.c.h.b16 %v1184
          %v1911 = vunpack.c.l.b16 %v1185
          %v1912 = vunpack.c.h.b16 %v1185
          %v1913 = vunpack.c.l.b16 %v1186
          %v1914 = vunpack.c.h.b16 %v1186
          %v1915 = vunpack.c.l.b16 %v1187
          %v1916 = vunpack.c.h.b16 %v1187
          %v1917 = vunpack.c.l.b16 %v1188
          %v1918 = vunpack.c.h.b16 %v1188
          %v1919 = vunpack.c.l.b16 %v1189
          %v1920 = vunpack.c.h.b16 %v1189
          %v1921 = vunpack.c.l.b16 %v1190
          %v1922 = vunpack.c.h.b16 %v1190
          %v1923 = vunpack.c.l.b16 %v1191
          %v1924 = vunpack.c.h.b16 %v1191
          %v1925 = vunpack.c.l.b16 %v1192
          %v1926 = vunpack.c.h.b16 %v1192
          %v1927 = vunpack.c.l.b16 %v1193
          %v1928 = vunpack.c.h.b16 %v1193
          %v1929 = vunpack.c.l.b16 %v1194
          %v1930 = vunpack.c.h.b16 %v1194
          %v1931 = vunpack.c.l.b16 %v1195
          %v1932 = vunpack.c.h.b16 %v1195
          %v1933 = vunpack.c.l.b16 %v1196
          %v1934 = vunpack.c.h.b16 %v1196
          %v1935 = vunpack.c.l.b16 %v1197
          %v1936 = vunpack.c.h.b16 %v1197
          %v1937 = vunpack.c.l.b16 %v1198
          %v1938 = vunpack.c.h.b16 %v1198
          %v1939 = vunpack.c.l.b16 %v1199
          %v1940 = vunpack.c.h.b16 %v1199
          %v1941 = vunpack.c.l.b16 %v1200
          %v1942 = vunpack.c.h.b16 %v1200
          %v1943 = vunpack.c.l.b16 %v1201
          %v1944 = vunpack.c.h.b16 %v1201
          %v1945 = vunpack.c.l.b16 %v1202
          %v1946 = vunpack.c.h.b16 %v1202
          %v1947 = vunpack.c.l.b16 %v1203
          %v1948 = vunpack.c.h.b16 %v1203
          %v1949 = vunpack.c.l.b16 %v1204
          %v1950 = vunpack.c.h.b16 %v1204
          %v1951 = vunpack.c.l.b16 %v1205
          %v1952 = vunpack.c.h.b16 %v1205
          %v1953 = vunpack.c.l.b16 %v1206
          %v1954 = vunpack.c.h.b16 %v1206
          %v1955 = vunpack.c.l.b16 %v1207
          %v1956 = vunpack.c.h.b16 %v1207
          %v1957 = vunpack.c.l.b16 %v1208
          %v1958 = vunpack.c.h.b16 %v1208
          %v1959 = vunpack.c.l.b16 %v1209
          %v1960 = vunpack.c.h.b16 %v1209
          %v1961 = vunpack.c.l.b16 %v1210
          %v1962 = vunpack.c.h.b16 %v1210
          %v1963 = vunpack.c.l.b16 %v1211
          %v1964 = vunpack.c.h.b16 %v1211
          %v1965 = vunpack.c.l.b16 %v1212
          %v1966 = vunpack.c.h.b16 %v1212
          %v1967 = vunpack.c.l.b16 %v1213
          %v1968 = vunpack.c.h.b16 %v1213
          %v1969 = vunpack.c.l.b16 %v1214
          %v1970 = vunpack.c.h.b16 %v1214
          %v1971 = vunpack.c.l.b16 %v1215
          %v1972 = vunpack.c.h.b16 %v1215
          %v1973 = vunpack.c.l.b16 %v1216
          %v1974 = vunpack.c.h.b16 %v1216
          %v1975 = vunpack.c.l.b16 %v1217
          %v1976 = vunpack.c.h.b16 %v1217
          %v1977 = vunpack.c.l.b16 %v1218
          %v1978 = vunpack.c.h.b16 %v1218
          %v1979 = vunpack.c.l.b16 %v1219
          %v1980 = vunpack.c.h.b16 %v1219
          %v1981 = vunpack.c.l.b16 %v1220
          %v1982 = vunpack.c.h.b16 %v1220
          %v1983 = vunpack.c.l.b16 %v1221
          %v1984 = vunpack.c.h.b16 %v1221
          %v1985 = vunpack.c.l.b16 %v1222
          %v1986 = vunpack.c.h.b16 %v1222
          %v1987 = vunpack.c.l.b16 %v1223
          %v1988 = vunpack.c.h.b16 %v1223
          %v1989 = vunpack.c.l.b16 %v1224
          %v1990 = vunpack.c.h.b16 %v1224
          %v1991 = vunpack.c.l.b16 %v1225
          %v1992 = vunpack.c.h.b16 %v1225
          %v1993 = vunpack.c.l.b16 %v1226
          %v1994 = vunpack.c.h.b16 %v1226
          %v1995 = vunpack.c.l.b16 %v1227
          %v1996 = vunpack.c.h.b16 %v1227
          %v1997 = vunpack.c.l.b16 %v1228
          %v1998 = vunpack.c.h.b16 %v1228
          %v1999 = vunpack.c.l.b16 %v1229
          %v2000 = vunpack.c.h.b16 %v1229
          %v2001 = vunpack.c.l.b16 %v1230
          %v2002 = vunpack.c.h.b16 %v1230
          %v2003 = vunpack.c.l.b16 %v1231
          %v2004 = vunpack.c.h.b16 %v1231
          %v2005 = vunpack.c.l.b16 %v1232
          %v2006 = vunpack.c.h.b16 %v1232
          %v2007 = vunpack.c.l.b16 %v1233
          %v2008 = vunpack.c.h.b16 %v1233
          %v2009 = vunpack.c.l.b16 %v1234
          %v2010 = vunpack.c.h.b16 %v1234
          %v2011 = vunpack.c.l.b16 %v1235
          %v2012 = vunpack.c.h.b16 %v1235
          %v2013 = vunpack.c.l.b16 %v1236
          %v2014 = vunpack.c.h.b16 %v1236
          %v2015 = vpack.c.b16 %v1507, %v1503
          %v2016 = vpack.c.b16 %v1508, %v1504
          %v2017 = vpack.c.b16 %v1509, %v1505
          %v2018 = vpack.c.b16 %v1510, %v1506
          %v2019 = vpack.c.b16 %v1515, %v1511
          %v2020 = vpack.c.b16 %v1516, %v1512
          %v2021 = vpack.c.b16 %v1517, %v1513
          %v2022 = vpack.c.b16 %v1518, %v1514
          %v2023 = vpack.c.b16 %v1523, %v1519
          %v2024 = vpack.c.b16 %v1524, %v1520
          %v2025 = vpack.c.b16 %v1525, %v1521
          %v2026 = vpack.c.b16 %v1526, %v1522
          %v2027 = vpack.c.b16 %v1531, %v1527
          %v2028 = vpack.c.b16 %v1532, %v1528
          %v2029 = vpack.c.b16 %v1533, %v1529
          %v2030 = vpack.c.b16 %v1534, %v1530
          %v2031 = vpack.c.b16 %v1539, %v1535
          %v2032 = vpack.c.b16 %v1540, %v1536
          %v2033 = vpack.c.b16 %v1541, %v1537
          %v2034 = vpack.c.b16 %v1542, %v1538
          %v2035 = vpack.c.b16 %v1547, %v1543
          %v2036 = vpack.c.b16 %v1548, %v1544
          %v2037 = vpack.c.b16 %v1549, %v1545
          %v2038 = vpack.c.b16 %v1550, %v1546
          %v2039 = vpack.c.b16 %v1555, %v1551
          %v2040 = vpack.c.b16 %v1556, %v1552
          %v2041 = vpack.c.b16 %v1557, %v1553
          %v2042 = vpack.c.b16 %v1558, %v1554
          %v2043 = vpack.c.b16 %v1563, %v1559
          %v2044 = vpack.c.b16 %v1564, %v1560
          %v2045 = vpack.c.b16 %v1565, %v1561
          %v2046 = vpack.c.b16 %v1566, %v1562
          %v2047 = vpack.c.b16 %v1571, %v1567
          %v2048 = vpack.c.b16 %v1572, %v1568
          %v2049 = vpack.c.b16 %v1573, %v1569
          %v2050 = vpack.c.b16 %v1574, %v1570
          %v2051 = vpack.c.b16 %v1579, %v1575
          %v2052 = vpack.c.b16 %v1580, %v1576
          %v2053 = vpack.c.b16 %v1581, %v1577
          %v2054 = vpack.c.b16 %v1582, %v1578
          %v2055 = vpack.c.b16 %v1587, %v1583
          %v2056 = vpack.c.b16 %v1588, %v1584
          %v2057 = vpack.c.b16 %v1589, %v1585
          %v2058 = vpack.c.b16 %v1590, %v1586
          %v2059 = vpack.c.b16 %v1595, %v1591
          %v2060 = vpack.c.b16 %v1596, %v1592
          %v2061 = vpack.c.b16 %v1597, %v1593
          %v2062 = vpack.c.b16 %v1598, %v1594
          %v2063 = vpack.c.b16 %v1603, %v1599
          %v2064 = vpack.c.b16 %v1604, %v1600
          %v2065 = vpack.c.b16 %v1605, %v1601
          %v2066 = vpack.c.b16 %v1606, %v1602
          %v2067 = vpack.c.b16 %v1611, %v1607
          %v2068 = vpack.c.b16 %v1612, %v1608
          %v2069 = vpack.c.b16 %v1613, %v1609
          %v2070 = vpack.c.b16 %v1614, %v1610
          %v2071 = vpack.c.b16 %v1619, %v1615
          %v2072 = vpack.c.b16 %v1620, %v1616
          %v2073 = vpack.c.b16 %v1621, %v1617
          %v2074 = vpack.c.b16 %v1622, %v1618
          %v2075 = vpack.c.b16 %v1627, %v1623
          %v2076 = vpack.c.b16 %v1628, %v1624
          %v2077 = vpack.c.b16 %v1629, %v1625
          %v2078 = vpack.c.b16 %v1630, %v1626
          %v2079 = vpack.c.b16 %v1635, %v1631
          %v2080 = vpack.c.b16 %v1636, %v1632
          %v2081 = vpack.c.b16 %v1637, %v1633
          %v2082 = vpack.c.b16 %v1638, %v1634
          %v2083 = vpack.c.b16 %v1643, %v1639
          %v2084 = vpack.c.b16 %v1644, %v1640
          %v2085 = vpack.c.b16 %v1645, %v1641
          %v2086 = vpack.c.b16 %v1646, %v1642
          %v2087 = vpack.c.b16 %v1651, %v1647
          %v2088 = vpack.c.b16 %v1652, %v1648
          %v2089 = vpack.c.b16 %v1653, %v1649
          %v2090 = vpack.c.b16 %v1654, %v1650
          %v2091 = vpack.c.b16 %v1659, %v1655
          %v2092 = vpack.c.b16 %v1660, %v1656
          %v2093 = vpack.c.b16 %v1661, %v1657
          %v2094 = vpack.c.b16 %v1662, %v1658
          %v2095 = vpack.c.b16 %v1667, %v1663
          %v2096 = vpack.c.b16 %v1668, %v1664
          %v2097 = vpack.c.b16 %v1669, %v1665
          %v2098 = vpack.c.b16 %v1670, %v1666
          %v2099 = vpack.c.b16 %v1675, %v1671
          %v2100 = vpack.c.b16 %v1676, %v1672
          %v2101 = vpack.c.b16 %v1677, %v1673
          %v2102 = vpack.c.b16 %v1678, %v1674
          %v2103 = vpack.c.b16 %v1683, %v1679
          %v2104 = vpack.c.b16 %v1684, %v1680
          %v2105 = vpack.c.b16 %v1685, %v1681
          %v2106 = vpack.c.b16 %v1686, %v1682
          %v2107 = vpack.c.b16 %v1691, %v1687
          %v2108 = vpack.c.b16 %v1692, %v1688
          %v2109 = vpack.c.b16 %v1693, %v1689
          %v2110 = vpack.c.b16 %v1694, %v1690
          %v2111 = vpack.c.b16 %v1699, %v1695
          %v2112 = vpack.c.b16 %v1700, %v1696
          %v2113 = vpack.c.b16 %v1701, %v1697
          %v2114 = vpack.c.b16 %v1702, %v1698
          %v2115 = vpack.c.b16 %v1707, %v1703
          %v2116 = vpack.c.b16 %v1708, %v1704
          %v2117 = vpack.c.b16 %v1709, %v1705
          %v2118 = vpack.c.b16 %v1710, %v1706
          %v2119 = vpack.c.b16 %v1715, %v1711
          %v2120 = vpack.c.b16 %v1716, %v1712
          %v2121 = vpack.c.b16 %v1717, %v1713
          %v2122 = vpack.c.b16 %v1718, %v1714
          %v2123 = vpack.c.b16 %v1723, %v1719
          %v2124 = vpack.c.b16 %v1724, %v1720
          %v2125 = vpack.c.b16 %v1725, %v1721
          %v2126 = vpack.c.b16 %v1726, %v1722
          %v2127 = vpack.c.b16 %v1731, %v1727
          %v2128 = vpack.c.b16 %v1732, %v1728
          %v2129 = vpack.c.b16 %v1733, %v1729
          %v2130 = vpack.c.b16 %v1734, %v1730
          %v2131 = vpack.c.b16 %v1739, %v1735
          %v2132 = vpack.c.b16 %v1740, %v1736
          %v2133 = vpack.c.b16 %v1741, %v1737
          %v2134 = vpack.c.b16 %v1742, %v1738
          %v2135 = vpack.c.b16 %v1747, %v1743
          %v2136 = vpack.c.b16 %v1748, %v1744
          %v2137 = vpack.c.b16 %v1749, %v1745
          %v2138 = vpack.c.b16 %v1750, %v1746
          %v2139 = vpack.c.b16 %v1755, %v1751
          %v2140 = vpack.c.b16 %v1756, %v1752
          %v2141 = vpack.c.b16 %v1757, %v1753
          %v2142 = vpack.c.b16 %v1758, %v1754
          %v2143 = vpack.c.b16 %v1763, %v1759
          %v2144 = vpack.c.b16 %v1764, %v1760
          %v2145 = vpack.c.b16 %v1765, %v1761
          %v2146 = vpack.c.b16 %v1766, %v1762
          %v2147 = vpack.c.b16 %v1771, %v1767
          %v2148 = vpack.c.b16 %v1772, %v1768
          %v2149 = vpack.c.b16 %v1773, %v1769
          %v2150 = vpack.c.b16 %v1774, %v1770
          %v2151 = vpack.c.b16 %v1779, %v1775
          %v2152 = vpack.c.b16 %v1780, %v1776
          %v2153 = vpack.c.b16 %v1781, %v1777
          %v2154 = vpack.c.b16 %v1782, %v1778
          %v2155 = vpack.c.b16 %v1787, %v1783
          %v2156 = vpack.c.b16 %v1788, %v1784
          %v2157 = vpack.c.b16 %v1789, %v1785
          %v2158 = vpack.c.b16 %v1790, %v1786
          %v2159 = vpack.c.b16 %v1795, %v1791
          %v2160 = vpack.c.b16 %v1796, %v1792
          %v2161 = vpack.c.b16 %v1797, %v1793
          %v2162 = vpack.c.b16 %v1798, %v1794
          %v2163 = vpack.c.b16 %v1803, %v1799
          %v2164 = vpack.c.b16 %v1804, %v1800
          %v2165 = vpack.c.b16 %v1805, %v1801
          %v2166 = vpack.c.b16 %v1806, %v1802
          %v2167 = vpack.c.b16 %v1811, %v1807
          %v2168 = vpack.c.b16 %v1812, %v1808
          %v2169 = vpack.c.b16 %v1813, %v1809
          %v2170 = vpack.c.b16 %v1814, %v1810
          %v2171 = vpack.c.b16 %v1819, %v1815
          %v2172 = vpack.c.b16 %v1820, %v1816
          %v2173 = vpack.c.b16 %v1821, %v1817
          %v2174 = vpack.c.b16 %v1822, %v1818
          %v2175 = vpack.c.b16 %v1827, %v1823
          %v2176 = vpack.c.b16 %v1828, %v1824
          %v2177 = vpack.c.b16 %v1829, %v1825
          %v2178 = vpack.c.b16 %v1830, %v1826
          %v2179 = vpack.c.b16 %v1835, %v1831
          %v2180 = vpack.c.b16 %v1836, %v1832
          %v2181 = vpack.c.b16 %v1837, %v1833
          %v2182 = vpack.c.b16 %v1838, %v1834
          %v2183 = vpack.c.b16 %v1843, %v1839
          %v2184 = vpack.c.b16 %v1844, %v1840
          %v2185 = vpack.c.b16 %v1845, %v1841
          %v2186 = vpack.c.b16 %v1846, %v1842
          %v2187 = vpack.c.b16 %v1851, %v1847
          %v2188 = vpack.c.b16 %v1852, %v1848
          %v2189 = vpack.c.b16 %v1853, %v1849
          %v2190 = vpack.c.b16 %v1854, %v1850
          %v2191 = vpack.c.b16 %v1859, %v1855
          %v2192 = vpack.c.b16 %v1860, %v1856
          %v2193 = vpack.c.b16 %v1861, %v1857
          %v2194 = vpack.c.b16 %v1862, %v1858
          %v2195 = vpack.c.b16 %v1867, %v1863
          %v2196 = vpack.c.b16 %v1868, %v1864
          %v2197 = vpack.c.b16 %v1869, %v1865
          %v2198 = vpack.c.b16 %v1870, %v1866
          %v2199 = vpack.c.b16 %v1875, %v1871
          %v2200 = vpack.c.b16 %v1876, %v1872
          %v2201 = vpack.c.b16 %v1877, %v1873
          %v2202 = vpack.c.b16 %v1878, %v1874
          %v2203 = vpack.c.b16 %v1883, %v1879
          %v2204 = vpack.c.b16 %v1884, %v1880
          %v2205 = vpack.c.b16 %v1885, %v1881
          %v2206 = vpack.c.b16 %v1886, %v1882
          %v2207 = vpack.c.b16 %v1891, %v1887
          %v2208 = vpack.c.b16 %v1892, %v1888
          %v2209 = vpack.c.b16 %v1893, %v1889
          %v2210 = vpack.c.b16 %v1894, %v1890
          %v2211 = vpack.c.b16 %v1899, %v1895
          %v2212 = vpack.c.b16 %v1900, %v1896
          %v2213 = vpack.c.b16 %v1901, %v1897
          %v2214 = vpack.c.b16 %v1902, %v1898
          %v2215 = vpack.c.b16 %v1907, %v1903
          %v2216 = vpack.c.b16 %v1908, %v1904
          %v2217 = vpack.c.b16 %v1909, %v1905
          %v2218 = vpack.c.b16 %v1910, %v1906
          %v2219 = vpack.c.b16 %v1915, %v1911
          %v2220 = vpack.c.b16 %v1916, %v1912
          %v2221 = vpack.c.b16 %v1917, %v1913
          %v2222 = vpack.c.b16 %v1918, %v1914
          %v2223 = vpack.c.b16 %v1923, %v1919
          %v2224 = vpack.c.b16 %v1924, %v1920
          %v2225 = vpack.c.b16 %v1925, %v1921
          %v2226 = vpack.c.b16 %v1926, %v1922
          %v2227 = vpack.c.b16 %v1931, %v1927
          %v2228 = vpack.c.b16 %v1932, %v1928
          %v2229 = vpack.c.b16 %v1933, %v1929
          %v2230 = vpack.c.b16 %v1934, %v1930
          %v2231 = vpack.c.b16 %v1939, %v1935
          %v2232 = vpack.c.b16 %v1940, %v1936
          %v2233 = vpack.c.b16 %v1941, %v1937
          %v2234 = vpack.c.b16 %v1942, %v1938
          %v2235 = vpack.c.b16 %v1947, %v1943
          %v2236 = vpack.c.b16 %v1948, %v1944
          %v2237 = vpack.c.b16 %v1949, %v1945
          %v2238 = vpack.c.b16 %v1950, %v1946
          %v2239 = vpack.c.b16 %v1955, %v1951
          %v2240 = vpack.c.b16 %v1956, %v1952
          %v2241 = vpack.c.b16 %v1957, %v1953
          %v2242 = vpack.c.b16 %v1958, %v1954
          %v2243 = vpack.c.b16 %v1963, %v1959
          %v2244 = vpack.c.b16 %v1964, %v1960
          %v2245 = vpack.c.b16 %v1965, %v1961
          %v2246 = vpack.c.b16 %v1966, %v1962
          %v2247 = vpack.c.b16 %v1971, %v1967
          %v2248 = vpack.c.b16 %v1972, %v1968
          %v2249 = vpack.c.b16 %v1973, %v1969
          %v2250 = vpack.c.b16 %v1974, %v1970
          %v2251 = vpack.c.b16 %v1979, %v1975
          %v2252 = vpack.c.b16 %v1980, %v1976
          %v2253 = vpack.c.b16 %v1981, %v1977
          %v2254 = vpack.c.b16 %v1982, %v1978
          %v2255 = vpack.c.b16 %v1987, %v1983
          %v2256 = vpack.c.b16 %v1988, %v1984
          %v2257 = vpack.c.b16 %v1989, %v1985
          %v2258 = vpack.c.b16 %v1990, %v1986
          %v2259 = vpack.c.b16 %v1995, %v1991
          %v2260 = vpack.c.b16 %v1996, %v1992
          %v2261 = vpack.c.b16 %v1997, %v1993
          %v2262 = vpack.c.b16 %v1998, %v1994
          %v2263 = vpack.c.b16 %v2003, %v1999
          %v2264 = vpack.c.b16 %v2004, %v2000
          %v2265 = vpack.c.b16 %v2005, %v2001
          %v2266 = vpack.c.b16 %v2006, %v2002
          %v2267 = vpack.c.b16 %v2011, %v2007
          %v2268 = vpack.c.b16 %v2012, %v2008
          %v2269 = vpack.c.b16 %v2013, %v2009
          %v2270 = vpack.c.b16 %v2014, %v2010
          %2527 = vmatpush.bf16.msra.mxu0 %v2043
          %2528 = vmatpush.bf16.msra.mxu0 %v2039
          %2529 = vmatpush.bf16.msra.mxu0 %v2035
          %2530 = vmatpush.bf16.msra.mxu0 %v2031
          %2531 = vmatpush.bf16.msra.mxu0 %v2027
          %2532 = vmatpush.bf16.msra.mxu0 %v2023
          %2533 = vmatpush.bf16.msra.mxu0 %v2019
          %2534 = vmatpush.bf16.msra.mxu0 %v2015
          %2535 = vmatmul.bf16.gmra.mxu0 %v973
          %v2536 = vpop.f32.mrf.mxu0
          %v2537 = vadd.f32 %v1239, %v2536
          %v2538 = vpop.f32.mrf.mxu0
          %2539 = vdwg.mxu0
          %2540 = vmatpush.bf16.msra.mxu0 %v2075
          %2541 = vmatpush.bf16.msra.mxu0 %v2071
          %2542 = vmatpush.bf16.msra.mxu0 %v2067
          %2543 = vmatpush.bf16.msra.mxu0 %v2063
          %2544 = vmatpush.bf16.msra.mxu0 %v2059
          %2545 = vmatpush.bf16.msra.mxu0 %v2055
          %2546 = vmatpush.bf16.msra.mxu0 %v2051
          %2547 = vmatpush.bf16.msra.mxu0 %v2047
          %2548 = vmatmul.bf16.gmra.mxu0 %v974
          %v2549 = vpop.f32.mrf.mxu0
          %v2550 = vadd.f32 %v2537, %v2549
          %v2551 = vpop.f32.mrf.mxu0
          %2552 = vdwg.mxu0
          %2553 = vmatpush.bf16.msra.mxu0 %v2107
          %2554 = vmatpush.bf16.msra.mxu0 %v2103
          %2555 = vmatpush.bf16.msra.mxu0 %v2099
          %2556 = vmatpush.bf16.msra.mxu0 %v2095
          %2557 = vmatpush.bf16.msra.mxu0 %v2091
          %2558 = vmatpush.bf16.msra.mxu0 %v2087
          %2559 = vmatpush.bf16.msra.mxu0 %v2083
          %2560 = vmatpush.bf16.msra.mxu0 %v2079
          %2561 = vmatmul.bf16.gmra.mxu0 %v975
          %v2562 = vpop.f32.mrf.mxu0
          %v2563 = vadd.f32 %v2550, %v2562
          %v2564 = vpop.f32.mrf.mxu0
          %2565 = vdwg.mxu0
          %2566 = vmatpush.bf16.msra.mxu0 %v2139
          %2567 = vmatpush.bf16.msra.mxu0 %v2135
          %2568 = vmatpush.bf16.msra.mxu0 %v2131
          %2569 = vmatpush.bf16.msra.mxu0 %v2127
          %2570 = vmatpush.bf16.msra.mxu0 %v2123
          %2571 = vmatpush.bf16.msra.mxu0 %v2119
          %2572 = vmatpush.bf16.msra.mxu0 %v2115
          %2573 = vmatpush.bf16.msra.mxu0 %v2111
          %2574 = vmatmul.bf16.gmra.mxu0 %v976
          %v2575 = vpop.f32.mrf.mxu0
          %v2576 = vadd.f32 %v2563, %v2575
          %v2577 = vpop.f32.mrf.mxu0
          %2578 = vdwg.mxu0
          %2579 = vmatpush.bf16.msra.mxu0 %v2171
          %2580 = vmatpush.bf16.msra.mxu0 %v2167
          %2581 = vmatpush.bf16.msra.mxu0 %v2163
          %2582 = vmatpush.bf16.msra.mxu0 %v2159
          %2583 = vmatpush.bf16.msra.mxu0 %v2155
          %2584 = vmatpush.bf16.msra.mxu0 %v2151
          %2585 = vmatpush.bf16.msra.mxu0 %v2147
          %2586 = vmatpush.bf16.msra.mxu0 %v2143
          %2587 = vmatmul.bf16.gmra.mxu0 %v977
          %v2588 = vpop.f32.mrf.mxu0
          %v2589 = vadd.f32 %v2576, %v2588
          %v2590 = vpop.f32.mrf.mxu0
          %2591 = vdwg.mxu0
          %2592 = vmatpush.bf16.msra.mxu0 %v2203
          %2593 = vmatpush.bf16.msra.mxu0 %v2199
          %2594 = vmatpush.bf16.msra.mxu0 %v2195
          %2595 = vmatpush.bf16.msra.mxu0 %v2191
          %2596 = vmatpush.bf16.msra.mxu0 %v2187
          %2597 = vmatpush.bf16.msra.mxu0 %v2183
          %2598 = vmatpush.bf16.msra.mxu0 %v2179
          %2599 = vmatpush.bf16.msra.mxu0 %v2175
          %2600 = vmatmul.bf16.gmra.mxu0 %v978
          %v2601 = vpop.f32.mrf.mxu0
          %v2602 = vadd.f32 %v2589, %v2601
          %v2603 = vpop.f32.mrf.mxu0
          %2604 = vdwg.mxu0
          %2605 = vmatpush.bf16.msra.mxu0 %v2235
          %2606 = vmatpush.bf16.msra.mxu0 %v2231
          %2607 = vmatpush.bf16.msra.mxu0 %v2227
          %2608 = vmatpush.bf16.msra.mxu0 %v2223
          %2609 = vmatpush.bf16.msra.mxu0 %v2219
          %2610 = vmatpush.bf16.msra.mxu0 %v2215
          %2611 = vmatpush.bf16.msra.mxu0 %v2211
          %2612 = vmatpush.bf16.msra.mxu0 %v2207
          %2613 = vmatmul.bf16.gmra.mxu0 %v979
          %v2614 = vpop.f32.mrf.mxu0
          %v2615 = vadd.f32 %v2602, %v2614
          %v2616 = vpop.f32.mrf.mxu0
          %2617 = vdwg.mxu0
          %2618 = vmatpush.bf16.msra.mxu0 %v2267
          %2619 = vmatpush.bf16.msra.mxu0 %v2263
          %2620 = vmatpush.bf16.msra.mxu0 %v2259
          %2621 = vmatpush.bf16.msra.mxu0 %v2255
          %2622 = vmatpush.bf16.msra.mxu0 %v2251
          %2623 = vmatpush.bf16.msra.mxu0 %v2247
          %2624 = vmatpush.bf16.msra.mxu0 %v2243
          %2625 = vmatpush.bf16.msra.mxu0 %v2239
          %2626 = vmatmul.bf16.gmra.mxu0 %v980
          %v2627 = vpop.f32.mrf.mxu0
          %v2628 = vadd.f32 %v2615, %v2627
          %v2629 = vpop.f32.mrf.mxu0
          %2630 = vdwg.mxu0
          %2631 = vmatpush.bf16.msra.mxu0 %v2044
          %2632 = vmatpush.bf16.msra.mxu0 %v2040
          %2633 = vmatpush.bf16.msra.mxu0 %v2036
          %2634 = vmatpush.bf16.msra.mxu0 %v2032
          %2635 = vmatpush.bf16.msra.mxu0 %v2028
          %2636 = vmatpush.bf16.msra.mxu0 %v2024
          %2637 = vmatpush.bf16.msra.mxu0 %v2020
          %2638 = vmatpush.bf16.msra.mxu0 %v2016
          %2639 = vmatmul.bf16.gmra.mxu0 %v973
          %v2640 = vpop.f32.mrf.mxu0
          %v2641 = vadd.f32 %v1240, %v2640
          %v2642 = vpop.f32.mrf.mxu0
          %2643 = vdwg.mxu0
          %2644 = vmatpush.bf16.msra.mxu0 %v2076
          %2645 = vmatpush.bf16.msra.mxu0 %v2072
          %2646 = vmatpush.bf16.msra.mxu0 %v2068
          %2647 = vmatpush.bf16.msra.mxu0 %v2064
          %2648 = vmatpush.bf16.msra.mxu0 %v2060
          %2649 = vmatpush.bf16.msra.mxu0 %v2056
          %2650 = vmatpush.bf16.msra.mxu0 %v2052
          %2651 = vmatpush.bf16.msra.mxu0 %v2048
          %2652 = vmatmul.bf16.gmra.mxu0 %v974
          %v2653 = vpop.f32.mrf.mxu0
          %v2654 = vadd.f32 %v2641, %v2653
          %v2655 = vpop.f32.mrf.mxu0
          %2656 = vdwg.mxu0
          %2657 = vmatpush.bf16.msra.mxu0 %v2108
          %2658 = vmatpush.bf16.msra.mxu0 %v2104
          %2659 = vmatpush.bf16.msra.mxu0 %v2100
          %2660 = vmatpush.bf16.msra.mxu0 %v2096
          %2661 = vmatpush.bf16.msra.mxu0 %v2092
          %2662 = vmatpush.bf16.msra.mxu0 %v2088
          %2663 = vmatpush.bf16.msra.mxu0 %v2084
          %2664 = vmatpush.bf16.msra.mxu0 %v2080
          %2665 = vmatmul.bf16.gmra.mxu0 %v975
          %v2666 = vpop.f32.mrf.mxu0
          %v2667 = vadd.f32 %v2654, %v2666
          %v2668 = vpop.f32.mrf.mxu0
          %2669 = vdwg.mxu0
          %2670 = vmatpush.bf16.msra.mxu0 %v2140
          %2671 = vmatpush.bf16.msra.mxu0 %v2136
          %2672 = vmatpush.bf16.msra.mxu0 %v2132
          %2673 = vmatpush.bf16.msra.mxu0 %v2128
          %2674 = vmatpush.bf16.msra.mxu0 %v2124
          %2675 = vmatpush.bf16.msra.mxu0 %v2120
          %2676 = vmatpush.bf16.msra.mxu0 %v2116
          %2677 = vmatpush.bf16.msra.mxu0 %v2112
          %2678 = vmatmul.bf16.gmra.mxu0 %v976
          %v2679 = vpop.f32.mrf.mxu0
          %v2680 = vadd.f32 %v2667, %v2679
          %v2681 = vpop.f32.mrf.mxu0
          %2682 = vdwg.mxu0
          %2683 = vmatpush.bf16.msra.mxu0 %v2172
          %2684 = vmatpush.bf16.msra.mxu0 %v2168
          %2685 = vmatpush.bf16.msra.mxu0 %v2164
          %2686 = vmatpush.bf16.msra.mxu0 %v2160
          %2687 = vmatpush.bf16.msra.mxu0 %v2156
          %2688 = vmatpush.bf16.msra.mxu0 %v2152
          %2689 = vmatpush.bf16.msra.mxu0 %v2148
          %2690 = vmatpush.bf16.msra.mxu0 %v2144
          %2691 = vmatmul.bf16.gmra.mxu0 %v977
          %v2692 = vpop.f32.mrf.mxu0
          %v2693 = vadd.f32 %v2680, %v2692
          %v2694 = vpop.f32.mrf.mxu0
          %2695 = vdwg.mxu0
          %2696 = vmatpush.bf16.msra.mxu0 %v2204
          %2697 = vmatpush.bf16.msra.mxu0 %v2200
          %2698 = vmatpush.bf16.msra.mxu0 %v2196
          %2699 = vmatpush.bf16.msra.mxu0 %v2192
          %2700 = vmatpush.bf16.msra.mxu0 %v2188
          %2701 = vmatpush.bf16.msra.mxu0 %v2184
          %2702 = vmatpush.bf16.msra.mxu0 %v2180
          %2703 = vmatpush.bf16.msra.mxu0 %v2176
          %2704 = vmatmul.bf16.gmra.mxu0 %v978
          %v2705 = vpop.f32.mrf.mxu0
          %v2706 = vadd.f32 %v2693, %v2705
          %v2707 = vpop.f32.mrf.mxu0
          %2708 = vdwg.mxu0
          %2709 = vmatpush.bf16.msra.mxu0 %v2236
          %2710 = vmatpush.bf16.msra.mxu0 %v2232
          %2711 = vmatpush.bf16.msra.mxu0 %v2228
          %2712 = vmatpush.bf16.msra.mxu0 %v2224
          %2713 = vmatpush.bf16.msra.mxu0 %v2220
          %2714 = vmatpush.bf16.msra.mxu0 %v2216
          %2715 = vmatpush.bf16.msra.mxu0 %v2212
          %2716 = vmatpush.bf16.msra.mxu0 %v2208
          %2717 = vmatmul.bf16.gmra.mxu0 %v979
          %v2718 = vpop.f32.mrf.mxu0
          %v2719 = vadd.f32 %v2706, %v2718
          %v2720 = vpop.f32.mrf.mxu0
          %2721 = vdwg.mxu0
          %2722 = vmatpush.bf16.msra.mxu0 %v2268
          %2723 = vmatpush.bf16.msra.mxu0 %v2264
          %2724 = vmatpush.bf16.msra.mxu0 %v2260
          %2725 = vmatpush.bf16.msra.mxu0 %v2256
          %2726 = vmatpush.bf16.msra.mxu0 %v2252
          %2727 = vmatpush.bf16.msra.mxu0 %v2248
          %2728 = vmatpush.bf16.msra.mxu0 %v2244
          %2729 = vmatpush.bf16.msra.mxu0 %v2240
          %2730 = vmatmul.bf16.gmra.mxu0 %v980
          %v2731 = vpop.f32.mrf.mxu0
          %v2732 = vadd.f32 %v2719, %v2731
          %v2733 = vpop.f32.mrf.mxu0
          %2734 = vdwg.mxu0
          %2735 = vmatpush.bf16.msra.mxu0 %v2045
          %2736 = vmatpush.bf16.msra.mxu0 %v2041
          %2737 = vmatpush.bf16.msra.mxu0 %v2037
          %2738 = vmatpush.bf16.msra.mxu0 %v2033
          %2739 = vmatpush.bf16.msra.mxu0 %v2029
          %2740 = vmatpush.bf16.msra.mxu0 %v2025
          %2741 = vmatpush.bf16.msra.mxu0 %v2021
          %2742 = vmatpush.bf16.msra.mxu0 %v2017
          %2743 = vmatmul.bf16.gmra.mxu0 %v973
          %v2744 = vpop.f32.mrf.mxu0
          %v2745 = vadd.f32 %v1241, %v2744
          %v2746 = vpop.f32.mrf.mxu0
          %2747 = vdwg.mxu0
          %2748 = vmatpush.bf16.msra.mxu0 %v2077
          %2749 = vmatpush.bf16.msra.mxu0 %v2073
          %2750 = vmatpush.bf16.msra.mxu0 %v2069
          %2751 = vmatpush.bf16.msra.mxu0 %v2065
          %2752 = vmatpush.bf16.msra.mxu0 %v2061
          %2753 = vmatpush.bf16.msra.mxu0 %v2057
          %2754 = vmatpush.bf16.msra.mxu0 %v2053
          %2755 = vmatpush.bf16.msra.mxu0 %v2049
          %2756 = vmatmul.bf16.gmra.mxu0 %v974
          %v2757 = vpop.f32.mrf.mxu0
          %v2758 = vadd.f32 %v2745, %v2757
          %v2759 = vpop.f32.mrf.mxu0
          %2760 = vdwg.mxu0
          %2761 = vmatpush.bf16.msra.mxu0 %v2109
          %2762 = vmatpush.bf16.msra.mxu0 %v2105
          %2763 = vmatpush.bf16.msra.mxu0 %v2101
          %2764 = vmatpush.bf16.msra.mxu0 %v2097
          %2765 = vmatpush.bf16.msra.mxu0 %v2093
          %2766 = vmatpush.bf16.msra.mxu0 %v2089
          %2767 = vmatpush.bf16.msra.mxu0 %v2085
          %2768 = vmatpush.bf16.msra.mxu0 %v2081
          %2769 = vmatmul.bf16.gmra.mxu0 %v975
          %v2770 = vpop.f32.mrf.mxu0
          %v2771 = vadd.f32 %v2758, %v2770
          %v2772 = vpop.f32.mrf.mxu0
          %2773 = vdwg.mxu0
          %2774 = vmatpush.bf16.msra.mxu0 %v2141
          %2775 = vmatpush.bf16.msra.mxu0 %v2137
          %2776 = vmatpush.bf16.msra.mxu0 %v2133
          %2777 = vmatpush.bf16.msra.mxu0 %v2129
          %2778 = vmatpush.bf16.msra.mxu0 %v2125
          %2779 = vmatpush.bf16.msra.mxu0 %v2121
          %2780 = vmatpush.bf16.msra.mxu0 %v2117
          %2781 = vmatpush.bf16.msra.mxu0 %v2113
          %2782 = vmatmul.bf16.gmra.mxu0 %v976
          %v2783 = vpop.f32.mrf.mxu0
          %v2784 = vadd.f32 %v2771, %v2783
          %v2785 = vpop.f32.mrf.mxu0
          %2786 = vdwg.mxu0
          %2787 = vmatpush.bf16.msra.mxu0 %v2173
          %2788 = vmatpush.bf16.msra.mxu0 %v2169
          %2789 = vmatpush.bf16.msra.mxu0 %v2165
          %2790 = vmatpush.bf16.msra.mxu0 %v2161
          %2791 = vmatpush.bf16.msra.mxu0 %v2157
          %2792 = vmatpush.bf16.msra.mxu0 %v2153
          %2793 = vmatpush.bf16.msra.mxu0 %v2149
          %2794 = vmatpush.bf16.msra.mxu0 %v2145
          %2795 = vmatmul.bf16.gmra.mxu0 %v977
          %v2796 = vpop.f32.mrf.mxu0
          %v2797 = vadd.f32 %v2784, %v2796
          %v2798 = vpop.f32.mrf.mxu0
          %2799 = vdwg.mxu0
          %2800 = vmatpush.bf16.msra.mxu0 %v2205
          %2801 = vmatpush.bf16.msra.mxu0 %v2201
          %2802 = vmatpush.bf16.msra.mxu0 %v2197
          %2803 = vmatpush.bf16.msra.mxu0 %v2193
          %2804 = vmatpush.bf16.msra.mxu0 %v2189
          %2805 = vmatpush.bf16.msra.mxu0 %v2185
          %2806 = vmatpush.bf16.msra.mxu0 %v2181
          %2807 = vmatpush.bf16.msra.mxu0 %v2177
          %2808 = vmatmul.bf16.gmra.mxu0 %v978
          %v2809 = vpop.f32.mrf.mxu0
          %v2810 = vadd.f32 %v2797, %v2809
          %v2811 = vpop.f32.mrf.mxu0
          %2812 = vdwg.mxu0
          %2813 = vmatpush.bf16.msra.mxu0 %v2237
          %2814 = vmatpush.bf16.msra.mxu0 %v2233
          %2815 = vmatpush.bf16.msra.mxu0 %v2229
          %2816 = vmatpush.bf16.msra.mxu0 %v2225
          %2817 = vmatpush.bf16.msra.mxu0 %v2221
          %2818 = vmatpush.bf16.msra.mxu0 %v2217
          %2819 = vmatpush.bf16.msra.mxu0 %v2213
          %2820 = vmatpush.bf16.msra.mxu0 %v2209
          %2821 = vmatmul.bf16.gmra.mxu0 %v979
          %v2822 = vpop.f32.mrf.mxu0
          %v2823 = vadd.f32 %v2810, %v2822
          %v2824 = vpop.f32.mrf.mxu0
          %2825 = vdwg.mxu0
          %2826 = vmatpush.bf16.msra.mxu0 %v2269
          %2827 = vmatpush.bf16.msra.mxu0 %v2265
          %2828 = vmatpush.bf16.msra.mxu0 %v2261
          %2829 = vmatpush.bf16.msra.mxu0 %v2257
          %2830 = vmatpush.bf16.msra.mxu0 %v2253
          %2831 = vmatpush.bf16.msra.mxu0 %v2249
          %2832 = vmatpush.bf16.msra.mxu0 %v2245
          %2833 = vmatpush.bf16.msra.mxu0 %v2241
          %2834 = vmatmul.bf16.gmra.mxu0 %v980
          %v2835 = vpop.f32.mrf.mxu0
          %v2836 = vadd.f32 %v2823, %v2835
          %v2837 = vpop.f32.mrf.mxu0
          %2838 = vdwg.mxu0
          %2839 = vmatpush.bf16.msra.mxu0 %v2046
          %2840 = vmatpush.bf16.msra.mxu0 %v2042
          %2841 = vmatpush.bf16.msra.mxu0 %v2038
          %2842 = vmatpush.bf16.msra.mxu0 %v2034
          %2843 = vmatpush.bf16.msra.mxu0 %v2030
          %2844 = vmatpush.bf16.msra.mxu0 %v2026
          %2845 = vmatpush.bf16.msra.mxu0 %v2022
          %2846 = vmatpush.bf16.msra.mxu0 %v2018
          %2847 = vmatmul.bf16.gmra.mxu0 %v973
          %v2848 = vpop.f32.mrf.mxu0
          %v2849 = vadd.f32 %v1242, %v2848
          %v2850 = vpop.f32.mrf.mxu0
          %2851 = vdwg.mxu0
          %2852 = vmatpush.bf16.msra.mxu0 %v2078
          %2853 = vmatpush.bf16.msra.mxu0 %v2074
          %2854 = vmatpush.bf16.msra.mxu0 %v2070
          %2855 = vmatpush.bf16.msra.mxu0 %v2066
          %2856 = vmatpush.bf16.msra.mxu0 %v2062
          %2857 = vmatpush.bf16.msra.mxu0 %v2058
          %2858 = vmatpush.bf16.msra.mxu0 %v2054
          %2859 = vmatpush.bf16.msra.mxu0 %v2050
          %2860 = vmatmul.bf16.gmra.mxu0 %v974
          %v2861 = vpop.f32.mrf.mxu0
          %v2862 = vadd.f32 %v2849, %v2861
          %v2863 = vpop.f32.mrf.mxu0
          %2864 = vdwg.mxu0
          %2865 = vmatpush.bf16.msra.mxu0 %v2110
          %2866 = vmatpush.bf16.msra.mxu0 %v2106
          %2867 = vmatpush.bf16.msra.mxu0 %v2102
          %2868 = vmatpush.bf16.msra.mxu0 %v2098
          %2869 = vmatpush.bf16.msra.mxu0 %v2094
          %2870 = vmatpush.bf16.msra.mxu0 %v2090
          %2871 = vmatpush.bf16.msra.mxu0 %v2086
          %2872 = vmatpush.bf16.msra.mxu0 %v2082
          %2873 = vmatmul.bf16.gmra.mxu0 %v975
          %v2874 = vpop.f32.mrf.mxu0
          %v2875 = vadd.f32 %v2862, %v2874
          %v2876 = vpop.f32.mrf.mxu0
          %2877 = vdwg.mxu0
          %2878 = vmatpush.bf16.msra.mxu0 %v2142
          %2879 = vmatpush.bf16.msra.mxu0 %v2138
          %2880 = vmatpush.bf16.msra.mxu0 %v2134
          %2881 = vmatpush.bf16.msra.mxu0 %v2130
          %2882 = vmatpush.bf16.msra.mxu0 %v2126
          %2883 = vmatpush.bf16.msra.mxu0 %v2122
          %2884 = vmatpush.bf16.msra.mxu0 %v2118
          %2885 = vmatpush.bf16.msra.mxu0 %v2114
          %2886 = vmatmul.bf16.gmra.mxu0 %v976
          %v2887 = vpop.f32.mrf.mxu0
          %v2888 = vadd.f32 %v2875, %v2887
          %v2889 = vpop.f32.mrf.mxu0
          %2890 = vdwg.mxu0
          %2891 = vmatpush.bf16.msra.mxu0 %v2174
          %2892 = vmatpush.bf16.msra.mxu0 %v2170
          %2893 = vmatpush.bf16.msra.mxu0 %v2166
          %2894 = vmatpush.bf16.msra.mxu0 %v2162
          %2895 = vmatpush.bf16.msra.mxu0 %v2158
          %2896 = vmatpush.bf16.msra.mxu0 %v2154
          %2897 = vmatpush.bf16.msra.mxu0 %v2150
          %2898 = vmatpush.bf16.msra.mxu0 %v2146
          %2899 = vmatmul.bf16.gmra.mxu0 %v977
          %v2900 = vpop.f32.mrf.mxu0
          %v2901 = vadd.f32 %v2888, %v2900
          %v2902 = vpop.f32.mrf.mxu0
          %2903 = vdwg.mxu0
          %2904 = vmatpush.bf16.msra.mxu0 %v2206
          %2905 = vmatpush.bf16.msra.mxu0 %v2202
          %2906 = vmatpush.bf16.msra.mxu0 %v2198
          %2907 = vmatpush.bf16.msra.mxu0 %v2194
          %2908 = vmatpush.bf16.msra.mxu0 %v2190
          %2909 = vmatpush.bf16.msra.mxu0 %v2186
          %2910 = vmatpush.bf16.msra.mxu0 %v2182
          %2911 = vmatpush.bf16.msra.mxu0 %v2178
          %2912 = vmatmul.bf16.gmra.mxu0 %v978
          %v2913 = vpop.f32.mrf.mxu0
          %v2914 = vadd.f32 %v2901, %v2913
          %v2915 = vpop.f32.mrf.mxu0
          %2916 = vdwg.mxu0
          %2917 = vmatpush.bf16.msra.mxu0 %v2238
          %2918 = vmatpush.bf16.msra.mxu0 %v2234
          %2919 = vmatpush.bf16.msra.mxu0 %v2230
          %2920 = vmatpush.bf16.msra.mxu0 %v2226
          %2921 = vmatpush.bf16.msra.mxu0 %v2222
          %2922 = vmatpush.bf16.msra.mxu0 %v2218
          %2923 = vmatpush.bf16.msra.mxu0 %v2214
          %2924 = vmatpush.bf16.msra.mxu0 %v2210
          %2925 = vmatmul.bf16.gmra.mxu0 %v979
          %v2926 = vpop.f32.mrf.mxu0
          %v2927 = vadd.f32 %v2914, %v2926
          %v2928 = vpop.f32.mrf.mxu0
          %2929 = vdwg.mxu0
          %2930 = vmatpush.bf16.msra.mxu0 %v2270
          %2931 = vmatpush.bf16.msra.mxu0 %v2266
          %2932 = vmatpush.bf16.msra.mxu0 %v2262
          %2933 = vmatpush.bf16.msra.mxu0 %v2258
          %2934 = vmatpush.bf16.msra.mxu0 %v2254
          %2935 = vmatpush.bf16.msra.mxu0 %v2250
          %2936 = vmatpush.bf16.msra.mxu0 %v2246
          %2937 = vmatpush.bf16.msra.mxu0 %v2242
          %2938 = vmatmul.bf16.gmra.mxu0 %v980
          %v2939 = vpop.f32.mrf.mxu0
          %v2940 = vadd.f32 %v2927, %v2939
          %v2941 = vpop.f32.mrf.mxu0
          %2942 = vdwg.mxu0
          %v2943 = vmax.f32 %v2628, 0.0
          %v2944 = vmax.f32 %v2732, 0.0
          %v2945 = vmax.f32 %v2836, 0.0
          %v2946 = vmax.f32 %v2940, 0.0
          %v2951 = vrot.slane %v2944, 4
          %v2952 = vrot.slane %v2946, 4
          %v2953 = vsel %vm919, %v2943, %v2951
          %v2954 = vsel %vm919, %v2945, %v2952
          %v2955 = vsel %vm919, %v2951, %v2943
          %v2956 = vrot.slane %v2955, 4
          %v2957 = vsel %vm919, %v2952, %v2945
          %v2958 = vrot.slane %v2957, 4
          %2959 = vst [vmem:[#allocation1] ss:$2 sm:$0xff] %v2953
          %s2960 = scalar_lea.vmem [#allocation1], 16
          %2961 = vst [vmem:[%s2960] ss:$2 sm:$0xff] %v2954
          %v2962 = vld.sshfl [vmem:[#allocation1] sm:$0xff pattern:$0x75316420]
          %v2963 = vld.sshfl [vmem:[#allocation1 + $0x8] sm:$0xff pattern:$0x75316420]
          %v2964 = vld.sshfl [vmem:[#allocation1 + $0x10] sm:$0xff pattern:$0x75316420]
          %v2965 = vld.sshfl [vmem:[#allocation1 + $0x18] sm:$0xff pattern:$0x75316420]
          %s2966 = scalar_lea.vmem [#allocation1], 32
          %2967 = vst [vmem:[%s2966] ss:$2 sm:$0xff] %v2956
          %s2968 = scalar_lea.vmem [#allocation1], 48
          %2969 = vst [vmem:[%s2968] ss:$2 sm:$0xff] %v2958
          %v2970 = vld.sshfl [vmem:[#allocation1 + $0x20] sm:$0xff pattern:$0x75316420]
          %v2971 = vld.sshfl [vmem:[#allocation1 + $0x28] sm:$0xff pattern:$0x75316420]
          %v2972 = vld.sshfl [vmem:[#allocation1 + $0x30] sm:$0xff pattern:$0x75316420]
          %v2973 = vld.sshfl [vmem:[#allocation1 + $0x38] sm:$0xff pattern:$0x75316420]
          %v2982 = vpack.c.bf16 %v2963, %v2962
          %v2983 = vpack.c.bf16 %v2965, %v2964
          %v2984 = vpack.c.bf16 %v2971, %v2970
          %v2985 = vpack.c.bf16 %v2973, %v2972
          %v2990 = vrot.slane %v2982, 2
          %v2991 = vrot.slane %v2983, 4
          %v2992 = vrot.slane %v2983, 6
          %v2993 = vrot.slane %v2984, 2
          %v2994 = vrot.slane %v2985, 4
          %v2995 = vrot.slane %v2985, 6
          %v2998 = vsel %vm915, %v2982, %v2990
          %v3001 = vsel %vm917, %v2991, %v2992
          %v3002 = vsel %vm919, %v2998, %v3001
          %v3005 = vsel %vm915, %v2984, %v2993
          %v3008 = vsel %vm917, %v2994, %v2995
          %v3009 = vsel %vm919, %v3005, %v3008
          %3012 = vst [vmem:[#allocation2] sm:$0xff] %v3002
          %3013 = vst [vmem:[#allocation2 + $0x8] sm:$0xff] %v3009
          %3014 = vst [vmem:[#allocation3] sm:$0xf] 0.0
        $region100: #{cnn22_forward.1} parent=63 // pred_fallthru
          _
        %v3015 = vld [vmem:[#allocation2] sm:$0x55]
        %v3016 = vld [vmem:[#allocation2 + $0x8] sm:$0x55]
        %v3017 = vld [vmem:[%s476] sm:$0xff]
        %v3018 = vld [vmem:[%s476 + $0x8] sm:$0xff]
        %v3019 = vld [vmem:[%s476 + $0x10] sm:$0xff]
        %v3020 = vld [vmem:[%s476 + $0x18] sm:$0xff]
        %v3021 = vld [vmem:[%s476 + $0x20] sm:$0xff]
        %v3022 = vld [vmem:[%s476 + $0x28] sm:$0xff]
        %v3023 = vld [vmem:[%s476 + $0x30] sm:$0xff]
        %v3024 = vld [vmem:[%s476 + $0x38] sm:$0xff]
        %v3025 = vld [vmem:[%s476 + $0x40] sm:$0xff]
        %v3026 = vld [vmem:[%s476 + $0x48] sm:$0xff]
        %v3027 = vld [vmem:[%s476 + $0x50] sm:$0xff]
        %v3028 = vld [vmem:[%s476 + $0x58] sm:$0xff]
        %v3029 = vld [vmem:[%s476 + $0x60] sm:$0xff]
        %v3030 = vld [vmem:[%s476 + $0x68] sm:$0xff]
        %v3031 = vld [vmem:[%s476 + $0x70] sm:$0xff]
        %v3032 = vld [vmem:[%s476 + $0x78] sm:$0xff]
        %v3033 = vld [vmem:[%s476 + $0x80] sm:$0xff]
        %v3034 = vld [vmem:[%s476 + $0x88] sm:$0xff]
        %v3035 = vld [vmem:[%s476 + $0x90] sm:$0xff]
        %v3036 = vld [vmem:[%s476 + $0x98] sm:$0xff]
        %v3037 = vld [vmem:[%s476 + $0xa0] sm:$0xff]
        %v3038 = vld [vmem:[%s476 + $0xa8] sm:$0xff]
        %v3039 = vld [vmem:[%s476 + $0xb0] sm:$0xff]
        %v3040 = vld [vmem:[%s476 + $0xb8] sm:$0xff]
        %v3041 = vld [vmem:[%s476 + $0xc0] sm:$0xff]
        %v3042 = vld [vmem:[%s476 + $0xc8] sm:$0xff]
        %v3043 = vld [vmem:[%s476 + $0xd0] sm:$0xff]
        %v3044 = vld [vmem:[%s476 + $0xd8] sm:$0xff]
        %v3045 = vld [vmem:[%s476 + $0xe0] sm:$0xff]
        %v3046 = vld [vmem:[%s476 + $0xe8] sm:$0xff]
        %v3047 = vld [vmem:[%s476 + $0xf0] sm:$0xff]
        %v3048 = vld [vmem:[%s476 + $0xf8] sm:$0xff]
        %v3049 = vld [vmem:[%s476 + $0x100] sm:$0xff]
        %v3050 = vld [vmem:[%s476 + $0x108] sm:$0xff]
        %v3051 = vld [vmem:[%s476 + $0x110] sm:$0xff]
        %v3052 = vld [vmem:[%s476 + $0x118] sm:$0xff]
        %v3053 = vld [vmem:[%s476 + $0x120] sm:$0xff]
        %v3054 = vld [vmem:[%s476 + $0x128] sm:$0xff]
        %v3055 = vld [vmem:[%s476 + $0x130] sm:$0xff]
        %v3056 = vld [vmem:[%s476 + $0x138] sm:$0xff]
        %v3057 = vld [vmem:[%s476 + $0x140] sm:$0xff]
        %v3058 = vld [vmem:[%s476 + $0x148] sm:$0xff]
        %v3059 = vld [vmem:[%s476 + $0x150] sm:$0xff]
        %v3060 = vld [vmem:[%s476 + $0x158] sm:$0xff]
        %v3061 = vld [vmem:[%s476 + $0x160] sm:$0xff]
        %v3062 = vld [vmem:[%s476 + $0x168] sm:$0xff]
        %v3063 = vld [vmem:[%s476 + $0x170] sm:$0xff]
        %v3064 = vld [vmem:[%s476 + $0x178] sm:$0xff]
        %v3065 = vld [vmem:[%s476 + $0x180] sm:$0xff]
        %v3066 = vld [vmem:[%s476 + $0x188] sm:$0xff]
        %v3067 = vld [vmem:[%s476 + $0x190] sm:$0xff]
        %v3068 = vld [vmem:[%s476 + $0x198] sm:$0xff]
        %v3069 = vld [vmem:[%s476 + $0x1a0] sm:$0xff]
        %v3070 = vld [vmem:[%s476 + $0x1a8] sm:$0xff]
        %v3071 = vld [vmem:[%s476 + $0x1b0] sm:$0xff]
        %v3072 = vld [vmem:[%s476 + $0x1b8] sm:$0xff]
        %v3073 = vld [vmem:[%s476 + $0x1c0] sm:$0xff]
        %v3074 = vld [vmem:[%s476 + $0x1c8] sm:$0xff]
        %v3075 = vld [vmem:[%s476 + $0x1d0] sm:$0xff]
        %v3076 = vld [vmem:[%s476 + $0x1d8] sm:$0xff]
        %v3077 = vld [vmem:[%s476 + $0x1e0] sm:$0xff]
        %v3078 = vld [vmem:[%s476 + $0x1e8] sm:$0xff]
        %v3079 = vld [vmem:[%s476 + $0x1f0] sm:$0xff]
        %v3080 = vld [vmem:[%s476 + $0x1f8] sm:$0xff]
        %v3081 = vld [vmem:[%s476 + $0x200] sm:$0xff]
        %v3082 = vld [vmem:[%s476 + $0x208] sm:$0xff]
        %v3083 = vld [vmem:[%s476 + $0x210] sm:$0xff]
        %v3084 = vld [vmem:[%s476 + $0x218] sm:$0xff]
        %v3085 = vld [vmem:[%s476 + $0x220] sm:$0xff]
        %v3086 = vld [vmem:[%s476 + $0x228] sm:$0xff]
        %v3087 = vld [vmem:[%s476 + $0x230] sm:$0xff]
        %v3088 = vld [vmem:[%s476 + $0x238] sm:$0xff]
        %v3089 = vld [vmem:[%s476 + $0x240] sm:$0xff]
        %v3090 = vld [vmem:[%s476 + $0x248] sm:$0xff]
        %v3091 = vld [vmem:[%s476 + $0x250] sm:$0xff]
        %v3092 = vld [vmem:[%s476 + $0x258] sm:$0xff]
        %v3093 = vld [vmem:[%s476 + $0x260] sm:$0xff]
        %v3094 = vld [vmem:[%s476 + $0x268] sm:$0xff]
        %v3095 = vld [vmem:[%s476 + $0x270] sm:$0xff]
        %v3096 = vld [vmem:[%s476 + $0x278] sm:$0xff]
        %v3097 = vld [vmem:[%s476 + $0x280] sm:$0xff]
        %v3098 = vld [vmem:[%s476 + $0x288] sm:$0xff]
        %v3099 = vld [vmem:[%s476 + $0x290] sm:$0xff]
        %v3100 = vld [vmem:[%s476 + $0x298] sm:$0xff]
        %v3101 = vld [vmem:[%s476 + $0x2a0] sm:$0xff]
        %v3102 = vld [vmem:[%s476 + $0x2a8] sm:$0xff]
        %v3103 = vld [vmem:[%s476 + $0x2b0] sm:$0xff]
        %v3104 = vld [vmem:[%s476 + $0x2b8] sm:$0xff]
        %v3105 = vld [vmem:[%s476 + $0x2c0] sm:$0xff]
        %v3106 = vld [vmem:[%s476 + $0x2c8] sm:$0xff]
        %v3107 = vld [vmem:[%s476 + $0x2d0] sm:$0xff]
        %v3108 = vld [vmem:[%s476 + $0x2d8] sm:$0xff]
        %v3109 = vld [vmem:[%s476 + $0x2e0] sm:$0xff]
        %v3110 = vld [vmem:[%s476 + $0x2e8] sm:$0xff]
        %v3111 = vld [vmem:[%s476 + $0x2f0] sm:$0xff]
        %v3112 = vld [vmem:[%s476 + $0x2f8] sm:$0xff]
        %v3113 = vld [vmem:[%s476 + $0x300] sm:$0xff]
        %v3114 = vld [vmem:[%s476 + $0x308] sm:$0xff]
        %v3115 = vld [vmem:[%s476 + $0x310] sm:$0xff]
        %v3116 = vld [vmem:[%s476 + $0x318] sm:$0xff]
        %v3117 = vld [vmem:[%s476 + $0x320] sm:$0xff]
        %v3118 = vld [vmem:[%s476 + $0x328] sm:$0xff]
        %v3119 = vld [vmem:[%s476 + $0x330] sm:$0xff]
        %v3120 = vld [vmem:[%s476 + $0x338] sm:$0xff]
        %v3121 = vld [vmem:[%s476 + $0x340] sm:$0xff]
        %v3122 = vld [vmem:[%s476 + $0x348] sm:$0xff]
        %v3123 = vld [vmem:[%s476 + $0x350] sm:$0xff]
        %v3124 = vld [vmem:[%s476 + $0x358] sm:$0xff]
        %v3125 = vld [vmem:[%s476 + $0x360] sm:$0xff]
        %v3126 = vld [vmem:[%s476 + $0x368] sm:$0xff]
        %v3127 = vld [vmem:[%s476 + $0x370] sm:$0xff]
        %v3128 = vld [vmem:[%s476 + $0x378] sm:$0xff]
        %v3129 = vld [vmem:[%s476 + $0x380] sm:$0xff]
        %v3130 = vld [vmem:[%s476 + $0x388] sm:$0xff]
        %v3131 = vld [vmem:[%s476 + $0x390] sm:$0xff]
        %v3132 = vld [vmem:[%s476 + $0x398] sm:$0xff]
        %v3133 = vld [vmem:[%s476 + $0x3a0] sm:$0xff]
        %v3134 = vld [vmem:[%s476 + $0x3a8] sm:$0xff]
        %v3135 = vld [vmem:[%s476 + $0x3b0] sm:$0xff]
        %v3136 = vld [vmem:[%s476 + $0x3b8] sm:$0xff]
        %v3137 = vld [vmem:[%s476 + $0x3c0] sm:$0xff]
        %v3138 = vld [vmem:[%s476 + $0x3c8] sm:$0xff]
        %v3139 = vld [vmem:[%s476 + $0x3d0] sm:$0xff]
        %v3140 = vld [vmem:[%s476 + $0x3d8] sm:$0xff]
        %v3141 = vld [vmem:[%s476 + $0x3e0] sm:$0xff]
        %v3142 = vld [vmem:[%s476 + $0x3e8] sm:$0xff]
        %v3143 = vld [vmem:[%s476 + $0x3f0] sm:$0xff]
        %v3144 = vld [vmem:[%s476 + $0x3f8] sm:$0xff]
        %s3145 = scalar_lea.vmem %s476, 1024 [#allocation12]
        %v3146 = vld [vmem:[%s3145] sm:$0xff]
        %v3147 = vld [vmem:[%s3145 + $0x8] sm:$0xff]
        %v3148 = vld [vmem:[%s3145 + $0x10] sm:$0xff]
        %v3149 = vld [vmem:[%s3145 + $0x18] sm:$0xff]
        %v3150 = vld [vmem:[%s3145 + $0x20] sm:$0xff]
        %v3151 = vld [vmem:[%s3145 + $0x28] sm:$0xff]
        %v3152 = vld [vmem:[%s3145 + $0x30] sm:$0xff]
        %v3153 = vld [vmem:[%s3145 + $0x38] sm:$0xff]
        %v3154 = vld [vmem:[%s3145 + $0x40] sm:$0xff]
        %v3155 = vld [vmem:[%s3145 + $0x48] sm:$0xff]
        %v3156 = vld [vmem:[%s3145 + $0x50] sm:$0xff]
        %v3157 = vld [vmem:[%s3145 + $0x58] sm:$0xff]
        %v3158 = vld [vmem:[%s3145 + $0x60] sm:$0xff]
        %v3159 = vld [vmem:[%s3145 + $0x68] sm:$0xff]
        %v3160 = vld [vmem:[%s3145 + $0x70] sm:$0xff]
        %v3161 = vld [vmem:[%s3145 + $0x78] sm:$0xff]
        %v3162 = vld [vmem:[%s3145 + $0x80] sm:$0xff]
        %v3163 = vld [vmem:[%s3145 + $0x88] sm:$0xff]
        %v3164 = vld [vmem:[%s3145 + $0x90] sm:$0xff]
        %v3165 = vld [vmem:[%s3145 + $0x98] sm:$0xff]
        %v3166 = vld [vmem:[%s3145 + $0xa0] sm:$0xff]
        %v3167 = vld [vmem:[%s3145 + $0xa8] sm:$0xff]
        %v3168 = vld [vmem:[%s3145 + $0xb0] sm:$0xff]
        %v3169 = vld [vmem:[%s3145 + $0xb8] sm:$0xff]
        %v3170 = vld [vmem:[%s3145 + $0xc0] sm:$0xff]
        %v3171 = vld [vmem:[%s3145 + $0xc8] sm:$0xff]
        %v3172 = vld [vmem:[%s3145 + $0xd0] sm:$0xff]
        %v3173 = vld [vmem:[%s3145 + $0xd8] sm:$0xff]
        %v3174 = vld [vmem:[%s3145 + $0xe0] sm:$0xff]
        %v3175 = vld [vmem:[%s3145 + $0xe8] sm:$0xff]
        %v3176 = vld [vmem:[%s3145 + $0xf0] sm:$0xff]
        %v3177 = vld [vmem:[%s3145 + $0xf8] sm:$0xff]
        %v3178 = vld [vmem:[%s3145 + $0x100] sm:$0xff]
        %v3179 = vld [vmem:[%s3145 + $0x108] sm:$0xff]
        %v3180 = vld [vmem:[%s3145 + $0x110] sm:$0xff]
        %v3181 = vld [vmem:[%s3145 + $0x118] sm:$0xff]
        %v3182 = vld [vmem:[%s3145 + $0x120] sm:$0xff]
        %v3183 = vld [vmem:[%s3145 + $0x128] sm:$0xff]
        %v3184 = vld [vmem:[%s3145 + $0x130] sm:$0xff]
        %v3185 = vld [vmem:[%s3145 + $0x138] sm:$0xff]
        %v3186 = vld [vmem:[%s3145 + $0x140] sm:$0xff]
        %v3187 = vld [vmem:[%s3145 + $0x148] sm:$0xff]
        %v3188 = vld [vmem:[%s3145 + $0x150] sm:$0xff]
        %v3189 = vld [vmem:[%s3145 + $0x158] sm:$0xff]
        %v3190 = vld [vmem:[%s3145 + $0x160] sm:$0xff]
        %v3191 = vld [vmem:[%s3145 + $0x168] sm:$0xff]
        %v3192 = vld [vmem:[%s3145 + $0x170] sm:$0xff]
        %v3193 = vld [vmem:[%s3145 + $0x178] sm:$0xff]
        %v3194 = vld [vmem:[%s3145 + $0x180] sm:$0xff]
        %v3195 = vld [vmem:[%s3145 + $0x188] sm:$0xff]
        %v3196 = vld [vmem:[%s3145 + $0x190] sm:$0xff]
        %v3197 = vld [vmem:[%s3145 + $0x198] sm:$0xff]
        %v3198 = vld [vmem:[%s3145 + $0x1a0] sm:$0xff]
        %v3199 = vld [vmem:[%s3145 + $0x1a8] sm:$0xff]
        %v3200 = vld [vmem:[%s3145 + $0x1b0] sm:$0xff]
        %v3201 = vld [vmem:[%s3145 + $0x1b8] sm:$0xff]
        %v3202 = vld [vmem:[%s3145 + $0x1c0] sm:$0xff]
        %v3203 = vld [vmem:[%s3145 + $0x1c8] sm:$0xff]
        %v3204 = vld [vmem:[%s3145 + $0x1d0] sm:$0xff]
        %v3205 = vld [vmem:[%s3145 + $0x1d8] sm:$0xff]
        %v3206 = vld [vmem:[%s3145 + $0x1e0] sm:$0xff]
        %v3207 = vld [vmem:[%s3145 + $0x1e8] sm:$0xff]
        %v3208 = vld [vmem:[%s3145 + $0x1f0] sm:$0xff]
        %v3209 = vld [vmem:[%s3145 + $0x1f8] sm:$0xff]
        %v3210 = vld [vmem:[%s3145 + $0x200] sm:$0xff]
        %v3211 = vld [vmem:[%s3145 + $0x208] sm:$0xff]
        %v3212 = vld [vmem:[%s3145 + $0x210] sm:$0xff]
        %v3213 = vld [vmem:[%s3145 + $0x218] sm:$0xff]
        %v3214 = vld [vmem:[%s3145 + $0x220] sm:$0xff]
        %v3215 = vld [vmem:[%s3145 + $0x228] sm:$0xff]
        %v3216 = vld [vmem:[%s3145 + $0x230] sm:$0xff]
        %v3217 = vld [vmem:[%s3145 + $0x238] sm:$0xff]
        %v3218 = vld [vmem:[%s3145 + $0x240] sm:$0xff]
        %v3219 = vld [vmem:[%s3145 + $0x248] sm:$0xff]
        %v3220 = vld [vmem:[%s3145 + $0x250] sm:$0xff]
        %v3221 = vld [vmem:[%s3145 + $0x258] sm:$0xff]
        %v3222 = vld [vmem:[%s3145 + $0x260] sm:$0xff]
        %v3223 = vld [vmem:[%s3145 + $0x268] sm:$0xff]
        %v3224 = vld [vmem:[%s3145 + $0x270] sm:$0xff]
        %v3225 = vld [vmem:[%s3145 + $0x278] sm:$0xff]
        %v3226 = vld [vmem:[%s3145 + $0x280] sm:$0xff]
        %v3227 = vld [vmem:[%s3145 + $0x288] sm:$0xff]
        %v3228 = vld [vmem:[%s3145 + $0x290] sm:$0xff]
        %v3229 = vld [vmem:[%s3145 + $0x298] sm:$0xff]
        %v3230 = vld [vmem:[%s3145 + $0x2a0] sm:$0xff]
        %v3231 = vld [vmem:[%s3145 + $0x2a8] sm:$0xff]
        %v3232 = vld [vmem:[%s3145 + $0x2b0] sm:$0xff]
        %v3233 = vld [vmem:[%s3145 + $0x2b8] sm:$0xff]
        %v3234 = vld [vmem:[%s3145 + $0x2c0] sm:$0xff]
        %v3235 = vld [vmem:[%s3145 + $0x2c8] sm:$0xff]
        %v3236 = vld [vmem:[%s3145 + $0x2d0] sm:$0xff]
        %v3237 = vld [vmem:[%s3145 + $0x2d8] sm:$0xff]
        %v3238 = vld [vmem:[%s3145 + $0x2e0] sm:$0xff]
        %v3239 = vld [vmem:[%s3145 + $0x2e8] sm:$0xff]
        %v3240 = vld [vmem:[%s3145 + $0x2f0] sm:$0xff]
        %v3241 = vld [vmem:[%s3145 + $0x2f8] sm:$0xff]
        %v3242 = vld [vmem:[%s3145 + $0x300] sm:$0xff]
        %v3243 = vld [vmem:[%s3145 + $0x308] sm:$0xff]
        %v3244 = vld [vmem:[%s3145 + $0x310] sm:$0xff]
        %v3245 = vld [vmem:[%s3145 + $0x318] sm:$0xff]
        %v3246 = vld [vmem:[%s3145 + $0x320] sm:$0xff]
        %v3247 = vld [vmem:[%s3145 + $0x328] sm:$0xff]
        %v3248 = vld [vmem:[%s3145 + $0x330] sm:$0xff]
        %v3249 = vld [vmem:[%s3145 + $0x338] sm:$0xff]
        %v3250 = vld [vmem:[%s3145 + $0x340] sm:$0xff]
        %v3251 = vld [vmem:[%s3145 + $0x348] sm:$0xff]
        %v3252 = vld [vmem:[%s3145 + $0x350] sm:$0xff]
        %v3253 = vld [vmem:[%s3145 + $0x358] sm:$0xff]
        %v3254 = vld [vmem:[%s3145 + $0x360] sm:$0xff]
        %v3255 = vld [vmem:[%s3145 + $0x368] sm:$0xff]
        %v3256 = vld [vmem:[%s3145 + $0x370] sm:$0xff]
        %v3257 = vld [vmem:[%s3145 + $0x378] sm:$0xff]
        %v3258 = vld [vmem:[%s3145 + $0x380] sm:$0xff]
        %v3259 = vld [vmem:[%s3145 + $0x388] sm:$0xff]
        %v3260 = vld [vmem:[%s3145 + $0x390] sm:$0xff]
        %v3261 = vld [vmem:[%s3145 + $0x398] sm:$0xff]
        %v3262 = vld [vmem:[%s3145 + $0x3a0] sm:$0xff]
        %v3263 = vld [vmem:[%s3145 + $0x3a8] sm:$0xff]
        %v3264 = vld [vmem:[%s3145 + $0x3b0] sm:$0xff]
        %v3265 = vld [vmem:[%s3145 + $0x3b8] sm:$0xff]
        %v3266 = vld [vmem:[%s3145 + $0x3c0] sm:$0xff]
        %v3267 = vld [vmem:[%s3145 + $0x3c8] sm:$0xff]
        %v3268 = vld [vmem:[%s3145 + $0x3d0] sm:$0xff]
        %v3269 = vld [vmem:[%s3145 + $0x3d8] sm:$0xff]
        %v3270 = vld [vmem:[%s3145 + $0x3e0] sm:$0xff]
        %v3271 = vld [vmem:[%s3145 + $0x3e8] sm:$0xff]
        %v3272 = vld [vmem:[%s3145 + $0x3f0] sm:$0xff]
        %v3273 = vld [vmem:[%s3145 + $0x3f8] sm:$0xff]
        %3275 = vst [vmem:[#allocation1] ss:$4 sm:$0xff] %v3015
        %v3276 = vld.sshfl [vmem:[#allocation1] sm:$0xff pattern:$0x73625140]
        %v3278 = vld.sshfl [vmem:[#allocation1 + $0x8] sm:$0xff pattern:$0x73625140]
        %v3280 = vld.sshfl [vmem:[#allocation1 + $0x10] sm:$0xff pattern:$0x73625140]
        %v3282 = vld.sshfl [vmem:[#allocation1 + $0x18] sm:$0xff pattern:$0x73625140]
        %s3285 = scalar_lea.vmem [#allocation1], 32
        %3286 = vst [vmem:[%s3285] ss:$4 sm:$0xff] %v3016
        %v3287 = vld.sshfl [vmem:[#allocation1 + $0x20] sm:$0xff pattern:$0x73625140]
        %v3289 = vld.sshfl [vmem:[#allocation1 + $0x28] sm:$0xff pattern:$0x73625140]
        %v3291 = vld.sshfl [vmem:[#allocation1 + $0x30] sm:$0xff pattern:$0x73625140]
        %v3293 = vld.sshfl [vmem:[#allocation1 + $0x38] sm:$0xff pattern:$0x73625140]
        %v3295 = vunpack.c.l.b16 %v3276
        %v3296 = vunpack.c.l.b16 %v3278
        %v3297 = vunpack.c.l.b16 %v3280
        %v3298 = vunpack.c.l.b16 %v3282
        %v3299 = vunpack.c.l.b16 %v3287
        %v3300 = vunpack.c.l.b16 %v3289
        %v3301 = vunpack.c.l.b16 %v3291
        %v3302 = vunpack.c.l.b16 %v3293
        %v3303 = vrot.slane %v3295, 1
        %vm3304 = vcmask 1041409
        %v3305 = vsel %vm3304, %v3299, %v3303
        %v3306 = vrot.slane %v3296, 1
        %v3307 = vsel %vm3304, %v3300, %v3306
        %v3308 = vrot.slane %v3297, 1
        %v3309 = vsel %vm3304, %v3301, %v3308
        %v3310 = vrot.slane %v3298, 1
        %v3311 = vsel %vm3304, %v3302, %v3310
        %v3312 = vpack.c.b16 %v3305, %v3305
        %v3313 = vpack.c.b16 %v3307, %v3307
        %v3314 = vpack.c.b16 %v3309, %v3309
        %v3315 = vpack.c.b16 %v3311, %v3311
        %v3448 = vunpack.c.l.b16 %v3146
        %v3449 = vunpack.c.h.b16 %v3146
        %v3450 = vunpack.c.l.b16 %v3147
        %v3451 = vunpack.c.h.b16 %v3147
        %v3452 = vunpack.c.l.b16 %v3148
        %v3453 = vunpack.c.h.b16 %v3148
        %v3454 = vunpack.c.l.b16 %v3149
        %v3455 = vunpack.c.h.b16 %v3149
        %v3456 = vunpack.c.l.b16 %v3150
        %v3457 = vunpack.c.h.b16 %v3150
        %v3458 = vunpack.c.l.b16 %v3151
        %v3459 = vunpack.c.h.b16 %v3151
        %v3460 = vunpack.c.l.b16 %v3152
        %v3461 = vunpack.c.h.b16 %v3152
        %v3462 = vunpack.c.l.b16 %v3153
        %v3463 = vunpack.c.h.b16 %v3153
        %v3464 = vunpack.c.l.b16 %v3154
        %v3465 = vunpack.c.h.b16 %v3154
        %v3466 = vunpack.c.l.b16 %v3155
        %v3467 = vunpack.c.h.b16 %v3155
        %v3468 = vunpack.c.l.b16 %v3156
        %v3469 = vunpack.c.h.b16 %v3156
        %v3470 = vunpack.c.l.b16 %v3157
        %v3471 = vunpack.c.h.b16 %v3157
        %v3472 = vunpack.c.l.b16 %v3158
        %v3473 = vunpack.c.h.b16 %v3158
        %v3474 = vunpack.c.l.b16 %v3159
        %v3475 = vunpack.c.h.b16 %v3159
        %v3476 = vunpack.c.l.b16 %v3160
        %v3477 = vunpack.c.h.b16 %v3160
        %v3478 = vunpack.c.l.b16 %v3161
        %v3479 = vunpack.c.h.b16 %v3161
        %v3480 = vunpack.c.l.b16 %v3162
        %v3481 = vunpack.c.h.b16 %v3162
        %v3482 = vunpack.c.l.b16 %v3163
        %v3483 = vunpack.c.h.b16 %v3163
        %v3484 = vunpack.c.l.b16 %v3164
        %v3485 = vunpack.c.h.b16 %v3164
        %v3486 = vunpack.c.l.b16 %v3165
        %v3487 = vunpack.c.h.b16 %v3165
        %v3488 = vunpack.c.l.b16 %v3166
        %v3489 = vunpack.c.h.b16 %v3166
        %v3490 = vunpack.c.l.b16 %v3167
        %v3491 = vunpack.c.h.b16 %v3167
        %v3492 = vunpack.c.l.b16 %v3168
        %v3493 = vunpack.c.h.b16 %v3168
        %v3494 = vunpack.c.l.b16 %v3169
        %v3495 = vunpack.c.h.b16 %v3169
        %v3496 = vunpack.c.l.b16 %v3170
        %v3497 = vunpack.c.h.b16 %v3170
        %v3498 = vunpack.c.l.b16 %v3171
        %v3499 = vunpack.c.h.b16 %v3171
        %v3500 = vunpack.c.l.b16 %v3172
        %v3501 = vunpack.c.h.b16 %v3172
        %v3502 = vunpack.c.l.b16 %v3173
        %v3503 = vunpack.c.h.b16 %v3173
        %v3504 = vunpack.c.l.b16 %v3174
        %v3505 = vunpack.c.h.b16 %v3174
        %v3506 = vunpack.c.l.b16 %v3175
        %v3507 = vunpack.c.h.b16 %v3175
        %v3508 = vunpack.c.l.b16 %v3176
        %v3509 = vunpack.c.h.b16 %v3176
        %v3510 = vunpack.c.l.b16 %v3177
        %v3511 = vunpack.c.h.b16 %v3177
        %v3512 = vunpack.c.l.b16 %v3178
        %v3513 = vunpack.c.h.b16 %v3178
        %v3514 = vunpack.c.l.b16 %v3179
        %v3515 = vunpack.c.h.b16 %v3179
        %v3516 = vunpack.c.l.b16 %v3180
        %v3517 = vunpack.c.h.b16 %v3180
        %v3518 = vunpack.c.l.b16 %v3181
        %v3519 = vunpack.c.h.b16 %v3181
        %v3520 = vunpack.c.l.b16 %v3182
        %v3521 = vunpack.c.h.b16 %v3182
        %v3522 = vunpack.c.l.b16 %v3183
        %v3523 = vunpack.c.h.b16 %v3183
        %v3524 = vunpack.c.l.b16 %v3184
        %v3525 = vunpack.c.h.b16 %v3184
        %v3526 = vunpack.c.l.b16 %v3185
        %v3527 = vunpack.c.h.b16 %v3185
        %v3528 = vunpack.c.l.b16 %v3186
        %v3529 = vunpack.c.h.b16 %v3186
        %v3530 = vunpack.c.l.b16 %v3187
        %v3531 = vunpack.c.h.b16 %v3187
        %v3532 = vunpack.c.l.b16 %v3188
        %v3533 = vunpack.c.h.b16 %v3188
        %v3534 = vunpack.c.l.b16 %v3189
        %v3535 = vunpack.c.h.b16 %v3189
        %v3536 = vunpack.c.l.b16 %v3190
        %v3537 = vunpack.c.h.b16 %v3190
        %v3538 = vunpack.c.l.b16 %v3191
        %v3539 = vunpack.c.h.b16 %v3191
        %v3540 = vunpack.c.l.b16 %v3192
        %v3541 = vunpack.c.h.b16 %v3192
        %v3542 = vunpack.c.l.b16 %v3193
        %v3543 = vunpack.c.h.b16 %v3193
        %v3544 = vunpack.c.l.b16 %v3194
        %v3545 = vunpack.c.h.b16 %v3194
        %v3546 = vunpack.c.l.b16 %v3195
        %v3547 = vunpack.c.h.b16 %v3195
        %v3548 = vunpack.c.l.b16 %v3196
        %v3549 = vunpack.c.h.b16 %v3196
        %v3550 = vunpack.c.l.b16 %v3197
        %v3551 = vunpack.c.h.b16 %v3197
        %v3552 = vunpack.c.l.b16 %v3198
        %v3553 = vunpack.c.h.b16 %v3198
        %v3554 = vunpack.c.l.b16 %v3199
        %v3555 = vunpack.c.h.b16 %v3199
        %v3556 = vunpack.c.l.b16 %v3200
        %v3557 = vunpack.c.h.b16 %v3200
        %v3558 = vunpack.c.l.b16 %v3201
        %v3559 = vunpack.c.h.b16 %v3201
        %v3560 = vunpack.c.l.b16 %v3202
        %v3561 = vunpack.c.h.b16 %v3202
        %v3562 = vunpack.c.l.b16 %v3203
        %v3563 = vunpack.c.h.b16 %v3203
        %v3564 = vunpack.c.l.b16 %v3204
        %v3565 = vunpack.c.h.b16 %v3204
        %v3566 = vunpack.c.l.b16 %v3205
        %v3567 = vunpack.c.h.b16 %v3205
        %v3568 = vunpack.c.l.b16 %v3206
        %v3569 = vunpack.c.h.b16 %v3206
        %v3570 = vunpack.c.l.b16 %v3207
        %v3571 = vunpack.c.h.b16 %v3207
        %v3572 = vunpack.c.l.b16 %v3208
        %v3573 = vunpack.c.h.b16 %v3208
        %v3574 = vunpack.c.l.b16 %v3209
        %v3575 = vunpack.c.h.b16 %v3209
        %v3576 = vunpack.c.l.b16 %v3210
        %v3577 = vunpack.c.h.b16 %v3210
        %v3578 = vunpack.c.l.b16 %v3211
        %v3579 = vunpack.c.h.b16 %v3211
        %v3580 = vunpack.c.l.b16 %v3212
        %v3581 = vunpack.c.h.b16 %v3212
        %v3582 = vunpack.c.l.b16 %v3213
        %v3583 = vunpack.c.h.b16 %v3213
        %v3584 = vunpack.c.l.b16 %v3214
        %v3585 = vunpack.c.h.b16 %v3214
        %v3586 = vunpack.c.l.b16 %v3215
        %v3587 = vunpack.c.h.b16 %v3215
        %v3588 = vunpack.c.l.b16 %v3216
        %v3589 = vunpack.c.h.b16 %v3216
        %v3590 = vunpack.c.l.b16 %v3217
        %v3591 = vunpack.c.h.b16 %v3217
        %v3592 = vunpack.c.l.b16 %v3218
        %v3593 = vunpack.c.h.b16 %v3218
        %v3594 = vunpack.c.l.b16 %v3219
        %v3595 = vunpack.c.h.b16 %v3219
        %v3596 = vunpack.c.l.b16 %v3220
        %v3597 = vunpack.c.h.b16 %v3220
        %v3598 = vunpack.c.l.b16 %v3221
        %v3599 = vunpack.c.h.b16 %v3221
        %v3600 = vunpack.c.l.b16 %v3222
        %v3601 = vunpack.c.h.b16 %v3222
        %v3602 = vunpack.c.l.b16 %v3223
        %v3603 = vunpack.c.h.b16 %v3223
        %v3604 = vunpack.c.l.b16 %v3224
        %v3605 = vunpack.c.h.b16 %v3224
        %v3606 = vunpack.c.l.b16 %v3225
        %v3607 = vunpack.c.h.b16 %v3225
        %v3608 = vunpack.c.l.b16 %v3226
        %v3609 = vunpack.c.h.b16 %v3226
        %v3610 = vunpack.c.l.b16 %v3227
        %v3611 = vunpack.c.h.b16 %v3227
        %v3612 = vunpack.c.l.b16 %v3228
        %v3613 = vunpack.c.h.b16 %v3228
        %v3614 = vunpack.c.l.b16 %v3229
        %v3615 = vunpack.c.h.b16 %v3229
        %v3616 = vunpack.c.l.b16 %v3230
        %v3617 = vunpack.c.h.b16 %v3230
        %v3618 = vunpack.c.l.b16 %v3231
        %v3619 = vunpack.c.h.b16 %v3231
        %v3620 = vunpack.c.l.b16 %v3232
        %v3621 = vunpack.c.h.b16 %v3232
        %v3622 = vunpack.c.l.b16 %v3233
        %v3623 = vunpack.c.h.b16 %v3233
        %v3624 = vunpack.c.l.b16 %v3234
        %v3625 = vunpack.c.h.b16 %v3234
        %v3626 = vunpack.c.l.b16 %v3235
        %v3627 = vunpack.c.h.b16 %v3235
        %v3628 = vunpack.c.l.b16 %v3236
        %v3629 = vunpack.c.h.b16 %v3236
        %v3630 = vunpack.c.l.b16 %v3237
        %v3631 = vunpack.c.h.b16 %v3237
        %v3632 = vunpack.c.l.b16 %v3238
        %v3633 = vunpack.c.h.b16 %v3238
        %v3634 = vunpack.c.l.b16 %v3239
        %v3635 = vunpack.c.h.b16 %v3239
        %v3636 = vunpack.c.l.b16 %v3240
        %v3637 = vunpack.c.h.b16 %v3240
        %v3638 = vunpack.c.l.b16 %v3241
        %v3639 = vunpack.c.h.b16 %v3241
        %v3640 = vunpack.c.l.b16 %v3242
        %v3641 = vunpack.c.h.b16 %v3242
        %v3642 = vunpack.c.l.b16 %v3243
        %v3643 = vunpack.c.h.b16 %v3243
        %v3644 = vunpack.c.l.b16 %v3244
        %v3645 = vunpack.c.h.b16 %v3244
        %v3646 = vunpack.c.l.b16 %v3245
        %v3647 = vunpack.c.h.b16 %v3245
        %v3648 = vunpack.c.l.b16 %v3246
        %v3649 = vunpack.c.h.b16 %v3246
        %v3650 = vunpack.c.l.b16 %v3247
        %v3651 = vunpack.c.h.b16 %v3247
        %v3652 = vunpack.c.l.b16 %v3248
        %v3653 = vunpack.c.h.b16 %v3248
        %v3654 = vunpack.c.l.b16 %v3249
        %v3655 = vunpack.c.h.b16 %v3249
        %v3656 = vunpack.c.l.b16 %v3250
        %v3657 = vunpack.c.h.b16 %v3250
        %v3658 = vunpack.c.l.b16 %v3251
        %v3659 = vunpack.c.h.b16 %v3251
        %v3660 = vunpack.c.l.b16 %v3252
        %v3661 = vunpack.c.h.b16 %v3252
        %v3662 = vunpack.c.l.b16 %v3253
        %v3663 = vunpack.c.h.b16 %v3253
        %v3664 = vunpack.c.l.b16 %v3254
        %v3665 = vunpack.c.h.b16 %v3254
        %v3666 = vunpack.c.l.b16 %v3255
        %v3667 = vunpack.c.h.b16 %v3255
        %v3668 = vunpack.c.l.b16 %v3256
        %v3669 = vunpack.c.h.b16 %v3256
        %v3670 = vunpack.c.l.b16 %v3257
        %v3671 = vunpack.c.h.b16 %v3257
        %v3672 = vunpack.c.l.b16 %v3258
        %v3673 = vunpack.c.h.b16 %v3258
        %v3674 = vunpack.c.l.b16 %v3259
        %v3675 = vunpack.c.h.b16 %v3259
        %v3676 = vunpack.c.l.b16 %v3260
        %v3677 = vunpack.c.h.b16 %v3260
        %v3678 = vunpack.c.l.b16 %v3261
        %v3679 = vunpack.c.h.b16 %v3261
        %v3680 = vunpack.c.l.b16 %v3262
        %v3681 = vunpack.c.h.b16 %v3262
        %v3682 = vunpack.c.l.b16 %v3263
        %v3683 = vunpack.c.h.b16 %v3263
        %v3684 = vunpack.c.l.b16 %v3264
        %v3685 = vunpack.c.h.b16 %v3264
        %v3686 = vunpack.c.l.b16 %v3265
        %v3687 = vunpack.c.h.b16 %v3265
        %v3688 = vunpack.c.l.b16 %v3266
        %v3689 = vunpack.c.h.b16 %v3266
        %v3690 = vunpack.c.l.b16 %v3267
        %v3691 = vunpack.c.h.b16 %v3267
        %v3692 = vunpack.c.l.b16 %v3268
        %v3693 = vunpack.c.h.b16 %v3268
        %v3694 = vunpack.c.l.b16 %v3269
        %v3695 = vunpack.c.h.b16 %v3269
        %v3696 = vunpack.c.l.b16 %v3270
        %v3697 = vunpack.c.h.b16 %v3270
        %v3698 = vunpack.c.l.b16 %v3271
        %v3699 = vunpack.c.h.b16 %v3271
        %v3700 = vunpack.c.l.b16 %v3272
        %v3701 = vunpack.c.h.b16 %v3272
        %v3702 = vunpack.c.l.b16 %v3273
        %v3703 = vunpack.c.h.b16 %v3273
        %v3704 = vpack.c.b16 %v3452, %v3448
        %v3705 = vpack.c.b16 %v3453, %v3449
        %v3706 = vpack.c.b16 %v3454, %v3450
        %v3707 = vpack.c.b16 %v3455, %v3451
        %v3708 = vpack.c.b16 %v3460, %v3456
        %v3709 = vpack.c.b16 %v3461, %v3457
        %v3710 = vpack.c.b16 %v3462, %v3458
        %v3711 = vpack.c.b16 %v3463, %v3459
        %v3712 = vpack.c.b16 %v3468, %v3464
        %v3713 = vpack.c.b16 %v3469, %v3465
        %v3714 = vpack.c.b16 %v3470, %v3466
        %v3715 = vpack.c.b16 %v3471, %v3467
        %v3716 = vpack.c.b16 %v3476, %v3472
        %v3717 = vpack.c.b16 %v3477, %v3473
        %v3718 = vpack.c.b16 %v3478, %v3474
        %v3719 = vpack.c.b16 %v3479, %v3475
        %v3720 = vpack.c.b16 %v3484, %v3480
        %v3721 = vpack.c.b16 %v3485, %v3481
        %v3722 = vpack.c.b16 %v3486, %v3482
        %v3723 = vpack.c.b16 %v3487, %v3483
        %v3724 = vpack.c.b16 %v3492, %v3488
        %v3725 = vpack.c.b16 %v3493, %v3489
        %v3726 = vpack.c.b16 %v3494, %v3490
        %v3727 = vpack.c.b16 %v3495, %v3491
        %v3728 = vpack.c.b16 %v3500, %v3496
        %v3729 = vpack.c.b16 %v3501, %v3497
        %v3730 = vpack.c.b16 %v3502, %v3498
        %v3731 = vpack.c.b16 %v3503, %v3499
        %v3732 = vpack.c.b16 %v3508, %v3504
        %v3733 = vpack.c.b16 %v3509, %v3505
        %v3734 = vpack.c.b16 %v3510, %v3506
        %v3735 = vpack.c.b16 %v3511, %v3507
        %v3736 = vpack.c.b16 %v3516, %v3512
        %v3737 = vpack.c.b16 %v3517, %v3513
        %v3738 = vpack.c.b16 %v3518, %v3514
        %v3739 = vpack.c.b16 %v3519, %v3515
        %v3740 = vpack.c.b16 %v3524, %v3520
        %v3741 = vpack.c.b16 %v3525, %v3521
        %v3742 = vpack.c.b16 %v3526, %v3522
        %v3743 = vpack.c.b16 %v3527, %v3523
        %v3744 = vpack.c.b16 %v3532, %v3528
        %v3745 = vpack.c.b16 %v3533, %v3529
        %v3746 = vpack.c.b16 %v3534, %v3530
        %v3747 = vpack.c.b16 %v3535, %v3531
        %v3748 = vpack.c.b16 %v3540, %v3536
        %v3749 = vpack.c.b16 %v3541, %v3537
        %v3750 = vpack.c.b16 %v3542, %v3538
        %v3751 = vpack.c.b16 %v3543, %v3539
        %v3752 = vpack.c.b16 %v3548, %v3544
        %v3753 = vpack.c.b16 %v3549, %v3545
        %v3754 = vpack.c.b16 %v3550, %v3546
        %v3755 = vpack.c.b16 %v3551, %v3547
        %v3756 = vpack.c.b16 %v3556, %v3552
        %v3757 = vpack.c.b16 %v3557, %v3553
        %v3758 = vpack.c.b16 %v3558, %v3554
        %v3759 = vpack.c.b16 %v3559, %v3555
        %v3760 = vpack.c.b16 %v3564, %v3560
        %v3761 = vpack.c.b16 %v3565, %v3561
        %v3762 = vpack.c.b16 %v3566, %v3562
        %v3763 = vpack.c.b16 %v3567, %v3563
        %v3764 = vpack.c.b16 %v3572, %v3568
        %v3765 = vpack.c.b16 %v3573, %v3569
        %v3766 = vpack.c.b16 %v3574, %v3570
        %v3767 = vpack.c.b16 %v3575, %v3571
        %v3768 = vpack.c.b16 %v3580, %v3576
        %v3769 = vpack.c.b16 %v3581, %v3577
        %v3770 = vpack.c.b16 %v3582, %v3578
        %v3771 = vpack.c.b16 %v3583, %v3579
        %v3772 = vpack.c.b16 %v3588, %v3584
        %v3773 = vpack.c.b16 %v3589, %v3585
        %v3774 = vpack.c.b16 %v3590, %v3586
        %v3775 = vpack.c.b16 %v3591, %v3587
        %v3776 = vpack.c.b16 %v3596, %v3592
        %v3777 = vpack.c.b16 %v3597, %v3593
        %v3778 = vpack.c.b16 %v3598, %v3594
        %v3779 = vpack.c.b16 %v3599, %v3595
        %v3780 = vpack.c.b16 %v3604, %v3600
        %v3781 = vpack.c.b16 %v3605, %v3601
        %v3782 = vpack.c.b16 %v3606, %v3602
        %v3783 = vpack.c.b16 %v3607, %v3603
        %v3784 = vpack.c.b16 %v3612, %v3608
        %v3785 = vpack.c.b16 %v3613, %v3609
        %v3786 = vpack.c.b16 %v3614, %v3610
        %v3787 = vpack.c.b16 %v3615, %v3611
        %v3788 = vpack.c.b16 %v3620, %v3616
        %v3789 = vpack.c.b16 %v3621, %v3617
        %v3790 = vpack.c.b16 %v3622, %v3618
        %v3791 = vpack.c.b16 %v3623, %v3619
        %v3792 = vpack.c.b16 %v3628, %v3624
        %v3793 = vpack.c.b16 %v3629, %v3625
        %v3794 = vpack.c.b16 %v3630, %v3626
        %v3795 = vpack.c.b16 %v3631, %v3627
        %v3796 = vpack.c.b16 %v3636, %v3632
        %v3797 = vpack.c.b16 %v3637, %v3633
        %v3798 = vpack.c.b16 %v3638, %v3634
        %v3799 = vpack.c.b16 %v3639, %v3635
        %v3800 = vpack.c.b16 %v3644, %v3640
        %v3801 = vpack.c.b16 %v3645, %v3641
        %v3802 = vpack.c.b16 %v3646, %v3642
        %v3803 = vpack.c.b16 %v3647, %v3643
        %v3804 = vpack.c.b16 %v3652, %v3648
        %v3805 = vpack.c.b16 %v3653, %v3649
        %v3806 = vpack.c.b16 %v3654, %v3650
        %v3807 = vpack.c.b16 %v3655, %v3651
        %v3808 = vpack.c.b16 %v3660, %v3656
        %v3809 = vpack.c.b16 %v3661, %v3657
        %v3810 = vpack.c.b16 %v3662, %v3658
        %v3811 = vpack.c.b16 %v3663, %v3659
        %v3812 = vpack.c.b16 %v3668, %v3664
        %v3813 = vpack.c.b16 %v3669, %v3665
        %v3814 = vpack.c.b16 %v3670, %v3666
        %v3815 = vpack.c.b16 %v3671, %v3667
        %v3816 = vpack.c.b16 %v3676, %v3672
        %v3817 = vpack.c.b16 %v3677, %v3673
        %v3818 = vpack.c.b16 %v3678, %v3674
        %v3819 = vpack.c.b16 %v3679, %v3675
        %v3820 = vpack.c.b16 %v3684, %v3680
        %v3821 = vpack.c.b16 %v3685, %v3681
        %v3822 = vpack.c.b16 %v3686, %v3682
        %v3823 = vpack.c.b16 %v3687, %v3683
        %v3824 = vpack.c.b16 %v3692, %v3688
        %v3825 = vpack.c.b16 %v3693, %v3689
        %v3826 = vpack.c.b16 %v3694, %v3690
        %v3827 = vpack.c.b16 %v3695, %v3691
        %v3828 = vpack.c.b16 %v3700, %v3696
        %v3829 = vpack.c.b16 %v3701, %v3697
        %v3830 = vpack.c.b16 %v3702, %v3698
        %v3831 = vpack.c.b16 %v3703, %v3699
        %3960 = vmatpush.bf16.msra.mxu0 %v3732
        %3961 = vmatpush.bf16.msra.mxu0 %v3728
        %3962 = vmatpush.bf16.msra.mxu0 %v3724
        %3963 = vmatpush.bf16.msra.mxu0 %v3720
        %3964 = vmatpush.bf16.msra.mxu0 %v3716
        %3965 = vmatpush.bf16.msra.mxu0 %v3712
        %3966 = vmatpush.bf16.msra.mxu0 %v3708
        %3967 = vmatpush.bf16.msra.mxu0 %v3704
        %3968 = vmatmul.bf16.gmra.mxu0 %v3312
        %v3969 = vpop.f32.mrf.mxu0
        %v3970 = vadd.f32 0.0, %v3969
        %v3971 = vpop.f32.mrf.mxu0
        %3972 = vdwg.mxu0
        %3973 = vmatpush.bf16.msra.mxu0 %v3764
        %3974 = vmatpush.bf16.msra.mxu0 %v3760
        %3975 = vmatpush.bf16.msra.mxu0 %v3756
        %3976 = vmatpush.bf16.msra.mxu0 %v3752
        %3977 = vmatpush.bf16.msra.mxu0 %v3748
        %3978 = vmatpush.bf16.msra.mxu0 %v3744
        %3979 = vmatpush.bf16.msra.mxu0 %v3740
        %3980 = vmatpush.bf16.msra.mxu0 %v3736
        %3981 = vmatmul.bf16.gmra.mxu0 %v3313
        %v3982 = vpop.f32.mrf.mxu0
        %v3983 = vadd.f32 %v3970, %v3982
        %v3984 = vpop.f32.mrf.mxu0
        %3985 = vdwg.mxu0
        %3986 = vmatpush.bf16.msra.mxu0 %v3796
        %3987 = vmatpush.bf16.msra.mxu0 %v3792
        %3988 = vmatpush.bf16.msra.mxu0 %v3788
        %3989 = vmatpush.bf16.msra.mxu0 %v3784
        %3990 = vmatpush.bf16.msra.mxu0 %v3780
        %3991 = vmatpush.bf16.msra.mxu0 %v3776
        %3992 = vmatpush.bf16.msra.mxu0 %v3772
        %3993 = vmatpush.bf16.msra.mxu0 %v3768
        %3994 = vmatmul.bf16.gmra.mxu0 %v3314
        %v3995 = vpop.f32.mrf.mxu0
        %v3996 = vadd.f32 %v3983, %v3995
        %v3997 = vpop.f32.mrf.mxu0
        %3998 = vdwg.mxu0
        %3999 = vmatpush.bf16.msra.mxu0 %v3828
        %4000 = vmatpush.bf16.msra.mxu0 %v3824
        %4001 = vmatpush.bf16.msra.mxu0 %v3820
        %4002 = vmatpush.bf16.msra.mxu0 %v3816
        %4003 = vmatpush.bf16.msra.mxu0 %v3812
        %4004 = vmatpush.bf16.msra.mxu0 %v3808
        %4005 = vmatpush.bf16.msra.mxu0 %v3804
        %4006 = vmatpush.bf16.msra.mxu0 %v3800
        %4007 = vmatmul.bf16.gmra.mxu0 %v3315
        %v4008 = vpop.f32.mrf.mxu0
        %v4009 = vadd.f32 %v3996, %v4008
        %v4010 = vpop.f32.mrf.mxu0
        %4011 = vdwg.mxu0
        %4012 = vmatpush.bf16.msra.mxu0 %v3733
        %4013 = vmatpush.bf16.msra.mxu0 %v3729
        %4014 = vmatpush.bf16.msra.mxu0 %v3725
        %4015 = vmatpush.bf16.msra.mxu0 %v3721
        %4016 = vmatpush.bf16.msra.mxu0 %v3717
        %4017 = vmatpush.bf16.msra.mxu0 %v3713
        %4018 = vmatpush.bf16.msra.mxu0 %v3709
        %4019 = vmatpush.bf16.msra.mxu0 %v3705
        %4020 = vmatmul.bf16.gmra.mxu0 %v3312
        %v4021 = vpop.f32.mrf.mxu0
        %v4022 = vadd.f32 0.0, %v4021
        %v4023 = vpop.f32.mrf.mxu0
        %4024 = vdwg.mxu0
        %4025 = vmatpush.bf16.msra.mxu0 %v3765
        %4026 = vmatpush.bf16.msra.mxu0 %v3761
        %4027 = vmatpush.bf16.msra.mxu0 %v3757
        %4028 = vmatpush.bf16.msra.mxu0 %v3753
        %4029 = vmatpush.bf16.msra.mxu0 %v3749
        %4030 = vmatpush.bf16.msra.mxu0 %v3745
        %4031 = vmatpush.bf16.msra.mxu0 %v3741
        %4032 = vmatpush.bf16.msra.mxu0 %v3737
        %4033 = vmatmul.bf16.gmra.mxu0 %v3313
        %v4034 = vpop.f32.mrf.mxu0
        %v4035 = vadd.f32 %v4022, %v4034
        %v4036 = vpop.f32.mrf.mxu0
        %4037 = vdwg.mxu0
        %4038 = vmatpush.bf16.msra.mxu0 %v3797
        %4039 = vmatpush.bf16.msra.mxu0 %v3793
        %4040 = vmatpush.bf16.msra.mxu0 %v3789
        %4041 = vmatpush.bf16.msra.mxu0 %v3785
        %4042 = vmatpush.bf16.msra.mxu0 %v3781
        %4043 = vmatpush.bf16.msra.mxu0 %v3777
        %4044 = vmatpush.bf16.msra.mxu0 %v3773
        %4045 = vmatpush.bf16.msra.mxu0 %v3769
        %4046 = vmatmul.bf16.gmra.mxu0 %v3314
        %v4047 = vpop.f32.mrf.mxu0
        %v4048 = vadd.f32 %v4035, %v4047
        %v4049 = vpop.f32.mrf.mxu0
        %4050 = vdwg.mxu0
        %4051 = vmatpush.bf16.msra.mxu0 %v3829
        %4052 = vmatpush.bf16.msra.mxu0 %v3825
        %4053 = vmatpush.bf16.msra.mxu0 %v3821
        %4054 = vmatpush.bf16.msra.mxu0 %v3817
        %4055 = vmatpush.bf16.msra.mxu0 %v3813
        %4056 = vmatpush.bf16.msra.mxu0 %v3809
        %4057 = vmatpush.bf16.msra.mxu0 %v3805
        %4058 = vmatpush.bf16.msra.mxu0 %v3801
        %4059 = vmatmul.bf16.gmra.mxu0 %v3315
        %v4060 = vpop.f32.mrf.mxu0
        %v4061 = vadd.f32 %v4048, %v4060
        %v4062 = vpop.f32.mrf.mxu0
        %4063 = vdwg.mxu0
        %4064 = vmatpush.bf16.msra.mxu0 %v3734
        %4065 = vmatpush.bf16.msra.mxu0 %v3730
        %4066 = vmatpush.bf16.msra.mxu0 %v3726
        %4067 = vmatpush.bf16.msra.mxu0 %v3722
        %4068 = vmatpush.bf16.msra.mxu0 %v3718
        %4069 = vmatpush.bf16.msra.mxu0 %v3714
        %4070 = vmatpush.bf16.msra.mxu0 %v3710
        %4071 = vmatpush.bf16.msra.mxu0 %v3706
        %4072 = vmatmul.bf16.gmra.mxu0 %v3312
        %v4073 = vpop.f32.mrf.mxu0
        %v4074 = vadd.f32 0.0, %v4073
        %v4075 = vpop.f32.mrf.mxu0
        %4076 = vdwg.mxu0
        %4077 = vmatpush.bf16.msra.mxu0 %v3766
        %4078 = vmatpush.bf16.msra.mxu0 %v3762
        %4079 = vmatpush.bf16.msra.mxu0 %v3758
        %4080 = vmatpush.bf16.msra.mxu0 %v3754
        %4081 = vmatpush.bf16.msra.mxu0 %v3750
        %4082 = vmatpush.bf16.msra.mxu0 %v3746
        %4083 = vmatpush.bf16.msra.mxu0 %v3742
        %4084 = vmatpush.bf16.msra.mxu0 %v3738
        %4085 = vmatmul.bf16.gmra.mxu0 %v3313
        %v4086 = vpop.f32.mrf.mxu0
        %v4087 = vadd.f32 %v4074, %v4086
        %v4088 = vpop.f32.mrf.mxu0
        %4089 = vdwg.mxu0
        %4090 = vmatpush.bf16.msra.mxu0 %v3798
        %4091 = vmatpush.bf16.msra.mxu0 %v3794
        %4092 = vmatpush.bf16.msra.mxu0 %v3790
        %4093 = vmatpush.bf16.msra.mxu0 %v3786
        %4094 = vmatpush.bf16.msra.mxu0 %v3782
        %4095 = vmatpush.bf16.msra.mxu0 %v3778
        %4096 = vmatpush.bf16.msra.mxu0 %v3774
        %4097 = vmatpush.bf16.msra.mxu0 %v3770
        %4098 = vmatmul.bf16.gmra.mxu0 %v3314
        %v4099 = vpop.f32.mrf.mxu0
        %v4100 = vadd.f32 %v4087, %v4099
        %v4101 = vpop.f32.mrf.mxu0
        %4102 = vdwg.mxu0
        %4103 = vmatpush.bf16.msra.mxu0 %v3830
        %4104 = vmatpush.bf16.msra.mxu0 %v3826
        %4105 = vmatpush.bf16.msra.mxu0 %v3822
        %4106 = vmatpush.bf16.msra.mxu0 %v3818
        %4107 = vmatpush.bf16.msra.mxu0 %v3814
        %4108 = vmatpush.bf16.msra.mxu0 %v3810
        %4109 = vmatpush.bf16.msra.mxu0 %v3806
        %4110 = vmatpush.bf16.msra.mxu0 %v3802
        %4111 = vmatmul.bf16.gmra.mxu0 %v3315
        %v4112 = vpop.f32.mrf.mxu0
        %v4113 = vadd.f32 %v4100, %v4112
        %v4114 = vpop.f32.mrf.mxu0
        %4115 = vdwg.mxu0
        %4116 = vmatpush.bf16.msra.mxu0 %v3735
        %4117 = vmatpush.bf16.msra.mxu0 %v3731
        %4118 = vmatpush.bf16.msra.mxu0 %v3727
        %4119 = vmatpush.bf16.msra.mxu0 %v3723
        %4120 = vmatpush.bf16.msra.mxu0 %v3719
        %4121 = vmatpush.bf16.msra.mxu0 %v3715
        %4122 = vmatpush.bf16.msra.mxu0 %v3711
        %4123 = vmatpush.bf16.msra.mxu0 %v3707
        %4124 = vmatmul.bf16.gmra.mxu0 %v3312
        %v4125 = vpop.f32.mrf.mxu0
        %v4126 = vadd.f32 0.0, %v4125
        %v4127 = vpop.f32.mrf.mxu0
        %4128 = vdwg.mxu0
        %4129 = vmatpush.bf16.msra.mxu0 %v3767
        %4130 = vmatpush.bf16.msra.mxu0 %v3763
        %4131 = vmatpush.bf16.msra.mxu0 %v3759
        %4132 = vmatpush.bf16.msra.mxu0 %v3755
        %4133 = vmatpush.bf16.msra.mxu0 %v3751
        %4134 = vmatpush.bf16.msra.mxu0 %v3747
        %4135 = vmatpush.bf16.msra.mxu0 %v3743
        %4136 = vmatpush.bf16.msra.mxu0 %v3739
        %4137 = vmatmul.bf16.gmra.mxu0 %v3313
        %v4138 = vpop.f32.mrf.mxu0
        %v4139 = vadd.f32 %v4126, %v4138
        %v4140 = vpop.f32.mrf.mxu0
        %4141 = vdwg.mxu0
        %4142 = vmatpush.bf16.msra.mxu0 %v3799
        %4143 = vmatpush.bf16.msra.mxu0 %v3795
        %4144 = vmatpush.bf16.msra.mxu0 %v3791
        %4145 = vmatpush.bf16.msra.mxu0 %v3787
        %4146 = vmatpush.bf16.msra.mxu0 %v3783
        %4147 = vmatpush.bf16.msra.mxu0 %v3779
        %4148 = vmatpush.bf16.msra.mxu0 %v3775
        %4149 = vmatpush.bf16.msra.mxu0 %v3771
        %4150 = vmatmul.bf16.gmra.mxu0 %v3314
        %v4151 = vpop.f32.mrf.mxu0
        %v4152 = vadd.f32 %v4139, %v4151
        %v4153 = vpop.f32.mrf.mxu0
        %4154 = vdwg.mxu0
        %4155 = vmatpush.bf16.msra.mxu0 %v3831
        %4156 = vmatpush.bf16.msra.mxu0 %v3827
        %4157 = vmatpush.bf16.msra.mxu0 %v3823
        %4158 = vmatpush.bf16.msra.mxu0 %v3819
        %4159 = vmatpush.bf16.msra.mxu0 %v3815
        %4160 = vmatpush.bf16.msra.mxu0 %v3811
        %4161 = vmatpush.bf16.msra.mxu0 %v3807
        %4162 = vmatpush.bf16.msra.mxu0 %v3803
        %4163 = vmatmul.bf16.gmra.mxu0 %v3315
        %v4164 = vpop.f32.mrf.mxu0
        %v4165 = vadd.f32 %v4152, %v4164
        %v4166 = vpop.f32.mrf.mxu0
        %4167 = vdwg.mxu0
        %4168 = vst [vmem:[#allocation1] ss:$4 sm:$0xff] %v3015
        %v4169 = vld.sshfl [vmem:[#allocation1] sm:$0xff pattern:$0x73625140]
        %v4171 = vld.sshfl [vmem:[#allocation1 + $0x8] sm:$0xff pattern:$0x73625140]
        %v4173 = vld.sshfl [vmem:[#allocation1 + $0x10] sm:$0xff pattern:$0x73625140]
        %v4175 = vld.sshfl [vmem:[#allocation1 + $0x18] sm:$0xff pattern:$0x73625140]
        %s4177 = scalar_lea.vmem [#allocation1], 32
        %4178 = vst [vmem:[%s4177] ss:$4 sm:$0xff] %v3016
        %v4179 = vld.sshfl [vmem:[#allocation1 + $0x20] sm:$0xff pattern:$0x73625140]
        %v4181 = vld.sshfl [vmem:[#allocation1 + $0x28] sm:$0xff pattern:$0x73625140]
        %v4183 = vld.sshfl [vmem:[#allocation1 + $0x30] sm:$0xff pattern:$0x73625140]
        %v4185 = vld.sshfl [vmem:[#allocation1 + $0x38] sm:$0xff pattern:$0x73625140]
        %v4187 = vunpack.c.l.b16 %v4169
        %v4188 = vunpack.c.l.b16 %v4171
        %v4189 = vunpack.c.l.b16 %v4173
        %v4190 = vunpack.c.l.b16 %v4175
        %v4191 = vunpack.c.l.b16 %v4179
        %v4192 = vunpack.c.l.b16 %v4181
        %v4193 = vunpack.c.l.b16 %v4183
        %v4194 = vunpack.c.l.b16 %v4185
        %v4195 = vrot.slane %v4191, 7
        %v4196 = vsel %vm3304, %v4195, %v4187
        %v4197 = vrot.slane %v4192, 7
        %v4198 = vsel %vm3304, %v4197, %v4188
        %v4199 = vrot.slane %v4193, 7
        %v4200 = vsel %vm3304, %v4199, %v4189
        %v4201 = vrot.slane %v4194, 7
        %v4202 = vsel %vm3304, %v4201, %v4190
        %v4203 = vpack.c.b16 %v4196, %v4196
        %v4204 = vpack.c.b16 %v4198, %v4198
        %v4205 = vpack.c.b16 %v4200, %v4200
        %v4206 = vpack.c.b16 %v4202, %v4202
        %v4339 = vunpack.c.l.b16 %v3017
        %v4340 = vunpack.c.h.b16 %v3017
        %v4341 = vunpack.c.l.b16 %v3018
        %v4342 = vunpack.c.h.b16 %v3018
        %v4343 = vunpack.c.l.b16 %v3019
        %v4344 = vunpack.c.h.b16 %v3019
        %v4345 = vunpack.c.l.b16 %v3020
        %v4346 = vunpack.c.h.b16 %v3020
        %v4347 = vunpack.c.l.b16 %v3021
        %v4348 = vunpack.c.h.b16 %v3021
        %v4349 = vunpack.c.l.b16 %v3022
        %v4350 = vunpack.c.h.b16 %v3022
        %v4351 = vunpack.c.l.b16 %v3023
        %v4352 = vunpack.c.h.b16 %v3023
        %v4353 = vunpack.c.l.b16 %v3024
        %v4354 = vunpack.c.h.b16 %v3024
        %v4355 = vunpack.c.l.b16 %v3025
        %v4356 = vunpack.c.h.b16 %v3025
        %v4357 = vunpack.c.l.b16 %v3026
        %v4358 = vunpack.c.h.b16 %v3026
        %v4359 = vunpack.c.l.b16 %v3027
        %v4360 = vunpack.c.h.b16 %v3027
        %v4361 = vunpack.c.l.b16 %v3028
        %v4362 = vunpack.c.h.b16 %v3028
        %v4363 = vunpack.c.l.b16 %v3029
        %v4364 = vunpack.c.h.b16 %v3029
        %v4365 = vunpack.c.l.b16 %v3030
        %v4366 = vunpack.c.h.b16 %v3030
        %v4367 = vunpack.c.l.b16 %v3031
        %v4368 = vunpack.c.h.b16 %v3031
        %v4369 = vunpack.c.l.b16 %v3032
        %v4370 = vunpack.c.h.b16 %v3032
        %v4371 = vunpack.c.l.b16 %v3033
        %v4372 = vunpack.c.h.b16 %v3033
        %v4373 = vunpack.c.l.b16 %v3034
        %v4374 = vunpack.c.h.b16 %v3034
        %v4375 = vunpack.c.l.b16 %v3035
        %v4376 = vunpack.c.h.b16 %v3035
        %v4377 = vunpack.c.l.b16 %v3036
        %v4378 = vunpack.c.h.b16 %v3036
        %v4379 = vunpack.c.l.b16 %v3037
        %v4380 = vunpack.c.h.b16 %v3037
        %v4381 = vunpack.c.l.b16 %v3038
        %v4382 = vunpack.c.h.b16 %v3038
        %v4383 = vunpack.c.l.b16 %v3039
        %v4384 = vunpack.c.h.b16 %v3039
        %v4385 = vunpack.c.l.b16 %v3040
        %v4386 = vunpack.c.h.b16 %v3040
        %v4387 = vunpack.c.l.b16 %v3041
        %v4388 = vunpack.c.h.b16 %v3041
        %v4389 = vunpack.c.l.b16 %v3042
        %v4390 = vunpack.c.h.b16 %v3042
        %v4391 = vunpack.c.l.b16 %v3043
        %v4392 = vunpack.c.h.b16 %v3043
        %v4393 = vunpack.c.l.b16 %v3044
        %v4394 = vunpack.c.h.b16 %v3044
        %v4395 = vunpack.c.l.b16 %v3045
        %v4396 = vunpack.c.h.b16 %v3045
        %v4397 = vunpack.c.l.b16 %v3046
        %v4398 = vunpack.c.h.b16 %v3046
        %v4399 = vunpack.c.l.b16 %v3047
        %v4400 = vunpack.c.h.b16 %v3047
        %v4401 = vunpack.c.l.b16 %v3048
        %v4402 = vunpack.c.h.b16 %v3048
        %v4403 = vunpack.c.l.b16 %v3049
        %v4404 = vunpack.c.h.b16 %v3049
        %v4405 = vunpack.c.l.b16 %v3050
        %v4406 = vunpack.c.h.b16 %v3050
        %v4407 = vunpack.c.l.b16 %v3051
        %v4408 = vunpack.c.h.b16 %v3051
        %v4409 = vunpack.c.l.b16 %v3052
        %v4410 = vunpack.c.h.b16 %v3052
        %v4411 = vunpack.c.l.b16 %v3053
        %v4412 = vunpack.c.h.b16 %v3053
        %v4413 = vunpack.c.l.b16 %v3054
        %v4414 = vunpack.c.h.b16 %v3054
        %v4415 = vunpack.c.l.b16 %v3055
        %v4416 = vunpack.c.h.b16 %v3055
        %v4417 = vunpack.c.l.b16 %v3056
        %v4418 = vunpack.c.h.b16 %v3056
        %v4419 = vunpack.c.l.b16 %v3057
        %v4420 = vunpack.c.h.b16 %v3057
        %v4421 = vunpack.c.l.b16 %v3058
        %v4422 = vunpack.c.h.b16 %v3058
        %v4423 = vunpack.c.l.b16 %v3059
        %v4424 = vunpack.c.h.b16 %v3059
        %v4425 = vunpack.c.l.b16 %v3060
        %v4426 = vunpack.c.h.b16 %v3060
        %v4427 = vunpack.c.l.b16 %v3061
        %v4428 = vunpack.c.h.b16 %v3061
        %v4429 = vunpack.c.l.b16 %v3062
        %v4430 = vunpack.c.h.b16 %v3062
        %v4431 = vunpack.c.l.b16 %v3063
        %v4432 = vunpack.c.h.b16 %v3063
        %v4433 = vunpack.c.l.b16 %v3064
        %v4434 = vunpack.c.h.b16 %v3064
        %v4435 = vunpack.c.l.b16 %v3065
        %v4436 = vunpack.c.h.b16 %v3065
        %v4437 = vunpack.c.l.b16 %v3066
        %v4438 = vunpack.c.h.b16 %v3066
        %v4439 = vunpack.c.l.b16 %v3067
        %v4440 = vunpack.c.h.b16 %v3067
        %v4441 = vunpack.c.l.b16 %v3068
        %v4442 = vunpack.c.h.b16 %v3068
        %v4443 = vunpack.c.l.b16 %v3069
        %v4444 = vunpack.c.h.b16 %v3069
        %v4445 = vunpack.c.l.b16 %v3070
        %v4446 = vunpack.c.h.b16 %v3070
        %v4447 = vunpack.c.l.b16 %v3071
        %v4448 = vunpack.c.h.b16 %v3071
        %v4449 = vunpack.c.l.b16 %v3072
        %v4450 = vunpack.c.h.b16 %v3072
        %v4451 = vunpack.c.l.b16 %v3073
        %v4452 = vunpack.c.h.b16 %v3073
        %v4453 = vunpack.c.l.b16 %v3074
        %v4454 = vunpack.c.h.b16 %v3074
        %v4455 = vunpack.c.l.b16 %v3075
        %v4456 = vunpack.c.h.b16 %v3075
        %v4457 = vunpack.c.l.b16 %v3076
        %v4458 = vunpack.c.h.b16 %v3076
        %v4459 = vunpack.c.l.b16 %v3077
        %v4460 = vunpack.c.h.b16 %v3077
        %v4461 = vunpack.c.l.b16 %v3078
        %v4462 = vunpack.c.h.b16 %v3078
        %v4463 = vunpack.c.l.b16 %v3079
        %v4464 = vunpack.c.h.b16 %v3079
        %v4465 = vunpack.c.l.b16 %v3080
        %v4466 = vunpack.c.h.b16 %v3080
        %v4467 = vunpack.c.l.b16 %v3081
        %v4468 = vunpack.c.h.b16 %v3081
        %v4469 = vunpack.c.l.b16 %v3082
        %v4470 = vunpack.c.h.b16 %v3082
        %v4471 = vunpack.c.l.b16 %v3083
        %v4472 = vunpack.c.h.b16 %v3083
        %v4473 = vunpack.c.l.b16 %v3084
        %v4474 = vunpack.c.h.b16 %v3084
        %v4475 = vunpack.c.l.b16 %v3085
        %v4476 = vunpack.c.h.b16 %v3085
        %v4477 = vunpack.c.l.b16 %v3086
        %v4478 = vunpack.c.h.b16 %v3086
        %v4479 = vunpack.c.l.b16 %v3087
        %v4480 = vunpack.c.h.b16 %v3087
        %v4481 = vunpack.c.l.b16 %v3088
        %v4482 = vunpack.c.h.b16 %v3088
        %v4483 = vunpack.c.l.b16 %v3089
        %v4484 = vunpack.c.h.b16 %v3089
        %v4485 = vunpack.c.l.b16 %v3090
        %v4486 = vunpack.c.h.b16 %v3090
        %v4487 = vunpack.c.l.b16 %v3091
        %v4488 = vunpack.c.h.b16 %v3091
        %v4489 = vunpack.c.l.b16 %v3092
        %v4490 = vunpack.c.h.b16 %v3092
        %v4491 = vunpack.c.l.b16 %v3093
        %v4492 = vunpack.c.h.b16 %v3093
        %v4493 = vunpack.c.l.b16 %v3094
        %v4494 = vunpack.c.h.b16 %v3094
        %v4495 = vunpack.c.l.b16 %v3095
        %v4496 = vunpack.c.h.b16 %v3095
        %v4497 = vunpack.c.l.b16 %v3096
        %v4498 = vunpack.c.h.b16 %v3096
        %v4499 = vunpack.c.l.b16 %v3097
        %v4500 = vunpack.c.h.b16 %v3097
        %v4501 = vunpack.c.l.b16 %v3098
        %v4502 = vunpack.c.h.b16 %v3098
        %v4503 = vunpack.c.l.b16 %v3099
        %v4504 = vunpack.c.h.b16 %v3099
        %v4505 = vunpack.c.l.b16 %v3100
        %v4506 = vunpack.c.h.b16 %v3100
        %v4507 = vunpack.c.l.b16 %v3101
        %v4508 = vunpack.c.h.b16 %v3101
        %v4509 = vunpack.c.l.b16 %v3102
        %v4510 = vunpack.c.h.b16 %v3102
        %v4511 = vunpack.c.l.b16 %v3103
        %v4512 = vunpack.c.h.b16 %v3103
        %v4513 = vunpack.c.l.b16 %v3104
        %v4514 = vunpack.c.h.b16 %v3104
        %v4515 = vunpack.c.l.b16 %v3105
        %v4516 = vunpack.c.h.b16 %v3105
        %v4517 = vunpack.c.l.b16 %v3106
        %v4518 = vunpack.c.h.b16 %v3106
        %v4519 = vunpack.c.l.b16 %v3107
        %v4520 = vunpack.c.h.b16 %v3107
        %v4521 = vunpack.c.l.b16 %v3108
        %v4522 = vunpack.c.h.b16 %v3108
        %v4523 = vunpack.c.l.b16 %v3109
        %v4524 = vunpack.c.h.b16 %v3109
        %v4525 = vunpack.c.l.b16 %v3110
        %v4526 = vunpack.c.h.b16 %v3110
        %v4527 = vunpack.c.l.b16 %v3111
        %v4528 = vunpack.c.h.b16 %v3111
        %v4529 = vunpack.c.l.b16 %v3112
        %v4530 = vunpack.c.h.b16 %v3112
        %v4531 = vunpack.c.l.b16 %v3113
        %v4532 = vunpack.c.h.b16 %v3113
        %v4533 = vunpack.c.l.b16 %v3114
        %v4534 = vunpack.c.h.b16 %v3114
        %v4535 = vunpack.c.l.b16 %v3115
        %v4536 = vunpack.c.h.b16 %v3115
        %v4537 = vunpack.c.l.b16 %v3116
        %v4538 = vunpack.c.h.b16 %v3116
        %v4539 = vunpack.c.l.b16 %v3117
        %v4540 = vunpack.c.h.b16 %v3117
        %v4541 = vunpack.c.l.b16 %v3118
        %v4542 = vunpack.c.h.b16 %v3118
        %v4543 = vunpack.c.l.b16 %v3119
        %v4544 = vunpack.c.h.b16 %v3119
        %v4545 = vunpack.c.l.b16 %v3120
        %v4546 = vunpack.c.h.b16 %v3120
        %v4547 = vunpack.c.l.b16 %v3121
        %v4548 = vunpack.c.h.b16 %v3121
        %v4549 = vunpack.c.l.b16 %v3122
        %v4550 = vunpack.c.h.b16 %v3122
        %v4551 = vunpack.c.l.b16 %v3123
        %v4552 = vunpack.c.h.b16 %v3123
        %v4553 = vunpack.c.l.b16 %v3124
        %v4554 = vunpack.c.h.b16 %v3124
        %v4555 = vunpack.c.l.b16 %v3125
        %v4556 = vunpack.c.h.b16 %v3125
        %v4557 = vunpack.c.l.b16 %v3126
        %v4558 = vunpack.c.h.b16 %v3126
        %v4559 = vunpack.c.l.b16 %v3127
        %v4560 = vunpack.c.h.b16 %v3127
        %v4561 = vunpack.c.l.b16 %v3128
        %v4562 = vunpack.c.h.b16 %v3128
        %v4563 = vunpack.c.l.b16 %v3129
        %v4564 = vunpack.c.h.b16 %v3129
        %v4565 = vunpack.c.l.b16 %v3130
        %v4566 = vunpack.c.h.b16 %v3130
        %v4567 = vunpack.c.l.b16 %v3131
        %v4568 = vunpack.c.h.b16 %v3131
        %v4569 = vunpack.c.l.b16 %v3132
        %v4570 = vunpack.c.h.b16 %v3132
        %v4571 = vunpack.c.l.b16 %v3133
        %v4572 = vunpack.c.h.b16 %v3133
        %v4573 = vunpack.c.l.b16 %v3134
        %v4574 = vunpack.c.h.b16 %v3134
        %v4575 = vunpack.c.l.b16 %v3135
        %v4576 = vunpack.c.h.b16 %v3135
        %v4577 = vunpack.c.l.b16 %v3136
        %v4578 = vunpack.c.h.b16 %v3136
        %v4579 = vunpack.c.l.b16 %v3137
        %v4580 = vunpack.c.h.b16 %v3137
        %v4581 = vunpack.c.l.b16 %v3138
        %v4582 = vunpack.c.h.b16 %v3138
        %v4583 = vunpack.c.l.b16 %v3139
        %v4584 = vunpack.c.h.b16 %v3139
        %v4585 = vunpack.c.l.b16 %v3140
        %v4586 = vunpack.c.h.b16 %v3140
        %v4587 = vunpack.c.l.b16 %v3141
        %v4588 = vunpack.c.h.b16 %v3141
        %v4589 = vunpack.c.l.b16 %v3142
        %v4590 = vunpack.c.h.b16 %v3142
        %v4591 = vunpack.c.l.b16 %v3143
        %v4592 = vunpack.c.h.b16 %v3143
        %v4593 = vunpack.c.l.b16 %v3144
        %v4594 = vunpack.c.h.b16 %v3144
        %v4595 = vpack.c.b16 %v4343, %v4339
        %v4596 = vpack.c.b16 %v4344, %v4340
        %v4597 = vpack.c.b16 %v4345, %v4341
        %v4598 = vpack.c.b16 %v4346, %v4342
        %v4599 = vpack.c.b16 %v4351, %v4347
        %v4600 = vpack.c.b16 %v4352, %v4348
        %v4601 = vpack.c.b16 %v4353, %v4349
        %v4602 = vpack.c.b16 %v4354, %v4350
        %v4603 = vpack.c.b16 %v4359, %v4355
        %v4604 = vpack.c.b16 %v4360, %v4356
        %v4605 = vpack.c.b16 %v4361, %v4357
        %v4606 = vpack.c.b16 %v4362, %v4358
        %v4607 = vpack.c.b16 %v4367, %v4363
        %v4608 = vpack.c.b16 %v4368, %v4364
        %v4609 = vpack.c.b16 %v4369, %v4365
        %v4610 = vpack.c.b16 %v4370, %v4366
        %v4611 = vpack.c.b16 %v4375, %v4371
        %v4612 = vpack.c.b16 %v4376, %v4372
        %v4613 = vpack.c.b16 %v4377, %v4373
        %v4614 = vpack.c.b16 %v4378, %v4374
        %v4615 = vpack.c.b16 %v4383, %v4379
        %v4616 = vpack.c.b16 %v4384, %v4380
        %v4617 = vpack.c.b16 %v4385, %v4381
        %v4618 = vpack.c.b16 %v4386, %v4382
        %v4619 = vpack.c.b16 %v4391, %v4387
        %v4620 = vpack.c.b16 %v4392, %v4388
        %v4621 = vpack.c.b16 %v4393, %v4389
        %v4622 = vpack.c.b16 %v4394, %v4390
        %v4623 = vpack.c.b16 %v4399, %v4395
        %v4624 = vpack.c.b16 %v4400, %v4396
        %v4625 = vpack.c.b16 %v4401, %v4397
        %v4626 = vpack.c.b16 %v4402, %v4398
        %v4627 = vpack.c.b16 %v4407, %v4403
        %v4628 = vpack.c.b16 %v4408, %v4404
        %v4629 = vpack.c.b16 %v4409, %v4405
        %v4630 = vpack.c.b16 %v4410, %v4406
        %v4631 = vpack.c.b16 %v4415, %v4411
        %v4632 = vpack.c.b16 %v4416, %v4412
        %v4633 = vpack.c.b16 %v4417, %v4413
        %v4634 = vpack.c.b16 %v4418, %v4414
        %v4635 = vpack.c.b16 %v4423, %v4419
        %v4636 = vpack.c.b16 %v4424, %v4420
        %v4637 = vpack.c.b16 %v4425, %v4421
        %v4638 = vpack.c.b16 %v4426, %v4422
        %v4639 = vpack.c.b16 %v4431, %v4427
        %v4640 = vpack.c.b16 %v4432, %v4428
        %v4641 = vpack.c.b16 %v4433, %v4429
        %v4642 = vpack.c.b16 %v4434, %v4430
        %v4643 = vpack.c.b16 %v4439, %v4435
        %v4644 = vpack.c.b16 %v4440, %v4436
        %v4645 = vpack.c.b16 %v4441, %v4437
        %v4646 = vpack.c.b16 %v4442, %v4438
        %v4647 = vpack.c.b16 %v4447, %v4443
        %v4648 = vpack.c.b16 %v4448, %v4444
        %v4649 = vpack.c.b16 %v4449, %v4445
        %v4650 = vpack.c.b16 %v4450, %v4446
        %v4651 = vpack.c.b16 %v4455, %v4451
        %v4652 = vpack.c.b16 %v4456, %v4452
        %v4653 = vpack.c.b16 %v4457, %v4453
        %v4654 = vpack.c.b16 %v4458, %v4454
        %v4655 = vpack.c.b16 %v4463, %v4459
        %v4656 = vpack.c.b16 %v4464, %v4460
        %v4657 = vpack.c.b16 %v4465, %v4461
        %v4658 = vpack.c.b16 %v4466, %v4462
        %v4659 = vpack.c.b16 %v4471, %v4467
        %v4660 = vpack.c.b16 %v4472, %v4468
        %v4661 = vpack.c.b16 %v4473, %v4469
        %v4662 = vpack.c.b16 %v4474, %v4470
        %v4663 = vpack.c.b16 %v4479, %v4475
        %v4664 = vpack.c.b16 %v4480, %v4476
        %v4665 = vpack.c.b16 %v4481, %v4477
        %v4666 = vpack.c.b16 %v4482, %v4478
        %v4667 = vpack.c.b16 %v4487, %v4483
        %v4668 = vpack.c.b16 %v4488, %v4484
        %v4669 = vpack.c.b16 %v4489, %v4485
        %v4670 = vpack.c.b16 %v4490, %v4486
        %v4671 = vpack.c.b16 %v4495, %v4491
        %v4672 = vpack.c.b16 %v4496, %v4492
        %v4673 = vpack.c.b16 %v4497, %v4493
        %v4674 = vpack.c.b16 %v4498, %v4494
        %v4675 = vpack.c.b16 %v4503, %v4499
        %v4676 = vpack.c.b16 %v4504, %v4500
        %v4677 = vpack.c.b16 %v4505, %v4501
        %v4678 = vpack.c.b16 %v4506, %v4502
        %v4679 = vpack.c.b16 %v4511, %v4507
        %v4680 = vpack.c.b16 %v4512, %v4508
        %v4681 = vpack.c.b16 %v4513, %v4509
        %v4682 = vpack.c.b16 %v4514, %v4510
        %v4683 = vpack.c.b16 %v4519, %v4515
        %v4684 = vpack.c.b16 %v4520, %v4516
        %v4685 = vpack.c.b16 %v4521, %v4517
        %v4686 = vpack.c.b16 %v4522, %v4518
        %v4687 = vpack.c.b16 %v4527, %v4523
        %v4688 = vpack.c.b16 %v4528, %v4524
        %v4689 = vpack.c.b16 %v4529, %v4525
        %v4690 = vpack.c.b16 %v4530, %v4526
        %v4691 = vpack.c.b16 %v4535, %v4531
        %v4692 = vpack.c.b16 %v4536, %v4532
        %v4693 = vpack.c.b16 %v4537, %v4533
        %v4694 = vpack.c.b16 %v4538, %v4534
        %v4695 = vpack.c.b16 %v4543, %v4539
        %v4696 = vpack.c.b16 %v4544, %v4540
        %v4697 = vpack.c.b16 %v4545, %v4541
        %v4698 = vpack.c.b16 %v4546, %v4542
        %v4699 = vpack.c.b16 %v4551, %v4547
        %v4700 = vpack.c.b16 %v4552, %v4548
        %v4701 = vpack.c.b16 %v4553, %v4549
        %v4702 = vpack.c.b16 %v4554, %v4550
        %v4703 = vpack.c.b16 %v4559, %v4555
        %v4704 = vpack.c.b16 %v4560, %v4556
        %v4705 = vpack.c.b16 %v4561, %v4557
        %v4706 = vpack.c.b16 %v4562, %v4558
        %v4707 = vpack.c.b16 %v4567, %v4563
        %v4708 = vpack.c.b16 %v4568, %v4564
        %v4709 = vpack.c.b16 %v4569, %v4565
        %v4710 = vpack.c.b16 %v4570, %v4566
        %v4711 = vpack.c.b16 %v4575, %v4571
        %v4712 = vpack.c.b16 %v4576, %v4572
        %v4713 = vpack.c.b16 %v4577, %v4573
        %v4714 = vpack.c.b16 %v4578, %v4574
        %v4715 = vpack.c.b16 %v4583, %v4579
        %v4716 = vpack.c.b16 %v4584, %v4580
        %v4717 = vpack.c.b16 %v4585, %v4581
        %v4718 = vpack.c.b16 %v4586, %v4582
        %v4719 = vpack.c.b16 %v4591, %v4587
        %v4720 = vpack.c.b16 %v4592, %v4588
        %v4721 = vpack.c.b16 %v4593, %v4589
        %v4722 = vpack.c.b16 %v4594, %v4590
        %4851 = vmatpush.bf16.msra.mxu0 %v4623
        %4852 = vmatpush.bf16.msra.mxu0 %v4619
        %4853 = vmatpush.bf16.msra.mxu0 %v4615
        %4854 = vmatpush.bf16.msra.mxu0 %v4611
        %4855 = vmatpush.bf16.msra.mxu0 %v4607
        %4856 = vmatpush.bf16.msra.mxu0 %v4603
        %4857 = vmatpush.bf16.msra.mxu0 %v4599
        %4858 = vmatpush.bf16.msra.mxu0 %v4595
        %4859 = vmatmul.bf16.gmra.mxu0 %v4203
        %v4860 = vpop.f32.mrf.mxu0
        %v4861 = vadd.f32 %v4009, %v4860
        %v4862 = vpop.f32.mrf.mxu0
        %4863 = vdwg.mxu0
        %4864 = vmatpush.bf16.msra.mxu0 %v4655
        %4865 = vmatpush.bf16.msra.mxu0 %v4651
        %4866 = vmatpush.bf16.msra.mxu0 %v4647
        %4867 = vmatpush.bf16.msra.mxu0 %v4643
        %4868 = vmatpush.bf16.msra.mxu0 %v4639
        %4869 = vmatpush.bf16.msra.mxu0 %v4635
        %4870 = vmatpush.bf16.msra.mxu0 %v4631
        %4871 = vmatpush.bf16.msra.mxu0 %v4627
        %4872 = vmatmul.bf16.gmra.mxu0 %v4204
        %v4873 = vpop.f32.mrf.mxu0
        %v4874 = vadd.f32 %v4861, %v4873
        %v4875 = vpop.f32.mrf.mxu0
        %4876 = vdwg.mxu0
        %4877 = vmatpush.bf16.msra.mxu0 %v4687
        %4878 = vmatpush.bf16.msra.mxu0 %v4683
        %4879 = vmatpush.bf16.msra.mxu0 %v4679
        %4880 = vmatpush.bf16.msra.mxu0 %v4675
        %4881 = vmatpush.bf16.msra.mxu0 %v4671
        %4882 = vmatpush.bf16.msra.mxu0 %v4667
        %4883 = vmatpush.bf16.msra.mxu0 %v4663
        %4884 = vmatpush.bf16.msra.mxu0 %v4659
        %4885 = vmatmul.bf16.gmra.mxu0 %v4205
        %v4886 = vpop.f32.mrf.mxu0
        %v4887 = vadd.f32 %v4874, %v4886
        %v4888 = vpop.f32.mrf.mxu0
        %4889 = vdwg.mxu0
        %4890 = vmatpush.bf16.msra.mxu0 %v4719
        %4891 = vmatpush.bf16.msra.mxu0 %v4715
        %4892 = vmatpush.bf16.msra.mxu0 %v4711
        %4893 = vmatpush.bf16.msra.mxu0 %v4707
        %4894 = vmatpush.bf16.msra.mxu0 %v4703
        %4895 = vmatpush.bf16.msra.mxu0 %v4699
        %4896 = vmatpush.bf16.msra.mxu0 %v4695
        %4897 = vmatpush.bf16.msra.mxu0 %v4691
        %4898 = vmatmul.bf16.gmra.mxu0 %v4206
        %v4899 = vpop.f32.mrf.mxu0
        %v4900 = vadd.f32 %v4887, %v4899
        %v4901 = vpop.f32.mrf.mxu0
        %4902 = vdwg.mxu0
        %4903 = vmatpush.bf16.msra.mxu0 %v4624
        %4904 = vmatpush.bf16.msra.mxu0 %v4620
        %4905 = vmatpush.bf16.msra.mxu0 %v4616
        %4906 = vmatpush.bf16.msra.mxu0 %v4612
        %4907 = vmatpush.bf16.msra.mxu0 %v4608
        %4908 = vmatpush.bf16.msra.mxu0 %v4604
        %4909 = vmatpush.bf16.msra.mxu0 %v4600
        %4910 = vmatpush.bf16.msra.mxu0 %v4596
        %4911 = vmatmul.bf16.gmra.mxu0 %v4203
        %v4912 = vpop.f32.mrf.mxu0
        %v4913 = vadd.f32 %v4061, %v4912
        %v4914 = vpop.f32.mrf.mxu0
        %4915 = vdwg.mxu0
        %4916 = vmatpush.bf16.msra.mxu0 %v4656
        %4917 = vmatpush.bf16.msra.mxu0 %v4652
        %4918 = vmatpush.bf16.msra.mxu0 %v4648
        %4919 = vmatpush.bf16.msra.mxu0 %v4644
        %4920 = vmatpush.bf16.msra.mxu0 %v4640
        %4921 = vmatpush.bf16.msra.mxu0 %v4636
        %4922 = vmatpush.bf16.msra.mxu0 %v4632
        %4923 = vmatpush.bf16.msra.mxu0 %v4628
        %4924 = vmatmul.bf16.gmra.mxu0 %v4204
        %v4925 = vpop.f32.mrf.mxu0
        %v4926 = vadd.f32 %v4913, %v4925
        %v4927 = vpop.f32.mrf.mxu0
        %4928 = vdwg.mxu0
        %4929 = vmatpush.bf16.msra.mxu0 %v4688
        %4930 = vmatpush.bf16.msra.mxu0 %v4684
        %4931 = vmatpush.bf16.msra.mxu0 %v4680
        %4932 = vmatpush.bf16.msra.mxu0 %v4676
        %4933 = vmatpush.bf16.msra.mxu0 %v4672
        %4934 = vmatpush.bf16.msra.mxu0 %v4668
        %4935 = vmatpush.bf16.msra.mxu0 %v4664
        %4936 = vmatpush.bf16.msra.mxu0 %v4660
        %4937 = vmatmul.bf16.gmra.mxu0 %v4205
        %v4938 = vpop.f32.mrf.mxu0
        %v4939 = vadd.f32 %v4926, %v4938
        %v4940 = vpop.f32.mrf.mxu0
        %4941 = vdwg.mxu0
        %4942 = vmatpush.bf16.msra.mxu0 %v4720
        %4943 = vmatpush.bf16.msra.mxu0 %v4716
        %4944 = vmatpush.bf16.msra.mxu0 %v4712
        %4945 = vmatpush.bf16.msra.mxu0 %v4708
        %4946 = vmatpush.bf16.msra.mxu0 %v4704
        %4947 = vmatpush.bf16.msra.mxu0 %v4700
        %4948 = vmatpush.bf16.msra.mxu0 %v4696
        %4949 = vmatpush.bf16.msra.mxu0 %v4692
        %4950 = vmatmul.bf16.gmra.mxu0 %v4206
        %v4951 = vpop.f32.mrf.mxu0
        %v4952 = vadd.f32 %v4939, %v4951
        %v4953 = vpop.f32.mrf.mxu0
        %4954 = vdwg.mxu0
        %4955 = vmatpush.bf16.msra.mxu0 %v4625
        %4956 = vmatpush.bf16.msra.mxu0 %v4621
        %4957 = vmatpush.bf16.msra.mxu0 %v4617
        %4958 = vmatpush.bf16.msra.mxu0 %v4613
        %4959 = vmatpush.bf16.msra.mxu0 %v4609
        %4960 = vmatpush.bf16.msra.mxu0 %v4605
        %4961 = vmatpush.bf16.msra.mxu0 %v4601
        %4962 = vmatpush.bf16.msra.mxu0 %v4597
        %4963 = vmatmul.bf16.gmra.mxu0 %v4203
        %v4964 = vpop.f32.mrf.mxu0
        %v4965 = vadd.f32 %v4113, %v4964
        %v4966 = vpop.f32.mrf.mxu0
        %4967 = vdwg.mxu0
        %4968 = vmatpush.bf16.msra.mxu0 %v4657
        %4969 = vmatpush.bf16.msra.mxu0 %v4653
        %4970 = vmatpush.bf16.msra.mxu0 %v4649
        %4971 = vmatpush.bf16.msra.mxu0 %v4645
        %4972 = vmatpush.bf16.msra.mxu0 %v4641
        %4973 = vmatpush.bf16.msra.mxu0 %v4637
        %4974 = vmatpush.bf16.msra.mxu0 %v4633
        %4975 = vmatpush.bf16.msra.mxu0 %v4629
        %4976 = vmatmul.bf16.gmra.mxu0 %v4204
        %v4977 = vpop.f32.mrf.mxu0
        %v4978 = vadd.f32 %v4965, %v4977
        %v4979 = vpop.f32.mrf.mxu0
        %4980 = vdwg.mxu0
        %4981 = vmatpush.bf16.msra.mxu0 %v4689
        %4982 = vmatpush.bf16.msra.mxu0 %v4685
        %4983 = vmatpush.bf16.msra.mxu0 %v4681
        %4984 = vmatpush.bf16.msra.mxu0 %v4677
        %4985 = vmatpush.bf16.msra.mxu0 %v4673
        %4986 = vmatpush.bf16.msra.mxu0 %v4669
        %4987 = vmatpush.bf16.msra.mxu0 %v4665
        %4988 = vmatpush.bf16.msra.mxu0 %v4661
        %4989 = vmatmul.bf16.gmra.mxu0 %v4205
        %v4990 = vpop.f32.mrf.mxu0
        %v4991 = vadd.f32 %v4978, %v4990
        %v4992 = vpop.f32.mrf.mxu0
        %4993 = vdwg.mxu0
        %4994 = vmatpush.bf16.msra.mxu0 %v4721
        %4995 = vmatpush.bf16.msra.mxu0 %v4717
        %4996 = vmatpush.bf16.msra.mxu0 %v4713
        %4997 = vmatpush.bf16.msra.mxu0 %v4709
        %4998 = vmatpush.bf16.msra.mxu0 %v4705
        %4999 = vmatpush.bf16.msra.mxu0 %v4701
        %5000 = vmatpush.bf16.msra.mxu0 %v4697
        %5001 = vmatpush.bf16.msra.mxu0 %v4693
        %5002 = vmatmul.bf16.gmra.mxu0 %v4206
        %v5003 = vpop.f32.mrf.mxu0
        %v5004 = vadd.f32 %v4991, %v5003
        %v5005 = vpop.f32.mrf.mxu0
        %5006 = vdwg.mxu0
        %5007 = vmatpush.bf16.msra.mxu0 %v4626
        %5008 = vmatpush.bf16.msra.mxu0 %v4622
        %5009 = vmatpush.bf16.msra.mxu0 %v4618
        %5010 = vmatpush.bf16.msra.mxu0 %v4614
        %5011 = vmatpush.bf16.msra.mxu0 %v4610
        %5012 = vmatpush.bf16.msra.mxu0 %v4606
        %5013 = vmatpush.bf16.msra.mxu0 %v4602
        %5014 = vmatpush.bf16.msra.mxu0 %v4598
        %5015 = vmatmul.bf16.gmra.mxu0 %v4203
        %v5016 = vpop.f32.mrf.mxu0
        %v5017 = vadd.f32 %v4165, %v5016
        %v5018 = vpop.f32.mrf.mxu0
        %5019 = vdwg.mxu0
        %5020 = vmatpush.bf16.msra.mxu0 %v4658
        %5021 = vmatpush.bf16.msra.mxu0 %v4654
        %5022 = vmatpush.bf16.msra.mxu0 %v4650
        %5023 = vmatpush.bf16.msra.mxu0 %v4646
        %5024 = vmatpush.bf16.msra.mxu0 %v4642
        %5025 = vmatpush.bf16.msra.mxu0 %v4638
        %5026 = vmatpush.bf16.msra.mxu0 %v4634
        %5027 = vmatpush.bf16.msra.mxu0 %v4630
        %5028 = vmatmul.bf16.gmra.mxu0 %v4204
        %v5029 = vpop.f32.mrf.mxu0
        %v5030 = vadd.f32 %v5017, %v5029
        %v5031 = vpop.f32.mrf.mxu0
        %5032 = vdwg.mxu0
        %5033 = vmatpush.bf16.msra.mxu0 %v4690
        %5034 = vmatpush.bf16.msra.mxu0 %v4686
        %5035 = vmatpush.bf16.msra.mxu0 %v4682
        %5036 = vmatpush.bf16.msra.mxu0 %v4678
        %5037 = vmatpush.bf16.msra.mxu0 %v4674
        %5038 = vmatpush.bf16.msra.mxu0 %v4670
        %5039 = vmatpush.bf16.msra.mxu0 %v4666
        %5040 = vmatpush.bf16.msra.mxu0 %v4662
        %5041 = vmatmul.bf16.gmra.mxu0 %v4205
        %v5042 = vpop.f32.mrf.mxu0
        %v5043 = vadd.f32 %v5030, %v5042
        %v5044 = vpop.f32.mrf.mxu0
        %5045 = vdwg.mxu0
        %5046 = vmatpush.bf16.msra.mxu0 %v4722
        %5047 = vmatpush.bf16.msra.mxu0 %v4718
        %5048 = vmatpush.bf16.msra.mxu0 %v4714
        %5049 = vmatpush.bf16.msra.mxu0 %v4710
        %5050 = vmatpush.bf16.msra.mxu0 %v4706
        %5051 = vmatpush.bf16.msra.mxu0 %v4702
        %5052 = vmatpush.bf16.msra.mxu0 %v4698
        %5053 = vmatpush.bf16.msra.mxu0 %v4694
        %5054 = vmatmul.bf16.gmra.mxu0 %v4206
        %v5055 = vpop.f32.mrf.mxu0
        %v5056 = vadd.f32 %v5043, %v5055
        %v5057 = vpop.f32.mrf.mxu0
        %5058 = vdwg.mxu0
        %v5059 = vld [vmem:[#allocation2] sm:$0xaa]
        %v5060 = vld [vmem:[#allocation2 + $0x8] sm:$0xaa]
        %s5061 = scalar_lea.vmem %s476, 2048 [#allocation12]
        %v5062 = vld [vmem:[%s5061] sm:$0xff]
        %v5063 = vld [vmem:[%s5061 + $0x8] sm:$0xff]
        %v5064 = vld [vmem:[%s5061 + $0x10] sm:$0xff]
        %v5065 = vld [vmem:[%s5061 + $0x18] sm:$0xff]
        %v5066 = vld [vmem:[%s5061 + $0x20] sm:$0xff]
        %v5067 = vld [vmem:[%s5061 + $0x28] sm:$0xff]
        %v5068 = vld [vmem:[%s5061 + $0x30] sm:$0xff]
        %v5069 = vld [vmem:[%s5061 + $0x38] sm:$0xff]
        %v5070 = vld [vmem:[%s5061 + $0x40] sm:$0xff]
        %v5071 = vld [vmem:[%s5061 + $0x48] sm:$0xff]
        %v5072 = vld [vmem:[%s5061 + $0x50] sm:$0xff]
        %v5073 = vld [vmem:[%s5061 + $0x58] sm:$0xff]
        %v5074 = vld [vmem:[%s5061 + $0x60] sm:$0xff]
        %v5075 = vld [vmem:[%s5061 + $0x68] sm:$0xff]
        %v5076 = vld [vmem:[%s5061 + $0x70] sm:$0xff]
        %v5077 = vld [vmem:[%s5061 + $0x78] sm:$0xff]
        %v5078 = vld [vmem:[%s5061 + $0x80] sm:$0xff]
        %v5079 = vld [vmem:[%s5061 + $0x88] sm:$0xff]
        %v5080 = vld [vmem:[%s5061 + $0x90] sm:$0xff]
        %v5081 = vld [vmem:[%s5061 + $0x98] sm:$0xff]
        %v5082 = vld [vmem:[%s5061 + $0xa0] sm:$0xff]
        %v5083 = vld [vmem:[%s5061 + $0xa8] sm:$0xff]
        %v5084 = vld [vmem:[%s5061 + $0xb0] sm:$0xff]
        %v5085 = vld [vmem:[%s5061 + $0xb8] sm:$0xff]
        %v5086 = vld [vmem:[%s5061 + $0xc0] sm:$0xff]
        %v5087 = vld [vmem:[%s5061 + $0xc8] sm:$0xff]
        %v5088 = vld [vmem:[%s5061 + $0xd0] sm:$0xff]
        %v5089 = vld [vmem:[%s5061 + $0xd8] sm:$0xff]
        %v5090 = vld [vmem:[%s5061 + $0xe0] sm:$0xff]
        %v5091 = vld [vmem:[%s5061 + $0xe8] sm:$0xff]
        %v5092 = vld [vmem:[%s5061 + $0xf0] sm:$0xff]
        %v5093 = vld [vmem:[%s5061 + $0xf8] sm:$0xff]
        %v5094 = vld [vmem:[%s5061 + $0x100] sm:$0xff]
        %v5095 = vld [vmem:[%s5061 + $0x108] sm:$0xff]
        %v5096 = vld [vmem:[%s5061 + $0x110] sm:$0xff]
        %v5097 = vld [vmem:[%s5061 + $0x118] sm:$0xff]
        %v5098 = vld [vmem:[%s5061 + $0x120] sm:$0xff]
        %v5099 = vld [vmem:[%s5061 + $0x128] sm:$0xff]
        %v5100 = vld [vmem:[%s5061 + $0x130] sm:$0xff]
        %v5101 = vld [vmem:[%s5061 + $0x138] sm:$0xff]
        %v5102 = vld [vmem:[%s5061 + $0x140] sm:$0xff]
        %v5103 = vld [vmem:[%s5061 + $0x148] sm:$0xff]
        %v5104 = vld [vmem:[%s5061 + $0x150] sm:$0xff]
        %v5105 = vld [vmem:[%s5061 + $0x158] sm:$0xff]
        %v5106 = vld [vmem:[%s5061 + $0x160] sm:$0xff]
        %v5107 = vld [vmem:[%s5061 + $0x168] sm:$0xff]
        %v5108 = vld [vmem:[%s5061 + $0x170] sm:$0xff]
        %v5109 = vld [vmem:[%s5061 + $0x178] sm:$0xff]
        %v5110 = vld [vmem:[%s5061 + $0x180] sm:$0xff]
        %v5111 = vld [vmem:[%s5061 + $0x188] sm:$0xff]
        %v5112 = vld [vmem:[%s5061 + $0x190] sm:$0xff]
        %v5113 = vld [vmem:[%s5061 + $0x198] sm:$0xff]
        %v5114 = vld [vmem:[%s5061 + $0x1a0] sm:$0xff]
        %v5115 = vld [vmem:[%s5061 + $0x1a8] sm:$0xff]
        %v5116 = vld [vmem:[%s5061 + $0x1b0] sm:$0xff]
        %v5117 = vld [vmem:[%s5061 + $0x1b8] sm:$0xff]
        %v5118 = vld [vmem:[%s5061 + $0x1c0] sm:$0xff]
        %v5119 = vld [vmem:[%s5061 + $0x1c8] sm:$0xff]
        %v5120 = vld [vmem:[%s5061 + $0x1d0] sm:$0xff]
        %v5121 = vld [vmem:[%s5061 + $0x1d8] sm:$0xff]
        %v5122 = vld [vmem:[%s5061 + $0x1e0] sm:$0xff]
        %v5123 = vld [vmem:[%s5061 + $0x1e8] sm:$0xff]
        %v5124 = vld [vmem:[%s5061 + $0x1f0] sm:$0xff]
        %v5125 = vld [vmem:[%s5061 + $0x1f8] sm:$0xff]
        %v5126 = vld [vmem:[%s5061 + $0x200] sm:$0xff]
        %v5127 = vld [vmem:[%s5061 + $0x208] sm:$0xff]
        %v5128 = vld [vmem:[%s5061 + $0x210] sm:$0xff]
        %v5129 = vld [vmem:[%s5061 + $0x218] sm:$0xff]
        %v5130 = vld [vmem:[%s5061 + $0x220] sm:$0xff]
        %v5131 = vld [vmem:[%s5061 + $0x228] sm:$0xff]
        %v5132 = vld [vmem:[%s5061 + $0x230] sm:$0xff]
        %v5133 = vld [vmem:[%s5061 + $0x238] sm:$0xff]
        %v5134 = vld [vmem:[%s5061 + $0x240] sm:$0xff]
        %v5135 = vld [vmem:[%s5061 + $0x248] sm:$0xff]
        %v5136 = vld [vmem:[%s5061 + $0x250] sm:$0xff]
        %v5137 = vld [vmem:[%s5061 + $0x258] sm:$0xff]
        %v5138 = vld [vmem:[%s5061 + $0x260] sm:$0xff]
        %v5139 = vld [vmem:[%s5061 + $0x268] sm:$0xff]
        %v5140 = vld [vmem:[%s5061 + $0x270] sm:$0xff]
        %v5141 = vld [vmem:[%s5061 + $0x278] sm:$0xff]
        %v5142 = vld [vmem:[%s5061 + $0x280] sm:$0xff]
        %v5143 = vld [vmem:[%s5061 + $0x288] sm:$0xff]
        %v5144 = vld [vmem:[%s5061 + $0x290] sm:$0xff]
        %v5145 = vld [vmem:[%s5061 + $0x298] sm:$0xff]
        %v5146 = vld [vmem:[%s5061 + $0x2a0] sm:$0xff]
        %v5147 = vld [vmem:[%s5061 + $0x2a8] sm:$0xff]
        %v5148 = vld [vmem:[%s5061 + $0x2b0] sm:$0xff]
        %v5149 = vld [vmem:[%s5061 + $0x2b8] sm:$0xff]
        %v5150 = vld [vmem:[%s5061 + $0x2c0] sm:$0xff]
        %v5151 = vld [vmem:[%s5061 + $0x2c8] sm:$0xff]
        %v5152 = vld [vmem:[%s5061 + $0x2d0] sm:$0xff]
        %v5153 = vld [vmem:[%s5061 + $0x2d8] sm:$0xff]
        %v5154 = vld [vmem:[%s5061 + $0x2e0] sm:$0xff]
        %v5155 = vld [vmem:[%s5061 + $0x2e8] sm:$0xff]
        %v5156 = vld [vmem:[%s5061 + $0x2f0] sm:$0xff]
        %v5157 = vld [vmem:[%s5061 + $0x2f8] sm:$0xff]
        %v5158 = vld [vmem:[%s5061 + $0x300] sm:$0xff]
        %v5159 = vld [vmem:[%s5061 + $0x308] sm:$0xff]
        %v5160 = vld [vmem:[%s5061 + $0x310] sm:$0xff]
        %v5161 = vld [vmem:[%s5061 + $0x318] sm:$0xff]
        %v5162 = vld [vmem:[%s5061 + $0x320] sm:$0xff]
        %v5163 = vld [vmem:[%s5061 + $0x328] sm:$0xff]
        %v5164 = vld [vmem:[%s5061 + $0x330] sm:$0xff]
        %v5165 = vld [vmem:[%s5061 + $0x338] sm:$0xff]
        %v5166 = vld [vmem:[%s5061 + $0x340] sm:$0xff]
        %v5167 = vld [vmem:[%s5061 + $0x348] sm:$0xff]
        %v5168 = vld [vmem:[%s5061 + $0x350] sm:$0xff]
        %v5169 = vld [vmem:[%s5061 + $0x358] sm:$0xff]
        %v5170 = vld [vmem:[%s5061 + $0x360] sm:$0xff]
        %v5171 = vld [vmem:[%s5061 + $0x368] sm:$0xff]
        %v5172 = vld [vmem:[%s5061 + $0x370] sm:$0xff]
        %v5173 = vld [vmem:[%s5061 + $0x378] sm:$0xff]
        %v5174 = vld [vmem:[%s5061 + $0x380] sm:$0xff]
        %v5175 = vld [vmem:[%s5061 + $0x388] sm:$0xff]
        %v5176 = vld [vmem:[%s5061 + $0x390] sm:$0xff]
        %v5177 = vld [vmem:[%s5061 + $0x398] sm:$0xff]
        %v5178 = vld [vmem:[%s5061 + $0x3a0] sm:$0xff]
        %v5179 = vld [vmem:[%s5061 + $0x3a8] sm:$0xff]
        %v5180 = vld [vmem:[%s5061 + $0x3b0] sm:$0xff]
        %v5181 = vld [vmem:[%s5061 + $0x3b8] sm:$0xff]
        %v5182 = vld [vmem:[%s5061 + $0x3c0] sm:$0xff]
        %v5183 = vld [vmem:[%s5061 + $0x3c8] sm:$0xff]
        %v5184 = vld [vmem:[%s5061 + $0x3d0] sm:$0xff]
        %v5185 = vld [vmem:[%s5061 + $0x3d8] sm:$0xff]
        %v5186 = vld [vmem:[%s5061 + $0x3e0] sm:$0xff]
        %v5187 = vld [vmem:[%s5061 + $0x3e8] sm:$0xff]
        %v5188 = vld [vmem:[%s5061 + $0x3f0] sm:$0xff]
        %v5189 = vld [vmem:[%s5061 + $0x3f8] sm:$0xff]
        %5191 = vst [vmem:[#allocation1] ss:$4 sm:$0xff] %v5059
        %v5192 = vld.sshfl [vmem:[#allocation1] sm:$0xff pattern:$0x73625140]
        %v5194 = vld.sshfl [vmem:[#allocation1 + $0x8] sm:$0xff pattern:$0x73625140]
        %v5196 = vld.sshfl [vmem:[#allocation1 + $0x10] sm:$0xff pattern:$0x73625140]
        %v5198 = vld.sshfl [vmem:[#allocation1 + $0x18] sm:$0xff pattern:$0x73625140]
        %s5201 = scalar_lea.vmem [#allocation1], 32
        %5202 = vst [vmem:[%s5201] ss:$4 sm:$0xff] %v5060
        %v5203 = vld.sshfl [vmem:[#allocation1 + $0x20] sm:$0xff pattern:$0x73625140]
        %v5205 = vld.sshfl [vmem:[#allocation1 + $0x28] sm:$0xff pattern:$0x73625140]
        %v5207 = vld.sshfl [vmem:[#allocation1 + $0x30] sm:$0xff pattern:$0x73625140]
        %v5209 = vld.sshfl [vmem:[#allocation1 + $0x38] sm:$0xff pattern:$0x73625140]
        %v5211 = vunpack.c.l.b16 %v5192
        %v5212 = vunpack.c.l.b16 %v5194
        %v5213 = vunpack.c.l.b16 %v5196
        %v5214 = vunpack.c.l.b16 %v5198
        %v5215 = vunpack.c.l.b16 %v5203
        %v5216 = vunpack.c.l.b16 %v5205
        %v5217 = vunpack.c.l.b16 %v5207
        %v5218 = vunpack.c.l.b16 %v5209
        %v5219 = vrot.slane %v5211, 2
        %v5220 = vrot.slane %v5215, 1
        %v5221 = vsel %vm3304, %v5220, %v5219
        %v5222 = vrot.slane %v5212, 2
        %v5223 = vrot.slane %v5216, 1
        %v5224 = vsel %vm3304, %v5223, %v5222
        %v5225 = vrot.slane %v5213, 2
        %v5226 = vrot.slane %v5217, 1
        %v5227 = vsel %vm3304, %v5226, %v5225
        %v5228 = vrot.slane %v5214, 2
        %v5229 = vrot.slane %v5218, 1
        %v5230 = vsel %vm3304, %v5229, %v5228
        %v5231 = vpack.c.b16 %v5221, %v5221
        %v5232 = vpack.c.b16 %v5224, %v5224
        %v5233 = vpack.c.b16 %v5227, %v5227
        %v5234 = vpack.c.b16 %v5230, %v5230
        %v5367 = vunpack.c.l.b16 %v5062
        %v5368 = vunpack.c.h.b16 %v5062
        %v5369 = vunpack.c.l.b16 %v5063
        %v5370 = vunpack.c.h.b16 %v5063
        %v5371 = vunpack.c.l.b16 %v5064
        %v5372 = vunpack.c.h.b16 %v5064
        %v5373 = vunpack.c.l.b16 %v5065
        %v5374 = vunpack.c.h.b16 %v5065
        %v5375 = vunpack.c.l.b16 %v5066
        %v5376 = vunpack.c.h.b16 %v5066
        %v5377 = vunpack.c.l.b16 %v5067
        %v5378 = vunpack.c.h.b16 %v5067
        %v5379 = vunpack.c.l.b16 %v5068
        %v5380 = vunpack.c.h.b16 %v5068
        %v5381 = vunpack.c.l.b16 %v5069
        %v5382 = vunpack.c.h.b16 %v5069
        %v5383 = vunpack.c.l.b16 %v5070
        %v5384 = vunpack.c.h.b16 %v5070
        %v5385 = vunpack.c.l.b16 %v5071
        %v5386 = vunpack.c.h.b16 %v5071
        %v5387 = vunpack.c.l.b16 %v5072
        %v5388 = vunpack.c.h.b16 %v5072
        %v5389 = vunpack.c.l.b16 %v5073
        %v5390 = vunpack.c.h.b16 %v5073
        %v5391 = vunpack.c.l.b16 %v5074
        %v5392 = vunpack.c.h.b16 %v5074
        %v5393 = vunpack.c.l.b16 %v5075
        %v5394 = vunpack.c.h.b16 %v5075
        %v5395 = vunpack.c.l.b16 %v5076
        %v5396 = vunpack.c.h.b16 %v5076
        %v5397 = vunpack.c.l.b16 %v5077
        %v5398 = vunpack.c.h.b16 %v5077
        %v5399 = vunpack.c.l.b16 %v5078
        %v5400 = vunpack.c.h.b16 %v5078
        %v5401 = vunpack.c.l.b16 %v5079
        %v5402 = vunpack.c.h.b16 %v5079
        %v5403 = vunpack.c.l.b16 %v5080
        %v5404 = vunpack.c.h.b16 %v5080
        %v5405 = vunpack.c.l.b16 %v5081
        %v5406 = vunpack.c.h.b16 %v5081
        %v5407 = vunpack.c.l.b16 %v5082
        %v5408 = vunpack.c.h.b16 %v5082
        %v5409 = vunpack.c.l.b16 %v5083
        %v5410 = vunpack.c.h.b16 %v5083
        %v5411 = vunpack.c.l.b16 %v5084
        %v5412 = vunpack.c.h.b16 %v5084
        %v5413 = vunpack.c.l.b16 %v5085
        %v5414 = vunpack.c.h.b16 %v5085
        %v5415 = vunpack.c.l.b16 %v5086
        %v5416 = vunpack.c.h.b16 %v5086
        %v5417 = vunpack.c.l.b16 %v5087
        %v5418 = vunpack.c.h.b16 %v5087
        %v5419 = vunpack.c.l.b16 %v5088
        %v5420 = vunpack.c.h.b16 %v5088
        %v5421 = vunpack.c.l.b16 %v5089
        %v5422 = vunpack.c.h.b16 %v5089
        %v5423 = vunpack.c.l.b16 %v5090
        %v5424 = vunpack.c.h.b16 %v5090
        %v5425 = vunpack.c.l.b16 %v5091
        %v5426 = vunpack.c.h.b16 %v5091
        %v5427 = vunpack.c.l.b16 %v5092
        %v5428 = vunpack.c.h.b16 %v5092
        %v5429 = vunpack.c.l.b16 %v5093
        %v5430 = vunpack.c.h.b16 %v5093
        %v5431 = vunpack.c.l.b16 %v5094
        %v5432 = vunpack.c.h.b16 %v5094
        %v5433 = vunpack.c.l.b16 %v5095
        %v5434 = vunpack.c.h.b16 %v5095
        %v5435 = vunpack.c.l.b16 %v5096
        %v5436 = vunpack.c.h.b16 %v5096
        %v5437 = vunpack.c.l.b16 %v5097
        %v5438 = vunpack.c.h.b16 %v5097
        %v5439 = vunpack.c.l.b16 %v5098
        %v5440 = vunpack.c.h.b16 %v5098
        %v5441 = vunpack.c.l.b16 %v5099
        %v5442 = vunpack.c.h.b16 %v5099
        %v5443 = vunpack.c.l.b16 %v5100
        %v5444 = vunpack.c.h.b16 %v5100
        %v5445 = vunpack.c.l.b16 %v5101
        %v5446 = vunpack.c.h.b16 %v5101
        %v5447 = vunpack.c.l.b16 %v5102
        %v5448 = vunpack.c.h.b16 %v5102
        %v5449 = vunpack.c.l.b16 %v5103
        %v5450 = vunpack.c.h.b16 %v5103
        %v5451 = vunpack.c.l.b16 %v5104
        %v5452 = vunpack.c.h.b16 %v5104
        %v5453 = vunpack.c.l.b16 %v5105
        %v5454 = vunpack.c.h.b16 %v5105
        %v5455 = vunpack.c.l.b16 %v5106
        %v5456 = vunpack.c.h.b16 %v5106
        %v5457 = vunpack.c.l.b16 %v5107
        %v5458 = vunpack.c.h.b16 %v5107
        %v5459 = vunpack.c.l.b16 %v5108
        %v5460 = vunpack.c.h.b16 %v5108
        %v5461 = vunpack.c.l.b16 %v5109
        %v5462 = vunpack.c.h.b16 %v5109
        %v5463 = vunpack.c.l.b16 %v5110
        %v5464 = vunpack.c.h.b16 %v5110
        %v5465 = vunpack.c.l.b16 %v5111
        %v5466 = vunpack.c.h.b16 %v5111
        %v5467 = vunpack.c.l.b16 %v5112
        %v5468 = vunpack.c.h.b16 %v5112
        %v5469 = vunpack.c.l.b16 %v5113
        %v5470 = vunpack.c.h.b16 %v5113
        %v5471 = vunpack.c.l.b16 %v5114
        %v5472 = vunpack.c.h.b16 %v5114
        %v5473 = vunpack.c.l.b16 %v5115
        %v5474 = vunpack.c.h.b16 %v5115
        %v5475 = vunpack.c.l.b16 %v5116
        %v5476 = vunpack.c.h.b16 %v5116
        %v5477 = vunpack.c.l.b16 %v5117
        %v5478 = vunpack.c.h.b16 %v5117
        %v5479 = vunpack.c.l.b16 %v5118
        %v5480 = vunpack.c.h.b16 %v5118
        %v5481 = vunpack.c.l.b16 %v5119
        %v5482 = vunpack.c.h.b16 %v5119
        %v5483 = vunpack.c.l.b16 %v5120
        %v5484 = vunpack.c.h.b16 %v5120
        %v5485 = vunpack.c.l.b16 %v5121
        %v5486 = vunpack.c.h.b16 %v5121
        %v5487 = vunpack.c.l.b16 %v5122
        %v5488 = vunpack.c.h.b16 %v5122
        %v5489 = vunpack.c.l.b16 %v5123
        %v5490 = vunpack.c.h.b16 %v5123
        %v5491 = vunpack.c.l.b16 %v5124
        %v5492 = vunpack.c.h.b16 %v5124
        %v5493 = vunpack.c.l.b16 %v5125
        %v5494 = vunpack.c.h.b16 %v5125
        %v5495 = vunpack.c.l.b16 %v5126
        %v5496 = vunpack.c.h.b16 %v5126
        %v5497 = vunpack.c.l.b16 %v5127
        %v5498 = vunpack.c.h.b16 %v5127
        %v5499 = vunpack.c.l.b16 %v5128
        %v5500 = vunpack.c.h.b16 %v5128
        %v5501 = vunpack.c.l.b16 %v5129
        %v5502 = vunpack.c.h.b16 %v5129
        %v5503 = vunpack.c.l.b16 %v5130
        %v5504 = vunpack.c.h.b16 %v5130
        %v5505 = vunpack.c.l.b16 %v5131
        %v5506 = vunpack.c.h.b16 %v5131
        %v5507 = vunpack.c.l.b16 %v5132
        %v5508 = vunpack.c.h.b16 %v5132
        %v5509 = vunpack.c.l.b16 %v5133
        %v5510 = vunpack.c.h.b16 %v5133
        %v5511 = vunpack.c.l.b16 %v5134
        %v5512 = vunpack.c.h.b16 %v5134
        %v5513 = vunpack.c.l.b16 %v5135
        %v5514 = vunpack.c.h.b16 %v5135
        %v5515 = vunpack.c.l.b16 %v5136
        %v5516 = vunpack.c.h.b16 %v5136
        %v5517 = vunpack.c.l.b16 %v5137
        %v5518 = vunpack.c.h.b16 %v5137
        %v5519 = vunpack.c.l.b16 %v5138
        %v5520 = vunpack.c.h.b16 %v5138
        %v5521 = vunpack.c.l.b16 %v5139
        %v5522 = vunpack.c.h.b16 %v5139
        %v5523 = vunpack.c.l.b16 %v5140
        %v5524 = vunpack.c.h.b16 %v5140
        %v5525 = vunpack.c.l.b16 %v5141
        %v5526 = vunpack.c.h.b16 %v5141
        %v5527 = vunpack.c.l.b16 %v5142
        %v5528 = vunpack.c.h.b16 %v5142
        %v5529 = vunpack.c.l.b16 %v5143
        %v5530 = vunpack.c.h.b16 %v5143
        %v5531 = vunpack.c.l.b16 %v5144
        %v5532 = vunpack.c.h.b16 %v5144
        %v5533 = vunpack.c.l.b16 %v5145
        %v5534 = vunpack.c.h.b16 %v5145
        %v5535 = vunpack.c.l.b16 %v5146
        %v5536 = vunpack.c.h.b16 %v5146
        %v5537 = vunpack.c.l.b16 %v5147
        %v5538 = vunpack.c.h.b16 %v5147
        %v5539 = vunpack.c.l.b16 %v5148
        %v5540 = vunpack.c.h.b16 %v5148
        %v5541 = vunpack.c.l.b16 %v5149
        %v5542 = vunpack.c.h.b16 %v5149
        %v5543 = vunpack.c.l.b16 %v5150
        %v5544 = vunpack.c.h.b16 %v5150
        %v5545 = vunpack.c.l.b16 %v5151
        %v5546 = vunpack.c.h.b16 %v5151
        %v5547 = vunpack.c.l.b16 %v5152
        %v5548 = vunpack.c.h.b16 %v5152
        %v5549 = vunpack.c.l.b16 %v5153
        %v5550 = vunpack.c.h.b16 %v5153
        %v5551 = vunpack.c.l.b16 %v5154
        %v5552 = vunpack.c.h.b16 %v5154
        %v5553 = vunpack.c.l.b16 %v5155
        %v5554 = vunpack.c.h.b16 %v5155
        %v5555 = vunpack.c.l.b16 %v5156
        %v5556 = vunpack.c.h.b16 %v5156
        %v5557 = vunpack.c.l.b16 %v5157
        %v5558 = vunpack.c.h.b16 %v5157
        %v5559 = vunpack.c.l.b16 %v5158
        %v5560 = vunpack.c.h.b16 %v5158
        %v5561 = vunpack.c.l.b16 %v5159
        %v5562 = vunpack.c.h.b16 %v5159
        %v5563 = vunpack.c.l.b16 %v5160
        %v5564 = vunpack.c.h.b16 %v5160
        %v5565 = vunpack.c.l.b16 %v5161
        %v5566 = vunpack.c.h.b16 %v5161
        %v5567 = vunpack.c.l.b16 %v5162
        %v5568 = vunpack.c.h.b16 %v5162
        %v5569 = vunpack.c.l.b16 %v5163
        %v5570 = vunpack.c.h.b16 %v5163
        %v5571 = vunpack.c.l.b16 %v5164
        %v5572 = vunpack.c.h.b16 %v5164
        %v5573 = vunpack.c.l.b16 %v5165
        %v5574 = vunpack.c.h.b16 %v5165
        %v5575 = vunpack.c.l.b16 %v5166
        %v5576 = vunpack.c.h.b16 %v5166
        %v5577 = vunpack.c.l.b16 %v5167
        %v5578 = vunpack.c.h.b16 %v5167
        %v5579 = vunpack.c.l.b16 %v5168
        %v5580 = vunpack.c.h.b16 %v5168
        %v5581 = vunpack.c.l.b16 %v5169
        %v5582 = vunpack.c.h.b16 %v5169
        %v5583 = vunpack.c.l.b16 %v5170
        %v5584 = vunpack.c.h.b16 %v5170
        %v5585 = vunpack.c.l.b16 %v5171
        %v5586 = vunpack.c.h.b16 %v5171
        %v5587 = vunpack.c.l.b16 %v5172
        %v5588 = vunpack.c.h.b16 %v5172
        %v5589 = vunpack.c.l.b16 %v5173
        %v5590 = vunpack.c.h.b16 %v5173
        %v5591 = vunpack.c.l.b16 %v5174
        %v5592 = vunpack.c.h.b16 %v5174
        %v5593 = vunpack.c.l.b16 %v5175
        %v5594 = vunpack.c.h.b16 %v5175
        %v5595 = vunpack.c.l.b16 %v5176
        %v5596 = vunpack.c.h.b16 %v5176
        %v5597 = vunpack.c.l.b16 %v5177
        %v5598 = vunpack.c.h.b16 %v5177
        %v5599 = vunpack.c.l.b16 %v5178
        %v5600 = vunpack.c.h.b16 %v5178
        %v5601 = vunpack.c.l.b16 %v5179
        %v5602 = vunpack.c.h.b16 %v5179
        %v5603 = vunpack.c.l.b16 %v5180
        %v5604 = vunpack.c.h.b16 %v5180
        %v5605 = vunpack.c.l.b16 %v5181
        %v5606 = vunpack.c.h.b16 %v5181
        %v5607 = vunpack.c.l.b16 %v5182
        %v5608 = vunpack.c.h.b16 %v5182
        %v5609 = vunpack.c.l.b16 %v5183
        %v5610 = vunpack.c.h.b16 %v5183
        %v5611 = vunpack.c.l.b16 %v5184
        %v5612 = vunpack.c.h.b16 %v5184
        %v5613 = vunpack.c.l.b16 %v5185
        %v5614 = vunpack.c.h.b16 %v5185
        %v5615 = vunpack.c.l.b16 %v5186
        %v5616 = vunpack.c.h.b16 %v5186
        %v5617 = vunpack.c.l.b16 %v5187
        %v5618 = vunpack.c.h.b16 %v5187
        %v5619 = vunpack.c.l.b16 %v5188
        %v5620 = vunpack.c.h.b16 %v5188
        %v5621 = vunpack.c.l.b16 %v5189
        %v5622 = vunpack.c.h.b16 %v5189
        %v5623 = vpack.c.b16 %v5371, %v5367
        %v5624 = vpack.c.b16 %v5372, %v5368
        %v5625 = vpack.c.b16 %v5373, %v5369
        %v5626 = vpack.c.b16 %v5374, %v5370
        %v5627 = vpack.c.b16 %v5379, %v5375
        %v5628 = vpack.c.b16 %v5380, %v5376
        %v5629 = vpack.c.b16 %v5381, %v5377
        %v5630 = vpack.c.b16 %v5382, %v5378
        %v5631 = vpack.c.b16 %v5387, %v5383
        %v5632 = vpack.c.b16 %v5388, %v5384
        %v5633 = vpack.c.b16 %v5389, %v5385
        %v5634 = vpack.c.b16 %v5390, %v5386
        %v5635 = vpack.c.b16 %v5395, %v5391
        %v5636 = vpack.c.b16 %v5396, %v5392
        %v5637 = vpack.c.b16 %v5397, %v5393
        %v5638 = vpack.c.b16 %v5398, %v5394
        %v5639 = vpack.c.b16 %v5403, %v5399
        %v5640 = vpack.c.b16 %v5404, %v5400
        %v5641 = vpack.c.b16 %v5405, %v5401
        %v5642 = vpack.c.b16 %v5406, %v5402
        %v5643 = vpack.c.b16 %v5411, %v5407
        %v5644 = vpack.c.b16 %v5412, %v5408
        %v5645 = vpack.c.b16 %v5413, %v5409
        %v5646 = vpack.c.b16 %v5414, %v5410
        %v5647 = vpack.c.b16 %v5419, %v5415
        %v5648 = vpack.c.b16 %v5420, %v5416
        %v5649 = vpack.c.b16 %v5421, %v5417
        %v5650 = vpack.c.b16 %v5422, %v5418
        %v5651 = vpack.c.b16 %v5427, %v5423
        %v5652 = vpack.c.b16 %v5428, %v5424
        %v5653 = vpack.c.b16 %v5429, %v5425
        %v5654 = vpack.c.b16 %v5430, %v5426
        %v5655 = vpack.c.b16 %v5435, %v5431
        %v5656 = vpack.c.b16 %v5436, %v5432
        %v5657 = vpack.c.b16 %v5437, %v5433
        %v5658 = vpack.c.b16 %v5438, %v5434
        %v5659 = vpack.c.b16 %v5443, %v5439
        %v5660 = vpack.c.b16 %v5444, %v5440
        %v5661 = vpack.c.b16 %v5445, %v5441
        %v5662 = vpack.c.b16 %v5446, %v5442
        %v5663 = vpack.c.b16 %v5451, %v5447
        %v5664 = vpack.c.b16 %v5452, %v5448
        %v5665 = vpack.c.b16 %v5453, %v5449
        %v5666 = vpack.c.b16 %v5454, %v5450
        %v5667 = vpack.c.b16 %v5459, %v5455
        %v5668 = vpack.c.b16 %v5460, %v5456
        %v5669 = vpack.c.b16 %v5461, %v5457
        %v5670 = vpack.c.b16 %v5462, %v5458
        %v5671 = vpack.c.b16 %v5467, %v5463
        %v5672 = vpack.c.b16 %v5468, %v5464
        %v5673 = vpack.c.b16 %v5469, %v5465
        %v5674 = vpack.c.b16 %v5470, %v5466
        %v5675 = vpack.c.b16 %v5475, %v5471
        %v5676 = vpack.c.b16 %v5476, %v5472
        %v5677 = vpack.c.b16 %v5477, %v5473
        %v5678 = vpack.c.b16 %v5478, %v5474
        %v5679 = vpack.c.b16 %v5483, %v5479
        %v5680 = vpack.c.b16 %v5484, %v5480
        %v5681 = vpack.c.b16 %v5485, %v5481
        %v5682 = vpack.c.b16 %v5486, %v5482
        %v5683 = vpack.c.b16 %v5491, %v5487
        %v5684 = vpack.c.b16 %v5492, %v5488
        %v5685 = vpack.c.b16 %v5493, %v5489
        %v5686 = vpack.c.b16 %v5494, %v5490
        %v5687 = vpack.c.b16 %v5499, %v5495
        %v5688 = vpack.c.b16 %v5500, %v5496
        %v5689 = vpack.c.b16 %v5501, %v5497
        %v5690 = vpack.c.b16 %v5502, %v5498
        %v5691 = vpack.c.b16 %v5507, %v5503
        %v5692 = vpack.c.b16 %v5508, %v5504
        %v5693 = vpack.c.b16 %v5509, %v5505
        %v5694 = vpack.c.b16 %v5510, %v5506
        %v5695 = vpack.c.b16 %v5515, %v5511
        %v5696 = vpack.c.b16 %v5516, %v5512
        %v5697 = vpack.c.b16 %v5517, %v5513
        %v5698 = vpack.c.b16 %v5518, %v5514
        %v5699 = vpack.c.b16 %v5523, %v5519
        %v5700 = vpack.c.b16 %v5524, %v5520
        %v5701 = vpack.c.b16 %v5525, %v5521
        %v5702 = vpack.c.b16 %v5526, %v5522
        %v5703 = vpack.c.b16 %v5531, %v5527
        %v5704 = vpack.c.b16 %v5532, %v5528
        %v5705 = vpack.c.b16 %v5533, %v5529
        %v5706 = vpack.c.b16 %v5534, %v5530
        %v5707 = vpack.c.b16 %v5539, %v5535
        %v5708 = vpack.c.b16 %v5540, %v5536
        %v5709 = vpack.c.b16 %v5541, %v5537
        %v5710 = vpack.c.b16 %v5542, %v5538
        %v5711 = vpack.c.b16 %v5547, %v5543
        %v5712 = vpack.c.b16 %v5548, %v5544
        %v5713 = vpack.c.b16 %v5549, %v5545
        %v5714 = vpack.c.b16 %v5550, %v5546
        %v5715 = vpack.c.b16 %v5555, %v5551
        %v5716 = vpack.c.b16 %v5556, %v5552
        %v5717 = vpack.c.b16 %v5557, %v5553
        %v5718 = vpack.c.b16 %v5558, %v5554
        %v5719 = vpack.c.b16 %v5563, %v5559
        %v5720 = vpack.c.b16 %v5564, %v5560
        %v5721 = vpack.c.b16 %v5565, %v5561
        %v5722 = vpack.c.b16 %v5566, %v5562
        %v5723 = vpack.c.b16 %v5571, %v5567
        %v5724 = vpack.c.b16 %v5572, %v5568
        %v5725 = vpack.c.b16 %v5573, %v5569
        %v5726 = vpack.c.b16 %v5574, %v5570
        %v5727 = vpack.c.b16 %v5579, %v5575
        %v5728 = vpack.c.b16 %v5580, %v5576
        %v5729 = vpack.c.b16 %v5581, %v5577
        %v5730 = vpack.c.b16 %v5582, %v5578
        %v5731 = vpack.c.b16 %v5587, %v5583
        %v5732 = vpack.c.b16 %v5588, %v5584
        %v5733 = vpack.c.b16 %v5589, %v5585
        %v5734 = vpack.c.b16 %v5590, %v5586
        %v5735 = vpack.c.b16 %v5595, %v5591
        %v5736 = vpack.c.b16 %v5596, %v5592
        %v5737 = vpack.c.b16 %v5597, %v5593
        %v5738 = vpack.c.b16 %v5598, %v5594
        %v5739 = vpack.c.b16 %v5603, %v5599
        %v5740 = vpack.c.b16 %v5604, %v5600
        %v5741 = vpack.c.b16 %v5605, %v5601
        %v5742 = vpack.c.b16 %v5606, %v5602
        %v5743 = vpack.c.b16 %v5611, %v5607
        %v5744 = vpack.c.b16 %v5612, %v5608
        %v5745 = vpack.c.b16 %v5613, %v5609
        %v5746 = vpack.c.b16 %v5614, %v5610
        %v5747 = vpack.c.b16 %v5619, %v5615
        %v5748 = vpack.c.b16 %v5620, %v5616
        %v5749 = vpack.c.b16 %v5621, %v5617
        %v5750 = vpack.c.b16 %v5622, %v5618
        %5879 = vmatpush.bf16.msra.mxu0 %v5651
        %5880 = vmatpush.bf16.msra.mxu0 %v5647
        %5881 = vmatpush.bf16.msra.mxu0 %v5643
        %5882 = vmatpush.bf16.msra.mxu0 %v5639
        %5883 = vmatpush.bf16.msra.mxu0 %v5635
        %5884 = vmatpush.bf16.msra.mxu0 %v5631
        %5885 = vmatpush.bf16.msra.mxu0 %v5627
        %5886 = vmatpush.bf16.msra.mxu0 %v5623
        %5887 = vmatmul.bf16.gmra.mxu0 %v5231
        %v5888 = vpop.f32.mrf.mxu0
        %v5889 = vadd.f32 0.0, %v5888
        %v5890 = vpop.f32.mrf.mxu0
        %5891 = vdwg.mxu0
        %5892 = vmatpush.bf16.msra.mxu0 %v5683
        %5893 = vmatpush.bf16.msra.mxu0 %v5679
        %5894 = vmatpush.bf16.msra.mxu0 %v5675
        %5895 = vmatpush.bf16.msra.mxu0 %v5671
        %5896 = vmatpush.bf16.msra.mxu0 %v5667
        %5897 = vmatpush.bf16.msra.mxu0 %v5663
        %5898 = vmatpush.bf16.msra.mxu0 %v5659
        %5899 = vmatpush.bf16.msra.mxu0 %v5655
        %5900 = vmatmul.bf16.gmra.mxu0 %v5232
        %v5901 = vpop.f32.mrf.mxu0
        %v5902 = vadd.f32 %v5889, %v5901
        %v5903 = vpop.f32.mrf.mxu0
        %5904 = vdwg.mxu0
        %5905 = vmatpush.bf16.msra.mxu0 %v5715
        %5906 = vmatpush.bf16.msra.mxu0 %v5711
        %5907 = vmatpush.bf16.msra.mxu0 %v5707
        %5908 = vmatpush.bf16.msra.mxu0 %v5703
        %5909 = vmatpush.bf16.msra.mxu0 %v5699
        %5910 = vmatpush.bf16.msra.mxu0 %v5695
        %5911 = vmatpush.bf16.msra.mxu0 %v5691
        %5912 = vmatpush.bf16.msra.mxu0 %v5687
        %5913 = vmatmul.bf16.gmra.mxu0 %v5233
        %v5914 = vpop.f32.mrf.mxu0
        %v5915 = vadd.f32 %v5902, %v5914
        %v5916 = vpop.f32.mrf.mxu0
        %5917 = vdwg.mxu0
        %5918 = vmatpush.bf16.msra.mxu0 %v5747
        %5919 = vmatpush.bf16.msra.mxu0 %v5743
        %5920 = vmatpush.bf16.msra.mxu0 %v5739
        %5921 = vmatpush.bf16.msra.mxu0 %v5735
        %5922 = vmatpush.bf16.msra.mxu0 %v5731
        %5923 = vmatpush.bf16.msra.mxu0 %v5727
        %5924 = vmatpush.bf16.msra.mxu0 %v5723
        %5925 = vmatpush.bf16.msra.mxu0 %v5719
        %5926 = vmatmul.bf16.gmra.mxu0 %v5234
        %v5927 = vpop.f32.mrf.mxu0
        %v5928 = vadd.f32 %v5915, %v5927
        %v5929 = vpop.f32.mrf.mxu0
        %5930 = vdwg.mxu0
        %5931 = vmatpush.bf16.msra.mxu0 %v5652
        %5932 = vmatpush.bf16.msra.mxu0 %v5648
        %5933 = vmatpush.bf16.msra.mxu0 %v5644
        %5934 = vmatpush.bf16.msra.mxu0 %v5640
        %5935 = vmatpush.bf16.msra.mxu0 %v5636
        %5936 = vmatpush.bf16.msra.mxu0 %v5632
        %5937 = vmatpush.bf16.msra.mxu0 %v5628
        %5938 = vmatpush.bf16.msra.mxu0 %v5624
        %5939 = vmatmul.bf16.gmra.mxu0 %v5231
        %v5940 = vpop.f32.mrf.mxu0
        %v5941 = vadd.f32 0.0, %v5940
        %v5942 = vpop.f32.mrf.mxu0
        %5943 = vdwg.mxu0
        %5944 = vmatpush.bf16.msra.mxu0 %v5684
        %5945 = vmatpush.bf16.msra.mxu0 %v5680
        %5946 = vmatpush.bf16.msra.mxu0 %v5676
        %5947 = vmatpush.bf16.msra.mxu0 %v5672
        %5948 = vmatpush.bf16.msra.mxu0 %v5668
        %5949 = vmatpush.bf16.msra.mxu0 %v5664
        %5950 = vmatpush.bf16.msra.mxu0 %v5660
        %5951 = vmatpush.bf16.msra.mxu0 %v5656
        %5952 = vmatmul.bf16.gmra.mxu0 %v5232
        %v5953 = vpop.f32.mrf.mxu0
        %v5954 = vadd.f32 %v5941, %v5953
        %v5955 = vpop.f32.mrf.mxu0
        %5956 = vdwg.mxu0
        %5957 = vmatpush.bf16.msra.mxu0 %v5716
        %5958 = vmatpush.bf16.msra.mxu0 %v5712
        %5959 = vmatpush.bf16.msra.mxu0 %v5708
        %5960 = vmatpush.bf16.msra.mxu0 %v5704
        %5961 = vmatpush.bf16.msra.mxu0 %v5700
        %5962 = vmatpush.bf16.msra.mxu0 %v5696
        %5963 = vmatpush.bf16.msra.mxu0 %v5692
        %5964 = vmatpush.bf16.msra.mxu0 %v5688
        %5965 = vmatmul.bf16.gmra.mxu0 %v5233
        %v5966 = vpop.f32.mrf.mxu0
        %v5967 = vadd.f32 %v5954, %v5966
        %v5968 = vpop.f32.mrf.mxu0
        %5969 = vdwg.mxu0
        %5970 = vmatpush.bf16.msra.mxu0 %v5748
        %5971 = vmatpush.bf16.msra.mxu0 %v5744
        %5972 = vmatpush.bf16.msra.mxu0 %v5740
        %5973 = vmatpush.bf16.msra.mxu0 %v5736
        %5974 = vmatpush.bf16.msra.mxu0 %v5732
        %5975 = vmatpush.bf16.msra.mxu0 %v5728
        %5976 = vmatpush.bf16.msra.mxu0 %v5724
        %5977 = vmatpush.bf16.msra.mxu0 %v5720
        %5978 = vmatmul.bf16.gmra.mxu0 %v5234
        %v5979 = vpop.f32.mrf.mxu0
        %v5980 = vadd.f32 %v5967, %v5979
        %v5981 = vpop.f32.mrf.mxu0
        %5982 = vdwg.mxu0
        %5983 = vmatpush.bf16.msra.mxu0 %v5653
        %5984 = vmatpush.bf16.msra.mxu0 %v5649
        %5985 = vmatpush.bf16.msra.mxu0 %v5645
        %5986 = vmatpush.bf16.msra.mxu0 %v5641
        %5987 = vmatpush.bf16.msra.mxu0 %v5637
        %5988 = vmatpush.bf16.msra.mxu0 %v5633
        %5989 = vmatpush.bf16.msra.mxu0 %v5629
        %5990 = vmatpush.bf16.msra.mxu0 %v5625
        %5991 = vmatmul.bf16.gmra.mxu0 %v5231
        %v5992 = vpop.f32.mrf.mxu0
        %v5993 = vadd.f32 0.0, %v5992
        %v5994 = vpop.f32.mrf.mxu0
        %5995 = vdwg.mxu0
        %5996 = vmatpush.bf16.msra.mxu0 %v5685
        %5997 = vmatpush.bf16.msra.mxu0 %v5681
        %5998 = vmatpush.bf16.msra.mxu0 %v5677
        %5999 = vmatpush.bf16.msra.mxu0 %v5673
        %6000 = vmatpush.bf16.msra.mxu0 %v5669
        %6001 = vmatpush.bf16.msra.mxu0 %v5665
        %6002 = vmatpush.bf16.msra.mxu0 %v5661
        %6003 = vmatpush.bf16.msra.mxu0 %v5657
        %6004 = vmatmul.bf16.gmra.mxu0 %v5232
        %v6005 = vpop.f32.mrf.mxu0
        %v6006 = vadd.f32 %v5993, %v6005
        %v6007 = vpop.f32.mrf.mxu0
        %6008 = vdwg.mxu0
        %6009 = vmatpush.bf16.msra.mxu0 %v5717
        %6010 = vmatpush.bf16.msra.mxu0 %v5713
        %6011 = vmatpush.bf16.msra.mxu0 %v5709
        %6012 = vmatpush.bf16.msra.mxu0 %v5705
        %6013 = vmatpush.bf16.msra.mxu0 %v5701
        %6014 = vmatpush.bf16.msra.mxu0 %v5697
        %6015 = vmatpush.bf16.msra.mxu0 %v5693
        %6016 = vmatpush.bf16.msra.mxu0 %v5689
        %6017 = vmatmul.bf16.gmra.mxu0 %v5233
        %v6018 = vpop.f32.mrf.mxu0
        %v6019 = vadd.f32 %v6006, %v6018
        %v6020 = vpop.f32.mrf.mxu0
        %6021 = vdwg.mxu0
        %6022 = vmatpush.bf16.msra.mxu0 %v5749
        %6023 = vmatpush.bf16.msra.mxu0 %v5745
        %6024 = vmatpush.bf16.msra.mxu0 %v5741
        %6025 = vmatpush.bf16.msra.mxu0 %v5737
        %6026 = vmatpush.bf16.msra.mxu0 %v5733
        %6027 = vmatpush.bf16.msra.mxu0 %v5729
        %6028 = vmatpush.bf16.msra.mxu0 %v5725
        %6029 = vmatpush.bf16.msra.mxu0 %v5721
        %6030 = vmatmul.bf16.gmra.mxu0 %v5234
        %v6031 = vpop.f32.mrf.mxu0
        %v6032 = vadd.f32 %v6019, %v6031
        %v6033 = vpop.f32.mrf.mxu0
        %6034 = vdwg.mxu0
        %6035 = vmatpush.bf16.msra.mxu0 %v5654
        %6036 = vmatpush.bf16.msra.mxu0 %v5650
        %6037 = vmatpush.bf16.msra.mxu0 %v5646
        %6038 = vmatpush.bf16.msra.mxu0 %v5642
        %6039 = vmatpush.bf16.msra.mxu0 %v5638
        %6040 = vmatpush.bf16.msra.mxu0 %v5634
        %6041 = vmatpush.bf16.msra.mxu0 %v5630
        %6042 = vmatpush.bf16.msra.mxu0 %v5626
        %6043 = vmatmul.bf16.gmra.mxu0 %v5231
        %v6044 = vpop.f32.mrf.mxu0
        %v6045 = vadd.f32 0.0, %v6044
        %v6046 = vpop.f32.mrf.mxu0
        %6047 = vdwg.mxu0
        %6048 = vmatpush.bf16.msra.mxu0 %v5686
        %6049 = vmatpush.bf16.msra.mxu0 %v5682
        %6050 = vmatpush.bf16.msra.mxu0 %v5678
        %6051 = vmatpush.bf16.msra.mxu0 %v5674
        %6052 = vmatpush.bf16.msra.mxu0 %v5670
        %6053 = vmatpush.bf16.msra.mxu0 %v5666
        %6054 = vmatpush.bf16.msra.mxu0 %v5662
        %6055 = vmatpush.bf16.msra.mxu0 %v5658
        %6056 = vmatmul.bf16.gmra.mxu0 %v5232
        %v6057 = vpop.f32.mrf.mxu0
        %v6058 = vadd.f32 %v6045, %v6057
        %v6059 = vpop.f32.mrf.mxu0
        %6060 = vdwg.mxu0
        %6061 = vmatpush.bf16.msra.mxu0 %v5718
        %6062 = vmatpush.bf16.msra.mxu0 %v5714
        %6063 = vmatpush.bf16.msra.mxu0 %v5710
        %6064 = vmatpush.bf16.msra.mxu0 %v5706
        %6065 = vmatpush.bf16.msra.mxu0 %v5702
        %6066 = vmatpush.bf16.msra.mxu0 %v5698
        %6067 = vmatpush.bf16.msra.mxu0 %v5694
        %6068 = vmatpush.bf16.msra.mxu0 %v5690
        %6069 = vmatmul.bf16.gmra.mxu0 %v5233
        %v6070 = vpop.f32.mrf.mxu0
        %v6071 = vadd.f32 %v6058, %v6070
        %v6072 = vpop.f32.mrf.mxu0
        %6073 = vdwg.mxu0
        %6074 = vmatpush.bf16.msra.mxu0 %v5750
        %6075 = vmatpush.bf16.msra.mxu0 %v5746
        %6076 = vmatpush.bf16.msra.mxu0 %v5742
        %6077 = vmatpush.bf16.msra.mxu0 %v5738
        %6078 = vmatpush.bf16.msra.mxu0 %v5734
        %6079 = vmatpush.bf16.msra.mxu0 %v5730
        %6080 = vmatpush.bf16.msra.mxu0 %v5726
        %6081 = vmatpush.bf16.msra.mxu0 %v5722
        %6082 = vmatmul.bf16.gmra.mxu0 %v5234
        %v6083 = vpop.f32.mrf.mxu0
        %v6084 = vadd.f32 %v6071, %v6083
        %v6085 = vpop.f32.mrf.mxu0
        %6086 = vdwg.mxu0
        %v6087 = vadd.f32 %v4900, %v5928
        %v6088 = vadd.f32 %v4952, %v5980
        %v6089 = vadd.f32 %v5004, %v6032
        %v6090 = vadd.f32 %v5056, %v6084
        %v6091 = vld [vmem:[#allocation2] sm:$0xaa]
        %v6092 = vld [vmem:[#allocation2 + $0x8] sm:$0xaa]
        %s6093 = scalar_lea.vmem %s476, 3072 [#allocation12]
        %v6094 = vld [vmem:[%s6093] sm:$0xff]
        %v6095 = vld [vmem:[%s6093 + $0x8] sm:$0xff]
        %v6096 = vld [vmem:[%s6093 + $0x10] sm:$0xff]
        %v6097 = vld [vmem:[%s6093 + $0x18] sm:$0xff]
        %v6098 = vld [vmem:[%s6093 + $0x20] sm:$0xff]
        %v6099 = vld [vmem:[%s6093 + $0x28] sm:$0xff]
        %v6100 = vld [vmem:[%s6093 + $0x30] sm:$0xff]
        %v6101 = vld [vmem:[%s6093 + $0x38] sm:$0xff]
        %v6102 = vld [vmem:[%s6093 + $0x40] sm:$0xff]
        %v6103 = vld [vmem:[%s6093 + $0x48] sm:$0xff]
        %v6104 = vld [vmem:[%s6093 + $0x50] sm:$0xff]
        %v6105 = vld [vmem:[%s6093 + $0x58] sm:$0xff]
        %v6106 = vld [vmem:[%s6093 + $0x60] sm:$0xff]
        %v6107 = vld [vmem:[%s6093 + $0x68] sm:$0xff]
        %v6108 = vld [vmem:[%s6093 + $0x70] sm:$0xff]
        %v6109 = vld [vmem:[%s6093 + $0x78] sm:$0xff]
        %v6110 = vld [vmem:[%s6093 + $0x80] sm:$0xff]
        %v6111 = vld [vmem:[%s6093 + $0x88] sm:$0xff]
        %v6112 = vld [vmem:[%s6093 + $0x90] sm:$0xff]
        %v6113 = vld [vmem:[%s6093 + $0x98] sm:$0xff]
        %v6114 = vld [vmem:[%s6093 + $0xa0] sm:$0xff]
        %v6115 = vld [vmem:[%s6093 + $0xa8] sm:$0xff]
        %v6116 = vld [vmem:[%s6093 + $0xb0] sm:$0xff]
        %v6117 = vld [vmem:[%s6093 + $0xb8] sm:$0xff]
        %v6118 = vld [vmem:[%s6093 + $0xc0] sm:$0xff]
        %v6119 = vld [vmem:[%s6093 + $0xc8] sm:$0xff]
        %v6120 = vld [vmem:[%s6093 + $0xd0] sm:$0xff]
        %v6121 = vld [vmem:[%s6093 + $0xd8] sm:$0xff]
        %v6122 = vld [vmem:[%s6093 + $0xe0] sm:$0xff]
        %v6123 = vld [vmem:[%s6093 + $0xe8] sm:$0xff]
        %v6124 = vld [vmem:[%s6093 + $0xf0] sm:$0xff]
        %v6125 = vld [vmem:[%s6093 + $0xf8] sm:$0xff]
        %v6126 = vld [vmem:[%s6093 + $0x100] sm:$0xff]
        %v6127 = vld [vmem:[%s6093 + $0x108] sm:$0xff]
        %v6128 = vld [vmem:[%s6093 + $0x110] sm:$0xff]
        %v6129 = vld [vmem:[%s6093 + $0x118] sm:$0xff]
        %v6130 = vld [vmem:[%s6093 + $0x120] sm:$0xff]
        %v6131 = vld [vmem:[%s6093 + $0x128] sm:$0xff]
        %v6132 = vld [vmem:[%s6093 + $0x130] sm:$0xff]
        %v6133 = vld [vmem:[%s6093 + $0x138] sm:$0xff]
        %v6134 = vld [vmem:[%s6093 + $0x140] sm:$0xff]
        %v6135 = vld [vmem:[%s6093 + $0x148] sm:$0xff]
        %v6136 = vld [vmem:[%s6093 + $0x150] sm:$0xff]
        %v6137 = vld [vmem:[%s6093 + $0x158] sm:$0xff]
        %v6138 = vld [vmem:[%s6093 + $0x160] sm:$0xff]
        %v6139 = vld [vmem:[%s6093 + $0x168] sm:$0xff]
        %v6140 = vld [vmem:[%s6093 + $0x170] sm:$0xff]
        %v6141 = vld [vmem:[%s6093 + $0x178] sm:$0xff]
        %v6142 = vld [vmem:[%s6093 + $0x180] sm:$0xff]
        %v6143 = vld [vmem:[%s6093 + $0x188] sm:$0xff]
        %v6144 = vld [vmem:[%s6093 + $0x190] sm:$0xff]
        %v6145 = vld [vmem:[%s6093 + $0x198] sm:$0xff]
        %v6146 = vld [vmem:[%s6093 + $0x1a0] sm:$0xff]
        %v6147 = vld [vmem:[%s6093 + $0x1a8] sm:$0xff]
        %v6148 = vld [vmem:[%s6093 + $0x1b0] sm:$0xff]
        %v6149 = vld [vmem:[%s6093 + $0x1b8] sm:$0xff]
        %v6150 = vld [vmem:[%s6093 + $0x1c0] sm:$0xff]
        %v6151 = vld [vmem:[%s6093 + $0x1c8] sm:$0xff]
        %v6152 = vld [vmem:[%s6093 + $0x1d0] sm:$0xff]
        %v6153 = vld [vmem:[%s6093 + $0x1d8] sm:$0xff]
        %v6154 = vld [vmem:[%s6093 + $0x1e0] sm:$0xff]
        %v6155 = vld [vmem:[%s6093 + $0x1e8] sm:$0xff]
        %v6156 = vld [vmem:[%s6093 + $0x1f0] sm:$0xff]
        %v6157 = vld [vmem:[%s6093 + $0x1f8] sm:$0xff]
        %v6158 = vld [vmem:[%s6093 + $0x200] sm:$0xff]
        %v6159 = vld [vmem:[%s6093 + $0x208] sm:$0xff]
        %v6160 = vld [vmem:[%s6093 + $0x210] sm:$0xff]
        %v6161 = vld [vmem:[%s6093 + $0x218] sm:$0xff]
        %v6162 = vld [vmem:[%s6093 + $0x220] sm:$0xff]
        %v6163 = vld [vmem:[%s6093 + $0x228] sm:$0xff]
        %v6164 = vld [vmem:[%s6093 + $0x230] sm:$0xff]
        %v6165 = vld [vmem:[%s6093 + $0x238] sm:$0xff]
        %v6166 = vld [vmem:[%s6093 + $0x240] sm:$0xff]
        %v6167 = vld [vmem:[%s6093 + $0x248] sm:$0xff]
        %v6168 = vld [vmem:[%s6093 + $0x250] sm:$0xff]
        %v6169 = vld [vmem:[%s6093 + $0x258] sm:$0xff]
        %v6170 = vld [vmem:[%s6093 + $0x260] sm:$0xff]
        %v6171 = vld [vmem:[%s6093 + $0x268] sm:$0xff]
        %v6172 = vld [vmem:[%s6093 + $0x270] sm:$0xff]
        %v6173 = vld [vmem:[%s6093 + $0x278] sm:$0xff]
        %v6174 = vld [vmem:[%s6093 + $0x280] sm:$0xff]
        %v6175 = vld [vmem:[%s6093 + $0x288] sm:$0xff]
        %v6176 = vld [vmem:[%s6093 + $0x290] sm:$0xff]
        %v6177 = vld [vmem:[%s6093 + $0x298] sm:$0xff]
        %v6178 = vld [vmem:[%s6093 + $0x2a0] sm:$0xff]
        %v6179 = vld [vmem:[%s6093 + $0x2a8] sm:$0xff]
        %v6180 = vld [vmem:[%s6093 + $0x2b0] sm:$0xff]
        %v6181 = vld [vmem:[%s6093 + $0x2b8] sm:$0xff]
        %v6182 = vld [vmem:[%s6093 + $0x2c0] sm:$0xff]
        %v6183 = vld [vmem:[%s6093 + $0x2c8] sm:$0xff]
        %v6184 = vld [vmem:[%s6093 + $0x2d0] sm:$0xff]
        %v6185 = vld [vmem:[%s6093 + $0x2d8] sm:$0xff]
        %v6186 = vld [vmem:[%s6093 + $0x2e0] sm:$0xff]
        %v6187 = vld [vmem:[%s6093 + $0x2e8] sm:$0xff]
        %v6188 = vld [vmem:[%s6093 + $0x2f0] sm:$0xff]
        %v6189 = vld [vmem:[%s6093 + $0x2f8] sm:$0xff]
        %v6190 = vld [vmem:[%s6093 + $0x300] sm:$0xff]
        %v6191 = vld [vmem:[%s6093 + $0x308] sm:$0xff]
        %v6192 = vld [vmem:[%s6093 + $0x310] sm:$0xff]
        %v6193 = vld [vmem:[%s6093 + $0x318] sm:$0xff]
        %v6194 = vld [vmem:[%s6093 + $0x320] sm:$0xff]
        %v6195 = vld [vmem:[%s6093 + $0x328] sm:$0xff]
        %v6196 = vld [vmem:[%s6093 + $0x330] sm:$0xff]
        %v6197 = vld [vmem:[%s6093 + $0x338] sm:$0xff]
        %v6198 = vld [vmem:[%s6093 + $0x340] sm:$0xff]
        %v6199 = vld [vmem:[%s6093 + $0x348] sm:$0xff]
        %v6200 = vld [vmem:[%s6093 + $0x350] sm:$0xff]
        %v6201 = vld [vmem:[%s6093 + $0x358] sm:$0xff]
        %v6202 = vld [vmem:[%s6093 + $0x360] sm:$0xff]
        %v6203 = vld [vmem:[%s6093 + $0x368] sm:$0xff]
        %v6204 = vld [vmem:[%s6093 + $0x370] sm:$0xff]
        %v6205 = vld [vmem:[%s6093 + $0x378] sm:$0xff]
        %v6206 = vld [vmem:[%s6093 + $0x380] sm:$0xff]
        %v6207 = vld [vmem:[%s6093 + $0x388] sm:$0xff]
        %v6208 = vld [vmem:[%s6093 + $0x390] sm:$0xff]
        %v6209 = vld [vmem:[%s6093 + $0x398] sm:$0xff]
        %v6210 = vld [vmem:[%s6093 + $0x3a0] sm:$0xff]
        %v6211 = vld [vmem:[%s6093 + $0x3a8] sm:$0xff]
        %v6212 = vld [vmem:[%s6093 + $0x3b0] sm:$0xff]
        %v6213 = vld [vmem:[%s6093 + $0x3b8] sm:$0xff]
        %v6214 = vld [vmem:[%s6093 + $0x3c0] sm:$0xff]
        %v6215 = vld [vmem:[%s6093 + $0x3c8] sm:$0xff]
        %v6216 = vld [vmem:[%s6093 + $0x3d0] sm:$0xff]
        %v6217 = vld [vmem:[%s6093 + $0x3d8] sm:$0xff]
        %v6218 = vld [vmem:[%s6093 + $0x3e0] sm:$0xff]
        %v6219 = vld [vmem:[%s6093 + $0x3e8] sm:$0xff]
        %v6220 = vld [vmem:[%s6093 + $0x3f0] sm:$0xff]
        %v6221 = vld [vmem:[%s6093 + $0x3f8] sm:$0xff]
        %6223 = vst [vmem:[#allocation1] ss:$4 sm:$0xff] %v6091
        %v6224 = vld.sshfl [vmem:[#allocation1] sm:$0xff pattern:$0x73625140]
        %v6226 = vld.sshfl [vmem:[#allocation1 + $0x8] sm:$0xff pattern:$0x73625140]
        %v6228 = vld.sshfl [vmem:[#allocation1 + $0x10] sm:$0xff pattern:$0x73625140]
        %v6230 = vld.sshfl [vmem:[#allocation1 + $0x18] sm:$0xff pattern:$0x73625140]
        %s6233 = scalar_lea.vmem [#allocation1], 32
        %6234 = vst [vmem:[%s6233] ss:$4 sm:$0xff] %v6092
        %v6235 = vld.sshfl [vmem:[#allocation1 + $0x20] sm:$0xff pattern:$0x73625140]
        %v6237 = vld.sshfl [vmem:[#allocation1 + $0x28] sm:$0xff pattern:$0x73625140]
        %v6239 = vld.sshfl [vmem:[#allocation1 + $0x30] sm:$0xff pattern:$0x73625140]
        %v6241 = vld.sshfl [vmem:[#allocation1 + $0x38] sm:$0xff pattern:$0x73625140]
        %v6243 = vunpack.c.l.b16 %v6224
        %v6244 = vunpack.c.l.b16 %v6226
        %v6245 = vunpack.c.l.b16 %v6228
        %v6246 = vunpack.c.l.b16 %v6230
        %v6247 = vunpack.c.l.b16 %v6235
        %v6248 = vunpack.c.l.b16 %v6237
        %v6249 = vunpack.c.l.b16 %v6239
        %v6250 = vunpack.c.l.b16 %v6241
        %v6251 = vrot.slane %v6243, 3
        %v6252 = vrot.slane %v6247, 2
        %v6253 = vsel %vm3304, %v6252, %v6251
        %v6254 = vrot.slane %v6244, 3
        %v6255 = vrot.slane %v6248, 2
        %v6256 = vsel %vm3304, %v6255, %v6254
        %v6257 = vrot.slane %v6245, 3
        %v6258 = vrot.slane %v6249, 2
        %v6259 = vsel %vm3304, %v6258, %v6257
        %v6260 = vrot.slane %v6246, 3
        %v6261 = vrot.slane %v6250, 2
        %v6262 = vsel %vm3304, %v6261, %v6260
        %v6263 = vpack.c.b16 %v6253, %v6253
        %v6264 = vpack.c.b16 %v6256, %v6256
        %v6265 = vpack.c.b16 %v6259, %v6259
        %v6266 = vpack.c.b16 %v6262, %v6262
        %v6399 = vunpack.c.l.b16 %v6094
        %v6400 = vunpack.c.h.b16 %v6094
        %v6401 = vunpack.c.l.b16 %v6095
        %v6402 = vunpack.c.h.b16 %v6095
        %v6403 = vunpack.c.l.b16 %v6096
        %v6404 = vunpack.c.h.b16 %v6096
        %v6405 = vunpack.c.l.b16 %v6097
        %v6406 = vunpack.c.h.b16 %v6097
        %v6407 = vunpack.c.l.b16 %v6098
        %v6408 = vunpack.c.h.b16 %v6098
        %v6409 = vunpack.c.l.b16 %v6099
        %v6410 = vunpack.c.h.b16 %v6099
        %v6411 = vunpack.c.l.b16 %v6100
        %v6412 = vunpack.c.h.b16 %v6100
        %v6413 = vunpack.c.l.b16 %v6101
        %v6414 = vunpack.c.h.b16 %v6101
        %v6415 = vunpack.c.l.b16 %v6102
        %v6416 = vunpack.c.h.b16 %v6102
        %v6417 = vunpack.c.l.b16 %v6103
        %v6418 = vunpack.c.h.b16 %v6103
        %v6419 = vunpack.c.l.b16 %v6104
        %v6420 = vunpack.c.h.b16 %v6104
        %v6421 = vunpack.c.l.b16 %v6105
        %v6422 = vunpack.c.h.b16 %v6105
        %v6423 = vunpack.c.l.b16 %v6106
        %v6424 = vunpack.c.h.b16 %v6106
        %v6425 = vunpack.c.l.b16 %v6107
        %v6426 = vunpack.c.h.b16 %v6107
        %v6427 = vunpack.c.l.b16 %v6108
        %v6428 = vunpack.c.h.b16 %v6108
        %v6429 = vunpack.c.l.b16 %v6109
        %v6430 = vunpack.c.h.b16 %v6109
        %v6431 = vunpack.c.l.b16 %v6110
        %v6432 = vunpack.c.h.b16 %v6110
        %v6433 = vunpack.c.l.b16 %v6111
        %v6434 = vunpack.c.h.b16 %v6111
        %v6435 = vunpack.c.l.b16 %v6112
        %v6436 = vunpack.c.h.b16 %v6112
        %v6437 = vunpack.c.l.b16 %v6113
        %v6438 = vunpack.c.h.b16 %v6113
        %v6439 = vunpack.c.l.b16 %v6114
        %v6440 = vunpack.c.h.b16 %v6114
        %v6441 = vunpack.c.l.b16 %v6115
        %v6442 = vunpack.c.h.b16 %v6115
        %v6443 = vunpack.c.l.b16 %v6116
        %v6444 = vunpack.c.h.b16 %v6116
        %v6445 = vunpack.c.l.b16 %v6117
        %v6446 = vunpack.c.h.b16 %v6117
        %v6447 = vunpack.c.l.b16 %v6118
        %v6448 = vunpack.c.h.b16 %v6118
        %v6449 = vunpack.c.l.b16 %v6119
        %v6450 = vunpack.c.h.b16 %v6119
        %v6451 = vunpack.c.l.b16 %v6120
        %v6452 = vunpack.c.h.b16 %v6120
        %v6453 = vunpack.c.l.b16 %v6121
        %v6454 = vunpack.c.h.b16 %v6121
        %v6455 = vunpack.c.l.b16 %v6122
        %v6456 = vunpack.c.h.b16 %v6122
        %v6457 = vunpack.c.l.b16 %v6123
        %v6458 = vunpack.c.h.b16 %v6123
        %v6459 = vunpack.c.l.b16 %v6124
        %v6460 = vunpack.c.h.b16 %v6124
        %v6461 = vunpack.c.l.b16 %v6125
        %v6462 = vunpack.c.h.b16 %v6125
        %v6463 = vunpack.c.l.b16 %v6126
        %v6464 = vunpack.c.h.b16 %v6126
        %v6465 = vunpack.c.l.b16 %v6127
        %v6466 = vunpack.c.h.b16 %v6127
        %v6467 = vunpack.c.l.b16 %v6128
        %v6468 = vunpack.c.h.b16 %v6128
        %v6469 = vunpack.c.l.b16 %v6129
        %v6470 = vunpack.c.h.b16 %v6129
        %v6471 = vunpack.c.l.b16 %v6130
        %v6472 = vunpack.c.h.b16 %v6130
        %v6473 = vunpack.c.l.b16 %v6131
        %v6474 = vunpack.c.h.b16 %v6131
        %v6475 = vunpack.c.l.b16 %v6132
        %v6476 = vunpack.c.h.b16 %v6132
        %v6477 = vunpack.c.l.b16 %v6133
        %v6478 = vunpack.c.h.b16 %v6133
        %v6479 = vunpack.c.l.b16 %v6134
        %v6480 = vunpack.c.h.b16 %v6134
        %v6481 = vunpack.c.l.b16 %v6135
        %v6482 = vunpack.c.h.b16 %v6135
        %v6483 = vunpack.c.l.b16 %v6136
        %v6484 = vunpack.c.h.b16 %v6136
        %v6485 = vunpack.c.l.b16 %v6137
        %v6486 = vunpack.c.h.b16 %v6137
        %v6487 = vunpack.c.l.b16 %v6138
        %v6488 = vunpack.c.h.b16 %v6138
        %v6489 = vunpack.c.l.b16 %v6139
        %v6490 = vunpack.c.h.b16 %v6139
        %v6491 = vunpack.c.l.b16 %v6140
        %v6492 = vunpack.c.h.b16 %v6140
        %v6493 = vunpack.c.l.b16 %v6141
        %v6494 = vunpack.c.h.b16 %v6141
        %v6495 = vunpack.c.l.b16 %v6142
        %v6496 = vunpack.c.h.b16 %v6142
        %v6497 = vunpack.c.l.b16 %v6143
        %v6498 = vunpack.c.h.b16 %v6143
        %v6499 = vunpack.c.l.b16 %v6144
        %v6500 = vunpack.c.h.b16 %v6144
        %v6501 = vunpack.c.l.b16 %v6145
        %v6502 = vunpack.c.h.b16 %v6145
        %v6503 = vunpack.c.l.b16 %v6146
        %v6504 = vunpack.c.h.b16 %v6146
        %v6505 = vunpack.c.l.b16 %v6147
        %v6506 = vunpack.c.h.b16 %v6147
        %v6507 = vunpack.c.l.b16 %v6148
        %v6508 = vunpack.c.h.b16 %v6148
        %v6509 = vunpack.c.l.b16 %v6149
        %v6510 = vunpack.c.h.b16 %v6149
        %v6511 = vunpack.c.l.b16 %v6150
        %v6512 = vunpack.c.h.b16 %v6150
        %v6513 = vunpack.c.l.b16 %v6151
        %v6514 = vunpack.c.h.b16 %v6151
        %v6515 = vunpack.c.l.b16 %v6152
        %v6516 = vunpack.c.h.b16 %v6152
        %v6517 = vunpack.c.l.b16 %v6153
        %v6518 = vunpack.c.h.b16 %v6153
        %v6519 = vunpack.c.l.b16 %v6154
        %v6520 = vunpack.c.h.b16 %v6154
        %v6521 = vunpack.c.l.b16 %v6155
        %v6522 = vunpack.c.h.b16 %v6155
        %v6523 = vunpack.c.l.b16 %v6156
        %v6524 = vunpack.c.h.b16 %v6156
        %v6525 = vunpack.c.l.b16 %v6157
        %v6526 = vunpack.c.h.b16 %v6157
        %v6527 = vunpack.c.l.b16 %v6158
        %v6528 = vunpack.c.h.b16 %v6158
        %v6529 = vunpack.c.l.b16 %v6159
        %v6530 = vunpack.c.h.b16 %v6159
        %v6531 = vunpack.c.l.b16 %v6160
        %v6532 = vunpack.c.h.b16 %v6160
        %v6533 = vunpack.c.l.b16 %v6161
        %v6534 = vunpack.c.h.b16 %v6161
        %v6535 = vunpack.c.l.b16 %v6162
        %v6536 = vunpack.c.h.b16 %v6162
        %v6537 = vunpack.c.l.b16 %v6163
        %v6538 = vunpack.c.h.b16 %v6163
        %v6539 = vunpack.c.l.b16 %v6164
        %v6540 = vunpack.c.h.b16 %v6164
        %v6541 = vunpack.c.l.b16 %v6165
        %v6542 = vunpack.c.h.b16 %v6165
        %v6543 = vunpack.c.l.b16 %v6166
        %v6544 = vunpack.c.h.b16 %v6166
        %v6545 = vunpack.c.l.b16 %v6167
        %v6546 = vunpack.c.h.b16 %v6167
        %v6547 = vunpack.c.l.b16 %v6168
        %v6548 = vunpack.c.h.b16 %v6168
        %v6549 = vunpack.c.l.b16 %v6169
        %v6550 = vunpack.c.h.b16 %v6169
        %v6551 = vunpack.c.l.b16 %v6170
        %v6552 = vunpack.c.h.b16 %v6170
        %v6553 = vunpack.c.l.b16 %v6171
        %v6554 = vunpack.c.h.b16 %v6171
        %v6555 = vunpack.c.l.b16 %v6172
        %v6556 = vunpack.c.h.b16 %v6172
        %v6557 = vunpack.c.l.b16 %v6173
        %v6558 = vunpack.c.h.b16 %v6173
        %v6559 = vunpack.c.l.b16 %v6174
        %v6560 = vunpack.c.h.b16 %v6174
        %v6561 = vunpack.c.l.b16 %v6175
        %v6562 = vunpack.c.h.b16 %v6175
        %v6563 = vunpack.c.l.b16 %v6176
        %v6564 = vunpack.c.h.b16 %v6176
        %v6565 = vunpack.c.l.b16 %v6177
        %v6566 = vunpack.c.h.b16 %v6177
        %v6567 = vunpack.c.l.b16 %v6178
        %v6568 = vunpack.c.h.b16 %v6178
        %v6569 = vunpack.c.l.b16 %v6179
        %v6570 = vunpack.c.h.b16 %v6179
        %v6571 = vunpack.c.l.b16 %v6180
        %v6572 = vunpack.c.h.b16 %v6180
        %v6573 = vunpack.c.l.b16 %v6181
        %v6574 = vunpack.c.h.b16 %v6181
        %v6575 = vunpack.c.l.b16 %v6182
        %v6576 = vunpack.c.h.b16 %v6182
        %v6577 = vunpack.c.l.b16 %v6183
        %v6578 = vunpack.c.h.b16 %v6183
        %v6579 = vunpack.c.l.b16 %v6184
        %v6580 = vunpack.c.h.b16 %v6184
        %v6581 = vunpack.c.l.b16 %v6185
        %v6582 = vunpack.c.h.b16 %v6185
        %v6583 = vunpack.c.l.b16 %v6186
        %v6584 = vunpack.c.h.b16 %v6186
        %v6585 = vunpack.c.l.b16 %v6187
        %v6586 = vunpack.c.h.b16 %v6187
        %v6587 = vunpack.c.l.b16 %v6188
        %v6588 = vunpack.c.h.b16 %v6188
        %v6589 = vunpack.c.l.b16 %v6189
        %v6590 = vunpack.c.h.b16 %v6189
        %v6591 = vunpack.c.l.b16 %v6190
        %v6592 = vunpack.c.h.b16 %v6190
        %v6593 = vunpack.c.l.b16 %v6191
        %v6594 = vunpack.c.h.b16 %v6191
        %v6595 = vunpack.c.l.b16 %v6192
        %v6596 = vunpack.c.h.b16 %v6192
        %v6597 = vunpack.c.l.b16 %v6193
        %v6598 = vunpack.c.h.b16 %v6193
        %v6599 = vunpack.c.l.b16 %v6194
        %v6600 = vunpack.c.h.b16 %v6194
        %v6601 = vunpack.c.l.b16 %v6195
        %v6602 = vunpack.c.h.b16 %v6195
        %v6603 = vunpack.c.l.b16 %v6196
        %v6604 = vunpack.c.h.b16 %v6196
        %v6605 = vunpack.c.l.b16 %v6197
        %v6606 = vunpack.c.h.b16 %v6197
        %v6607 = vunpack.c.l.b16 %v6198
        %v6608 = vunpack.c.h.b16 %v6198
        %v6609 = vunpack.c.l.b16 %v6199
        %v6610 = vunpack.c.h.b16 %v6199
        %v6611 = vunpack.c.l.b16 %v6200
        %v6612 = vunpack.c.h.b16 %v6200
        %v6613 = vunpack.c.l.b16 %v6201
        %v6614 = vunpack.c.h.b16 %v6201
        %v6615 = vunpack.c.l.b16 %v6202
        %v6616 = vunpack.c.h.b16 %v6202
        %v6617 = vunpack.c.l.b16 %v6203
        %v6618 = vunpack.c.h.b16 %v6203
        %v6619 = vunpack.c.l.b16 %v6204
        %v6620 = vunpack.c.h.b16 %v6204
        %v6621 = vunpack.c.l.b16 %v6205
        %v6622 = vunpack.c.h.b16 %v6205
        %v6623 = vunpack.c.l.b16 %v6206
        %v6624 = vunpack.c.h.b16 %v6206
        %v6625 = vunpack.c.l.b16 %v6207
        %v6626 = vunpack.c.h.b16 %v6207
        %v6627 = vunpack.c.l.b16 %v6208
        %v6628 = vunpack.c.h.b16 %v6208
        %v6629 = vunpack.c.l.b16 %v6209
        %v6630 = vunpack.c.h.b16 %v6209
        %v6631 = vunpack.c.l.b16 %v6210
        %v6632 = vunpack.c.h.b16 %v6210
        %v6633 = vunpack.c.l.b16 %v6211
        %v6634 = vunpack.c.h.b16 %v6211
        %v6635 = vunpack.c.l.b16 %v6212
        %v6636 = vunpack.c.h.b16 %v6212
        %v6637 = vunpack.c.l.b16 %v6213
        %v6638 = vunpack.c.h.b16 %v6213
        %v6639 = vunpack.c.l.b16 %v6214
        %v6640 = vunpack.c.h.b16 %v6214
        %v6641 = vunpack.c.l.b16 %v6215
        %v6642 = vunpack.c.h.b16 %v6215
        %v6643 = vunpack.c.l.b16 %v6216
        %v6644 = vunpack.c.h.b16 %v6216
        %v6645 = vunpack.c.l.b16 %v6217
        %v6646 = vunpack.c.h.b16 %v6217
        %v6647 = vunpack.c.l.b16 %v6218
        %v6648 = vunpack.c.h.b16 %v6218
        %v6649 = vunpack.c.l.b16 %v6219
        %v6650 = vunpack.c.h.b16 %v6219
        %v6651 = vunpack.c.l.b16 %v6220
        %v6652 = vunpack.c.h.b16 %v6220
        %v6653 = vunpack.c.l.b16 %v6221
        %v6654 = vunpack.c.h.b16 %v6221
        %v6655 = vpack.c.b16 %v6403, %v6399
        %v6656 = vpack.c.b16 %v6404, %v6400
        %v6657 = vpack.c.b16 %v6405, %v6401
        %v6658 = vpack.c.b16 %v6406, %v6402
        %v6659 = vpack.c.b16 %v6411, %v6407
        %v6660 = vpack.c.b16 %v6412, %v6408
        %v6661 = vpack.c.b16 %v6413, %v6409
        %v6662 = vpack.c.b16 %v6414, %v6410
        %v6663 = vpack.c.b16 %v6419, %v6415
        %v6664 = vpack.c.b16 %v6420, %v6416
        %v6665 = vpack.c.b16 %v6421, %v6417
        %v6666 = vpack.c.b16 %v6422, %v6418
        %v6667 = vpack.c.b16 %v6427, %v6423
        %v6668 = vpack.c.b16 %v6428, %v6424
        %v6669 = vpack.c.b16 %v6429, %v6425
        %v6670 = vpack.c.b16 %v6430, %v6426
        %v6671 = vpack.c.b16 %v6435, %v6431
        %v6672 = vpack.c.b16 %v6436, %v6432
        %v6673 = vpack.c.b16 %v6437, %v6433
        %v6674 = vpack.c.b16 %v6438, %v6434
        %v6675 = vpack.c.b16 %v6443, %v6439
        %v6676 = vpack.c.b16 %v6444, %v6440
        %v6677 = vpack.c.b16 %v6445, %v6441
        %v6678 = vpack.c.b16 %v6446, %v6442
        %v6679 = vpack.c.b16 %v6451, %v6447
        %v6680 = vpack.c.b16 %v6452, %v6448
        %v6681 = vpack.c.b16 %v6453, %v6449
        %v6682 = vpack.c.b16 %v6454, %v6450
        %v6683 = vpack.c.b16 %v6459, %v6455
        %v6684 = vpack.c.b16 %v6460, %v6456
        %v6685 = vpack.c.b16 %v6461, %v6457
        %v6686 = vpack.c.b16 %v6462, %v6458
        %v6687 = vpack.c.b16 %v6467, %v6463
        %v6688 = vpack.c.b16 %v6468, %v6464
        %v6689 = vpack.c.b16 %v6469, %v6465
        %v6690 = vpack.c.b16 %v6470, %v6466
        %v6691 = vpack.c.b16 %v6475, %v6471
        %v6692 = vpack.c.b16 %v6476, %v6472
        %v6693 = vpack.c.b16 %v6477, %v6473
        %v6694 = vpack.c.b16 %v6478, %v6474
        %v6695 = vpack.c.b16 %v6483, %v6479
        %v6696 = vpack.c.b16 %v6484, %v6480
        %v6697 = vpack.c.b16 %v6485, %v6481
        %v6698 = vpack.c.b16 %v6486, %v6482
        %v6699 = vpack.c.b16 %v6491, %v6487
        %v6700 = vpack.c.b16 %v6492, %v6488
        %v6701 = vpack.c.b16 %v6493, %v6489
        %v6702 = vpack.c.b16 %v6494, %v6490
        %v6703 = vpack.c.b16 %v6499, %v6495
        %v6704 = vpack.c.b16 %v6500, %v6496
        %v6705 = vpack.c.b16 %v6501, %v6497
        %v6706 = vpack.c.b16 %v6502, %v6498
        %v6707 = vpack.c.b16 %v6507, %v6503
        %v6708 = vpack.c.b16 %v6508, %v6504
        %v6709 = vpack.c.b16 %v6509, %v6505
        %v6710 = vpack.c.b16 %v6510, %v6506
        %v6711 = vpack.c.b16 %v6515, %v6511
        %v6712 = vpack.c.b16 %v6516, %v6512
        %v6713 = vpack.c.b16 %v6517, %v6513
        %v6714 = vpack.c.b16 %v6518, %v6514
        %v6715 = vpack.c.b16 %v6523, %v6519
        %v6716 = vpack.c.b16 %v6524, %v6520
        %v6717 = vpack.c.b16 %v6525, %v6521
        %v6718 = vpack.c.b16 %v6526, %v6522
        %v6719 = vpack.c.b16 %v6531, %v6527
        %v6720 = vpack.c.b16 %v6532, %v6528
        %v6721 = vpack.c.b16 %v6533, %v6529
        %v6722 = vpack.c.b16 %v6534, %v6530
        %v6723 = vpack.c.b16 %v6539, %v6535
        %v6724 = vpack.c.b16 %v6540, %v6536
        %v6725 = vpack.c.b16 %v6541, %v6537
        %v6726 = vpack.c.b16 %v6542, %v6538
        %v6727 = vpack.c.b16 %v6547, %v6543
        %v6728 = vpack.c.b16 %v6548, %v6544
        %v6729 = vpack.c.b16 %v6549, %v6545
        %v6730 = vpack.c.b16 %v6550, %v6546
        %v6731 = vpack.c.b16 %v6555, %v6551
        %v6732 = vpack.c.b16 %v6556, %v6552
        %v6733 = vpack.c.b16 %v6557, %v6553
        %v6734 = vpack.c.b16 %v6558, %v6554
        %v6735 = vpack.c.b16 %v6563, %v6559
        %v6736 = vpack.c.b16 %v6564, %v6560
        %v6737 = vpack.c.b16 %v6565, %v6561
        %v6738 = vpack.c.b16 %v6566, %v6562
        %v6739 = vpack.c.b16 %v6571, %v6567
        %v6740 = vpack.c.b16 %v6572, %v6568
        %v6741 = vpack.c.b16 %v6573, %v6569
        %v6742 = vpack.c.b16 %v6574, %v6570
        %v6743 = vpack.c.b16 %v6579, %v6575
        %v6744 = vpack.c.b16 %v6580, %v6576
        %v6745 = vpack.c.b16 %v6581, %v6577
        %v6746 = vpack.c.b16 %v6582, %v6578
        %v6747 = vpack.c.b16 %v6587, %v6583
        %v6748 = vpack.c.b16 %v6588, %v6584
        %v6749 = vpack.c.b16 %v6589, %v6585
        %v6750 = vpack.c.b16 %v6590, %v6586
        %v6751 = vpack.c.b16 %v6595, %v6591
        %v6752 = vpack.c.b16 %v6596, %v6592
        %v6753 = vpack.c.b16 %v6597, %v6593
        %v6754 = vpack.c.b16 %v6598, %v6594
        %v6755 = vpack.c.b16 %v6603, %v6599
        %v6756 = vpack.c.b16 %v6604, %v6600
        %v6757 = vpack.c.b16 %v6605, %v6601
        %v6758 = vpack.c.b16 %v6606, %v6602
        %v6759 = vpack.c.b16 %v6611, %v6607
        %v6760 = vpack.c.b16 %v6612, %v6608
        %v6761 = vpack.c.b16 %v6613, %v6609
        %v6762 = vpack.c.b16 %v6614, %v6610
        %v6763 = vpack.c.b16 %v6619, %v6615
        %v6764 = vpack.c.b16 %v6620, %v6616
        %v6765 = vpack.c.b16 %v6621, %v6617
        %v6766 = vpack.c.b16 %v6622, %v6618
        %v6767 = vpack.c.b16 %v6627, %v6623
        %v6768 = vpack.c.b16 %v6628, %v6624
        %v6769 = vpack.c.b16 %v6629, %v6625
        %v6770 = vpack.c.b16 %v6630, %v6626
        %v6771 = vpack.c.b16 %v6635, %v6631
        %v6772 = vpack.c.b16 %v6636, %v6632
        %v6773 = vpack.c.b16 %v6637, %v6633
        %v6774 = vpack.c.b16 %v6638, %v6634
        %v6775 = vpack.c.b16 %v6643, %v6639
        %v6776 = vpack.c.b16 %v6644, %v6640
        %v6777 = vpack.c.b16 %v6645, %v6641
        %v6778 = vpack.c.b16 %v6646, %v6642
        %v6779 = vpack.c.b16 %v6651, %v6647
        %v6780 = vpack.c.b16 %v6652, %v6648
        %v6781 = vpack.c.b16 %v6653, %v6649
        %v6782 = vpack.c.b16 %v6654, %v6650
        %6911 = vmatpush.bf16.msra.mxu0 %v6683
        %6912 = vmatpush.bf16.msra.mxu0 %v6679
        %6913 = vmatpush.bf16.msra.mxu0 %v6675
        %6914 = vmatpush.bf16.msra.mxu0 %v6671
        %6915 = vmatpush.bf16.msra.mxu0 %v6667
        %6916 = vmatpush.bf16.msra.mxu0 %v6663
        %6917 = vmatpush.bf16.msra.mxu0 %v6659
        %6918 = vmatpush.bf16.msra.mxu0 %v6655
        %6919 = vmatmul.bf16.gmra.mxu0 %v6263
        %v6920 = vpop.f32.mrf.mxu0
        %v6921 = vadd.f32 0.0, %v6920
        %v6922 = vpop.f32.mrf.mxu0
        %6923 = vdwg.mxu0
        %6924 = vmatpush.bf16.msra.mxu0 %v6715
        %6925 = vmatpush.bf16.msra.mxu0 %v6711
        %6926 = vmatpush.bf16.msra.mxu0 %v6707
        %6927 = vmatpush.bf16.msra.mxu0 %v6703
        %6928 = vmatpush.bf16.msra.mxu0 %v6699
        %6929 = vmatpush.bf16.msra.mxu0 %v6695
        %6930 = vmatpush.bf16.msra.mxu0 %v6691
        %6931 = vmatpush.bf16.msra.mxu0 %v6687
        %6932 = vmatmul.bf16.gmra.mxu0 %v6264
        %v6933 = vpop.f32.mrf.mxu0
        %v6934 = vadd.f32 %v6921, %v6933
        %v6935 = vpop.f32.mrf.mxu0
        %6936 = vdwg.mxu0
        %6937 = vmatpush.bf16.msra.mxu0 %v6747
        %6938 = vmatpush.bf16.msra.mxu0 %v6743
        %6939 = vmatpush.bf16.msra.mxu0 %v6739
        %6940 = vmatpush.bf16.msra.mxu0 %v6735
        %6941 = vmatpush.bf16.msra.mxu0 %v6731
        %6942 = vmatpush.bf16.msra.mxu0 %v6727
        %6943 = vmatpush.bf16.msra.mxu0 %v6723
        %6944 = vmatpush.bf16.msra.mxu0 %v6719
        %6945 = vmatmul.bf16.gmra.mxu0 %v6265
        %v6946 = vpop.f32.mrf.mxu0
        %v6947 = vadd.f32 %v6934, %v6946
        %v6948 = vpop.f32.mrf.mxu0
        %6949 = vdwg.mxu0
        %6950 = vmatpush.bf16.msra.mxu0 %v6779
        %6951 = vmatpush.bf16.msra.mxu0 %v6775
        %6952 = vmatpush.bf16.msra.mxu0 %v6771
        %6953 = vmatpush.bf16.msra.mxu0 %v6767
        %6954 = vmatpush.bf16.msra.mxu0 %v6763
        %6955 = vmatpush.bf16.msra.mxu0 %v6759
        %6956 = vmatpush.bf16.msra.mxu0 %v6755
        %6957 = vmatpush.bf16.msra.mxu0 %v6751
        %6958 = vmatmul.bf16.gmra.mxu0 %v6266
        %v6959 = vpop.f32.mrf.mxu0
        %v6960 = vadd.f32 %v6947, %v6959
        %v6961 = vpop.f32.mrf.mxu0
        %6962 = vdwg.mxu0
        %6963 = vmatpush.bf16.msra.mxu0 %v6684
        %6964 = vmatpush.bf16.msra.mxu0 %v6680
        %6965 = vmatpush.bf16.msra.mxu0 %v6676
        %6966 = vmatpush.bf16.msra.mxu0 %v6672
        %6967 = vmatpush.bf16.msra.mxu0 %v6668
        %6968 = vmatpush.bf16.msra.mxu0 %v6664
        %6969 = vmatpush.bf16.msra.mxu0 %v6660
        %6970 = vmatpush.bf16.msra.mxu0 %v6656
        %6971 = vmatmul.bf16.gmra.mxu0 %v6263
        %v6972 = vpop.f32.mrf.mxu0
        %v6973 = vadd.f32 0.0, %v6972
        %v6974 = vpop.f32.mrf.mxu0
        %6975 = vdwg.mxu0
        %6976 = vmatpush.bf16.msra.mxu0 %v6716
        %6977 = vmatpush.bf16.msra.mxu0 %v6712
        %6978 = vmatpush.bf16.msra.mxu0 %v6708
        %6979 = vmatpush.bf16.msra.mxu0 %v6704
        %6980 = vmatpush.bf16.msra.mxu0 %v6700
        %6981 = vmatpush.bf16.msra.mxu0 %v6696
        %6982 = vmatpush.bf16.msra.mxu0 %v6692
        %6983 = vmatpush.bf16.msra.mxu0 %v6688
        %6984 = vmatmul.bf16.gmra.mxu0 %v6264
        %v6985 = vpop.f32.mrf.mxu0
        %v6986 = vadd.f32 %v6973, %v6985
        %v6987 = vpop.f32.mrf.mxu0
        %6988 = vdwg.mxu0
        %6989 = vmatpush.bf16.msra.mxu0 %v6748
        %6990 = vmatpush.bf16.msra.mxu0 %v6744
        %6991 = vmatpush.bf16.msra.mxu0 %v6740
        %6992 = vmatpush.bf16.msra.mxu0 %v6736
        %6993 = vmatpush.bf16.msra.mxu0 %v6732
        %6994 = vmatpush.bf16.msra.mxu0 %v6728
        %6995 = vmatpush.bf16.msra.mxu0 %v6724
        %6996 = vmatpush.bf16.msra.mxu0 %v6720
        %6997 = vmatmul.bf16.gmra.mxu0 %v6265
        %v6998 = vpop.f32.mrf.mxu0
        %v6999 = vadd.f32 %v6986, %v6998
        %v7000 = vpop.f32.mrf.mxu0
        %7001 = vdwg.mxu0
        %7002 = vmatpush.bf16.msra.mxu0 %v6780
        %7003 = vmatpush.bf16.msra.mxu0 %v6776
        %7004 = vmatpush.bf16.msra.mxu0 %v6772
        %7005 = vmatpush.bf16.msra.mxu0 %v6768
        %7006 = vmatpush.bf16.msra.mxu0 %v6764
        %7007 = vmatpush.bf16.msra.mxu0 %v6760
        %7008 = vmatpush.bf16.msra.mxu0 %v6756
        %7009 = vmatpush.bf16.msra.mxu0 %v6752
        %7010 = vmatmul.bf16.gmra.mxu0 %v6266
        %v7011 = vpop.f32.mrf.mxu0
        %v7012 = vadd.f32 %v6999, %v7011
        %v7013 = vpop.f32.mrf.mxu0
        %7014 = vdwg.mxu0
        %7015 = vmatpush.bf16.msra.mxu0 %v6685
        %7016 = vmatpush.bf16.msra.mxu0 %v6681
        %7017 = vmatpush.bf16.msra.mxu0 %v6677
        %7018 = vmatpush.bf16.msra.mxu0 %v6673
        %7019 = vmatpush.bf16.msra.mxu0 %v6669
        %7020 = vmatpush.bf16.msra.mxu0 %v6665
        %7021 = vmatpush.bf16.msra.mxu0 %v6661
        %7022 = vmatpush.bf16.msra.mxu0 %v6657
        %7023 = vmatmul.bf16.gmra.mxu0 %v6263
        %v7024 = vpop.f32.mrf.mxu0
        %v7025 = vadd.f32 0.0, %v7024
        %v7026 = vpop.f32.mrf.mxu0
        %7027 = vdwg.mxu0
        %7028 = vmatpush.bf16.msra.mxu0 %v6717
        %7029 = vmatpush.bf16.msra.mxu0 %v6713
        %7030 = vmatpush.bf16.msra.mxu0 %v6709
        %7031 = vmatpush.bf16.msra.mxu0 %v6705
        %7032 = vmatpush.bf16.msra.mxu0 %v6701
        %7033 = vmatpush.bf16.msra.mxu0 %v6697
        %7034 = vmatpush.bf16.msra.mxu0 %v6693
        %7035 = vmatpush.bf16.msra.mxu0 %v6689
        %7036 = vmatmul.bf16.gmra.mxu0 %v6264
        %v7037 = vpop.f32.mrf.mxu0
        %v7038 = vadd.f32 %v7025, %v7037
        %v7039 = vpop.f32.mrf.mxu0
        %7040 = vdwg.mxu0
        %7041 = vmatpush.bf16.msra.mxu0 %v6749
        %7042 = vmatpush.bf16.msra.mxu0 %v6745
        %7043 = vmatpush.bf16.msra.mxu0 %v6741
        %7044 = vmatpush.bf16.msra.mxu0 %v6737
        %7045 = vmatpush.bf16.msra.mxu0 %v6733
        %7046 = vmatpush.bf16.msra.mxu0 %v6729
        %7047 = vmatpush.bf16.msra.mxu0 %v6725
        %7048 = vmatpush.bf16.msra.mxu0 %v6721
        %7049 = vmatmul.bf16.gmra.mxu0 %v6265
        %v7050 = vpop.f32.mrf.mxu0
        %v7051 = vadd.f32 %v7038, %v7050
        %v7052 = vpop.f32.mrf.mxu0
        %7053 = vdwg.mxu0
        %7054 = vmatpush.bf16.msra.mxu0 %v6781
        %7055 = vmatpush.bf16.msra.mxu0 %v6777
        %7056 = vmatpush.bf16.msra.mxu0 %v6773
        %7057 = vmatpush.bf16.msra.mxu0 %v6769
        %7058 = vmatpush.bf16.msra.mxu0 %v6765
        %7059 = vmatpush.bf16.msra.mxu0 %v6761
        %7060 = vmatpush.bf16.msra.mxu0 %v6757
        %7061 = vmatpush.bf16.msra.mxu0 %v6753
        %7062 = vmatmul.bf16.gmra.mxu0 %v6266
        %v7063 = vpop.f32.mrf.mxu0
        %v7064 = vadd.f32 %v7051, %v7063
        %v7065 = vpop.f32.mrf.mxu0
        %7066 = vdwg.mxu0
        %7067 = vmatpush.bf16.msra.mxu0 %v6686
        %7068 = vmatpush.bf16.msra.mxu0 %v6682
        %7069 = vmatpush.bf16.msra.mxu0 %v6678
        %7070 = vmatpush.bf16.msra.mxu0 %v6674
        %7071 = vmatpush.bf16.msra.mxu0 %v6670
        %7072 = vmatpush.bf16.msra.mxu0 %v6666
        %7073 = vmatpush.bf16.msra.mxu0 %v6662
        %7074 = vmatpush.bf16.msra.mxu0 %v6658
        %7075 = vmatmul.bf16.gmra.mxu0 %v6263
        %v7076 = vpop.f32.mrf.mxu0
        %v7077 = vadd.f32 0.0, %v7076
        %v7078 = vpop.f32.mrf.mxu0
        %7079 = vdwg.mxu0
        %7080 = vmatpush.bf16.msra.mxu0 %v6718
        %7081 = vmatpush.bf16.msra.mxu0 %v6714
        %7082 = vmatpush.bf16.msra.mxu0 %v6710
        %7083 = vmatpush.bf16.msra.mxu0 %v6706
        %7084 = vmatpush.bf16.msra.mxu0 %v6702
        %7085 = vmatpush.bf16.msra.mxu0 %v6698
        %7086 = vmatpush.bf16.msra.mxu0 %v6694
        %7087 = vmatpush.bf16.msra.mxu0 %v6690
        %7088 = vmatmul.bf16.gmra.mxu0 %v6264
        %v7089 = vpop.f32.mrf.mxu0
        %v7090 = vadd.f32 %v7077, %v7089
        %v7091 = vpop.f32.mrf.mxu0
        %7092 = vdwg.mxu0
        %7093 = vmatpush.bf16.msra.mxu0 %v6750
        %7094 = vmatpush.bf16.msra.mxu0 %v6746
        %7095 = vmatpush.bf16.msra.mxu0 %v6742
        %7096 = vmatpush.bf16.msra.mxu0 %v6738
        %7097 = vmatpush.bf16.msra.mxu0 %v6734
        %7098 = vmatpush.bf16.msra.mxu0 %v6730
        %7099 = vmatpush.bf16.msra.mxu0 %v6726
        %7100 = vmatpush.bf16.msra.mxu0 %v6722
        %7101 = vmatmul.bf16.gmra.mxu0 %v6265
        %v7102 = vpop.f32.mrf.mxu0
        %v7103 = vadd.f32 %v7090, %v7102
        %v7104 = vpop.f32.mrf.mxu0
        %7105 = vdwg.mxu0
        %7106 = vmatpush.bf16.msra.mxu0 %v6782
        %7107 = vmatpush.bf16.msra.mxu0 %v6778
        %7108 = vmatpush.bf16.msra.mxu0 %v6774
        %7109 = vmatpush.bf16.msra.mxu0 %v6770
        %7110 = vmatpush.bf16.msra.mxu0 %v6766
        %7111 = vmatpush.bf16.msra.mxu0 %v6762
        %7112 = vmatpush.bf16.msra.mxu0 %v6758
        %7113 = vmatpush.bf16.msra.mxu0 %v6754
        %7114 = vmatmul.bf16.gmra.mxu0 %v6266
        %v7115 = vpop.f32.mrf.mxu0
        %v7116 = vadd.f32 %v7103, %v7115
        %v7117 = vpop.f32.mrf.mxu0
        %7118 = vdwg.mxu0
        %v7119 = vadd.f32 %v6087, %v6960
        %v7120 = vadd.f32 %v6088, %v7012
        %v7121 = vadd.f32 %v6089, %v7064
        %v7122 = vadd.f32 %v6090, %v7116
        %v7123 = vld [vmem:[%s486] sm:$0xf]
        %v7125 = vperm.slane %v7123, 0
        %v7126 = vperm.slane %v7123, 1
        %v7127 = vperm.slane %v7123, 2
        %v7128 = vperm.slane %v7123, 3
        %v7133 = vadd.f32 %v7119, %v7125
        %v7134 = vadd.f32 %v7120, %v7126
        %v7135 = vadd.f32 %v7121, %v7127
        %v7136 = vadd.f32 %v7122, %v7128
        %v7137 = vmax.f32 %v7133, 0.0
        %v7138 = vmax.f32 %v7134, 0.0
        %v7139 = vmax.f32 %v7135, 0.0
        %v7140 = vmax.f32 %v7136, 0.0
        %v7141 = vpack.c.bf16 %v7137, %v7137
        %v7142 = vpack.c.bf16 %v7138, %v7138
        %v7143 = vpack.c.bf16 %v7139, %v7139
        %v7144 = vpack.c.bf16 %v7140, %v7140
        %v7145 = vld [vmem:[#allocation3] sm:$0xf]
        %v7146 = vld [vmem:[%s496] sm:$0xff]
        %v7147 = vld [vmem:[%s496 + $0x8] sm:$0xff]
        %v7148 = vld [vmem:[%s496 + $0x10] sm:$0xff]
        %v7149 = vld [vmem:[%s496 + $0x18] sm:$0xff]
        %v7150 = vld [vmem:[%s496 + $0x20] sm:$0xff]
        %v7151 = vld [vmem:[%s496 + $0x28] sm:$0xff]
        %v7152 = vld [vmem:[%s496 + $0x30] sm:$0xff]
        %v7153 = vld [vmem:[%s496 + $0x38] sm:$0xff]
        %v7154 = vld [vmem:[%s496 + $0x40] sm:$0xff]
        %v7155 = vld [vmem:[%s496 + $0x48] sm:$0xff]
        %v7156 = vld [vmem:[%s496 + $0x50] sm:$0xff]
        %v7157 = vld [vmem:[%s496 + $0x58] sm:$0xff]
        %v7158 = vld [vmem:[%s496 + $0x60] sm:$0xff]
        %v7159 = vld [vmem:[%s496 + $0x68] sm:$0xff]
        %v7160 = vld [vmem:[%s496 + $0x70] sm:$0xff]
        %v7161 = vld [vmem:[%s496 + $0x78] sm:$0xff]
        %v7162 = vld [vmem:[%s496 + $0x80] sm:$0xff]
        %v7163 = vld [vmem:[%s496 + $0x88] sm:$0xff]
        %v7164 = vld [vmem:[%s496 + $0x90] sm:$0xff]
        %v7165 = vld [vmem:[%s496 + $0x98] sm:$0xff]
        %v7166 = vld [vmem:[%s496 + $0xa0] sm:$0xff]
        %v7167 = vld [vmem:[%s496 + $0xa8] sm:$0xff]
        %v7168 = vld [vmem:[%s496 + $0xb0] sm:$0xff]
        %v7169 = vld [vmem:[%s496 + $0xb8] sm:$0xff]
        %v7170 = vld [vmem:[%s496 + $0xc0] sm:$0xff]
        %v7171 = vld [vmem:[%s496 + $0xc8] sm:$0xff]
        %v7172 = vld [vmem:[%s496 + $0xd0] sm:$0xff]
        %v7173 = vld [vmem:[%s496 + $0xd8] sm:$0xff]
        %v7174 = vld [vmem:[%s496 + $0xe0] sm:$0xff]
        %v7175 = vld [vmem:[%s496 + $0xe8] sm:$0xff]
        %v7176 = vld [vmem:[%s496 + $0xf0] sm:$0xff]
        %v7177 = vld [vmem:[%s496 + $0xf8] sm:$0xff]
        %v7178 = vld [vmem:[%s496 + $0x100] sm:$0xff]
        %v7179 = vld [vmem:[%s496 + $0x108] sm:$0xff]
        %v7180 = vld [vmem:[%s496 + $0x110] sm:$0xff]
        %v7181 = vld [vmem:[%s496 + $0x118] sm:$0xff]
        %v7182 = vld [vmem:[%s496 + $0x120] sm:$0xff]
        %v7183 = vld [vmem:[%s496 + $0x128] sm:$0xff]
        %v7184 = vld [vmem:[%s496 + $0x130] sm:$0xff]
        %v7185 = vld [vmem:[%s496 + $0x138] sm:$0xff]
        %v7186 = vld [vmem:[%s496 + $0x140] sm:$0xff]
        %v7187 = vld [vmem:[%s496 + $0x148] sm:$0xff]
        %v7188 = vld [vmem:[%s496 + $0x150] sm:$0xff]
        %v7189 = vld [vmem:[%s496 + $0x158] sm:$0xff]
        %v7190 = vld [vmem:[%s496 + $0x160] sm:$0xff]
        %v7191 = vld [vmem:[%s496 + $0x168] sm:$0xff]
        %v7192 = vld [vmem:[%s496 + $0x170] sm:$0xff]
        %v7193 = vld [vmem:[%s496 + $0x178] sm:$0xff]
        %v7194 = vld [vmem:[%s496 + $0x180] sm:$0xff]
        %v7195 = vld [vmem:[%s496 + $0x188] sm:$0xff]
        %v7196 = vld [vmem:[%s496 + $0x190] sm:$0xff]
        %v7197 = vld [vmem:[%s496 + $0x198] sm:$0xff]
        %v7198 = vld [vmem:[%s496 + $0x1a0] sm:$0xff]
        %v7199 = vld [vmem:[%s496 + $0x1a8] sm:$0xff]
        %v7200 = vld [vmem:[%s496 + $0x1b0] sm:$0xff]
        %v7201 = vld [vmem:[%s496 + $0x1b8] sm:$0xff]
        %v7202 = vld [vmem:[%s496 + $0x1c0] sm:$0xff]
        %v7203 = vld [vmem:[%s496 + $0x1c8] sm:$0xff]
        %v7204 = vld [vmem:[%s496 + $0x1d0] sm:$0xff]
        %v7205 = vld [vmem:[%s496 + $0x1d8] sm:$0xff]
        %v7206 = vld [vmem:[%s496 + $0x1e0] sm:$0xff]
        %v7207 = vld [vmem:[%s496 + $0x1e8] sm:$0xff]
        %v7208 = vld [vmem:[%s496 + $0x1f0] sm:$0xff]
        %v7209 = vld [vmem:[%s496 + $0x1f8] sm:$0xff]
        %v7274 = vunpack.c.l.b16 %v7146
        %v7275 = vunpack.c.h.b16 %v7146
        %v7276 = vunpack.c.l.b16 %v7147
        %v7277 = vunpack.c.h.b16 %v7147
        %v7278 = vunpack.c.l.b16 %v7148
        %v7279 = vunpack.c.h.b16 %v7148
        %v7280 = vunpack.c.l.b16 %v7149
        %v7281 = vunpack.c.h.b16 %v7149
        %v7282 = vunpack.c.l.b16 %v7150
        %v7283 = vunpack.c.h.b16 %v7150
        %v7284 = vunpack.c.l.b16 %v7151
        %v7285 = vunpack.c.h.b16 %v7151
        %v7286 = vunpack.c.l.b16 %v7152
        %v7287 = vunpack.c.h.b16 %v7152
        %v7288 = vunpack.c.l.b16 %v7153
        %v7289 = vunpack.c.h.b16 %v7153
        %v7290 = vunpack.c.l.b16 %v7154
        %v7291 = vunpack.c.h.b16 %v7154
        %v7292 = vunpack.c.l.b16 %v7155
        %v7293 = vunpack.c.h.b16 %v7155
        %v7294 = vunpack.c.l.b16 %v7156
        %v7295 = vunpack.c.h.b16 %v7156
        %v7296 = vunpack.c.l.b16 %v7157
        %v7297 = vunpack.c.h.b16 %v7157
        %v7298 = vunpack.c.l.b16 %v7158
        %v7299 = vunpack.c.h.b16 %v7158
        %v7300 = vunpack.c.l.b16 %v7159
        %v7301 = vunpack.c.h.b16 %v7159
        %v7302 = vunpack.c.l.b16 %v7160
        %v7303 = vunpack.c.h.b16 %v7160
        %v7304 = vunpack.c.l.b16 %v7161
        %v7305 = vunpack.c.h.b16 %v7161
        %v7306 = vunpack.c.l.b16 %v7162
        %v7307 = vunpack.c.h.b16 %v7162
        %v7308 = vunpack.c.l.b16 %v7163
        %v7309 = vunpack.c.h.b16 %v7163
        %v7310 = vunpack.c.l.b16 %v7164
        %v7311 = vunpack.c.h.b16 %v7164
        %v7312 = vunpack.c.l.b16 %v7165
        %v7313 = vunpack.c.h.b16 %v7165
        %v7314 = vunpack.c.l.b16 %v7166
        %v7315 = vunpack.c.h.b16 %v7166
        %v7316 = vunpack.c.l.b16 %v7167
        %v7317 = vunpack.c.h.b16 %v7167
        %v7318 = vunpack.c.l.b16 %v7168
        %v7319 = vunpack.c.h.b16 %v7168
        %v7320 = vunpack.c.l.b16 %v7169
        %v7321 = vunpack.c.h.b16 %v7169
        %v7322 = vunpack.c.l.b16 %v7170
        %v7323 = vunpack.c.h.b16 %v7170
        %v7324 = vunpack.c.l.b16 %v7171
        %v7325 = vunpack.c.h.b16 %v7171
        %v7326 = vunpack.c.l.b16 %v7172
        %v7327 = vunpack.c.h.b16 %v7172
        %v7328 = vunpack.c.l.b16 %v7173
        %v7329 = vunpack.c.h.b16 %v7173
        %v7330 = vunpack.c.l.b16 %v7174
        %v7331 = vunpack.c.h.b16 %v7174
        %v7332 = vunpack.c.l.b16 %v7175
        %v7333 = vunpack.c.h.b16 %v7175
        %v7334 = vunpack.c.l.b16 %v7176
        %v7335 = vunpack.c.h.b16 %v7176
        %v7336 = vunpack.c.l.b16 %v7177
        %v7337 = vunpack.c.h.b16 %v7177
        %v7338 = vunpack.c.l.b16 %v7178
        %v7339 = vunpack.c.h.b16 %v7178
        %v7340 = vunpack.c.l.b16 %v7179
        %v7341 = vunpack.c.h.b16 %v7179
        %v7342 = vunpack.c.l.b16 %v7180
        %v7343 = vunpack.c.h.b16 %v7180
        %v7344 = vunpack.c.l.b16 %v7181
        %v7345 = vunpack.c.h.b16 %v7181
        %v7346 = vunpack.c.l.b16 %v7182
        %v7347 = vunpack.c.h.b16 %v7182
        %v7348 = vunpack.c.l.b16 %v7183
        %v7349 = vunpack.c.h.b16 %v7183
        %v7350 = vunpack.c.l.b16 %v7184
        %v7351 = vunpack.c.h.b16 %v7184
        %v7352 = vunpack.c.l.b16 %v7185
        %v7353 = vunpack.c.h.b16 %v7185
        %v7354 = vunpack.c.l.b16 %v7186
        %v7355 = vunpack.c.h.b16 %v7186
        %v7356 = vunpack.c.l.b16 %v7187
        %v7357 = vunpack.c.h.b16 %v7187
        %v7358 = vunpack.c.l.b16 %v7188
        %v7359 = vunpack.c.h.b16 %v7188
        %v7360 = vunpack.c.l.b16 %v7189
        %v7361 = vunpack.c.h.b16 %v7189
        %v7362 = vunpack.c.l.b16 %v7190
        %v7363 = vunpack.c.h.b16 %v7190
        %v7364 = vunpack.c.l.b16 %v7191
        %v7365 = vunpack.c.h.b16 %v7191
        %v7366 = vunpack.c.l.b16 %v7192
        %v7367 = vunpack.c.h.b16 %v7192
        %v7368 = vunpack.c.l.b16 %v7193
        %v7369 = vunpack.c.h.b16 %v7193
        %v7370 = vunpack.c.l.b16 %v7194
        %v7371 = vunpack.c.h.b16 %v7194
        %v7372 = vunpack.c.l.b16 %v7195
        %v7373 = vunpack.c.h.b16 %v7195
        %v7374 = vunpack.c.l.b16 %v7196
        %v7375 = vunpack.c.h.b16 %v7196
        %v7376 = vunpack.c.l.b16 %v7197
        %v7377 = vunpack.c.h.b16 %v7197
        %v7378 = vunpack.c.l.b16 %v7198
        %v7379 = vunpack.c.h.b16 %v7198
        %v7380 = vunpack.c.l.b16 %v7199
        %v7381 = vunpack.c.h.b16 %v7199
        %v7382 = vunpack.c.l.b16 %v7200
        %v7383 = vunpack.c.h.b16 %v7200
        %v7384 = vunpack.c.l.b16 %v7201
        %v7385 = vunpack.c.h.b16 %v7201
        %v7386 = vunpack.c.l.b16 %v7202
        %v7387 = vunpack.c.h.b16 %v7202
        %v7388 = vunpack.c.l.b16 %v7203
        %v7389 = vunpack.c.h.b16 %v7203
        %v7390 = vunpack.c.l.b16 %v7204
        %v7391 = vunpack.c.h.b16 %v7204
        %v7392 = vunpack.c.l.b16 %v7205
        %v7393 = vunpack.c.h.b16 %v7205
        %v7394 = vunpack.c.l.b16 %v7206
        %v7395 = vunpack.c.h.b16 %v7206
        %v7396 = vunpack.c.l.b16 %v7207
        %v7397 = vunpack.c.h.b16 %v7207
        %v7398 = vunpack.c.l.b16 %v7208
        %v7399 = vunpack.c.h.b16 %v7208
        %v7400 = vunpack.c.l.b16 %v7209
        %v7401 = vunpack.c.h.b16 %v7209
        %v7402 = vpack.c.b16 %v7276, %v7274
        %v7403 = vpack.c.b16 %v7277, %v7275
        %v7404 = vpack.c.b16 %v7280, %v7278
        %v7405 = vpack.c.b16 %v7281, %v7279
        %v7406 = vpack.c.b16 %v7284, %v7282
        %v7407 = vpack.c.b16 %v7285, %v7283
        %v7408 = vpack.c.b16 %v7288, %v7286
        %v7409 = vpack.c.b16 %v7289, %v7287
        %v7410 = vpack.c.b16 %v7292, %v7290
        %v7411 = vpack.c.b16 %v7293, %v7291
        %v7412 = vpack.c.b16 %v7296, %v7294
        %v7413 = vpack.c.b16 %v7297, %v7295
        %v7414 = vpack.c.b16 %v7300, %v7298
        %v7415 = vpack.c.b16 %v7301, %v7299
        %v7416 = vpack.c.b16 %v7304, %v7302
        %v7417 = vpack.c.b16 %v7305, %v7303
        %v7418 = vpack.c.b16 %v7308, %v7306
        %v7419 = vpack.c.b16 %v7309, %v7307
        %v7420 = vpack.c.b16 %v7312, %v7310
        %v7421 = vpack.c.b16 %v7313, %v7311
        %v7422 = vpack.c.b16 %v7316, %v7314
        %v7423 = vpack.c.b16 %v7317, %v7315
        %v7424 = vpack.c.b16 %v7320, %v7318
        %v7425 = vpack.c.b16 %v7321, %v7319
        %v7426 = vpack.c.b16 %v7324, %v7322
        %v7427 = vpack.c.b16 %v7325, %v7323
        %v7428 = vpack.c.b16 %v7328, %v7326
        %v7429 = vpack.c.b16 %v7329, %v7327
        %v7430 = vpack.c.b16 %v7332, %v7330
        %v7431 = vpack.c.b16 %v7333, %v7331
        %v7432 = vpack.c.b16 %v7336, %v7334
        %v7433 = vpack.c.b16 %v7337, %v7335
        %v7434 = vpack.c.b16 %v7340, %v7338
        %v7435 = vpack.c.b16 %v7341, %v7339
        %v7436 = vpack.c.b16 %v7344, %v7342
        %v7437 = vpack.c.b16 %v7345, %v7343
        %v7438 = vpack.c.b16 %v7348, %v7346
        %v7439 = vpack.c.b16 %v7349, %v7347
        %v7440 = vpack.c.b16 %v7352, %v7350
        %v7441 = vpack.c.b16 %v7353, %v7351
        %v7442 = vpack.c.b16 %v7356, %v7354
        %v7443 = vpack.c.b16 %v7357, %v7355
        %v7444 = vpack.c.b16 %v7360, %v7358
        %v7445 = vpack.c.b16 %v7361, %v7359
        %v7446 = vpack.c.b16 %v7364, %v7362
        %v7447 = vpack.c.b16 %v7365, %v7363
        %v7448 = vpack.c.b16 %v7368, %v7366
        %v7449 = vpack.c.b16 %v7369, %v7367
        %v7450 = vpack.c.b16 %v7372, %v7370
        %v7451 = vpack.c.b16 %v7373, %v7371
        %v7452 = vpack.c.b16 %v7376, %v7374
        %v7453 = vpack.c.b16 %v7377, %v7375
        %v7454 = vpack.c.b16 %v7380, %v7378
        %v7455 = vpack.c.b16 %v7381, %v7379
        %v7456 = vpack.c.b16 %v7384, %v7382
        %v7457 = vpack.c.b16 %v7385, %v7383
        %v7458 = vpack.c.b16 %v7388, %v7386
        %v7459 = vpack.c.b16 %v7389, %v7387
        %v7460 = vpack.c.b16 %v7392, %v7390
        %v7461 = vpack.c.b16 %v7393, %v7391
        %v7462 = vpack.c.b16 %v7396, %v7394
        %v7463 = vpack.c.b16 %v7397, %v7395
        %v7464 = vpack.c.b16 %v7400, %v7398
        %v7465 = vpack.c.b16 %v7401, %v7399
        %7530 = vmatpush.bf16.msra.mxu0 %v7416
        %7531 = vmatpush.bf16.msra.mxu0 %v7414
        %7532 = vmatpush.bf16.msra.mxu0 %v7412
        %7533 = vmatpush.bf16.msra.mxu0 %v7410
        %7534 = vmatpush.bf16.msra.mxu0 %v7408
        %7535 = vmatpush.bf16.msra.mxu0 %v7406
        %7536 = vmatpush.bf16.msra.mxu0 %v7404
        %7537 = vmatpush.bf16.msra.mxu0 %v7402
        %7538 = vmatmul.bf16.gmra.mxu0 %v7141
        %v7539 = vpop.f32.mrf.mxu0
        %v7540 = vadd.f32 0.0, %v7539
        %v7541 = vpop.f32.mrf.mxu0
        %7542 = vdwg.mxu0
        %7543 = vmatpush.bf16.msra.mxu0 %v7432
        %7544 = vmatpush.bf16.msra.mxu0 %v7430
        %7545 = vmatpush.bf16.msra.mxu0 %v7428
        %7546 = vmatpush.bf16.msra.mxu0 %v7426
        %7547 = vmatpush.bf16.msra.mxu0 %v7424
        %7548 = vmatpush.bf16.msra.mxu0 %v7422
        %7549 = vmatpush.bf16.msra.mxu0 %v7420
        %7550 = vmatpush.bf16.msra.mxu0 %v7418
        %7551 = vmatmul.bf16.gmra.mxu0 %v7142
        %v7552 = vpop.f32.mrf.mxu0
        %v7553 = vadd.f32 %v7540, %v7552
        %v7554 = vpop.f32.mrf.mxu0
        %7555 = vdwg.mxu0
        %7556 = vmatpush.bf16.msra.mxu0 %v7448
        %7557 = vmatpush.bf16.msra.mxu0 %v7446
        %7558 = vmatpush.bf16.msra.mxu0 %v7444
        %7559 = vmatpush.bf16.msra.mxu0 %v7442
        %7560 = vmatpush.bf16.msra.mxu0 %v7440
        %7561 = vmatpush.bf16.msra.mxu0 %v7438
        %7562 = vmatpush.bf16.msra.mxu0 %v7436
        %7563 = vmatpush.bf16.msra.mxu0 %v7434
        %7564 = vmatmul.bf16.gmra.mxu0 %v7143
        %v7565 = vpop.f32.mrf.mxu0
        %v7566 = vadd.f32 %v7553, %v7565
        %v7567 = vpop.f32.mrf.mxu0
        %7568 = vdwg.mxu0
        %7569 = vmatpush.bf16.msra.mxu0 %v7464
        %7570 = vmatpush.bf16.msra.mxu0 %v7462
        %7571 = vmatpush.bf16.msra.mxu0 %v7460
        %7572 = vmatpush.bf16.msra.mxu0 %v7458
        %7573 = vmatpush.bf16.msra.mxu0 %v7456
        %7574 = vmatpush.bf16.msra.mxu0 %v7454
        %7575 = vmatpush.bf16.msra.mxu0 %v7452
        %7576 = vmatpush.bf16.msra.mxu0 %v7450
        %7577 = vmatmul.bf16.gmra.mxu0 %v7144
        %v7578 = vpop.f32.mrf.mxu0
        %v7579 = vadd.f32 %v7566, %v7578
        %v7580 = vpop.f32.mrf.mxu0
        %7581 = vdwg.mxu0
        %7582 = vmatpush.bf16.msra.mxu0 %v7417
        %7583 = vmatpush.bf16.msra.mxu0 %v7415
        %7584 = vmatpush.bf16.msra.mxu0 %v7413
        %7585 = vmatpush.bf16.msra.mxu0 %v7411
        %7586 = vmatpush.bf16.msra.mxu0 %v7409
        %7587 = vmatpush.bf16.msra.mxu0 %v7407
        %7588 = vmatpush.bf16.msra.mxu0 %v7405
        %7589 = vmatpush.bf16.msra.mxu0 %v7403
        %7590 = vmatmul.bf16.gmra.mxu0 %v7141
        %v7591 = vpop.f32.mrf.mxu0
        %v7592 = vadd.f32 0.0, %v7591
        %v7593 = vpop.f32.mrf.mxu0
        %7594 = vdwg.mxu0
        %7595 = vmatpush.bf16.msra.mxu0 %v7433
        %7596 = vmatpush.bf16.msra.mxu0 %v7431
        %7597 = vmatpush.bf16.msra.mxu0 %v7429
        %7598 = vmatpush.bf16.msra.mxu0 %v7427
        %7599 = vmatpush.bf16.msra.mxu0 %v7425
        %7600 = vmatpush.bf16.msra.mxu0 %v7423
        %7601 = vmatpush.bf16.msra.mxu0 %v7421
        %7602 = vmatpush.bf16.msra.mxu0 %v7419
        %7603 = vmatmul.bf16.gmra.mxu0 %v7142
        %v7604 = vpop.f32.mrf.mxu0
        %v7605 = vadd.f32 %v7592, %v7604
        %v7606 = vpop.f32.mrf.mxu0
        %7607 = vdwg.mxu0
        %7608 = vmatpush.bf16.msra.mxu0 %v7449
        %7609 = vmatpush.bf16.msra.mxu0 %v7447
        %7610 = vmatpush.bf16.msra.mxu0 %v7445
        %7611 = vmatpush.bf16.msra.mxu0 %v7443
        %7612 = vmatpush.bf16.msra.mxu0 %v7441
        %7613 = vmatpush.bf16.msra.mxu0 %v7439
        %7614 = vmatpush.bf16.msra.mxu0 %v7437
        %7615 = vmatpush.bf16.msra.mxu0 %v7435
        %7616 = vmatmul.bf16.gmra.mxu0 %v7143
        %v7617 = vpop.f32.mrf.mxu0
        %v7618 = vadd.f32 %v7605, %v7617
        %v7619 = vpop.f32.mrf.mxu0
        %7620 = vdwg.mxu0
        %7621 = vmatpush.bf16.msra.mxu0 %v7465
        %7622 = vmatpush.bf16.msra.mxu0 %v7463
        %7623 = vmatpush.bf16.msra.mxu0 %v7461
        %7624 = vmatpush.bf16.msra.mxu0 %v7459
        %7625 = vmatpush.bf16.msra.mxu0 %v7457
        %7626 = vmatpush.bf16.msra.mxu0 %v7455
        %7627 = vmatpush.bf16.msra.mxu0 %v7453
        %7628 = vmatpush.bf16.msra.mxu0 %v7451
        %7629 = vmatmul.bf16.gmra.mxu0 %v7144
        %v7630 = vpop.f32.mrf.mxu0
        %v7631 = vadd.f32 %v7618, %v7630
        %v7632 = vpop.f32.mrf.mxu0
        %7633 = vdwg.mxu0
        %v7636 = vrot.slane %v7631, 6
        %vm7637 = vcmask 1041408
        %v7638 = vsel %vm7637, %v7579, %v7636
        %v7640 = vadd.f32 %v7145, %v7638
        %7641 = vst [vmem:[#allocation3] sm:$0xf] %v7640
        %p7642 = scmp.eq.s32.totalorder %s27, 1
        // Predicated region
        $region101: #{cnn22_forward.1} parent=63 // pred_check
          %p7643 = pneg %p7642
        $region102: #{cnn22_forward.1} parent=63 // pred_check_branch
          %7645 = sbr.rel (%p7643) target = $region104
        $region103: #{cnn22_forward.1} parent=63 // pred_region
          %v7646 = vld [vmem:[#allocation3] sm:$0xf]
          %v7647 = vld [vmem:[#allocation15] sm:$0x3]
          %v7649 = vperm.slane %v7647, 0
          %v7650 = vperm.slane %v7647, 1
          %v7651 = vrot.slane %v7650, 6
          %v7652 = vsel %vm7637, %v7649, %v7651
          %v7654 = vadd.f32 %v7646, %v7652
          %v7655 = vmax.f32 %v7654, 0.0
          %7657 = vst [vmem:[#allocation1] ss:$4 sm:$0xff] %v7655
          %v7658 = vld.sshfl [vmem:[#allocation1] sm:$0xff pattern:$0x73625140]
          %v7659 = vld.sshfl [vmem:[#allocation1 + $0x8] sm:$0xff pattern:$0x73625140]
          %v7662 = vpack.c.bf16 %v7658, %v7658
          %v7663 = vpack.c.bf16 %v7659, %v7659
          %v7664 = vld [vmem:[%s9] sm:$0xf]
          %v7665 = vld [vmem:[%s9 + $0x4] sm:$0xf]
          %v7666 = vld [vmem:[%s9 + $0x8] sm:$0xf]
          %v7667 = vld [vmem:[%s9 + $0xc] sm:$0xf]
          %v7668 = vld [vmem:[%s9 + $0x10] sm:$0xf]
          %v7669 = vld [vmem:[%s9 + $0x14] sm:$0xf]
          %v7670 = vld [vmem:[%s9 + $0x18] sm:$0xf]
          %v7671 = vld [vmem:[%s9 + $0x1c] sm:$0xf]
          %v7672 = vld [vmem:[%s9 + $0x20] sm:$0xf]
          %v7673 = vld [vmem:[%s9 + $0x24] sm:$0xf]
          %v7674 = vld [vmem:[%s9 + $0x28] sm:$0xf]
          %v7675 = vld [vmem:[%s9 + $0x2c] sm:$0xf]
          %v7676 = vld [vmem:[%s9 + $0x30] sm:$0xf]
          %v7677 = vld [vmem:[%s9 + $0x34] sm:$0xf]
          %v7678 = vld [vmem:[%s9 + $0x38] sm:$0xf]
          %v7679 = vld [vmem:[%s9 + $0x3c] sm:$0xf]
          %v7680 = vld [vmem:[%s9 + $0x40] sm:$0xf]
          %v7681 = vld [vmem:[%s9 + $0x44] sm:$0xf]
          %v7682 = vld [vmem:[%s9 + $0x48] sm:$0xf]
          %v7683 = vld [vmem:[%s9 + $0x4c] sm:$0xf]
          %v7684 = vld [vmem:[%s9 + $0x50] sm:$0xf]
          %v7685 = vld [vmem:[%s9 + $0x54] sm:$0xf]
          %v7686 = vld [vmem:[%s9 + $0x58] sm:$0xf]
          %v7687 = vld [vmem:[%s9 + $0x5c] sm:$0xf]
          %v7688 = vld [vmem:[%s9 + $0x60] sm:$0xf]
          %v7689 = vld [vmem:[%s9 + $0x64] sm:$0xf]
          %v7690 = vld [vmem:[%s9 + $0x68] sm:$0xf]
          %v7691 = vld [vmem:[%s9 + $0x6c] sm:$0xf]
          %v7692 = vld [vmem:[%s9 + $0x70] sm:$0xf]
          %v7693 = vld [vmem:[%s9 + $0x74] sm:$0xf]
          %v7694 = vld [vmem:[%s9 + $0x78] sm:$0xf]
          %v7695 = vld [vmem:[%s9 + $0x7c] sm:$0xf]
          %v7696 = vld [vmem:[#allocation4] sm:$0x1]
          %v7698 = vperm.slane %v7696, 0
          %v7732 = vunpack.c.l.b16 %v7664
          %v7733 = vunpack.c.l.b16 %v7665
          %v7734 = vunpack.c.l.b16 %v7666
          %v7735 = vunpack.c.l.b16 %v7667
          %v7736 = vunpack.c.l.b16 %v7668
          %v7737 = vunpack.c.l.b16 %v7669
          %v7738 = vunpack.c.l.b16 %v7670
          %v7739 = vunpack.c.l.b16 %v7671
          %v7740 = vunpack.c.l.b16 %v7672
          %v7741 = vunpack.c.l.b16 %v7673
          %v7742 = vunpack.c.l.b16 %v7674
          %v7743 = vunpack.c.l.b16 %v7675
          %v7744 = vunpack.c.l.b16 %v7676
          %v7745 = vunpack.c.l.b16 %v7677
          %v7746 = vunpack.c.l.b16 %v7678
          %v7747 = vunpack.c.l.b16 %v7679
          %v7748 = vunpack.c.l.b16 %v7680
          %v7749 = vunpack.c.l.b16 %v7681
          %v7750 = vunpack.c.l.b16 %v7682
          %v7751 = vunpack.c.l.b16 %v7683
          %v7752 = vunpack.c.l.b16 %v7684
          %v7753 = vunpack.c.l.b16 %v7685
          %v7754 = vunpack.c.l.b16 %v7686
          %v7755 = vunpack.c.l.b16 %v7687
          %v7756 = vunpack.c.l.b16 %v7688
          %v7757 = vunpack.c.l.b16 %v7689
          %v7758 = vunpack.c.l.b16 %v7690
          %v7759 = vunpack.c.l.b16 %v7691
          %v7760 = vunpack.c.l.b16 %v7692
          %v7761 = vunpack.c.l.b16 %v7693
          %v7762 = vunpack.c.l.b16 %v7694
          %v7763 = vunpack.c.l.b16 %v7695
          %v7764 = vpack.c.b16 %v7733, %v7732
          %v7765 = vpack.c.b16 %v7735, %v7734
          %v7766 = vpack.c.b16 %v7737, %v7736
          %v7767 = vpack.c.b16 %v7739, %v7738
          %v7768 = vpack.c.b16 %v7741, %v7740
          %v7769 = vpack.c.b16 %v7743, %v7742
          %v7770 = vpack.c.b16 %v7745, %v7744
          %v7771 = vpack.c.b16 %v7747, %v7746
          %v7772 = vpack.c.b16 %v7749, %v7748
          %v7773 = vpack.c.b16 %v7751, %v7750
          %v7774 = vpack.c.b16 %v7753, %v7752
          %v7775 = vpack.c.b16 %v7755, %v7754
          %v7776 = vpack.c.b16 %v7757, %v7756
          %v7777 = vpack.c.b16 %v7759, %v7758
          %v7778 = vpack.c.b16 %v7761, %v7760
          %v7779 = vpack.c.b16 %v7763, %v7762
          %7796 = vmatpush.bf16.msra.mxu0 %v7771
          %7797 = vmatpush.bf16.msra.mxu0 %v7770
          %7798 = vmatpush.bf16.msra.mxu0 %v7769
          %7799 = vmatpush.bf16.msra.mxu0 %v7768
          %7800 = vmatpush.bf16.msra.mxu0 %v7767
          %7801 = vmatpush.bf16.msra.mxu0 %v7766
          %7802 = vmatpush.bf16.msra.mxu0 %v7765
          %7803 = vmatpush.bf16.msra.mxu0 %v7764
          %7804 = vmatmul.bf16.gmra.mxu0 %v7662
          %v7805 = vpop.f32.mrf.mxu0
          %v7806 = vadd.f32 %v7698, %v7805
          %v7807 = vpop.f32.mrf.mxu0
          %7808 = vdwg.mxu0
          %7809 = vmatpush.bf16.msra.mxu0 %v7779
          %7810 = vmatpush.bf16.msra.mxu0 %v7778
          %7811 = vmatpush.bf16.msra.mxu0 %v7777
          %7812 = vmatpush.bf16.msra.mxu0 %v7776
          %7813 = vmatpush.bf16.msra.mxu0 %v7775
          %7814 = vmatpush.bf16.msra.mxu0 %v7774
          %7815 = vmatpush.bf16.msra.mxu0 %v7773
          %7816 = vmatpush.bf16.msra.mxu0 %v7772
          %7817 = vmatmul.bf16.gmra.mxu0 %v7663
          %v7818 = vpop.f32.mrf.mxu0
          %v7819 = vadd.f32 %v7806, %v7818
          %v7820 = vpop.f32.mrf.mxu0
          %7821 = vdwg.mxu0
          %vm7822 = vcmask 1024
          %7823 = vst.msk [vmem:[%s11] sm:$0x3] %vm7822, %v7819
        $region104: #{cnn22_forward.1} parent=63 // pred_fallthru
          _
        // Predicated region
        $region105: #{cnn22_forward.1} parent=63 // pred_check
          %p7824 = pneg %p286
        $region106: #{cnn22_forward.1} parent=63 // pred_check_branch
          %7826 = sbr.rel (%p7824) target = $region108
        $region107: #{cnn22_forward.1} parent=63 // pred_region
          _
        $region108: #{cnn22_forward.1} parent=63 // pred_fallthru
          _
        // Predicated region
        $region109: #{cnn22_forward.1} parent=63 // pred_check
          %p7827 = pneg %p286
        $region110: #{cnn22_forward.1} parent=63 // pred_check_branch
          %7829 = sbr.rel (%p7827) target = $region112
        $region111: #{cnn22_forward.1} parent=63 // pred_region
          _
        $region112: #{cnn22_forward.1} parent=63 // pred_fallthru
          _
      $region64: #{cnn22_forward.1} parent=5 // pred_fallthru
        _
      %p7830 = scmp.le.s32.totalorder 2, %s22
      // Predicated region
      $region113: #{cnn22_forward.1} parent=5 // pred_check
        %p7831 = pneg %p7830
      $region114: #{cnn22_forward.1} parent=5 // pred_check_branch
        %7833 = sbr.rel (%p7831) target = $region116
      $region115: #{cnn22_forward.1} parent=5 // pred_region
        %s7834 = ssub.s32 %s22, 2
      $region116: #{cnn22_forward.1} parent=5 // pred_fallthru
        _
    $region6: #{cnn22_forward.1} parent=1 // loop_footer
      %s26 = sadd.s32 1, %s22
    $region7: #{cnn22_forward.1} parent=1 // loop_footer_branch
      %21 = sbr.rel target = $region3
    $region8: #{cnn22_forward.1} parent=1 // loop_exit
      _
    %7835 = vsyncpa [#allocation6], 1
    %s7836 = scalar_lea.sflag [#allocation6], 1
    %7837 = vsyncpa %s7836, 1
    %7838 = vsyncpa [#allocation8], 1
    %7839 = vsyncpa [#allocation11], 1

</llo_original>
